<compile_context>
chip_gen: v6e
topology: v6e:2x2x1
jax: 0.10.0
libtpu: 0.0.40
codegen_flags: <defaults>
</compile_context>

<pallas_src>
import functools

import jax
import jax.numpy as jnp
from jax.experimental import pallas as pl
from jax.experimental.pallas import tpu as pltpu

BN_EPS = 1e-5

_PARALLEL_N = pltpu.CompilerParams(dimension_semantics=("parallel",))


# ----------------------------------------------------------------- in-kernel helpers
def _im2col3(x2d, T, H, W, C):
    """(P, C) -> (P, 27*C) patches for a SAME 3x3x3 conv. Staged in the input dtype (bf16)."""
    P = T * H * W
    xp = jnp.zeros((T + 2, H + 2, W + 2, C), x2d.dtype)
    xp = xp.at[1:T + 1, 1:H + 1, 1:W + 1, :].set(x2d.reshape(T, H, W, C))
    taps = [xp[a:a + T, b:b + H, c:c + W, :].reshape(P, C)
            for a in range(3) for b in range(3) for c in range(3)]
    return jnp.concatenate(taps, axis=-1)


def _axial_attention(qkv3, axis, T, H, W, C, NH):
    """qkv3: (P, 3C) f32 stacked [q|k|v] (q pre-scaled by 1/sqrt(d) at prep time).
    Attention along spatial `axis` (0=T, 1=H, 2=W), heads folded into the batch dim so the
    score and p.v contractions are batched MXU matmuls. Returns (P, C) f32."""
    d = C // NH
    order = [ax for ax in range(3) if ax != axis] + [3, axis, 4]   # (other, other, NH, seq, d)
    inv = [order.index(i) for i in range(5)]

    def stage(z):
        z5 = jnp.transpose(z.reshape(T, H, W, NH, d).astype(jnp.bfloat16), order)
        return z5.reshape(-1, z5.shape[3], d), z5.shape             # (B, S, d) bf16

    qb, shp = stage(qkv3[:, :C])
    kb, _ = stage(qkv3[:, C:2 * C])
    vb, _ = stage(qkv3[:, 2 * C:])

    s = jnp.einsum('bqd,bkd->bqk', qb, kb, preferred_element_type=jnp.float32)
    e = jnp.exp(s - jnp.max(s, axis=-1, keepdims=True))
    l = jnp.sum(e, axis=-1, keepdims=True)
    o = jnp.einsum('bqk,bkd->bqd', e.astype(jnp.bfloat16), vb,
                   preferred_element_type=jnp.float32)
    o = o * pl.reciprocal(l, approx=True)                            # deferred softmax norm (EUP)

    o5 = jnp.transpose(o.reshape(shp), inv)                          # back to (T, H, W, NH, d)
    return o5.reshape(T * H * W, C)


# ----------------------------------------------------------------- kernels
def down_conv_relu_kernel(xs_ref, w_ref, b_ref, o_ref, *, To, Ho, Wo, C8):
    """SamePadConv3d(k=4, s=2) + ReLU on a bf16 polyphase (space-to-depth) restaged input."""
    P = To * Ho * Wo
    xs = xs_ref[0].reshape(To + 1, Ho + 1, Wo + 1, C8)               # bf16
    taps = [xs[a:a + To, b:b + Ho, c:c + Wo, :].reshape(P, C8)
            for a in range(2) for b in range(2) for c in range(2)]
    patches = jnp.concatenate(taps, axis=-1)                         # (P, 64*Cin) bf16
    y = jnp.dot(patches, w_ref[...], preferred_element_type=jnp.float32) + b_ref[...]
    o_ref[0] = jnp.maximum(y, 0.0).astype(o_ref.dtype)


def attn_res_block_kernel(*refs, T, H, W, C, Cin, NH, fuse_conv_last, fuse_final_bn):
    """Fully fused [optional conv_last] -> AttentionResidualBlock -> [optional final BN+ReLU].

    One pallas_call per batch element; everything stays in VMEM between stages."""
    f32, bf16 = jnp.float32, jnp.bfloat16
    it = iter(refs)
    x_ref = next(it)
    if fuse_conv_last:
        wl_ref, bl_ref = next(it), next(it)
    s1_ref, b1_ref = next(it), next(it)
    w1_ref, b2_ref = next(it), next(it)          # w1 has BN2 scale folded in
    w2_ref, b3_ref = next(it), next(it)          # w2 has BN3 scale folded in
    wqkv_ref, wfc_ref, bfc_ref = next(it), next(it), next(it)
    if fuse_final_bn:
        fs_ref, fb_ref = next(it), next(it)
    o_ref = next(it)

    xin = x_ref[0]                                                   # (P, Cin) bf16

    # optional conv_last (k=3, s=1, with bias): im2col in bf16 -> single MXU matmul, f32 acc
    if fuse_conv_last:
        x2 = jnp.dot(_im2col3(xin, T, H, W, Cin), wl_ref[...],
                     preferred_element_type=f32) + bl_ref[...]
    else:
        x2 = xin.astype(f32)

    # BN1 (folded affine) + ReLU
    h = jnp.maximum(x2 * s1_ref[...] + b1_ref[...], 0.0)

    # 3x3x3 conv C -> C//2 (BN2 scale folded into weights) + BN2 bias + ReLU
    h = jnp.dot(_im2col3(h.astype(bf16), T, H, W, C), w1_ref[...],
                preferred_element_type=f32)
    h = jnp.maximum(h + b2_ref[...], 0.0)

    # 1x1x1 conv C//2 -> C (BN3 scale folded into weights) + BN3 bias + ReLU
    h = jnp.dot(h.astype(bf16), w2_ref[...], preferred_element_type=f32)
    h = jnp.maximum(h + b3_ref[...], 0.0)

    # q/k/v projections for all three axial attentions, one stacked matmul -> (P, 9C)
    qkv = jnp.dot(h.astype(bf16), wqkv_ref[...], preferred_element_type=f32)

    a_w = _axial_attention(qkv[:, 0:3 * C], 2, T, H, W, C, NH)       # attention along W
    a_h = _axial_attention(qkv[:, 3 * C:6 * C], 1, T, H, W, C, NH)   # attention along H
    a_t = _axial_attention(qkv[:, 6 * C:9 * C], 0, T, H, W, C, NH)   # attention along T

    # stacked fc projections of the three attentions + residual add
    a_all = jnp.concatenate([a_w, a_h, a_t], axis=-1).astype(bf16)   # (P, 3C)
    y = x2 + jnp.dot(a_all, wfc_ref[...], preferred_element_type=f32) + bfc_ref[...]

    if fuse_final_bn:                                                # trailing BN + ReLU
        y = jnp.maximum(y * fs_ref[...] + fb_ref[...], 0.0)
    o_ref[0] = y.astype(o_ref.dtype)


def conv3_kernel(x_ref, w_ref, b_ref, o_ref, *, T, H, W, Cin):
    """Standalone SamePadConv3d(k=3, s=1) + bias (only used when n_res_layers == 0)."""
    patches = _im2col3(x_ref[0], T, H, W, Cin)
    y = jnp.dot(patches, w_ref[...], preferred_element_type=jnp.float32) + b_ref[...]
    o_ref[0] = y.astype(o_ref.dtype)


def bn_relu_kernel(x_ref, s_ref, b_ref, o_ref):
    """Standalone BN + ReLU (only used when n_res_layers == 0)."""
    x = x_ref[0].astype(jnp.float32)
    o_ref[0] = jnp.maximum(x * s_ref[...] + b_ref[...], 0.0).astype(o_ref.dtype)


# ----------------------------------------------------------------- parameter restaging (once)
def _prep_conv3_w(w):
    """(Cout, Cin, 3, 3, 3) torch layout -> (27*Cin, Cout), rows ordered (kt, kh, kw, cin)."""
    cout, cin = w.shape[0], w.shape[1]
    return jnp.transpose(w, (2, 3, 4, 1, 0)).reshape(27 * cin, cout)


def _prep_conv4_s2_w(w):
    """(Cout, Cin, 4, 4, 4) -> (64*Cin, Cout) matching the polyphase (space-to-depth) kernel."""
    cout, cin = w.shape[0], w.shape[1]
    w = jnp.transpose(w, (2, 3, 4, 1, 0))                 # (kt, kh, kw, cin, cout)
    w = w.reshape(2, 2, 2, 2, 2, 2, cin, cout)            # (qt, rt, qh, rh, qw, rw, cin, cout)
    w = jnp.transpose(w, (0, 2, 4, 1, 3, 5, 6, 7))        # (qt, qh, qw, rt, rh, rw, cin, cout)
    return w.reshape(64 * cin, cout)


def _space_to_depth_pad(x):
    """(N,T,H,W,C) -> (N, T//2+1, H//2+1, W//2+1, 8*C): stride-2 polyphase of the SAME-padded
    input so the strided 4^3 conv needs only 8 unstrided tap slices inside the kernel."""
    N, T, H, W, C = x.shape
    xp = jnp.pad(x, ((0, 0), (1, 1), (1, 1), (1, 1), (0, 0)))
    xp = xp.reshape(N, T // 2 + 1, 2, H // 2 + 1, 2, W // 2 + 1, 2, C)
    xp = jnp.transpose(xp, (0, 1, 3, 5, 2, 4, 6, 7))
    return xp.reshape(N, T // 2 + 1, H // 2 + 1, W // 2 + 1, 8 * C)


def _bn_affine(bn, eps=BN_EPS):
    g, b, m, v = bn
    scale = g * jax.lax.rsqrt(v + eps)
    return scale.reshape(1, -1), (b - m * scale).reshape(1, -1)


def prepare_params(raw, n_head):
    prep = {'down': [], 'res_blocks': []}
    for (w, b) in raw['down']:
        prep['down'].append((_prep_conv4_s2_w(w).astype(jnp.bfloat16), b.reshape(1, -1)))
    prep['conv_last_w'] = _prep_conv3_w(raw['conv_last_w']).astype(jnp.bfloat16)
    prep['conv_last_b'] = raw['conv_last_b'].reshape(1, -1)
    for bp in raw['res_blocks']:
        d = {}
        C = bp['conv2_w'].shape[0]
        d['s1'], d['b1'] = _bn_affine(bp['bn1'])
        s2, d['b2'] = _bn_affine(bp['bn2'])
        d['w1'] = (_prep_conv3_w(bp['conv1_w']) * s2).astype(jnp.bfloat16)       # fold BN2 scale
        s3, d['b3'] = _bn_affine(bp['bn3'])
        w2 = jnp.transpose(bp['conv2_w'][:, :, 0, 0, 0], (1, 0))
        d['w2'] = (w2 * s3).astype(jnp.bfloat16)                                 # fold BN3 scale
        qscale = 1.0 / float(C // n_head) ** 0.5
        wqkv_cols, wfc_rows, bfc = [], [], 0.0
        for ax in ('w', 'h', 't'):
            a = bp['attn_' + ax]
            wqkv_cols += [(a['wq'] * qscale).T, a['wk'].T, a['wv'].T]            # fold 1/sqrt(d)
            wfc_rows.append(a['wfc'].T)
            bfc = bfc + a['bfc']
        d['wqkv'] = jnp.concatenate(wqkv_cols, axis=1).astype(jnp.bfloat16)      # (C, 9C)
        d['wfc'] = jnp.concatenate(wfc_rows, axis=0).astype(jnp.bfloat16)        # (3C, C)
        d['bfc'] = bfc.reshape(1, -1)
        prep['res_blocks'].append(d)
    prep['final_s'], prep['final_b'] = _bn_affine(raw['final_bn'])
    return prep


# ----------------------------------------------------------------- pallas_call wrappers
def down_conv_relu(x, w_mat, bias):
    N, T, H, W, Cin = x.shape
    To, Ho, Wo = T // 2, H // 2, W // 2
    Cout = w_mat.shape[-1]
    C8 = 8 * Cin
    xs = _space_to_depth_pad(x).reshape(N, (To + 1) * (Ho + 1), Wo + 1, C8)      # bf16 restage
    P = To * Ho * Wo
    kern = functools.partial(down_conv_relu_kernel, To=To, Ho=Ho, Wo=Wo, C8=C8)
    out = pl.pallas_call(
        kern,
        out_shape=jax.ShapeDtypeStruct((N, P, Cout), jnp.bfloat16),
        grid=(N,),
        in_specs=[
            pl.BlockSpec((1, (To + 1) * (Ho + 1), Wo + 1, C8), lambda n: (n, 0, 0, 0)),
            pl.BlockSpec(w_mat.shape, lambda n: (0, 0)),
            pl.BlockSpec(bias.shape, lambda n: (0, 0)),
        ],
        out_specs=pl.BlockSpec((1, P, Cout), lambda n: (n, 0, 0)),
        compiler_params=_PARALLEL_N,
    )(xs, w_mat, bias)
    return out.reshape(N, To, Ho, Wo, Cout)


def attention_residual_block(x, p, n_head, *, conv_last=None, final_bn=None):
    N, T, H, W, Cin = x.shape
    C = p['wfc'].shape[-1]
    P = T * H * W
    out_dtype = jnp.float32 if final_bn is not None else jnp.bfloat16

    operands = [x.reshape(N, P, Cin)]
    in_specs = [pl.BlockSpec((1, P, Cin), lambda n: (n, 0, 0))]

    def add_param(arr):
        operands.append(arr)
        in_specs.append(pl.BlockSpec(arr.shape, lambda n: (0, 0)))

    if conv_last is not None:
        add_param(conv_last[0]); add_param(conv_last[1])
    for name in ('s1', 'b1', 'w1', 'b2', 'w2', 'b3', 'wqkv', 'wfc', 'bfc'):
        add_param(p[name])
    if final_bn is not None:
        add_param(final_bn[0]); add_param(final_bn[1])

    kern = functools.partial(attn_res_block_kernel, T=T, H=H, W=W, C=C, Cin=Cin, NH=n_head,
                             fuse_conv_last=conv_last is not None,
                             fuse_final_bn=final_bn is not None)
    out = pl.pallas_call(
        kern,
        out_shape=jax.ShapeDtypeStruct((N, P, C), out_dtype),
        grid=(N,),
        in_specs=in_specs,
        out_specs=pl.BlockSpec((1, P, C), lambda n: (n, 0, 0)),
        compiler_params=_PARALLEL_N,
    )(*operands)
    return out.reshape(N, T, H, W, C)


def conv3_same(x, w_mat, bias):
    N, T, H, W, C = x.shape
    Cout = w_mat.shape[-1]
    P = T * H * W
    kern = functools.partial(conv3_kernel, T=T, H=H, W=W, Cin=C)
    out = pl.pallas_call(
        kern, out_shape=jax.ShapeDtypeStruct((N, P, Cout), jnp.float32),
        grid=(N,),
        in_specs=[pl.BlockSpec((1, P, C), lambda n: (n, 0, 0)),
                  pl.BlockSpec(w_mat.shape, lambda n: (0, 0)),
                  pl.BlockSpec(bias.shape, lambda n: (0, 0))],
        out_specs=pl.BlockSpec((1, P, Cout), lambda n: (n, 0, 0)),
        compiler_params=_PARALLEL_N,
    )(x.reshape(N, P, C), w_mat, bias)
    return out.reshape(N, T, H, W, Cout)


def bn_relu(x, s, b):
    N, T, H, W, C = x.shape
    P = T * H * W
    out = pl.pallas_call(
        bn_relu_kernel, out_shape=jax.ShapeDtypeStruct((N, P, C), jnp.float32),
        grid=(N,),
        in_specs=[pl.BlockSpec((1, P, C), lambda n: (n, 0, 0)),
                  pl.BlockSpec(s.shape, lambda n: (0, 0)),
                  pl.BlockSpec(b.shape, lambda n: (0, 0))],
        out_specs=pl.BlockSpec((1, P, C), lambda n: (n, 0, 0)),
        compiler_params=_PARALLEL_N,
    )(x.reshape(N, P, C), s, b)
    return out.reshape(N, T, H, W, C)


def encoder3d_forward(x_ncthw, prep, n_head):
    """Full Encoder3D forward. x_ncthw: (N, 1, T, H, W). Returns (N, C, T', H', W') f32."""
    x = jnp.transpose(x_ncthw, (0, 2, 3, 4, 1)).astype(jnp.bfloat16)   # channels-last, bf16
    for (w_mat, b) in prep['down']:
        x = down_conv_relu(x, w_mat, b)                                # conv(k=4,s=2)+ReLU, bf16
    nblk = len(prep['res_blocks'])
    if nblk == 0:
        x = conv3_same(x, prep['conv_last_w'], prep['conv_last_b'])
        x = bn_relu(x, prep['final_s'], prep['final_b'])
    else:
        for i, bp in enumerate(prep['res_blocks']):
            conv_last = (prep['conv_last_w'], prep['conv_last_b']) if i == 0 else None
            final_bn = (prep['final_s'], prep['final_b']) if i == nblk - 1 else None
            x = attention_residual_block(x, bp, n_head, conv_last=conv_last, final_bn=final_bn)
    return jnp.transpose(x.astype(jnp.float32), (0, 4, 1, 2, 3))


# ----------------------------------------------------------------- pure-JAX reference
def _ref_conv3d(x, w, b, stride):
    ks = w.shape[2:]
    pads = [((k - s) // 2 + (k - s) % 2, (k - s) // 2) for k, s in zip(ks, stride)]
    w_cl = jnp.transpose(w, (2, 3, 4, 1, 0))
    y = jax.lax.conv_general_dilated(x, w_cl, window_strides=stride, padding=pads,
                                     dimension_numbers=('NDHWC', 'DHWIO', 'NDHWC'))
    if b is not None:
        y = y + b.reshape(1, 1, 1, 1, -1)
    return y


def _ref_bn(x, bn, eps=BN_EPS):
    g, b, m, v = bn
    return (x - m) * jax.lax.rsqrt(v + eps) * g + b


def _ref_axial_attn(h, p, n_head, axis):
    N, T, H, W, C = h.shape
    d = C // n_head

    def proj(wm):
        return (h @ wm.T).reshape(N, T, H, W, n_head, d)

    q = jnp.moveaxis(proj(p['wq']), axis, -2)
    k = jnp.moveaxis(proj(p['wk']), axis, -2)
    v = jnp.moveaxis(proj(p['wv']), axis, -2)
    s = jnp.einsum('...qd,...kd->...qk', q, k) / (float(d) ** 0.5)
    a = jax.nn.softmax(s, axis=-1)
    o = jnp.einsum('...qk,...kd->...qd', a, v)
    o = jnp.moveaxis(o, -2, axis).reshape(N, T, H, W, C)
    return o @ p['wfc'].T + p['bfc']


def _ref_res_block(x, bp, n_head):
    h = jax.nn.relu(_ref_bn(x, bp['bn1']))
    h = _ref_conv3d(h, bp['conv1_w'], None, (1, 1, 1))
    h = jax.nn.relu(_ref_bn(h, bp['bn2']))
    h = _ref_conv3d(h, bp['conv2_w'], None, (1, 1, 1))
    h = jax.nn.relu(_ref_bn(h, bp['bn3']))
    a = (_ref_axial_attn(h, bp['attn_w'], n_head, 3)
         + _ref_axial_attn(h, bp['attn_h'], n_head, 2)
         + _ref_axial_attn(h, bp['attn_t'], n_head, 1))
    return x + a


def reference_encoder3d(x_ncthw, raw, n_head):
    x = jnp.transpose(x_ncthw, (0, 2, 3, 4, 1)).astype(jnp.float32)
    for (w, b) in raw['down']:
        x = jax.nn.relu(_ref_conv3d(x, w, b, (2, 2, 2)))
    x = _ref_conv3d(x, raw['conv_last_w'], raw['conv_last_b'], (1, 1, 1))
    for bp in raw['res_blocks']:
        x = _ref_res_block(x, bp, n_head)
    x = jax.nn.relu(_ref_bn(x, raw['final_bn']))
    return jnp.transpose(x, (0, 4, 1, 2, 3))


# ----------------------------------------------------------------- main
if __name__ == "__main__":
    N = 2
    n_hiddens = 32
    n_head = 2               # AxialBlock(n_hiddens, 2) in the reference module
    n_res_layers = 1
    T, H, W = 16, 32, 32     # input video (N, 1, T, H, W); downsample = (4, 4, 4)

    key = jax.random.PRNGKey(0)
    keys = iter(jax.random.split(key, 64))

    def nk():
        return next(keys)

    def conv_w(cout, cin, k):
        fan_in = cin * k ** 3
        return jax.random.normal(nk(), (cout, cin, k, k, k), jnp.float32) / (fan_in ** 0.5)

    def lin_w(cout, cin):
        return jax.random.normal(nk(), (cout, cin), jnp.float32) / (cin ** 0.5)

    def bn_params(c):
        return (1.0 + 0.1 * jax.random.normal(nk(), (c,), jnp.float32),   # gamma
                0.1 * jax.random.normal(nk(), (c,), jnp.float32),          # beta
                0.1 * jax.random.normal(nk(), (c,), jnp.float32),          # running_mean
                0.5 + jax.random.uniform(nk(), (c,), jnp.float32))         # running_var

    raw = {
        'down': [(conv_w(n_hiddens, 1, 4), 0.05 * jax.random.normal(nk(), (n_hiddens,), jnp.float32)),
                 (conv_w(n_hiddens, n_hiddens, 4), 0.05 * jax.random.normal(nk(), (n_hiddens,), jnp.float32))],
        'conv_last_w': conv_w(n_hiddens, n_hiddens, 3),
        'conv_last_b': 0.05 * jax.random.normal(nk(), (n_hiddens,), jnp.float32),
        'res_blocks': [],
        'final_bn': bn_params(n_hiddens),
    }
    for _ in range(n_res_layers):
        bp = {
            'bn1': bn_params(n_hiddens),
            'conv1_w': conv_w(n_hiddens // 2, n_hiddens, 3),
            'bn2': bn_params(n_hiddens // 2),
            'conv2_w': conv_w(n_hiddens, n_hiddens // 2, 1),
            'bn3': bn_params(n_hiddens),
        }
        for ax in ('w', 'h', 't'):
            bp['attn_' + ax] = {
                'wq': lin_w(n_hiddens, n_hiddens),
                'wk': lin_w(n_hiddens, n_hiddens),
                'wv': lin_w(n_hiddens, n_hiddens),
                'wfc': lin_w(n_hiddens, n_hiddens),
                'bfc': 0.05 * jax.random.normal(nk(), (n_hiddens,), jnp.float32),
            }
        raw['res_blocks'].append(bp)

    x_in = jax.random.normal(nk(), (N, 1, T, H, W), jnp.float32)

    prep = prepare_params(raw, n_head)
    out = encoder3d_forward(x_in, prep, n_head)
    out = jax.block_until_ready(out)

    ref = reference_encoder3d(x_in, raw, n_head)
    err = float(jnp.max(jnp.abs(out - ref)))

    assert out.shape == (N, n_hiddens, T // 4, H // 4, W // 4), out.shape
    # bf16 MXU operands (convs, qkv/fc, attention scores & p.v), bf16 inter-layer activations,
    # approx-reciprocal softmax normalization; f32 accumulation / residual / BN.
    assert err < 1.2e-1, f"max abs error too large: {err}"
    print("KERNEL_OK")
</pallas_src>

<mosaic_0001>
module attributes {stable_mosaic.version = 11 : i64} {
  func.func @down_conv_relu_kernel(%arg0: i32, %arg1: memref<1x153x17x8xbf16, #tpu.memory_space<vmem>>, %arg2: memref<64x32xbf16, #tpu.memory_space<vmem>>, %arg3: memref<1x32xf32, #tpu.memory_space<vmem>>, %arg4: memref<1x2048x32xbf16, #tpu.memory_space<vmem>>) attributes {dimension_semantics = [#tpu.dimension_semantics<parallel>], iteration_bounds = array<i64: 2>, scalar_prefetch = 0 : i64, scratch_operands = 0 : i64, tpu.core_type = #tpu.core_type<tc>, window_params = [{transform_indices = @transform_0, window_bounds = array<i64: 1, 153, 17, 8>}, {pipeline_mode = #tpu.pipeline_mode<synchronous>, transform_indices = @transform_1, window_bounds = array<i64: 64, 32>}, {pipeline_mode = #tpu.pipeline_mode<synchronous>, transform_indices = @transform_2, window_bounds = array<i64: 1, 32>}, {transform_indices = @transform_3, window_bounds = array<i64: 1, 2048, 32>}]} {
    %c0 = arith.constant 0 : index
    %c0_0 = arith.constant 0 : index
    %c0_1 = arith.constant 0 : index
    %c0_2 = arith.constant 0 : index
    %0 = vector.load %arg1[%c0, %c0_0, %c0_1, %c0_2] : memref<1x153x17x8xbf16, #tpu.memory_space<vmem>>, vector<1x153x17x8xbf16>
    %1 = vector.shape_cast %0 : vector<1x153x17x8xbf16> to vector<153x17x8xbf16>
    %2 = vector.shape_cast %1 : vector<153x17x8xbf16> to vector<9x17x17x8xbf16>
    %3 = vector.extract_strided_slice %2 {offsets = [0, 0, 0, 0], sizes = [8, 16, 16, 8], strides = [1, 1, 1, 1]} : vector<9x17x17x8xbf16> to vector<8x16x16x8xbf16>
    %4 = vector.shape_cast %3 : vector<8x16x16x8xbf16> to vector<2048x8xbf16>
    %5 = vector.extract_strided_slice %2 {offsets = [0, 0, 1, 0], sizes = [8, 16, 16, 8], strides = [1, 1, 1, 1]} : vector<9x17x17x8xbf16> to vector<8x16x16x8xbf16>
    %6 = vector.shape_cast %5 : vector<8x16x16x8xbf16> to vector<2048x8xbf16>
    %7 = vector.extract_strided_slice %2 {offsets = [0, 1, 0, 0], sizes = [8, 16, 16, 8], strides = [1, 1, 1, 1]} : vector<9x17x17x8xbf16> to vector<8x16x16x8xbf16>
    %8 = vector.shape_cast %7 : vector<8x16x16x8xbf16> to vector<2048x8xbf16>
    %9 = vector.extract_strided_slice %2 {offsets = [0, 1, 1, 0], sizes = [8, 16, 16, 8], strides = [1, 1, 1, 1]} : vector<9x17x17x8xbf16> to vector<8x16x16x8xbf16>
    %10 = vector.shape_cast %9 : vector<8x16x16x8xbf16> to vector<2048x8xbf16>
    %11 = vector.extract_strided_slice %2 {offsets = [1, 0, 0, 0], sizes = [8, 16, 16, 8], strides = [1, 1, 1, 1]} : vector<9x17x17x8xbf16> to vector<8x16x16x8xbf16>
    %12 = vector.shape_cast %11 : vector<8x16x16x8xbf16> to vector<2048x8xbf16>
    %13 = vector.extract_strided_slice %2 {offsets = [1, 0, 1, 0], sizes = [8, 16, 16, 8], strides = [1, 1, 1, 1]} : vector<9x17x17x8xbf16> to vector<8x16x16x8xbf16>
    %14 = vector.shape_cast %13 : vector<8x16x16x8xbf16> to vector<2048x8xbf16>
    %15 = vector.extract_strided_slice %2 {offsets = [1, 1, 0, 0], sizes = [8, 16, 16, 8], strides = [1, 1, 1, 1]} : vector<9x17x17x8xbf16> to vector<8x16x16x8xbf16>
    %16 = vector.shape_cast %15 : vector<8x16x16x8xbf16> to vector<2048x8xbf16>
    %17 = vector.extract_strided_slice %2 {offsets = [1, 1, 1, 0], sizes = [8, 16, 16, 8], strides = [1, 1, 1, 1]} : vector<9x17x17x8xbf16> to vector<8x16x16x8xbf16>
    %18 = vector.shape_cast %17 : vector<8x16x16x8xbf16> to vector<2048x8xbf16>
    %19 = tpu.concatenate %4, %6, %8, %10, %12, %14, %16, %18 in 1 : vector<2048x8xbf16>, vector<2048x8xbf16>, vector<2048x8xbf16>, vector<2048x8xbf16>, vector<2048x8xbf16>, vector<2048x8xbf16>, vector<2048x8xbf16>, vector<2048x8xbf16> -> vector<2048x64xbf16>
    %c0_3 = arith.constant 0 : index
    %c0_4 = arith.constant 0 : index
    %20 = vector.load %arg2[%c0_3, %c0_4] : memref<64x32xbf16, #tpu.memory_space<vmem>>, vector<64x32xbf16>
    %cst = arith.constant dense<0.000000e+00> : vector<2048x32xf32>
    %21 = tpu.matmul %19, %20, %cst {dimension_numbers = #tpu.dot_dimension_numbers<[1], [0], [0], [1], [0, 0, 1, 1], [], []>} : vector<2048x64xbf16>, vector<64x32xbf16>, vector<2048x32xf32> -> vector<2048x32xf32>
    %c0_5 = arith.constant 0 : index
    %c0_6 = arith.constant 0 : index
    %22 = vector.load %arg3[%c0_5, %c0_6] : memref<1x32xf32, #tpu.memory_space<vmem>>, vector<1x32xf32>
    %23 = vector.broadcast %22 : vector<1x32xf32> to vector<2048x32xf32>
    %24 = arith.addf %21, %23 : vector<2048x32xf32>
    %cst_7 = arith.constant 0.000000e+00 : f32
    %25 = vector.broadcast %cst_7 : f32 to vector<2048x32xf32>
    %26 = arith.maximumf %24, %25 : vector<2048x32xf32>
    %27 = arith.truncf %26 : vector<2048x32xf32> to vector<2048x32xbf16>
    %c0_8 = arith.constant 0 : index
    %c0_9 = arith.constant 0 : index
    %c0_10 = arith.constant 0 : index
    %28 = vector.load %arg4[%c0_8, %c0_9, %c0_10] : memref<1x2048x32xbf16, #tpu.memory_space<vmem>>, vector<1x2048x32xbf16>
    %29 = vector.shape_cast %28 : vector<1x2048x32xbf16> to vector<2048x32xbf16>
    %30 = vector.shape_cast %27 : vector<2048x32xbf16> to vector<1x2048x32xbf16>
    tpu.vector_store %arg4[%c0_8, %c0_9, %c0_10], %30 {strides = array<i32>} : memref<1x2048x32xbf16, #tpu.memory_space<vmem>>, vector<1x2048x32xbf16>,
    return
  }
  func.func @transform_0(%arg0: i32) -> (i32, i32, i32, i32) {
    %c0_i32 = arith.constant 0 : i32
    %c0_i32_0 = arith.constant 0 : i32
    %c0_i32_1 = arith.constant 0 : i32
    %c0_i32_2 = arith.constant 0 : i32
    return %arg0, %c0_i32, %c0_i32_0, %c0_i32_1 : i32, i32, i32, i32
  }
  func.func @transform_1(%arg0: i32) -> (i32, i32) {
    %c0_i32 = arith.constant 0 : i32
    %c0_i32_0 = arith.constant 0 : i32
    %c0_i32_1 = arith.constant 0 : i32
    return %c0_i32, %c0_i32_0 : i32, i32
  }
  func.func @transform_2(%arg0: i32) -> (i32, i32) {
    %c0_i32 = arith.constant 0 : i32
    %c0_i32_0 = arith.constant 0 : i32
    %c0_i32_1 = arith.constant 0 : i32
    return %c0_i32, %c0_i32_0 : i32, i32
  }
  func.func @transform_3(%arg0: i32) -> (i32, i32, i32) {
    %c0_i32 = arith.constant 0 : i32
    %c0_i32_0 = arith.constant 0 : i32
    %c0_i32_1 = arith.constant 0 : i32
    return %arg0, %c0_i32, %c0_i32_0 : i32, i32, i32
  }
}

</mosaic_0001>

<llo_original>
// kernel: tpu_custom_call.1
$region0: #{tpu_custom_call.1}
  #allocation0 [shape = 'u32[]', space=smem, size = 0x4, offset = 0x4, fixed_abs, tag = 'smem constant byte address 0x4 - core index']
  #allocation1 [shape = 'u32[144,128]{1,0:T(1,128)}', space=vmem, size = 0x12000, scoped, tag = 'internal scratch']
  %s0 = inlined_call_operand.vmem [shape: bf16[2,153,17,8], index: 0, kind: input, shape index: {}]
  %s1 = inlined_call_operand.vmem [shape: bf16[64,32], index: 1, kind: input, shape index: {}]
  %s2 = inlined_call_operand.vmem [shape: f32[1,32], index: 2, kind: input, shape index: {}]
  %s3 = inlined_call_operand.vmem [shape: bf16[2,2048,32], index: 3, kind: output, shape index: {}]
  %s4 = sld [smem:[#allocation0]]
  $region45: #{tpu_custom_call.1} parent=0
    _
  %s6 = ssub.s32 1, %s4
  %s7 = scalar_select 0, %s6, %s4
  loop: start=0, step=1, limit=4
  $region2: #{tpu_custom_call.1} parent=0 // loop_pre_header
    _
  $region3: #{tpu_custom_call.1} parent=0 // loop_header
    %s9 = sphi 0, %s13
    %p10 = scmp.ge.s32.totalorder %s9, 4
    %s19 = sphi 0, %s21
    %s22 = sphi 0, %s19
    %s23 = sphi 0, %s22
    %s39 = sphi 0, %s23
    %s43 = sphi 0, %s43
    %s45 = sphi 0, %s43
    %s46 = sphi 0, %s45
    %s60 = sphi 0, %s46
    %s64 = sphi 0, %s64
    %s66 = sphi 0, %s64
    %s67 = sphi 0, %s66
    %s81 = sphi 0, %s67
    %s87 = sphi 0, %s89
    %s90 = sphi 0, %s87
    %s91 = sphi 0, %s90
    %s107 = sphi 0, %s91
  $region4: #{tpu_custom_call.1} parent=0 // loop_header_branch
    %12 = sbr.rel (%p10) target = $region8
  $region5: #{tpu_custom_call.1} parent=0 // loop_body
    %s14 = ssub.s32 %s9, 1
    %s15 = ssub.s32 %s9, 2
    %s16 = sadd.s32 %s9, 1
    %s17 = ssub.s32 %s9, %s16
    %p18 = scmp.eq.s32.totalorder %s17, 0
    %s20 = sadd.s32 %s19, 1
    %s21 = scalar_select %p18, %s19, %s20
    %p24 = pneg %p18
    %p25 = scmp.eq.s32.totalorder %s9, 1
    %p26 = por %p24, %p25
    %p27 = scmp.ne.s32.totalorder %s19, %s22
    %p28 = scmp.eq.s32.totalorder %s9, 0
    %p29 = por %p27, %p28
    %p30 = scmp.ne.s32.totalorder %s19, %s22
    %p31 = scmp.eq.s32.totalorder %s14, 1
    %p32 = por %p30, %p31
    %p33 = scmp.ne.s32.totalorder %s22, %s23
    %p34 = scmp.eq.s32.totalorder %s14, 0
    %p35 = por %p33, %p34
    %p36 = scmp.ne.s32.totalorder %s22, %s23
    %p37 = scmp.eq.s32.totalorder %s15, 1
    %p38 = por %p36, %p37
    %p40 = scmp.ne.s32.totalorder %s23, %s39
    %p41 = scmp.eq.s32.totalorder %s15, 0
    %p42 = por %p40, %p41
    %s44 = sadd.s32 %s43, 1
    %p47 = scmp.eq.s32.totalorder %s9, 1
    %p48 = scmp.ne.s32.totalorder %s43, %s45
    %p49 = scmp.eq.s32.totalorder %s9, 0
    %p50 = por %p48, %p49
    %p51 = scmp.ne.s32.totalorder %s43, %s45
    %p52 = scmp.eq.s32.totalorder %s14, 1
    %p53 = por %p51, %p52
    %p54 = scmp.ne.s32.totalorder %s45, %s46
    %p55 = scmp.eq.s32.totalorder %s14, 0
    %p56 = por %p54, %p55
    %p57 = scmp.ne.s32.totalorder %s45, %s46
    %p58 = scmp.eq.s32.totalorder %s15, 1
    %p59 = por %p57, %p58
    %p61 = scmp.ne.s32.totalorder %s46, %s60
    %p62 = scmp.eq.s32.totalorder %s15, 0
    %p63 = por %p61, %p62
    %s65 = sadd.s32 %s64, 1
    %p68 = scmp.eq.s32.totalorder %s9, 1
    %p69 = scmp.ne.s32.totalorder %s64, %s66
    %p70 = scmp.eq.s32.totalorder %s9, 0
    %p71 = por %p69, %p70
    %p72 = scmp.ne.s32.totalorder %s64, %s66
    %p73 = scmp.eq.s32.totalorder %s14, 1
    %p74 = por %p72, %p73
    %p75 = scmp.ne.s32.totalorder %s66, %s67
    %p76 = scmp.eq.s32.totalorder %s14, 0
    %p77 = por %p75, %p76
    %p78 = scmp.ne.s32.totalorder %s66, %s67
    %p79 = scmp.eq.s32.totalorder %s15, 1
    %p80 = por %p78, %p79
    %p82 = scmp.ne.s32.totalorder %s67, %s81
    %p83 = scmp.eq.s32.totalorder %s15, 0
    %p84 = por %p82, %p83
    %s85 = ssub.s32 %s9, %s16
    %p86 = scmp.eq.s32.totalorder %s85, 0
    %s88 = sadd.s32 %s87, 1
    %s89 = scalar_select %p86, %s87, %s88
    %p92 = pneg %p86
    %p93 = scmp.eq.s32.totalorder %s9, 1
    %p94 = por %p92, %p93
    %p95 = scmp.ne.s32.totalorder %s87, %s90
    %p96 = scmp.eq.s32.totalorder %s9, 0
    %p97 = por %p95, %p96
    %p98 = scmp.ne.s32.totalorder %s87, %s90
    %p99 = scmp.eq.s32.totalorder %s14, 1
    %p100 = por %p98, %p99
    %p101 = scmp.ne.s32.totalorder %s90, %s91
    %p102 = scmp.eq.s32.totalorder %s14, 0
    %p103 = por %p101, %p102
    %p104 = scmp.ne.s32.totalorder %s90, %s91
    %p105 = scmp.eq.s32.totalorder %s15, 1
    %p106 = por %p104, %p105
    %p108 = scmp.ne.s32.totalorder %s91, %s107
    %p109 = scmp.eq.s32.totalorder %s15, 0
    %p110 = por %p108, %p109
    %p111 = scmp.le.s32.totalorder 1, %s9
    %p112 = scmp.lt.s32.totalorder %s9, 3
    %p113 = pnand %p111, %p112
    %p114 = pneg %p113
    // Predicated region
    $region9: #{tpu_custom_call.1} parent=5 // pred_check
      _
    $region10: #{tpu_custom_call.1} parent=5 // pred_check_branch
      %116 = sbr.rel (%p113) target = $region12
    $region11: #{tpu_custom_call.1} parent=5 // pred_region
      %s117 = ssub.s32 %s9, 1
      // Predicated region
      $region13: #{tpu_custom_call.1} parent=11 // pred_check
        %p118 = pneg %p56
      $region14: #{tpu_custom_call.1} parent=11 // pred_check_branch
        %120 = sbr.rel (%p118) target = $region16
      $region15: #{tpu_custom_call.1} parent=11 // pred_region
        _
      $region16: #{tpu_custom_call.1} parent=11 // pred_fallthru
        _
      // Predicated region
      $region17: #{tpu_custom_call.1} parent=11 // pred_check
        %p121 = pneg %p77
      $region18: #{tpu_custom_call.1} parent=11 // pred_check_branch
        %123 = sbr.rel (%p121) target = $region20
      $region19: #{tpu_custom_call.1} parent=11 // pred_region
        _
      $region20: #{tpu_custom_call.1} parent=11 // pred_fallthru
        _
    $region12: #{tpu_custom_call.1} parent=5 // pred_fallthru
      _
    %p124 = scmp.lt.s32.totalorder %s9, 2
    // Predicated region
    $region21: #{tpu_custom_call.1} parent=5 // pred_check
      %p125 = pneg %p124
    $region22: #{tpu_custom_call.1} parent=5 // pred_check_branch
      %127 = sbr.rel (%p125) target = $region24
    $region23: #{tpu_custom_call.1} parent=5 // pred_region
      // Predicated region
      $region25: #{tpu_custom_call.1} parent=23 // pred_check
        %p128 = pneg %p29
      $region26: #{tpu_custom_call.1} parent=23 // pred_check_branch
        %130 = sbr.rel (%p128) target = $region28
      $region27: #{tpu_custom_call.1} parent=23 // pred_region
        %p131 = scmp.lt.s32.totalorder %s9, 1
        %s132 = scalar_select %p131, %s9, 1
        %s133 = smul.addr %s132, 459
        %s134 = smul.addr %s133, 4
        %s135 = scalar_lea.vmem %s0, %s134
      $region28: #{tpu_custom_call.1} parent=23 // pred_fallthru
        _
    $region24: #{tpu_custom_call.1} parent=5 // pred_fallthru
      _
    %p136 = scmp.le.s32.totalorder 1, %s9
    %p137 = scmp.lt.s32.totalorder %s9, 3
    %p138 = pnand %p136, %p137
    %p139 = pneg %p138
    // Predicated region
    $region29: #{tpu_custom_call.1} parent=5 // pred_check
      _
    $region30: #{tpu_custom_call.1} parent=5 // pred_check_branch
      %141 = sbr.rel (%p138) target = $region32
    $region31: #{tpu_custom_call.1} parent=5 // pred_region
      %s142 = ssub.s32 %s9, 1
      %p143 = scmp.lt.s32.totalorder %s14, 1
      %s144 = scalar_select %p143, %s14, 1
      %s145 = smul.addr %s144, 459
      %s146 = smul.addr %s145, 4
      %s147 = scalar_lea.vmem %s0, %s146
      %p148 = pneg %p35
      %p149 = pneg %p32
      %p150 = pneg %p56
      %p151 = pneg %p53
      %p152 = pneg %p77
      %p153 = pneg %p74
      %p154 = pneg %p103
      %p155 = pneg %p100
      %p156 = scmp.lt.s32.totalorder %s14, 1
      %s157 = scalar_select %p156, %s14, 1
      %s158 = smul.addr %s157, 256
      %s159 = smul.addr %s158, 4
      %s160 = scalar_lea.vmem %s3, %s159
      %p161 = scmp.lt.s32.totalorder %s14, 1
      %s162 = scalar_select %p161, %s14, 1
      %s163 = smul.addr %s162, 459
      %s164 = smul.addr %s163, 4
      %s165 = scalar_lea.vmem %s0, %s164
      %p166 = scmp.lt.s32.totalorder %s14, 1
      %s167 = scalar_select %p166, %s14, 1
      %s168 = smul.addr %s167, 256
      %s169 = smul.addr %s168, 4
      %s170 = scalar_lea.vmem %s3, %s169
      %v172 = vld [vmem:[%s165] sm:$0xf]
      %v173 = vld [vmem:[%s165 + $0x4] sm:$0xf]
      %v174 = vld [vmem:[%s165 + $0x8] sm:$0x1]
      %v175 = vld [vmem:[%s165 + $0xc] sm:$0xf]
      %v176 = vld [vmem:[%s165 + $0x10] sm:$0xf]
      %v177 = vld [vmem:[%s165 + $0x14] sm:$0x1]
      %v178 = vld [vmem:[%s165 + $0x18] sm:$0xf]
      %v179 = vld [vmem:[%s165 + $0x1c] sm:$0xf]
      %v180 = vld [vmem:[%s165 + $0x20] sm:$0x1]
      %v181 = vld [vmem:[%s165 + $0x24] sm:$0xf]
      %v182 = vld [vmem:[%s165 + $0x28] sm:$0xf]
      %v183 = vld [vmem:[%s165 + $0x2c] sm:$0x1]
      %v184 = vld [vmem:[%s165 + $0x30] sm:$0xf]
      %v185 = vld [vmem:[%s165 + $0x34] sm:$0xf]
      %v186 = vld [vmem:[%s165 + $0x38] sm:$0x1]
      %v187 = vld [vmem:[%s165 + $0x3c] sm:$0xf]
      %v188 = vld [vmem:[%s165 + $0x40] sm:$0xf]
      %v189 = vld [vmem:[%s165 + $0x44] sm:$0x1]
      %v190 = vld [vmem:[%s165 + $0x48] sm:$0xf]
      %v191 = vld [vmem:[%s165 + $0x4c] sm:$0xf]
      %v192 = vld [vmem:[%s165 + $0x50] sm:$0x1]
      %v193 = vld [vmem:[%s165 + $0x54] sm:$0xf]
      %v194 = vld [vmem:[%s165 + $0x58] sm:$0xf]
      %v195 = vld [vmem:[%s165 + $0x5c] sm:$0x1]
      %v196 = vld [vmem:[%s165 + $0x60] sm:$0xf]
      %v197 = vld [vmem:[%s165 + $0x64] sm:$0xf]
      %v198 = vld [vmem:[%s165 + $0x68] sm:$0x1]
      %v199 = vld [vmem:[%s165 + $0x6c] sm:$0xf]
      %v200 = vld [vmem:[%s165 + $0x70] sm:$0xf]
      %v201 = vld [vmem:[%s165 + $0x74] sm:$0x1]
      %v202 = vld [vmem:[%s165 + $0x78] sm:$0xf]
      %v203 = vld [vmem:[%s165 + $0x7c] sm:$0xf]
      %v204 = vld [vmem:[%s165 + $0x80] sm:$0x1]
      %v205 = vld [vmem:[%s165 + $0x84] sm:$0xf]
      %v206 = vld [vmem:[%s165 + $0x88] sm:$0xf]
      %v207 = vld [vmem:[%s165 + $0x8c] sm:$0x1]
      %v208 = vld [vmem:[%s165 + $0x90] sm:$0xf]
      %v209 = vld [vmem:[%s165 + $0x94] sm:$0xf]
      %v210 = vld [vmem:[%s165 + $0x98] sm:$0x1]
      %v211 = vld [vmem:[%s165 + $0x9c] sm:$0xf]
      %v212 = vld [vmem:[%s165 + $0xa0] sm:$0xf]
      %v213 = vld [vmem:[%s165 + $0xa4] sm:$0x1]
      %v214 = vld [vmem:[%s165 + $0xa8] sm:$0xf]
      %v215 = vld [vmem:[%s165 + $0xac] sm:$0xf]
      %v216 = vld [vmem:[%s165 + $0xb0] sm:$0x1]
      %v217 = vld [vmem:[%s165 + $0xb4] sm:$0xf]
      %v218 = vld [vmem:[%s165 + $0xb8] sm:$0xf]
      %v219 = vld [vmem:[%s165 + $0xbc] sm:$0x1]
      %v220 = vld [vmem:[%s165 + $0xc0] sm:$0xf]
      %v221 = vld [vmem:[%s165 + $0xc4] sm:$0xf]
      %v222 = vld [vmem:[%s165 + $0xc8] sm:$0x1]
      %v223 = vld [vmem:[%s165 + $0xcc] sm:$0xf]
      %v224 = vld [vmem:[%s165 + $0xd0] sm:$0xf]
      %v225 = vld [vmem:[%s165 + $0xd4] sm:$0x1]
      %v226 = vld [vmem:[%s165 + $0xd8] sm:$0xf]
      %v227 = vld [vmem:[%s165 + $0xdc] sm:$0xf]
      %v228 = vld [vmem:[%s165 + $0xe0] sm:$0x1]
      %v229 = vld [vmem:[%s165 + $0xe4] sm:$0xf]
      %v230 = vld [vmem:[%s165 + $0xe8] sm:$0xf]
      %v231 = vld [vmem:[%s165 + $0xec] sm:$0x1]
      %v232 = vld [vmem:[%s165 + $0xf0] sm:$0xf]
      %v233 = vld [vmem:[%s165 + $0xf4] sm:$0xf]
      %v234 = vld [vmem:[%s165 + $0xf8] sm:$0x1]
      %v235 = vld [vmem:[%s165 + $0xfc] sm:$0xf]
      %v236 = vld [vmem:[%s165 + $0x100] sm:$0xf]
      %v237 = vld [vmem:[%s165 + $0x104] sm:$0x1]
      %v238 = vld [vmem:[%s165 + $0x108] sm:$0xf]
      %v239 = vld [vmem:[%s165 + $0x10c] sm:$0xf]
      %v240 = vld [vmem:[%s165 + $0x110] sm:$0x1]
      %v241 = vld [vmem:[%s165 + $0x114] sm:$0xf]
      %v242 = vld [vmem:[%s165 + $0x118] sm:$0xf]
      %v243 = vld [vmem:[%s165 + $0x11c] sm:$0x1]
      %v244 = vld [vmem:[%s165 + $0x120] sm:$0xf]
      %v245 = vld [vmem:[%s165 + $0x124] sm:$0xf]
      %v246 = vld [vmem:[%s165 + $0x128] sm:$0x1]
      %v247 = vld [vmem:[%s165 + $0x12c] sm:$0xf]
      %v248 = vld [vmem:[%s165 + $0x130] sm:$0xf]
      %v249 = vld [vmem:[%s165 + $0x134] sm:$0x1]
      %v250 = vld [vmem:[%s165 + $0x138] sm:$0xf]
      %v251 = vld [vmem:[%s165 + $0x13c] sm:$0xf]
      %v252 = vld [vmem:[%s165 + $0x140] sm:$0x1]
      %v253 = vld [vmem:[%s165 + $0x144] sm:$0xf]
      %v254 = vld [vmem:[%s165 + $0x148] sm:$0xf]
      %v255 = vld [vmem:[%s165 + $0x14c] sm:$0x1]
      %v256 = vld [vmem:[%s165 + $0x150] sm:$0xf]
      %v257 = vld [vmem:[%s165 + $0x154] sm:$0xf]
      %v258 = vld [vmem:[%s165 + $0x158] sm:$0x1]
      %v259 = vld [vmem:[%s165 + $0x15c] sm:$0xf]
      %v260 = vld [vmem:[%s165 + $0x160] sm:$0xf]
      %v261 = vld [vmem:[%s165 + $0x164] sm:$0x1]
      %v262 = vld [vmem:[%s165 + $0x168] sm:$0xf]
      %v263 = vld [vmem:[%s165 + $0x16c] sm:$0xf]
      %v264 = vld [vmem:[%s165 + $0x170] sm:$0x1]
      %v265 = vld [vmem:[%s165 + $0x174] sm:$0xf]
      %v266 = vld [vmem:[%s165 + $0x178] sm:$0xf]
      %v267 = vld [vmem:[%s165 + $0x17c] sm:$0x1]
      %v268 = vld [vmem:[%s165 + $0x180] sm:$0xf]
      %v269 = vld [vmem:[%s165 + $0x184] sm:$0xf]
      %v270 = vld [vmem:[%s165 + $0x188] sm:$0x1]
      %v271 = vld [vmem:[%s165 + $0x18c] sm:$0xf]
      %v272 = vld [vmem:[%s165 + $0x190] sm:$0xf]
      %v273 = vld [vmem:[%s165 + $0x194] sm:$0x1]
      %v274 = vld [vmem:[%s165 + $0x198] sm:$0xf]
      %v275 = vld [vmem:[%s165 + $0x19c] sm:$0xf]
      %v276 = vld [vmem:[%s165 + $0x1a0] sm:$0x1]
      %v277 = vld [vmem:[%s165 + $0x1a4] sm:$0xf]
      %v278 = vld [vmem:[%s165 + $0x1a8] sm:$0xf]
      %v279 = vld [vmem:[%s165 + $0x1ac] sm:$0x1]
      %v280 = vld [vmem:[%s165 + $0x1b0] sm:$0xf]
      %v281 = vld [vmem:[%s165 + $0x1b4] sm:$0xf]
      %v282 = vld [vmem:[%s165 + $0x1b8] sm:$0x1]
      %v283 = vld [vmem:[%s165 + $0x1bc] sm:$0xf]
      %v284 = vld [vmem:[%s165 + $0x1c0] sm:$0xf]
      %v285 = vld [vmem:[%s165 + $0x1c4] sm:$0x1]
      %v286 = vld [vmem:[%s165 + $0x1c8] sm:$0xf]
      %v287 = vld [vmem:[%s165 + $0x1cc] sm:$0xf]
      %v288 = vld [vmem:[%s165 + $0x1d0] sm:$0x1]
      %v289 = vld [vmem:[%s165 + $0x1d4] sm:$0xf]
      %v290 = vld [vmem:[%s165 + $0x1d8] sm:$0xf]
      %v291 = vld [vmem:[%s165 + $0x1dc] sm:$0x1]
      %v292 = vld [vmem:[%s165 + $0x1e0] sm:$0xf]
      %v293 = vld [vmem:[%s165 + $0x1e4] sm:$0xf]
      %v294 = vld [vmem:[%s165 + $0x1e8] sm:$0x1]
      %v295 = vld [vmem:[%s165 + $0x1ec] sm:$0xf]
      %v296 = vld [vmem:[%s165 + $0x1f0] sm:$0xf]
      %v297 = vld [vmem:[%s165 + $0x1f4] sm:$0x1]
      %v298 = vld [vmem:[%s165 + $0x1f8] sm:$0xf]
      %v299 = vld [vmem:[%s165 + $0x1fc] sm:$0xf]
      %v300 = vld [vmem:[%s165 + $0x200] sm:$0x1]
      %v301 = vld [vmem:[%s165 + $0x204] sm:$0xf]
      %v302 = vld [vmem:[%s165 + $0x208] sm:$0xf]
      %v303 = vld [vmem:[%s165 + $0x20c] sm:$0x1]
      %v304 = vld [vmem:[%s165 + $0x210] sm:$0xf]
      %v305 = vld [vmem:[%s165 + $0x214] sm:$0xf]
      %v306 = vld [vmem:[%s165 + $0x218] sm:$0x1]
      %v307 = vld [vmem:[%s165 + $0x21c] sm:$0xf]
      %v308 = vld [vmem:[%s165 + $0x220] sm:$0xf]
      %v309 = vld [vmem:[%s165 + $0x224] sm:$0x1]
      %v310 = vld [vmem:[%s165 + $0x228] sm:$0xf]
      %v311 = vld [vmem:[%s165 + $0x22c] sm:$0xf]
      %v312 = vld [vmem:[%s165 + $0x230] sm:$0x1]
      %v313 = vld [vmem:[%s165 + $0x234] sm:$0xf]
      %v314 = vld [vmem:[%s165 + $0x238] sm:$0xf]
      %v315 = vld [vmem:[%s165 + $0x23c] sm:$0x1]
      %v316 = vld [vmem:[%s165 + $0x240] sm:$0xf]
      %v317 = vld [vmem:[%s165 + $0x244] sm:$0xf]
      %v318 = vld [vmem:[%s165 + $0x248] sm:$0x1]
      %v319 = vld [vmem:[%s165 + $0x24c] sm:$0xf]
      %v320 = vld [vmem:[%s165 + $0x250] sm:$0xf]
      %v321 = vld [vmem:[%s165 + $0x254] sm:$0x1]
      %v322 = vld [vmem:[%s165 + $0x258] sm:$0xf]
      %v323 = vld [vmem:[%s165 + $0x25c] sm:$0xf]
      %v324 = vld [vmem:[%s165 + $0x260] sm:$0x1]
      %v325 = vld [vmem:[%s165 + $0x264] sm:$0xf]
      %v326 = vld [vmem:[%s165 + $0x268] sm:$0xf]
      %v327 = vld [vmem:[%s165 + $0x26c] sm:$0x1]
      %v328 = vld [vmem:[%s165 + $0x270] sm:$0xf]
      %v329 = vld [vmem:[%s165 + $0x274] sm:$0xf]
      %v330 = vld [vmem:[%s165 + $0x278] sm:$0x1]
      %v331 = vld [vmem:[%s165 + $0x27c] sm:$0xf]
      %v332 = vld [vmem:[%s165 + $0x280] sm:$0xf]
      %v333 = vld [vmem:[%s165 + $0x284] sm:$0x1]
      %v334 = vld [vmem:[%s165 + $0x288] sm:$0xf]
      %v335 = vld [vmem:[%s165 + $0x28c] sm:$0xf]
      %v336 = vld [vmem:[%s165 + $0x290] sm:$0x1]
      %v337 = vld [vmem:[%s165 + $0x294] sm:$0xf]
      %v338 = vld [vmem:[%s165 + $0x298] sm:$0xf]
      %v339 = vld [vmem:[%s165 + $0x29c] sm:$0x1]
      %v340 = vld [vmem:[%s165 + $0x2a0] sm:$0xf]
      %v341 = vld [vmem:[%s165 + $0x2a4] sm:$0xf]
      %v342 = vld [vmem:[%s165 + $0x2a8] sm:$0x1]
      %v343 = vld [vmem:[%s165 + $0x2ac] sm:$0xf]
      %v344 = vld [vmem:[%s165 + $0x2b0] sm:$0xf]
      %v345 = vld [vmem:[%s165 + $0x2b4] sm:$0x1]
      %v346 = vld [vmem:[%s165 + $0x2b8] sm:$0xf]
      %v347 = vld [vmem:[%s165 + $0x2bc] sm:$0xf]
      %v348 = vld [vmem:[%s165 + $0x2c0] sm:$0x1]
      %v349 = vld [vmem:[%s165 + $0x2c4] sm:$0xf]
      %v350 = vld [vmem:[%s165 + $0x2c8] sm:$0xf]
      %v351 = vld [vmem:[%s165 + $0x2cc] sm:$0x1]
      %v352 = vld [vmem:[%s165 + $0x2d0] sm:$0xf]
      %v353 = vld [vmem:[%s165 + $0x2d4] sm:$0xf]
      %v354 = vld [vmem:[%s165 + $0x2d8] sm:$0x1]
      %v355 = vld [vmem:[%s165 + $0x2dc] sm:$0xf]
      %v356 = vld [vmem:[%s165 + $0x2e0] sm:$0xf]
      %v357 = vld [vmem:[%s165 + $0x2e4] sm:$0x1]
      %v358 = vld [vmem:[%s165 + $0x2e8] sm:$0xf]
      %v359 = vld [vmem:[%s165 + $0x2ec] sm:$0xf]
      %v360 = vld [vmem:[%s165 + $0x2f0] sm:$0x1]
      %v361 = vld [vmem:[%s165 + $0x2f4] sm:$0xf]
      %v362 = vld [vmem:[%s165 + $0x2f8] sm:$0xf]
      %v363 = vld [vmem:[%s165 + $0x2fc] sm:$0x1]
      %v364 = vld [vmem:[%s165 + $0x300] sm:$0xf]
      %v365 = vld [vmem:[%s165 + $0x304] sm:$0xf]
      %v366 = vld [vmem:[%s165 + $0x308] sm:$0x1]
      %v367 = vld [vmem:[%s165 + $0x30c] sm:$0xf]
      %v368 = vld [vmem:[%s165 + $0x310] sm:$0xf]
      %v369 = vld [vmem:[%s165 + $0x314] sm:$0x1]
      %v370 = vld [vmem:[%s165 + $0x318] sm:$0xf]
      %v371 = vld [vmem:[%s165 + $0x31c] sm:$0xf]
      %v372 = vld [vmem:[%s165 + $0x320] sm:$0x1]
      %v373 = vld [vmem:[%s165 + $0x324] sm:$0xf]
      %v374 = vld [vmem:[%s165 + $0x328] sm:$0xf]
      %v375 = vld [vmem:[%s165 + $0x32c] sm:$0x1]
      %v376 = vld [vmem:[%s165 + $0x330] sm:$0xf]
      %v377 = vld [vmem:[%s165 + $0x334] sm:$0xf]
      %v378 = vld [vmem:[%s165 + $0x338] sm:$0x1]
      %v379 = vld [vmem:[%s165 + $0x33c] sm:$0xf]
      %v380 = vld [vmem:[%s165 + $0x340] sm:$0xf]
      %v381 = vld [vmem:[%s165 + $0x344] sm:$0x1]
      %v382 = vld [vmem:[%s165 + $0x348] sm:$0xf]
      %v383 = vld [vmem:[%s165 + $0x34c] sm:$0xf]
      %v384 = vld [vmem:[%s165 + $0x350] sm:$0x1]
      %v385 = vld [vmem:[%s165 + $0x354] sm:$0xf]
      %v386 = vld [vmem:[%s165 + $0x358] sm:$0xf]
      %v387 = vld [vmem:[%s165 + $0x35c] sm:$0x1]
      %v388 = vld [vmem:[%s165 + $0x360] sm:$0xf]
      %v389 = vld [vmem:[%s165 + $0x364] sm:$0xf]
      %v390 = vld [vmem:[%s165 + $0x368] sm:$0x1]
      %v391 = vld [vmem:[%s165 + $0x36c] sm:$0xf]
      %v392 = vld [vmem:[%s165 + $0x370] sm:$0xf]
      %v393 = vld [vmem:[%s165 + $0x374] sm:$0x1]
      %v394 = vld [vmem:[%s165 + $0x378] sm:$0xf]
      %v395 = vld [vmem:[%s165 + $0x37c] sm:$0xf]
      %v396 = vld [vmem:[%s165 + $0x380] sm:$0x1]
      %v397 = vld [vmem:[%s165 + $0x384] sm:$0xf]
      %v398 = vld [vmem:[%s165 + $0x388] sm:$0xf]
      %v399 = vld [vmem:[%s165 + $0x38c] sm:$0x1]
      %v400 = vld [vmem:[%s165 + $0x390] sm:$0xf]
      %v401 = vld [vmem:[%s165 + $0x394] sm:$0xf]
      %v402 = vld [vmem:[%s165 + $0x398] sm:$0x1]
      %v403 = vld [vmem:[%s165 + $0x39c] sm:$0xf]
      %v404 = vld [vmem:[%s165 + $0x3a0] sm:$0xf]
      %v405 = vld [vmem:[%s165 + $0x3a4] sm:$0x1]
      %v406 = vld [vmem:[%s165 + $0x3a8] sm:$0xf]
      %v407 = vld [vmem:[%s165 + $0x3ac] sm:$0xf]
      %v408 = vld [vmem:[%s165 + $0x3b0] sm:$0x1]
      %v409 = vld [vmem:[%s165 + $0x3b4] sm:$0xf]
      %v410 = vld [vmem:[%s165 + $0x3b8] sm:$0xf]
      %v411 = vld [vmem:[%s165 + $0x3bc] sm:$0x1]
      %v412 = vld [vmem:[%s165 + $0x3c0] sm:$0xf]
      %v413 = vld [vmem:[%s165 + $0x3c4] sm:$0xf]
      %v414 = vld [vmem:[%s165 + $0x3c8] sm:$0x1]
      %v415 = vld [vmem:[%s165 + $0x3cc] sm:$0xf]
      %v416 = vld [vmem:[%s165 + $0x3d0] sm:$0xf]
      %v417 = vld [vmem:[%s165 + $0x3d4] sm:$0x1]
      %v418 = vld [vmem:[%s165 + $0x3d8] sm:$0xf]
      %v419 = vld [vmem:[%s165 + $0x3dc] sm:$0xf]
      %v420 = vld [vmem:[%s165 + $0x3e0] sm:$0x1]
      %v421 = vld [vmem:[%s165 + $0x3e4] sm:$0xf]
      %v422 = vld [vmem:[%s165 + $0x3e8] sm:$0xf]
      %v423 = vld [vmem:[%s165 + $0x3ec] sm:$0x1]
      %v424 = vld [vmem:[%s165 + $0x3f0] sm:$0xf]
      %v425 = vld [vmem:[%s165 + $0x3f4] sm:$0xf]
      %v426 = vld [vmem:[%s165 + $0x3f8] sm:$0x1]
      %v427 = vld [vmem:[%s165 + $0x3fc] sm:$0xf]
      %v428 = vld [vmem:[%s165 + $0x400] sm:$0xf]
      %v429 = vld [vmem:[%s165 + $0x404] sm:$0x1]
      %v430 = vld [vmem:[%s165 + $0x408] sm:$0xf]
      %v431 = vld [vmem:[%s165 + $0x40c] sm:$0xf]
      %v432 = vld [vmem:[%s165 + $0x410] sm:$0x1]
      %v433 = vld [vmem:[%s165 + $0x414] sm:$0xf]
      %v434 = vld [vmem:[%s165 + $0x418] sm:$0xf]
      %v435 = vld [vmem:[%s165 + $0x41c] sm:$0x1]
      %v436 = vld [vmem:[%s165 + $0x420] sm:$0xf]
      %v437 = vld [vmem:[%s165 + $0x424] sm:$0xf]
      %v438 = vld [vmem:[%s165 + $0x428] sm:$0x1]
      %v439 = vld [vmem:[%s165 + $0x42c] sm:$0xf]
      %v440 = vld [vmem:[%s165 + $0x430] sm:$0xf]
      %v441 = vld [vmem:[%s165 + $0x434] sm:$0x1]
      %v442 = vld [vmem:[%s165 + $0x438] sm:$0xf]
      %v443 = vld [vmem:[%s165 + $0x43c] sm:$0xf]
      %v444 = vld [vmem:[%s165 + $0x440] sm:$0x1]
      %v445 = vld [vmem:[%s165 + $0x444] sm:$0xf]
      %v446 = vld [vmem:[%s165 + $0x448] sm:$0xf]
      %v447 = vld [vmem:[%s165 + $0x44c] sm:$0x1]
      %v448 = vld [vmem:[%s165 + $0x450] sm:$0xf]
      %v449 = vld [vmem:[%s165 + $0x454] sm:$0xf]
      %v450 = vld [vmem:[%s165 + $0x458] sm:$0x1]
      %v451 = vld [vmem:[%s165 + $0x45c] sm:$0xf]
      %v452 = vld [vmem:[%s165 + $0x460] sm:$0xf]
      %v453 = vld [vmem:[%s165 + $0x464] sm:$0x1]
      %v454 = vld [vmem:[%s165 + $0x468] sm:$0xf]
      %v455 = vld [vmem:[%s165 + $0x46c] sm:$0xf]
      %v456 = vld [vmem:[%s165 + $0x470] sm:$0x1]
      %v457 = vld [vmem:[%s165 + $0x474] sm:$0xf]
      %v458 = vld [vmem:[%s165 + $0x478] sm:$0xf]
      %v459 = vld [vmem:[%s165 + $0x47c] sm:$0x1]
      %v460 = vld [vmem:[%s165 + $0x480] sm:$0xf]
      %v461 = vld [vmem:[%s165 + $0x484] sm:$0xf]
      %v462 = vld [vmem:[%s165 + $0x488] sm:$0x1]
      %v463 = vld [vmem:[%s165 + $0x48c] sm:$0xf]
      %v464 = vld [vmem:[%s165 + $0x490] sm:$0xf]
      %v465 = vld [vmem:[%s165 + $0x494] sm:$0x1]
      %v466 = vld [vmem:[%s165 + $0x498] sm:$0xf]
      %v467 = vld [vmem:[%s165 + $0x49c] sm:$0xf]
      %v468 = vld [vmem:[%s165 + $0x4a0] sm:$0x1]
      %v469 = vld [vmem:[%s165 + $0x4a4] sm:$0xf]
      %v470 = vld [vmem:[%s165 + $0x4a8] sm:$0xf]
      %v471 = vld [vmem:[%s165 + $0x4ac] sm:$0x1]
      %v472 = vld [vmem:[%s165 + $0x4b0] sm:$0xf]
      %v473 = vld [vmem:[%s165 + $0x4b4] sm:$0xf]
      %v474 = vld [vmem:[%s165 + $0x4b8] sm:$0x1]
      %v475 = vld [vmem:[%s165 + $0x4bc] sm:$0xf]
      %v476 = vld [vmem:[%s165 + $0x4c0] sm:$0xf]
      %v477 = vld [vmem:[%s165 + $0x4c4] sm:$0x1]
      %v478 = vld [vmem:[%s165 + $0x4c8] sm:$0xf]
      %v479 = vld [vmem:[%s165 + $0x4cc] sm:$0xf]
      %v480 = vld [vmem:[%s165 + $0x4d0] sm:$0x1]
      %v481 = vld [vmem:[%s165 + $0x4d4] sm:$0xf]
      %v482 = vld [vmem:[%s165 + $0x4d8] sm:$0xf]
      %v483 = vld [vmem:[%s165 + $0x4dc] sm:$0x1]
      %v484 = vld [vmem:[%s165 + $0x4e0] sm:$0xf]
      %v485 = vld [vmem:[%s165 + $0x4e4] sm:$0xf]
      %v486 = vld [vmem:[%s165 + $0x4e8] sm:$0x1]
      %v487 = vld [vmem:[%s165 + $0x4ec] sm:$0xf]
      %v488 = vld [vmem:[%s165 + $0x4f0] sm:$0xf]
      %v489 = vld [vmem:[%s165 + $0x4f4] sm:$0x1]
      %v490 = vld [vmem:[%s165 + $0x4f8] sm:$0xf]
      %v491 = vld [vmem:[%s165 + $0x4fc] sm:$0xf]
      %v492 = vld [vmem:[%s165 + $0x500] sm:$0x1]
      %v493 = vld [vmem:[%s165 + $0x504] sm:$0xf]
      %v494 = vld [vmem:[%s165 + $0x508] sm:$0xf]
      %v495 = vld [vmem:[%s165 + $0x50c] sm:$0x1]
      %v496 = vld [vmem:[%s165 + $0x510] sm:$0xf]
      %v497 = vld [vmem:[%s165 + $0x514] sm:$0xf]
      %v498 = vld [vmem:[%s165 + $0x518] sm:$0x1]
      %v499 = vld [vmem:[%s165 + $0x51c] sm:$0xf]
      %v500 = vld [vmem:[%s165 + $0x520] sm:$0xf]
      %v501 = vld [vmem:[%s165 + $0x524] sm:$0x1]
      %v502 = vld [vmem:[%s165 + $0x528] sm:$0xf]
      %v503 = vld [vmem:[%s165 + $0x52c] sm:$0xf]
      %v504 = vld [vmem:[%s165 + $0x530] sm:$0x1]
      %v505 = vld [vmem:[%s165 + $0x534] sm:$0xf]
      %v506 = vld [vmem:[%s165 + $0x538] sm:$0xf]
      %v507 = vld [vmem:[%s165 + $0x53c] sm:$0x1]
      %v508 = vld [vmem:[%s165 + $0x540] sm:$0xf]
      %v509 = vld [vmem:[%s165 + $0x544] sm:$0xf]
      %v510 = vld [vmem:[%s165 + $0x548] sm:$0x1]
      %v511 = vld [vmem:[%s165 + $0x54c] sm:$0xf]
      %v512 = vld [vmem:[%s165 + $0x550] sm:$0xf]
      %v513 = vld [vmem:[%s165 + $0x554] sm:$0x1]
      %v514 = vld [vmem:[%s165 + $0x558] sm:$0xf]
      %v515 = vld [vmem:[%s165 + $0x55c] sm:$0xf]
      %v516 = vld [vmem:[%s165 + $0x560] sm:$0x1]
      %v517 = vld [vmem:[%s165 + $0x564] sm:$0xf]
      %v518 = vld [vmem:[%s165 + $0x568] sm:$0xf]
      %v519 = vld [vmem:[%s165 + $0x56c] sm:$0x1]
      %v520 = vld [vmem:[%s165 + $0x570] sm:$0xf]
      %v521 = vld [vmem:[%s165 + $0x574] sm:$0xf]
      %v522 = vld [vmem:[%s165 + $0x578] sm:$0x1]
      %v523 = vld [vmem:[%s165 + $0x57c] sm:$0xf]
      %v524 = vld [vmem:[%s165 + $0x580] sm:$0xf]
      %v525 = vld [vmem:[%s165 + $0x584] sm:$0x1]
      %v526 = vld [vmem:[%s165 + $0x588] sm:$0xf]
      %v527 = vld [vmem:[%s165 + $0x58c] sm:$0xf]
      %v528 = vld [vmem:[%s165 + $0x590] sm:$0x1]
      %v529 = vld [vmem:[%s165 + $0x594] sm:$0xf]
      %v530 = vld [vmem:[%s165 + $0x598] sm:$0xf]
      %v531 = vld [vmem:[%s165 + $0x59c] sm:$0x1]
      %v532 = vld [vmem:[%s165 + $0x5a0] sm:$0xf]
      %v533 = vld [vmem:[%s165 + $0x5a4] sm:$0xf]
      %v534 = vld [vmem:[%s165 + $0x5a8] sm:$0x1]
      %v535 = vld [vmem:[%s165 + $0x5ac] sm:$0xf]
      %v536 = vld [vmem:[%s165 + $0x5b0] sm:$0xf]
      %v537 = vld [vmem:[%s165 + $0x5b4] sm:$0x1]
      %v538 = vld [vmem:[%s165 + $0x5b8] sm:$0xf]
      %v539 = vld [vmem:[%s165 + $0x5bc] sm:$0xf]
      %v540 = vld [vmem:[%s165 + $0x5c0] sm:$0x1]
      %v541 = vld [vmem:[%s165 + $0x5c4] sm:$0xf]
      %v542 = vld [vmem:[%s165 + $0x5c8] sm:$0xf]
      %v543 = vld [vmem:[%s165 + $0x5cc] sm:$0x1]
      %v544 = vld [vmem:[%s165 + $0x5d0] sm:$0xf]
      %v545 = vld [vmem:[%s165 + $0x5d4] sm:$0xf]
      %v546 = vld [vmem:[%s165 + $0x5d8] sm:$0x1]
      %v547 = vld [vmem:[%s165 + $0x5dc] sm:$0xf]
      %v548 = vld [vmem:[%s165 + $0x5e0] sm:$0xf]
      %v549 = vld [vmem:[%s165 + $0x5e4] sm:$0x1]
      %v550 = vld [vmem:[%s165 + $0x5e8] sm:$0xf]
      %v551 = vld [vmem:[%s165 + $0x5ec] sm:$0xf]
      %v552 = vld [vmem:[%s165 + $0x5f0] sm:$0x1]
      %v553 = vld [vmem:[%s165 + $0x5f4] sm:$0xf]
      %v554 = vld [vmem:[%s165 + $0x5f8] sm:$0xf]
      %v555 = vld [vmem:[%s165 + $0x5fc] sm:$0x1]
      %v556 = vld [vmem:[%s165 + $0x600] sm:$0xf]
      %v557 = vld [vmem:[%s165 + $0x604] sm:$0xf]
      %v558 = vld [vmem:[%s165 + $0x608] sm:$0x1]
      %v559 = vld [vmem:[%s165 + $0x60c] sm:$0xf]
      %v560 = vld [vmem:[%s165 + $0x610] sm:$0xf]
      %v561 = vld [vmem:[%s165 + $0x614] sm:$0x1]
      %v562 = vld [vmem:[%s165 + $0x618] sm:$0xf]
      %v563 = vld [vmem:[%s165 + $0x61c] sm:$0xf]
      %v564 = vld [vmem:[%s165 + $0x620] sm:$0x1]
      %v565 = vld [vmem:[%s165 + $0x624] sm:$0xf]
      %v566 = vld [vmem:[%s165 + $0x628] sm:$0xf]
      %v567 = vld [vmem:[%s165 + $0x62c] sm:$0x1]
      %v568 = vld [vmem:[%s165 + $0x630] sm:$0xf]
      %v569 = vld [vmem:[%s165 + $0x634] sm:$0xf]
      %v570 = vld [vmem:[%s165 + $0x638] sm:$0x1]
      %v571 = vld [vmem:[%s165 + $0x63c] sm:$0xf]
      %v572 = vld [vmem:[%s165 + $0x640] sm:$0xf]
      %v573 = vld [vmem:[%s165 + $0x644] sm:$0x1]
      %v574 = vld [vmem:[%s165 + $0x648] sm:$0xf]
      %v575 = vld [vmem:[%s165 + $0x64c] sm:$0xf]
      %v576 = vld [vmem:[%s165 + $0x650] sm:$0x1]
      %v577 = vld [vmem:[%s165 + $0x654] sm:$0xf]
      %v578 = vld [vmem:[%s165 + $0x658] sm:$0xf]
      %v579 = vld [vmem:[%s165 + $0x65c] sm:$0x1]
      %v580 = vld [vmem:[%s165 + $0x660] sm:$0xf]
      %v581 = vld [vmem:[%s165 + $0x664] sm:$0xf]
      %v582 = vld [vmem:[%s165 + $0x668] sm:$0x1]
      %v583 = vld [vmem:[%s165 + $0x66c] sm:$0xf]
      %v584 = vld [vmem:[%s165 + $0x670] sm:$0xf]
      %v585 = vld [vmem:[%s165 + $0x674] sm:$0x1]
      %v586 = vld [vmem:[%s165 + $0x678] sm:$0xf]
      %v587 = vld [vmem:[%s165 + $0x67c] sm:$0xf]
      %v588 = vld [vmem:[%s165 + $0x680] sm:$0x1]
      %v589 = vld [vmem:[%s165 + $0x684] sm:$0xf]
      %v590 = vld [vmem:[%s165 + $0x688] sm:$0xf]
      %v591 = vld [vmem:[%s165 + $0x68c] sm:$0x1]
      %v592 = vld [vmem:[%s165 + $0x690] sm:$0xf]
      %v593 = vld [vmem:[%s165 + $0x694] sm:$0xf]
      %v594 = vld [vmem:[%s165 + $0x698] sm:$0x1]
      %v595 = vld [vmem:[%s165 + $0x69c] sm:$0xf]
      %v596 = vld [vmem:[%s165 + $0x6a0] sm:$0xf]
      %v597 = vld [vmem:[%s165 + $0x6a4] sm:$0x1]
      %v598 = vld [vmem:[%s165 + $0x6a8] sm:$0xf]
      %v599 = vld [vmem:[%s165 + $0x6ac] sm:$0xf]
      %v600 = vld [vmem:[%s165 + $0x6b0] sm:$0x1]
      %v601 = vld [vmem:[%s165 + $0x6b4] sm:$0xf]
      %v602 = vld [vmem:[%s165 + $0x6b8] sm:$0xf]
      %v603 = vld [vmem:[%s165 + $0x6bc] sm:$0x1]
      %v604 = vld [vmem:[%s165 + $0x6c0] sm:$0xf]
      %v605 = vld [vmem:[%s165 + $0x6c4] sm:$0xf]
      %v606 = vld [vmem:[%s165 + $0x6c8] sm:$0x1]
      %v607 = vld [vmem:[%s165 + $0x6cc] sm:$0xf]
      %v608 = vld [vmem:[%s165 + $0x6d0] sm:$0xf]
      %v609 = vld [vmem:[%s165 + $0x6d4] sm:$0x1]
      %v610 = vld [vmem:[%s165 + $0x6d8] sm:$0xf]
      %v611 = vld [vmem:[%s165 + $0x6dc] sm:$0xf]
      %v612 = vld [vmem:[%s165 + $0x6e0] sm:$0x1]
      %v613 = vld [vmem:[%s165 + $0x6e4] sm:$0xf]
      %v614 = vld [vmem:[%s165 + $0x6e8] sm:$0xf]
      %v615 = vld [vmem:[%s165 + $0x6ec] sm:$0x1]
      %v616 = vld [vmem:[%s165 + $0x6f0] sm:$0xf]
      %v617 = vld [vmem:[%s165 + $0x6f4] sm:$0xf]
      %v618 = vld [vmem:[%s165 + $0x6f8] sm:$0x1]
      %v619 = vld [vmem:[%s165 + $0x6fc] sm:$0xf]
      %v620 = vld [vmem:[%s165 + $0x700] sm:$0xf]
      %v621 = vld [vmem:[%s165 + $0x704] sm:$0x1]
      %v622 = vld [vmem:[%s165 + $0x708] sm:$0xf]
      %v623 = vld [vmem:[%s165 + $0x70c] sm:$0xf]
      %v624 = vld [vmem:[%s165 + $0x710] sm:$0x1]
      %v625 = vld [vmem:[%s165 + $0x714] sm:$0xf]
      %v626 = vld [vmem:[%s165 + $0x718] sm:$0xf]
      %v627 = vld [vmem:[%s165 + $0x71c] sm:$0x1]
      %v628 = vld [vmem:[%s165 + $0x720] sm:$0xf]
      %v629 = vld [vmem:[%s165 + $0x724] sm:$0xf]
      %v630 = vld [vmem:[%s165 + $0x728] sm:$0x1]
      %vm631 = vsmask.f32 3328
      %vm632 = vsmask.f32 7440
      %vm633 = vmor %vm631, %vm632
      %v635 = vshrl.u32 %v172, 16
      %v637 = vrot.slane %v635, 4
      %v638 = vshll.u32 %v172, 16
      %v640 = vrot.slane %v638, 5
      %v641 = vor.u32 %v637, %v640
      %v642 = vrot.slane %v641, 4
      %v644 = vshll.u32 %v173, 16
      %v646 = vrot.slane %v644, 5
      %v647 = vsel %vm633, %v642, %v646
      %v648 = vshrl.u32 %v173, 16
      %v650 = vrot.slane %v648, 4
      %v651 = vor.u32 %v650, %v646
      %v652 = vrot.slane %v651, 4
      %v654 = vshll.u32 %v174, 16
      %v656 = vrot.slane %v654, 5
      %v657 = vsel %vm633, %v652, %v656
      %v659 = vshrl.u32 %v175, 16
      %v661 = vrot.slane %v659, 4
      %v662 = vshll.u32 %v175, 16
      %v664 = vrot.slane %v662, 5
      %v665 = vor.u32 %v661, %v664
      %v666 = vrot.slane %v665, 4
      %v668 = vshll.u32 %v176, 16
      %v670 = vrot.slane %v668, 5
      %v671 = vsel %vm633, %v666, %v670
      %v672 = vshrl.u32 %v176, 16
      %v674 = vrot.slane %v672, 4
      %v675 = vor.u32 %v674, %v670
      %v676 = vrot.slane %v675, 4
      %v678 = vshll.u32 %v177, 16
      %v680 = vrot.slane %v678, 5
      %v681 = vsel %vm633, %v676, %v680
      %v683 = vshrl.u32 %v178, 16
      %v685 = vrot.slane %v683, 4
      %v686 = vshll.u32 %v178, 16
      %v688 = vrot.slane %v686, 5
      %v689 = vor.u32 %v685, %v688
      %v690 = vrot.slane %v689, 4
      %v692 = vshll.u32 %v179, 16
      %v694 = vrot.slane %v692, 5
      %v695 = vsel %vm633, %v690, %v694
      %v696 = vshrl.u32 %v179, 16
      %v698 = vrot.slane %v696, 4
      %v699 = vor.u32 %v698, %v694
      %v700 = vrot.slane %v699, 4
      %v702 = vshll.u32 %v180, 16
      %v704 = vrot.slane %v702, 5
      %v705 = vsel %vm633, %v700, %v704
      %v707 = vshrl.u32 %v181, 16
      %v709 = vrot.slane %v707, 4
      %v710 = vshll.u32 %v181, 16
      %v712 = vrot.slane %v710, 5
      %v713 = vor.u32 %v709, %v712
      %v714 = vrot.slane %v713, 4
      %v716 = vshll.u32 %v182, 16
      %v718 = vrot.slane %v716, 5
      %v719 = vsel %vm633, %v714, %v718
      %v720 = vshrl.u32 %v182, 16
      %v722 = vrot.slane %v720, 4
      %v723 = vor.u32 %v722, %v718
      %v724 = vrot.slane %v723, 4
      %v726 = vshll.u32 %v183, 16
      %v728 = vrot.slane %v726, 5
      %v729 = vsel %vm633, %v724, %v728
      %v731 = vshrl.u32 %v184, 16
      %v733 = vrot.slane %v731, 4
      %v734 = vshll.u32 %v184, 16
      %v736 = vrot.slane %v734, 5
      %v737 = vor.u32 %v733, %v736
      %v738 = vrot.slane %v737, 4
      %v740 = vshll.u32 %v185, 16
      %v742 = vrot.slane %v740, 5
      %v743 = vsel %vm633, %v738, %v742
      %v744 = vshrl.u32 %v185, 16
      %v746 = vrot.slane %v744, 4
      %v747 = vor.u32 %v746, %v742
      %v748 = vrot.slane %v747, 4
      %v750 = vshll.u32 %v186, 16
      %v752 = vrot.slane %v750, 5
      %v753 = vsel %vm633, %v748, %v752
      %v755 = vshrl.u32 %v187, 16
      %v757 = vrot.slane %v755, 4
      %v758 = vshll.u32 %v187, 16
      %v760 = vrot.slane %v758, 5
      %v761 = vor.u32 %v757, %v760
      %v762 = vrot.slane %v761, 4
      %v764 = vshll.u32 %v188, 16
      %v766 = vrot.slane %v764, 5
      %v767 = vsel %vm633, %v762, %v766
      %v768 = vshrl.u32 %v188, 16
      %v770 = vrot.slane %v768, 4
      %v771 = vor.u32 %v770, %v766
      %v772 = vrot.slane %v771, 4
      %v774 = vshll.u32 %v189, 16
      %v776 = vrot.slane %v774, 5
      %v777 = vsel %vm633, %v772, %v776
      %v779 = vshrl.u32 %v190, 16
      %v781 = vrot.slane %v779, 4
      %v782 = vshll.u32 %v190, 16
      %v784 = vrot.slane %v782, 5
      %v785 = vor.u32 %v781, %v784
      %v786 = vrot.slane %v785, 4
      %v788 = vshll.u32 %v191, 16
      %v790 = vrot.slane %v788, 5
      %v791 = vsel %vm633, %v786, %v790
      %v792 = vshrl.u32 %v191, 16
      %v794 = vrot.slane %v792, 4
      %v795 = vor.u32 %v794, %v790
      %v796 = vrot.slane %v795, 4
      %v798 = vshll.u32 %v192, 16
      %v800 = vrot.slane %v798, 5
      %v801 = vsel %vm633, %v796, %v800
      %v803 = vshrl.u32 %v193, 16
      %v805 = vrot.slane %v803, 4
      %v806 = vshll.u32 %v193, 16
      %v808 = vrot.slane %v806, 5
      %v809 = vor.u32 %v805, %v808
      %v810 = vrot.slane %v809, 4
      %v812 = vshll.u32 %v194, 16
      %v814 = vrot.slane %v812, 5
      %v815 = vsel %vm633, %v810, %v814
      %v816 = vshrl.u32 %v194, 16
      %v818 = vrot.slane %v816, 4
      %v819 = vor.u32 %v818, %v814
      %v820 = vrot.slane %v819, 4
      %v822 = vshll.u32 %v195, 16
      %v824 = vrot.slane %v822, 5
      %v825 = vsel %vm633, %v820, %v824
      %v827 = vshrl.u32 %v196, 16
      %v829 = vrot.slane %v827, 4
      %v830 = vshll.u32 %v196, 16
      %v832 = vrot.slane %v830, 5
      %v833 = vor.u32 %v829, %v832
      %v834 = vrot.slane %v833, 4
      %v836 = vshll.u32 %v197, 16
      %v838 = vrot.slane %v836, 5
      %v839 = vsel %vm633, %v834, %v838
      %v840 = vshrl.u32 %v197, 16
      %v842 = vrot.slane %v840, 4
      %v843 = vor.u32 %v842, %v838
      %v844 = vrot.slane %v843, 4
      %v846 = vshll.u32 %v198, 16
      %v848 = vrot.slane %v846, 5
      %v849 = vsel %vm633, %v844, %v848
      %v851 = vshrl.u32 %v199, 16
      %v853 = vrot.slane %v851, 4
      %v854 = vshll.u32 %v199, 16
      %v856 = vrot.slane %v854, 5
      %v857 = vor.u32 %v853, %v856
      %v858 = vrot.slane %v857, 4
      %v860 = vshll.u32 %v200, 16
      %v862 = vrot.slane %v860, 5
      %v863 = vsel %vm633, %v858, %v862
      %v864 = vshrl.u32 %v200, 16
      %v866 = vrot.slane %v864, 4
      %v867 = vor.u32 %v866, %v862
      %v868 = vrot.slane %v867, 4
      %v870 = vshll.u32 %v201, 16
      %v872 = vrot.slane %v870, 5
      %v873 = vsel %vm633, %v868, %v872
      %v875 = vshrl.u32 %v202, 16
      %v877 = vrot.slane %v875, 4
      %v878 = vshll.u32 %v202, 16
      %v880 = vrot.slane %v878, 5
      %v881 = vor.u32 %v877, %v880
      %v882 = vrot.slane %v881, 4
      %v884 = vshll.u32 %v203, 16
      %v886 = vrot.slane %v884, 5
      %v887 = vsel %vm633, %v882, %v886
      %v888 = vshrl.u32 %v203, 16
      %v890 = vrot.slane %v888, 4
      %v891 = vor.u32 %v890, %v886
      %v892 = vrot.slane %v891, 4
      %v894 = vshll.u32 %v204, 16
      %v896 = vrot.slane %v894, 5
      %v897 = vsel %vm633, %v892, %v896
      %v899 = vshrl.u32 %v205, 16
      %v901 = vrot.slane %v899, 4
      %v902 = vshll.u32 %v205, 16
      %v904 = vrot.slane %v902, 5
      %v905 = vor.u32 %v901, %v904
      %v906 = vrot.slane %v905, 4
      %v908 = vshll.u32 %v206, 16
      %v910 = vrot.slane %v908, 5
      %v911 = vsel %vm633, %v906, %v910
      %v912 = vshrl.u32 %v206, 16
      %v914 = vrot.slane %v912, 4
      %v915 = vor.u32 %v914, %v910
      %v916 = vrot.slane %v915, 4
      %v918 = vshll.u32 %v207, 16
      %v920 = vrot.slane %v918, 5
      %v921 = vsel %vm633, %v916, %v920
      %v923 = vshrl.u32 %v208, 16
      %v925 = vrot.slane %v923, 4
      %v926 = vshll.u32 %v208, 16
      %v928 = vrot.slane %v926, 5
      %v929 = vor.u32 %v925, %v928
      %v930 = vrot.slane %v929, 4
      %v932 = vshll.u32 %v209, 16
      %v934 = vrot.slane %v932, 5
      %v935 = vsel %vm633, %v930, %v934
      %v936 = vshrl.u32 %v209, 16
      %v938 = vrot.slane %v936, 4
      %v939 = vor.u32 %v938, %v934
      %v940 = vrot.slane %v939, 4
      %v942 = vshll.u32 %v210, 16
      %v944 = vrot.slane %v942, 5
      %v945 = vsel %vm633, %v940, %v944
      %v947 = vshrl.u32 %v211, 16
      %v949 = vrot.slane %v947, 4
      %v950 = vshll.u32 %v211, 16
      %v952 = vrot.slane %v950, 5
      %v953 = vor.u32 %v949, %v952
      %v954 = vrot.slane %v953, 4
      %v956 = vshll.u32 %v212, 16
      %v958 = vrot.slane %v956, 5
      %v959 = vsel %vm633, %v954, %v958
      %v960 = vshrl.u32 %v212, 16
      %v962 = vrot.slane %v960, 4
      %v963 = vor.u32 %v962, %v958
      %v964 = vrot.slane %v963, 4
      %v966 = vshll.u32 %v213, 16
      %v968 = vrot.slane %v966, 5
      %v969 = vsel %vm633, %v964, %v968
      %v971 = vshrl.u32 %v214, 16
      %v973 = vrot.slane %v971, 4
      %v974 = vshll.u32 %v214, 16
      %v976 = vrot.slane %v974, 5
      %v977 = vor.u32 %v973, %v976
      %v978 = vrot.slane %v977, 4
      %v980 = vshll.u32 %v215, 16
      %v982 = vrot.slane %v980, 5
      %v983 = vsel %vm633, %v978, %v982
      %v984 = vshrl.u32 %v215, 16
      %v986 = vrot.slane %v984, 4
      %v987 = vor.u32 %v986, %v982
      %v988 = vrot.slane %v987, 4
      %v990 = vshll.u32 %v216, 16
      %v992 = vrot.slane %v990, 5
      %v993 = vsel %vm633, %v988, %v992
      %v995 = vshrl.u32 %v217, 16
      %v997 = vrot.slane %v995, 4
      %v998 = vshll.u32 %v217, 16
      %v1000 = vrot.slane %v998, 5
      %v1001 = vor.u32 %v997, %v1000
      %v1002 = vrot.slane %v1001, 4
      %v1004 = vshll.u32 %v218, 16
      %v1006 = vrot.slane %v1004, 5
      %v1007 = vsel %vm633, %v1002, %v1006
      %v1008 = vshrl.u32 %v218, 16
      %v1010 = vrot.slane %v1008, 4
      %v1011 = vor.u32 %v1010, %v1006
      %v1012 = vrot.slane %v1011, 4
      %v1014 = vshll.u32 %v219, 16
      %v1016 = vrot.slane %v1014, 5
      %v1017 = vsel %vm633, %v1012, %v1016
      %v1019 = vshrl.u32 %v223, 16
      %v1021 = vrot.slane %v1019, 4
      %v1022 = vshll.u32 %v223, 16
      %v1024 = vrot.slane %v1022, 5
      %v1025 = vor.u32 %v1021, %v1024
      %v1026 = vrot.slane %v1025, 4
      %v1028 = vshll.u32 %v224, 16
      %v1030 = vrot.slane %v1028, 5
      %v1031 = vsel %vm633, %v1026, %v1030
      %v1032 = vshrl.u32 %v224, 16
      %v1034 = vrot.slane %v1032, 4
      %v1035 = vor.u32 %v1034, %v1030
      %v1036 = vrot.slane %v1035, 4
      %v1038 = vshll.u32 %v225, 16
      %v1040 = vrot.slane %v1038, 5
      %v1041 = vsel %vm633, %v1036, %v1040
      %v1043 = vshrl.u32 %v226, 16
      %v1045 = vrot.slane %v1043, 4
      %v1046 = vshll.u32 %v226, 16
      %v1048 = vrot.slane %v1046, 5
      %v1049 = vor.u32 %v1045, %v1048
      %v1050 = vrot.slane %v1049, 4
      %v1052 = vshll.u32 %v227, 16
      %v1054 = vrot.slane %v1052, 5
      %v1055 = vsel %vm633, %v1050, %v1054
      %v1056 = vshrl.u32 %v227, 16
      %v1058 = vrot.slane %v1056, 4
      %v1059 = vor.u32 %v1058, %v1054
      %v1060 = vrot.slane %v1059, 4
      %v1062 = vshll.u32 %v228, 16
      %v1064 = vrot.slane %v1062, 5
      %v1065 = vsel %vm633, %v1060, %v1064
      %v1067 = vshrl.u32 %v229, 16
      %v1069 = vrot.slane %v1067, 4
      %v1070 = vshll.u32 %v229, 16
      %v1072 = vrot.slane %v1070, 5
      %v1073 = vor.u32 %v1069, %v1072
      %v1074 = vrot.slane %v1073, 4
      %v1076 = vshll.u32 %v230, 16
      %v1078 = vrot.slane %v1076, 5
      %v1079 = vsel %vm633, %v1074, %v1078
      %v1080 = vshrl.u32 %v230, 16
      %v1082 = vrot.slane %v1080, 4
      %v1083 = vor.u32 %v1082, %v1078
      %v1084 = vrot.slane %v1083, 4
      %v1086 = vshll.u32 %v231, 16
      %v1088 = vrot.slane %v1086, 5
      %v1089 = vsel %vm633, %v1084, %v1088
      %v1091 = vshrl.u32 %v232, 16
      %v1093 = vrot.slane %v1091, 4
      %v1094 = vshll.u32 %v232, 16
      %v1096 = vrot.slane %v1094, 5
      %v1097 = vor.u32 %v1093, %v1096
      %v1098 = vrot.slane %v1097, 4
      %v1100 = vshll.u32 %v233, 16
      %v1102 = vrot.slane %v1100, 5
      %v1103 = vsel %vm633, %v1098, %v1102
      %v1104 = vshrl.u32 %v233, 16
      %v1106 = vrot.slane %v1104, 4
      %v1107 = vor.u32 %v1106, %v1102
      %v1108 = vrot.slane %v1107, 4
      %v1110 = vshll.u32 %v234, 16
      %v1112 = vrot.slane %v1110, 5
      %v1113 = vsel %vm633, %v1108, %v1112
      %v1115 = vshrl.u32 %v235, 16
      %v1117 = vrot.slane %v1115, 4
      %v1118 = vshll.u32 %v235, 16
      %v1120 = vrot.slane %v1118, 5
      %v1121 = vor.u32 %v1117, %v1120
      %v1122 = vrot.slane %v1121, 4
      %v1124 = vshll.u32 %v236, 16
      %v1126 = vrot.slane %v1124, 5
      %v1127 = vsel %vm633, %v1122, %v1126
      %v1128 = vshrl.u32 %v236, 16
      %v1130 = vrot.slane %v1128, 4
      %v1131 = vor.u32 %v1130, %v1126
      %v1132 = vrot.slane %v1131, 4
      %v1134 = vshll.u32 %v237, 16
      %v1136 = vrot.slane %v1134, 5
      %v1137 = vsel %vm633, %v1132, %v1136
      %v1139 = vshrl.u32 %v238, 16
      %v1141 = vrot.slane %v1139, 4
      %v1142 = vshll.u32 %v238, 16
      %v1144 = vrot.slane %v1142, 5
      %v1145 = vor.u32 %v1141, %v1144
      %v1146 = vrot.slane %v1145, 4
      %v1148 = vshll.u32 %v239, 16
      %v1150 = vrot.slane %v1148, 5
      %v1151 = vsel %vm633, %v1146, %v1150
      %v1152 = vshrl.u32 %v239, 16
      %v1154 = vrot.slane %v1152, 4
      %v1155 = vor.u32 %v1154, %v1150
      %v1156 = vrot.slane %v1155, 4
      %v1158 = vshll.u32 %v240, 16
      %v1160 = vrot.slane %v1158, 5
      %v1161 = vsel %vm633, %v1156, %v1160
      %v1163 = vshrl.u32 %v241, 16
      %v1165 = vrot.slane %v1163, 4
      %v1166 = vshll.u32 %v241, 16
      %v1168 = vrot.slane %v1166, 5
      %v1169 = vor.u32 %v1165, %v1168
      %v1170 = vrot.slane %v1169, 4
      %v1172 = vshll.u32 %v242, 16
      %v1174 = vrot.slane %v1172, 5
      %v1175 = vsel %vm633, %v1170, %v1174
      %v1176 = vshrl.u32 %v242, 16
      %v1178 = vrot.slane %v1176, 4
      %v1179 = vor.u32 %v1178, %v1174
      %v1180 = vrot.slane %v1179, 4
      %v1182 = vshll.u32 %v243, 16
      %v1184 = vrot.slane %v1182, 5
      %v1185 = vsel %vm633, %v1180, %v1184
      %v1187 = vshrl.u32 %v244, 16
      %v1189 = vrot.slane %v1187, 4
      %v1190 = vshll.u32 %v244, 16
      %v1192 = vrot.slane %v1190, 5
      %v1193 = vor.u32 %v1189, %v1192
      %v1194 = vrot.slane %v1193, 4
      %v1196 = vshll.u32 %v245, 16
      %v1198 = vrot.slane %v1196, 5
      %v1199 = vsel %vm633, %v1194, %v1198
      %v1200 = vshrl.u32 %v245, 16
      %v1202 = vrot.slane %v1200, 4
      %v1203 = vor.u32 %v1202, %v1198
      %v1204 = vrot.slane %v1203, 4
      %v1206 = vshll.u32 %v246, 16
      %v1208 = vrot.slane %v1206, 5
      %v1209 = vsel %vm633, %v1204, %v1208
      %v1211 = vshrl.u32 %v247, 16
      %v1213 = vrot.slane %v1211, 4
      %v1214 = vshll.u32 %v247, 16
      %v1216 = vrot.slane %v1214, 5
      %v1217 = vor.u32 %v1213, %v1216
      %v1218 = vrot.slane %v1217, 4
      %v1220 = vshll.u32 %v248, 16
      %v1222 = vrot.slane %v1220, 5
      %v1223 = vsel %vm633, %v1218, %v1222
      %v1224 = vshrl.u32 %v248, 16
      %v1226 = vrot.slane %v1224, 4
      %v1227 = vor.u32 %v1226, %v1222
      %v1228 = vrot.slane %v1227, 4
      %v1230 = vshll.u32 %v249, 16
      %v1232 = vrot.slane %v1230, 5
      %v1233 = vsel %vm633, %v1228, %v1232
      %v1235 = vshrl.u32 %v250, 16
      %v1237 = vrot.slane %v1235, 4
      %v1238 = vshll.u32 %v250, 16
      %v1240 = vrot.slane %v1238, 5
      %v1241 = vor.u32 %v1237, %v1240
      %v1242 = vrot.slane %v1241, 4
      %v1244 = vshll.u32 %v251, 16
      %v1246 = vrot.slane %v1244, 5
      %v1247 = vsel %vm633, %v1242, %v1246
      %v1248 = vshrl.u32 %v251, 16
      %v1250 = vrot.slane %v1248, 4
      %v1251 = vor.u32 %v1250, %v1246
      %v1252 = vrot.slane %v1251, 4
      %v1254 = vshll.u32 %v252, 16
      %v1256 = vrot.slane %v1254, 5
      %v1257 = vsel %vm633, %v1252, %v1256
      %v1259 = vshrl.u32 %v253, 16
      %v1261 = vrot.slane %v1259, 4
      %v1262 = vshll.u32 %v253, 16
      %v1264 = vrot.slane %v1262, 5
      %v1265 = vor.u32 %v1261, %v1264
      %v1266 = vrot.slane %v1265, 4
      %v1268 = vshll.u32 %v254, 16
      %v1270 = vrot.slane %v1268, 5
      %v1271 = vsel %vm633, %v1266, %v1270
      %v1272 = vshrl.u32 %v254, 16
      %v1274 = vrot.slane %v1272, 4
      %v1275 = vor.u32 %v1274, %v1270
      %v1276 = vrot.slane %v1275, 4
      %v1278 = vshll.u32 %v255, 16
      %v1280 = vrot.slane %v1278, 5
      %v1281 = vsel %vm633, %v1276, %v1280
      %v1283 = vshrl.u32 %v256, 16
      %v1285 = vrot.slane %v1283, 4
      %v1286 = vshll.u32 %v256, 16
      %v1288 = vrot.slane %v1286, 5
      %v1289 = vor.u32 %v1285, %v1288
      %v1290 = vrot.slane %v1289, 4
      %v1292 = vshll.u32 %v257, 16
      %v1294 = vrot.slane %v1292, 5
      %v1295 = vsel %vm633, %v1290, %v1294
      %v1296 = vshrl.u32 %v257, 16
      %v1298 = vrot.slane %v1296, 4
      %v1299 = vor.u32 %v1298, %v1294
      %v1300 = vrot.slane %v1299, 4
      %v1302 = vshll.u32 %v258, 16
      %v1304 = vrot.slane %v1302, 5
      %v1305 = vsel %vm633, %v1300, %v1304
      %v1307 = vshrl.u32 %v259, 16
      %v1309 = vrot.slane %v1307, 4
      %v1310 = vshll.u32 %v259, 16
      %v1312 = vrot.slane %v1310, 5
      %v1313 = vor.u32 %v1309, %v1312
      %v1314 = vrot.slane %v1313, 4
      %v1316 = vshll.u32 %v260, 16
      %v1318 = vrot.slane %v1316, 5
      %v1319 = vsel %vm633, %v1314, %v1318
      %v1320 = vshrl.u32 %v260, 16
      %v1322 = vrot.slane %v1320, 4
      %v1323 = vor.u32 %v1322, %v1318
      %v1324 = vrot.slane %v1323, 4
      %v1326 = vshll.u32 %v261, 16
      %v1328 = vrot.slane %v1326, 5
      %v1329 = vsel %vm633, %v1324, %v1328
      %v1331 = vshrl.u32 %v262, 16
      %v1333 = vrot.slane %v1331, 4
      %v1334 = vshll.u32 %v262, 16
      %v1336 = vrot.slane %v1334, 5
      %v1337 = vor.u32 %v1333, %v1336
      %v1338 = vrot.slane %v1337, 4
      %v1340 = vshll.u32 %v263, 16
      %v1342 = vrot.slane %v1340, 5
      %v1343 = vsel %vm633, %v1338, %v1342
      %v1344 = vshrl.u32 %v263, 16
      %v1346 = vrot.slane %v1344, 4
      %v1347 = vor.u32 %v1346, %v1342
      %v1348 = vrot.slane %v1347, 4
      %v1350 = vshll.u32 %v264, 16
      %v1352 = vrot.slane %v1350, 5
      %v1353 = vsel %vm633, %v1348, %v1352
      %v1355 = vshrl.u32 %v265, 16
      %v1357 = vrot.slane %v1355, 4
      %v1358 = vshll.u32 %v265, 16
      %v1360 = vrot.slane %v1358, 5
      %v1361 = vor.u32 %v1357, %v1360
      %v1362 = vrot.slane %v1361, 4
      %v1364 = vshll.u32 %v266, 16
      %v1366 = vrot.slane %v1364, 5
      %v1367 = vsel %vm633, %v1362, %v1366
      %v1368 = vshrl.u32 %v266, 16
      %v1370 = vrot.slane %v1368, 4
      %v1371 = vor.u32 %v1370, %v1366
      %v1372 = vrot.slane %v1371, 4
      %v1374 = vshll.u32 %v267, 16
      %v1376 = vrot.slane %v1374, 5
      %v1377 = vsel %vm633, %v1372, %v1376
      %v1379 = vshrl.u32 %v268, 16
      %v1381 = vrot.slane %v1379, 4
      %v1382 = vshll.u32 %v268, 16
      %v1384 = vrot.slane %v1382, 5
      %v1385 = vor.u32 %v1381, %v1384
      %v1386 = vrot.slane %v1385, 4
      %v1388 = vshll.u32 %v269, 16
      %v1390 = vrot.slane %v1388, 5
      %v1391 = vsel %vm633, %v1386, %v1390
      %v1392 = vshrl.u32 %v269, 16
      %v1394 = vrot.slane %v1392, 4
      %v1395 = vor.u32 %v1394, %v1390
      %v1396 = vrot.slane %v1395, 4
      %v1398 = vshll.u32 %v270, 16
      %v1400 = vrot.slane %v1398, 5
      %v1401 = vsel %vm633, %v1396, %v1400
      %v1403 = vshrl.u32 %v274, 16
      %v1405 = vrot.slane %v1403, 4
      %v1406 = vshll.u32 %v274, 16
      %v1408 = vrot.slane %v1406, 5
      %v1409 = vor.u32 %v1405, %v1408
      %v1410 = vrot.slane %v1409, 4
      %v1412 = vshll.u32 %v275, 16
      %v1414 = vrot.slane %v1412, 5
      %v1415 = vsel %vm633, %v1410, %v1414
      %v1416 = vshrl.u32 %v275, 16
      %v1418 = vrot.slane %v1416, 4
      %v1419 = vor.u32 %v1418, %v1414
      %v1420 = vrot.slane %v1419, 4
      %v1422 = vshll.u32 %v276, 16
      %v1424 = vrot.slane %v1422, 5
      %v1425 = vsel %vm633, %v1420, %v1424
      %v1427 = vshrl.u32 %v277, 16
      %v1429 = vrot.slane %v1427, 4
      %v1430 = vshll.u32 %v277, 16
      %v1432 = vrot.slane %v1430, 5
      %v1433 = vor.u32 %v1429, %v1432
      %v1434 = vrot.slane %v1433, 4
      %v1436 = vshll.u32 %v278, 16
      %v1438 = vrot.slane %v1436, 5
      %v1439 = vsel %vm633, %v1434, %v1438
      %v1440 = vshrl.u32 %v278, 16
      %v1442 = vrot.slane %v1440, 4
      %v1443 = vor.u32 %v1442, %v1438
      %v1444 = vrot.slane %v1443, 4
      %v1446 = vshll.u32 %v279, 16
      %v1448 = vrot.slane %v1446, 5
      %v1449 = vsel %vm633, %v1444, %v1448
      %v1451 = vshrl.u32 %v280, 16
      %v1453 = vrot.slane %v1451, 4
      %v1454 = vshll.u32 %v280, 16
      %v1456 = vrot.slane %v1454, 5
      %v1457 = vor.u32 %v1453, %v1456
      %v1458 = vrot.slane %v1457, 4
      %v1460 = vshll.u32 %v281, 16
      %v1462 = vrot.slane %v1460, 5
      %v1463 = vsel %vm633, %v1458, %v1462
      %v1464 = vshrl.u32 %v281, 16
      %v1466 = vrot.slane %v1464, 4
      %v1467 = vor.u32 %v1466, %v1462
      %v1468 = vrot.slane %v1467, 4
      %v1470 = vshll.u32 %v282, 16
      %v1472 = vrot.slane %v1470, 5
      %v1473 = vsel %vm633, %v1468, %v1472
      %v1475 = vshrl.u32 %v283, 16
      %v1477 = vrot.slane %v1475, 4
      %v1478 = vshll.u32 %v283, 16
      %v1480 = vrot.slane %v1478, 5
      %v1481 = vor.u32 %v1477, %v1480
      %v1482 = vrot.slane %v1481, 4
      %v1484 = vshll.u32 %v284, 16
      %v1486 = vrot.slane %v1484, 5
      %v1487 = vsel %vm633, %v1482, %v1486
      %v1488 = vshrl.u32 %v284, 16
      %v1490 = vrot.slane %v1488, 4
      %v1491 = vor.u32 %v1490, %v1486
      %v1492 = vrot.slane %v1491, 4
      %v1494 = vshll.u32 %v285, 16
      %v1496 = vrot.slane %v1494, 5
      %v1497 = vsel %vm633, %v1492, %v1496
      %v1499 = vshrl.u32 %v286, 16
      %v1501 = vrot.slane %v1499, 4
      %v1502 = vshll.u32 %v286, 16
      %v1504 = vrot.slane %v1502, 5
      %v1505 = vor.u32 %v1501, %v1504
      %v1506 = vrot.slane %v1505, 4
      %v1508 = vshll.u32 %v287, 16
      %v1510 = vrot.slane %v1508, 5
      %v1511 = vsel %vm633, %v1506, %v1510
      %v1512 = vshrl.u32 %v287, 16
      %v1514 = vrot.slane %v1512, 4
      %v1515 = vor.u32 %v1514, %v1510
      %v1516 = vrot.slane %v1515, 4
      %v1518 = vshll.u32 %v288, 16
      %v1520 = vrot.slane %v1518, 5
      %v1521 = vsel %vm633, %v1516, %v1520
      %v1523 = vshrl.u32 %v289, 16
      %v1525 = vrot.slane %v1523, 4
      %v1526 = vshll.u32 %v289, 16
      %v1528 = vrot.slane %v1526, 5
      %v1529 = vor.u32 %v1525, %v1528
      %v1530 = vrot.slane %v1529, 4
      %v1532 = vshll.u32 %v290, 16
      %v1534 = vrot.slane %v1532, 5
      %v1535 = vsel %vm633, %v1530, %v1534
      %v1536 = vshrl.u32 %v290, 16
      %v1538 = vrot.slane %v1536, 4
      %v1539 = vor.u32 %v1538, %v1534
      %v1540 = vrot.slane %v1539, 4
      %v1542 = vshll.u32 %v291, 16
      %v1544 = vrot.slane %v1542, 5
      %v1545 = vsel %vm633, %v1540, %v1544
      %v1547 = vshrl.u32 %v292, 16
      %v1549 = vrot.slane %v1547, 4
      %v1550 = vshll.u32 %v292, 16
      %v1552 = vrot.slane %v1550, 5
      %v1553 = vor.u32 %v1549, %v1552
      %v1554 = vrot.slane %v1553, 4
      %v1556 = vshll.u32 %v293, 16
      %v1558 = vrot.slane %v1556, 5
      %v1559 = vsel %vm633, %v1554, %v1558
      %v1560 = vshrl.u32 %v293, 16
      %v1562 = vrot.slane %v1560, 4
      %v1563 = vor.u32 %v1562, %v1558
      %v1564 = vrot.slane %v1563, 4
      %v1566 = vshll.u32 %v294, 16
      %v1568 = vrot.slane %v1566, 5
      %v1569 = vsel %vm633, %v1564, %v1568
      %v1571 = vshrl.u32 %v295, 16
      %v1573 = vrot.slane %v1571, 4
      %v1574 = vshll.u32 %v295, 16
      %v1576 = vrot.slane %v1574, 5
      %v1577 = vor.u32 %v1573, %v1576
      %v1578 = vrot.slane %v1577, 4
      %v1580 = vshll.u32 %v296, 16
      %v1582 = vrot.slane %v1580, 5
      %v1583 = vsel %vm633, %v1578, %v1582
      %v1584 = vshrl.u32 %v296, 16
      %v1586 = vrot.slane %v1584, 4
      %v1587 = vor.u32 %v1586, %v1582
      %v1588 = vrot.slane %v1587, 4
      %v1590 = vshll.u32 %v297, 16
      %v1592 = vrot.slane %v1590, 5
      %v1593 = vsel %vm633, %v1588, %v1592
      %v1595 = vshrl.u32 %v298, 16
      %v1597 = vrot.slane %v1595, 4
      %v1598 = vshll.u32 %v298, 16
      %v1600 = vrot.slane %v1598, 5
      %v1601 = vor.u32 %v1597, %v1600
      %v1602 = vrot.slane %v1601, 4
      %v1604 = vshll.u32 %v299, 16
      %v1606 = vrot.slane %v1604, 5
      %v1607 = vsel %vm633, %v1602, %v1606
      %v1608 = vshrl.u32 %v299, 16
      %v1610 = vrot.slane %v1608, 4
      %v1611 = vor.u32 %v1610, %v1606
      %v1612 = vrot.slane %v1611, 4
      %v1614 = vshll.u32 %v300, 16
      %v1616 = vrot.slane %v1614, 5
      %v1617 = vsel %vm633, %v1612, %v1616
      %v1619 = vshrl.u32 %v301, 16
      %v1621 = vrot.slane %v1619, 4
      %v1622 = vshll.u32 %v301, 16
      %v1624 = vrot.slane %v1622, 5
      %v1625 = vor.u32 %v1621, %v1624
      %v1626 = vrot.slane %v1625, 4
      %v1628 = vshll.u32 %v302, 16
      %v1630 = vrot.slane %v1628, 5
      %v1631 = vsel %vm633, %v1626, %v1630
      %v1632 = vshrl.u32 %v302, 16
      %v1634 = vrot.slane %v1632, 4
      %v1635 = vor.u32 %v1634, %v1630
      %v1636 = vrot.slane %v1635, 4
      %v1638 = vshll.u32 %v303, 16
      %v1640 = vrot.slane %v1638, 5
      %v1641 = vsel %vm633, %v1636, %v1640
      %v1643 = vshrl.u32 %v304, 16
      %v1645 = vrot.slane %v1643, 4
      %v1646 = vshll.u32 %v304, 16
      %v1648 = vrot.slane %v1646, 5
      %v1649 = vor.u32 %v1645, %v1648
      %v1650 = vrot.slane %v1649, 4
      %v1652 = vshll.u32 %v305, 16
      %v1654 = vrot.slane %v1652, 5
      %v1655 = vsel %vm633, %v1650, %v1654
      %v1656 = vshrl.u32 %v305, 16
      %v1658 = vrot.slane %v1656, 4
      %v1659 = vor.u32 %v1658, %v1654
      %v1660 = vrot.slane %v1659, 4
      %v1662 = vshll.u32 %v306, 16
      %v1664 = vrot.slane %v1662, 5
      %v1665 = vsel %vm633, %v1660, %v1664
      %v1667 = vshrl.u32 %v307, 16
      %v1669 = vrot.slane %v1667, 4
      %v1670 = vshll.u32 %v307, 16
      %v1672 = vrot.slane %v1670, 5
      %v1673 = vor.u32 %v1669, %v1672
      %v1674 = vrot.slane %v1673, 4
      %v1676 = vshll.u32 %v308, 16
      %v1678 = vrot.slane %v1676, 5
      %v1679 = vsel %vm633, %v1674, %v1678
      %v1680 = vshrl.u32 %v308, 16
      %v1682 = vrot.slane %v1680, 4
      %v1683 = vor.u32 %v1682, %v1678
      %v1684 = vrot.slane %v1683, 4
      %v1686 = vshll.u32 %v309, 16
      %v1688 = vrot.slane %v1686, 5
      %v1689 = vsel %vm633, %v1684, %v1688
      %v1691 = vshrl.u32 %v310, 16
      %v1693 = vrot.slane %v1691, 4
      %v1694 = vshll.u32 %v310, 16
      %v1696 = vrot.slane %v1694, 5
      %v1697 = vor.u32 %v1693, %v1696
      %v1698 = vrot.slane %v1697, 4
      %v1700 = vshll.u32 %v311, 16
      %v1702 = vrot.slane %v1700, 5
      %v1703 = vsel %vm633, %v1698, %v1702
      %v1704 = vshrl.u32 %v311, 16
      %v1706 = vrot.slane %v1704, 4
      %v1707 = vor.u32 %v1706, %v1702
      %v1708 = vrot.slane %v1707, 4
      %v1710 = vshll.u32 %v312, 16
      %v1712 = vrot.slane %v1710, 5
      %v1713 = vsel %vm633, %v1708, %v1712
      %v1715 = vshrl.u32 %v313, 16
      %v1717 = vrot.slane %v1715, 4
      %v1718 = vshll.u32 %v313, 16
      %v1720 = vrot.slane %v1718, 5
      %v1721 = vor.u32 %v1717, %v1720
      %v1722 = vrot.slane %v1721, 4
      %v1724 = vshll.u32 %v314, 16
      %v1726 = vrot.slane %v1724, 5
      %v1727 = vsel %vm633, %v1722, %v1726
      %v1728 = vshrl.u32 %v314, 16
      %v1730 = vrot.slane %v1728, 4
      %v1731 = vor.u32 %v1730, %v1726
      %v1732 = vrot.slane %v1731, 4
      %v1734 = vshll.u32 %v315, 16
      %v1736 = vrot.slane %v1734, 5
      %v1737 = vsel %vm633, %v1732, %v1736
      %v1739 = vshrl.u32 %v316, 16
      %v1741 = vrot.slane %v1739, 4
      %v1742 = vshll.u32 %v316, 16
      %v1744 = vrot.slane %v1742, 5
      %v1745 = vor.u32 %v1741, %v1744
      %v1746 = vrot.slane %v1745, 4
      %v1748 = vshll.u32 %v317, 16
      %v1750 = vrot.slane %v1748, 5
      %v1751 = vsel %vm633, %v1746, %v1750
      %v1752 = vshrl.u32 %v317, 16
      %v1754 = vrot.slane %v1752, 4
      %v1755 = vor.u32 %v1754, %v1750
      %v1756 = vrot.slane %v1755, 4
      %v1758 = vshll.u32 %v318, 16
      %v1760 = vrot.slane %v1758, 5
      %v1761 = vsel %vm633, %v1756, %v1760
      %v1763 = vshrl.u32 %v319, 16
      %v1765 = vrot.slane %v1763, 4
      %v1766 = vshll.u32 %v319, 16
      %v1768 = vrot.slane %v1766, 5
      %v1769 = vor.u32 %v1765, %v1768
      %v1770 = vrot.slane %v1769, 4
      %v1772 = vshll.u32 %v320, 16
      %v1774 = vrot.slane %v1772, 5
      %v1775 = vsel %vm633, %v1770, %v1774
      %v1776 = vshrl.u32 %v320, 16
      %v1778 = vrot.slane %v1776, 4
      %v1779 = vor.u32 %v1778, %v1774
      %v1780 = vrot.slane %v1779, 4
      %v1782 = vshll.u32 %v321, 16
      %v1784 = vrot.slane %v1782, 5
      %v1785 = vsel %vm633, %v1780, %v1784
      %v1787 = vshrl.u32 %v325, 16
      %v1789 = vrot.slane %v1787, 4
      %v1790 = vshll.u32 %v325, 16
      %v1792 = vrot.slane %v1790, 5
      %v1793 = vor.u32 %v1789, %v1792
      %v1794 = vrot.slane %v1793, 4
      %v1796 = vshll.u32 %v326, 16
      %v1798 = vrot.slane %v1796, 5
      %v1799 = vsel %vm633, %v1794, %v1798
      %v1800 = vshrl.u32 %v326, 16
      %v1802 = vrot.slane %v1800, 4
      %v1803 = vor.u32 %v1802, %v1798
      %v1804 = vrot.slane %v1803, 4
      %v1806 = vshll.u32 %v327, 16
      %v1808 = vrot.slane %v1806, 5
      %v1809 = vsel %vm633, %v1804, %v1808
      %v1811 = vshrl.u32 %v328, 16
      %v1813 = vrot.slane %v1811, 4
      %v1814 = vshll.u32 %v328, 16
      %v1816 = vrot.slane %v1814, 5
      %v1817 = vor.u32 %v1813, %v1816
      %v1818 = vrot.slane %v1817, 4
      %v1820 = vshll.u32 %v329, 16
      %v1822 = vrot.slane %v1820, 5
      %v1823 = vsel %vm633, %v1818, %v1822
      %v1824 = vshrl.u32 %v329, 16
      %v1826 = vrot.slane %v1824, 4
      %v1827 = vor.u32 %v1826, %v1822
      %v1828 = vrot.slane %v1827, 4
      %v1830 = vshll.u32 %v330, 16
      %v1832 = vrot.slane %v1830, 5
      %v1833 = vsel %vm633, %v1828, %v1832
      %v1835 = vshrl.u32 %v331, 16
      %v1837 = vrot.slane %v1835, 4
      %v1838 = vshll.u32 %v331, 16
      %v1840 = vrot.slane %v1838, 5
      %v1841 = vor.u32 %v1837, %v1840
      %v1842 = vrot.slane %v1841, 4
      %v1844 = vshll.u32 %v332, 16
      %v1846 = vrot.slane %v1844, 5
      %v1847 = vsel %vm633, %v1842, %v1846
      %v1848 = vshrl.u32 %v332, 16
      %v1850 = vrot.slane %v1848, 4
      %v1851 = vor.u32 %v1850, %v1846
      %v1852 = vrot.slane %v1851, 4
      %v1854 = vshll.u32 %v333, 16
      %v1856 = vrot.slane %v1854, 5
      %v1857 = vsel %vm633, %v1852, %v1856
      %v1859 = vshrl.u32 %v334, 16
      %v1861 = vrot.slane %v1859, 4
      %v1862 = vshll.u32 %v334, 16
      %v1864 = vrot.slane %v1862, 5
      %v1865 = vor.u32 %v1861, %v1864
      %v1866 = vrot.slane %v1865, 4
      %v1868 = vshll.u32 %v335, 16
      %v1870 = vrot.slane %v1868, 5
      %v1871 = vsel %vm633, %v1866, %v1870
      %v1872 = vshrl.u32 %v335, 16
      %v1874 = vrot.slane %v1872, 4
      %v1875 = vor.u32 %v1874, %v1870
      %v1876 = vrot.slane %v1875, 4
      %v1878 = vshll.u32 %v336, 16
      %v1880 = vrot.slane %v1878, 5
      %v1881 = vsel %vm633, %v1876, %v1880
      %v1883 = vshrl.u32 %v337, 16
      %v1885 = vrot.slane %v1883, 4
      %v1886 = vshll.u32 %v337, 16
      %v1888 = vrot.slane %v1886, 5
      %v1889 = vor.u32 %v1885, %v1888
      %v1890 = vrot.slane %v1889, 4
      %v1892 = vshll.u32 %v338, 16
      %v1894 = vrot.slane %v1892, 5
      %v1895 = vsel %vm633, %v1890, %v1894
      %v1896 = vshrl.u32 %v338, 16
      %v1898 = vrot.slane %v1896, 4
      %v1899 = vor.u32 %v1898, %v1894
      %v1900 = vrot.slane %v1899, 4
      %v1902 = vshll.u32 %v339, 16
      %v1904 = vrot.slane %v1902, 5
      %v1905 = vsel %vm633, %v1900, %v1904
      %v1907 = vshrl.u32 %v340, 16
      %v1909 = vrot.slane %v1907, 4
      %v1910 = vshll.u32 %v340, 16
      %v1912 = vrot.slane %v1910, 5
      %v1913 = vor.u32 %v1909, %v1912
      %v1914 = vrot.slane %v1913, 4
      %v1916 = vshll.u32 %v341, 16
      %v1918 = vrot.slane %v1916, 5
      %v1919 = vsel %vm633, %v1914, %v1918
      %v1920 = vshrl.u32 %v341, 16
      %v1922 = vrot.slane %v1920, 4
      %v1923 = vor.u32 %v1922, %v1918
      %v1924 = vrot.slane %v1923, 4
      %v1926 = vshll.u32 %v342, 16
      %v1928 = vrot.slane %v1926, 5
      %v1929 = vsel %vm633, %v1924, %v1928
      %v1931 = vshrl.u32 %v343, 16
      %v1933 = vrot.slane %v1931, 4
      %v1934 = vshll.u32 %v343, 16
      %v1936 = vrot.slane %v1934, 5
      %v1937 = vor.u32 %v1933, %v1936
      %v1938 = vrot.slane %v1937, 4
      %v1940 = vshll.u32 %v344, 16
      %v1942 = vrot.slane %v1940, 5
      %v1943 = vsel %vm633, %v1938, %v1942
      %v1944 = vshrl.u32 %v344, 16
      %v1946 = vrot.slane %v1944, 4
      %v1947 = vor.u32 %v1946, %v1942
      %v1948 = vrot.slane %v1947, 4
      %v1950 = vshll.u32 %v345, 16
      %v1952 = vrot.slane %v1950, 5
      %v1953 = vsel %vm633, %v1948, %v1952
      %v1955 = vshrl.u32 %v346, 16
      %v1957 = vrot.slane %v1955, 4
      %v1958 = vshll.u32 %v346, 16
      %v1960 = vrot.slane %v1958, 5
      %v1961 = vor.u32 %v1957, %v1960
      %v1962 = vrot.slane %v1961, 4
      %v1964 = vshll.u32 %v347, 16
      %v1966 = vrot.slane %v1964, 5
      %v1967 = vsel %vm633, %v1962, %v1966
      %v1968 = vshrl.u32 %v347, 16
      %v1970 = vrot.slane %v1968, 4
      %v1971 = vor.u32 %v1970, %v1966
      %v1972 = vrot.slane %v1971, 4
      %v1974 = vshll.u32 %v348, 16
      %v1976 = vrot.slane %v1974, 5
      %v1977 = vsel %vm633, %v1972, %v1976
      %v1979 = vshrl.u32 %v349, 16
      %v1981 = vrot.slane %v1979, 4
      %v1982 = vshll.u32 %v349, 16
      %v1984 = vrot.slane %v1982, 5
      %v1985 = vor.u32 %v1981, %v1984
      %v1986 = vrot.slane %v1985, 4
      %v1988 = vshll.u32 %v350, 16
      %v1990 = vrot.slane %v1988, 5
      %v1991 = vsel %vm633, %v1986, %v1990
      %v1992 = vshrl.u32 %v350, 16
      %v1994 = vrot.slane %v1992, 4
      %v1995 = vor.u32 %v1994, %v1990
      %v1996 = vrot.slane %v1995, 4
      %v1998 = vshll.u32 %v351, 16
      %v2000 = vrot.slane %v1998, 5
      %v2001 = vsel %vm633, %v1996, %v2000
      %v2003 = vshrl.u32 %v352, 16
      %v2005 = vrot.slane %v2003, 4
      %v2006 = vshll.u32 %v352, 16
      %v2008 = vrot.slane %v2006, 5
      %v2009 = vor.u32 %v2005, %v2008
      %v2010 = vrot.slane %v2009, 4
      %v2012 = vshll.u32 %v353, 16
      %v2014 = vrot.slane %v2012, 5
      %v2015 = vsel %vm633, %v2010, %v2014
      %v2016 = vshrl.u32 %v353, 16
      %v2018 = vrot.slane %v2016, 4
      %v2019 = vor.u32 %v2018, %v2014
      %v2020 = vrot.slane %v2019, 4
      %v2022 = vshll.u32 %v354, 16
      %v2024 = vrot.slane %v2022, 5
      %v2025 = vsel %vm633, %v2020, %v2024
      %v2027 = vshrl.u32 %v355, 16
      %v2029 = vrot.slane %v2027, 4
      %v2030 = vshll.u32 %v355, 16
      %v2032 = vrot.slane %v2030, 5
      %v2033 = vor.u32 %v2029, %v2032
      %v2034 = vrot.slane %v2033, 4
      %v2036 = vshll.u32 %v356, 16
      %v2038 = vrot.slane %v2036, 5
      %v2039 = vsel %vm633, %v2034, %v2038
      %v2040 = vshrl.u32 %v356, 16
      %v2042 = vrot.slane %v2040, 4
      %v2043 = vor.u32 %v2042, %v2038
      %v2044 = vrot.slane %v2043, 4
      %v2046 = vshll.u32 %v357, 16
      %v2048 = vrot.slane %v2046, 5
      %v2049 = vsel %vm633, %v2044, %v2048
      %v2051 = vshrl.u32 %v358, 16
      %v2053 = vrot.slane %v2051, 4
      %v2054 = vshll.u32 %v358, 16
      %v2056 = vrot.slane %v2054, 5
      %v2057 = vor.u32 %v2053, %v2056
      %v2058 = vrot.slane %v2057, 4
      %v2060 = vshll.u32 %v359, 16
      %v2062 = vrot.slane %v2060, 5
      %v2063 = vsel %vm633, %v2058, %v2062
      %v2064 = vshrl.u32 %v359, 16
      %v2066 = vrot.slane %v2064, 4
      %v2067 = vor.u32 %v2066, %v2062
      %v2068 = vrot.slane %v2067, 4
      %v2070 = vshll.u32 %v360, 16
      %v2072 = vrot.slane %v2070, 5
      %v2073 = vsel %vm633, %v2068, %v2072
      %v2075 = vshrl.u32 %v361, 16
      %v2077 = vrot.slane %v2075, 4
      %v2078 = vshll.u32 %v361, 16
      %v2080 = vrot.slane %v2078, 5
      %v2081 = vor.u32 %v2077, %v2080
      %v2082 = vrot.slane %v2081, 4
      %v2084 = vshll.u32 %v362, 16
      %v2086 = vrot.slane %v2084, 5
      %v2087 = vsel %vm633, %v2082, %v2086
      %v2088 = vshrl.u32 %v362, 16
      %v2090 = vrot.slane %v2088, 4
      %v2091 = vor.u32 %v2090, %v2086
      %v2092 = vrot.slane %v2091, 4
      %v2094 = vshll.u32 %v363, 16
      %v2096 = vrot.slane %v2094, 5
      %v2097 = vsel %vm633, %v2092, %v2096
      %v2099 = vshrl.u32 %v364, 16
      %v2101 = vrot.slane %v2099, 4
      %v2102 = vshll.u32 %v364, 16
      %v2104 = vrot.slane %v2102, 5
      %v2105 = vor.u32 %v2101, %v2104
      %v2106 = vrot.slane %v2105, 4
      %v2108 = vshll.u32 %v365, 16
      %v2110 = vrot.slane %v2108, 5
      %v2111 = vsel %vm633, %v2106, %v2110
      %v2112 = vshrl.u32 %v365, 16
      %v2114 = vrot.slane %v2112, 4
      %v2115 = vor.u32 %v2114, %v2110
      %v2116 = vrot.slane %v2115, 4
      %v2118 = vshll.u32 %v366, 16
      %v2120 = vrot.slane %v2118, 5
      %v2121 = vsel %vm633, %v2116, %v2120
      %v2123 = vshrl.u32 %v367, 16
      %v2125 = vrot.slane %v2123, 4
      %v2126 = vshll.u32 %v367, 16
      %v2128 = vrot.slane %v2126, 5
      %v2129 = vor.u32 %v2125, %v2128
      %v2130 = vrot.slane %v2129, 4
      %v2132 = vshll.u32 %v368, 16
      %v2134 = vrot.slane %v2132, 5
      %v2135 = vsel %vm633, %v2130, %v2134
      %v2136 = vshrl.u32 %v368, 16
      %v2138 = vrot.slane %v2136, 4
      %v2139 = vor.u32 %v2138, %v2134
      %v2140 = vrot.slane %v2139, 4
      %v2142 = vshll.u32 %v369, 16
      %v2144 = vrot.slane %v2142, 5
      %v2145 = vsel %vm633, %v2140, %v2144
      %v2147 = vshrl.u32 %v370, 16
      %v2149 = vrot.slane %v2147, 4
      %v2150 = vshll.u32 %v370, 16
      %v2152 = vrot.slane %v2150, 5
      %v2153 = vor.u32 %v2149, %v2152
      %v2154 = vrot.slane %v2153, 4
      %v2156 = vshll.u32 %v371, 16
      %v2158 = vrot.slane %v2156, 5
      %v2159 = vsel %vm633, %v2154, %v2158
      %v2160 = vshrl.u32 %v371, 16
      %v2162 = vrot.slane %v2160, 4
      %v2163 = vor.u32 %v2162, %v2158
      %v2164 = vrot.slane %v2163, 4
      %v2166 = vshll.u32 %v372, 16
      %v2168 = vrot.slane %v2166, 5
      %v2169 = vsel %vm633, %v2164, %v2168
      %v2171 = vshrl.u32 %v376, 16
      %v2173 = vrot.slane %v2171, 4
      %v2174 = vshll.u32 %v376, 16
      %v2176 = vrot.slane %v2174, 5
      %v2177 = vor.u32 %v2173, %v2176
      %v2178 = vrot.slane %v2177, 4
      %v2180 = vshll.u32 %v377, 16
      %v2182 = vrot.slane %v2180, 5
      %v2183 = vsel %vm633, %v2178, %v2182
      %v2184 = vshrl.u32 %v377, 16
      %v2186 = vrot.slane %v2184, 4
      %v2187 = vor.u32 %v2186, %v2182
      %v2188 = vrot.slane %v2187, 4
      %v2190 = vshll.u32 %v378, 16
      %v2192 = vrot.slane %v2190, 5
      %v2193 = vsel %vm633, %v2188, %v2192
      %v2195 = vshrl.u32 %v379, 16
      %v2197 = vrot.slane %v2195, 4
      %v2198 = vshll.u32 %v379, 16
      %v2200 = vrot.slane %v2198, 5
      %v2201 = vor.u32 %v2197, %v2200
      %v2202 = vrot.slane %v2201, 4
      %v2204 = vshll.u32 %v380, 16
      %v2206 = vrot.slane %v2204, 5
      %v2207 = vsel %vm633, %v2202, %v2206
      %v2208 = vshrl.u32 %v380, 16
      %v2210 = vrot.slane %v2208, 4
      %v2211 = vor.u32 %v2210, %v2206
      %v2212 = vrot.slane %v2211, 4
      %v2214 = vshll.u32 %v381, 16
      %v2216 = vrot.slane %v2214, 5
      %v2217 = vsel %vm633, %v2212, %v2216
      %v2219 = vshrl.u32 %v382, 16
      %v2221 = vrot.slane %v2219, 4
      %v2222 = vshll.u32 %v382, 16
      %v2224 = vrot.slane %v2222, 5
      %v2225 = vor.u32 %v2221, %v2224
      %v2226 = vrot.slane %v2225, 4
      %v2228 = vshll.u32 %v383, 16
      %v2230 = vrot.slane %v2228, 5
      %v2231 = vsel %vm633, %v2226, %v2230
      %v2232 = vshrl.u32 %v383, 16
      %v2234 = vrot.slane %v2232, 4
      %v2235 = vor.u32 %v2234, %v2230
      %v2236 = vrot.slane %v2235, 4
      %v2238 = vshll.u32 %v384, 16
      %v2240 = vrot.slane %v2238, 5
      %v2241 = vsel %vm633, %v2236, %v2240
      %v2243 = vshrl.u32 %v385, 16
      %v2245 = vrot.slane %v2243, 4
      %v2246 = vshll.u32 %v385, 16
      %v2248 = vrot.slane %v2246, 5
      %v2249 = vor.u32 %v2245, %v2248
      %v2250 = vrot.slane %v2249, 4
      %v2252 = vshll.u32 %v386, 16
      %v2254 = vrot.slane %v2252, 5
      %v2255 = vsel %vm633, %v2250, %v2254
      %v2256 = vshrl.u32 %v386, 16
      %v2258 = vrot.slane %v2256, 4
      %v2259 = vor.u32 %v2258, %v2254
      %v2260 = vrot.slane %v2259, 4
      %v2262 = vshll.u32 %v387, 16
      %v2264 = vrot.slane %v2262, 5
      %v2265 = vsel %vm633, %v2260, %v2264
      %v2267 = vshrl.u32 %v388, 16
      %v2269 = vrot.slane %v2267, 4
      %v2270 = vshll.u32 %v388, 16
      %v2272 = vrot.slane %v2270, 5
      %v2273 = vor.u32 %v2269, %v2272
      %v2274 = vrot.slane %v2273, 4
      %v2276 = vshll.u32 %v389, 16
      %v2278 = vrot.slane %v2276, 5
      %v2279 = vsel %vm633, %v2274, %v2278
      %v2280 = vshrl.u32 %v389, 16
      %v2282 = vrot.slane %v2280, 4
      %v2283 = vor.u32 %v2282, %v2278
      %v2284 = vrot.slane %v2283, 4
      %v2286 = vshll.u32 %v390, 16
      %v2288 = vrot.slane %v2286, 5
      %v2289 = vsel %vm633, %v2284, %v2288
      %v2291 = vshrl.u32 %v391, 16
      %v2293 = vrot.slane %v2291, 4
      %v2294 = vshll.u32 %v391, 16
      %v2296 = vrot.slane %v2294, 5
      %v2297 = vor.u32 %v2293, %v2296
      %v2298 = vrot.slane %v2297, 4
      %v2300 = vshll.u32 %v392, 16
      %v2302 = vrot.slane %v2300, 5
      %v2303 = vsel %vm633, %v2298, %v2302
      %v2304 = vshrl.u32 %v392, 16
      %v2306 = vrot.slane %v2304, 4
      %v2307 = vor.u32 %v2306, %v2302
      %v2308 = vrot.slane %v2307, 4
      %v2310 = vshll.u32 %v393, 16
      %v2312 = vrot.slane %v2310, 5
      %v2313 = vsel %vm633, %v2308, %v2312
      %v2315 = vshrl.u32 %v394, 16
      %v2317 = vrot.slane %v2315, 4
      %v2318 = vshll.u32 %v394, 16
      %v2320 = vrot.slane %v2318, 5
      %v2321 = vor.u32 %v2317, %v2320
      %v2322 = vrot.slane %v2321, 4
      %v2324 = vshll.u32 %v395, 16
      %v2326 = vrot.slane %v2324, 5
      %v2327 = vsel %vm633, %v2322, %v2326
      %v2328 = vshrl.u32 %v395, 16
      %v2330 = vrot.slane %v2328, 4
      %v2331 = vor.u32 %v2330, %v2326
      %v2332 = vrot.slane %v2331, 4
      %v2334 = vshll.u32 %v396, 16
      %v2336 = vrot.slane %v2334, 5
      %v2337 = vsel %vm633, %v2332, %v2336
      %v2339 = vshrl.u32 %v397, 16
      %v2341 = vrot.slane %v2339, 4
      %v2342 = vshll.u32 %v397, 16
      %v2344 = vrot.slane %v2342, 5
      %v2345 = vor.u32 %v2341, %v2344
      %v2346 = vrot.slane %v2345, 4
      %v2348 = vshll.u32 %v398, 16
      %v2350 = vrot.slane %v2348, 5
      %v2351 = vsel %vm633, %v2346, %v2350
      %v2352 = vshrl.u32 %v398, 16
      %v2354 = vrot.slane %v2352, 4
      %v2355 = vor.u32 %v2354, %v2350
      %v2356 = vrot.slane %v2355, 4
      %v2358 = vshll.u32 %v399, 16
      %v2360 = vrot.slane %v2358, 5
      %v2361 = vsel %vm633, %v2356, %v2360
      %v2363 = vshrl.u32 %v400, 16
      %v2365 = vrot.slane %v2363, 4
      %v2366 = vshll.u32 %v400, 16
      %v2368 = vrot.slane %v2366, 5
      %v2369 = vor.u32 %v2365, %v2368
      %v2370 = vrot.slane %v2369, 4
      %v2372 = vshll.u32 %v401, 16
      %v2374 = vrot.slane %v2372, 5
      %v2375 = vsel %vm633, %v2370, %v2374
      %v2376 = vshrl.u32 %v401, 16
      %v2378 = vrot.slane %v2376, 4
      %v2379 = vor.u32 %v2378, %v2374
      %v2380 = vrot.slane %v2379, 4
      %v2382 = vshll.u32 %v402, 16
      %v2384 = vrot.slane %v2382, 5
      %v2385 = vsel %vm633, %v2380, %v2384
      %v2387 = vshrl.u32 %v403, 16
      %v2389 = vrot.slane %v2387, 4
      %v2390 = vshll.u32 %v403, 16
      %v2392 = vrot.slane %v2390, 5
      %v2393 = vor.u32 %v2389, %v2392
      %v2394 = vrot.slane %v2393, 4
      %v2396 = vshll.u32 %v404, 16
      %v2398 = vrot.slane %v2396, 5
      %v2399 = vsel %vm633, %v2394, %v2398
      %v2400 = vshrl.u32 %v404, 16
      %v2402 = vrot.slane %v2400, 4
      %v2403 = vor.u32 %v2402, %v2398
      %v2404 = vrot.slane %v2403, 4
      %v2406 = vshll.u32 %v405, 16
      %v2408 = vrot.slane %v2406, 5
      %v2409 = vsel %vm633, %v2404, %v2408
      %v2411 = vshrl.u32 %v406, 16
      %v2413 = vrot.slane %v2411, 4
      %v2414 = vshll.u32 %v406, 16
      %v2416 = vrot.slane %v2414, 5
      %v2417 = vor.u32 %v2413, %v2416
      %v2418 = vrot.slane %v2417, 4
      %v2420 = vshll.u32 %v407, 16
      %v2422 = vrot.slane %v2420, 5
      %v2423 = vsel %vm633, %v2418, %v2422
      %v2424 = vshrl.u32 %v407, 16
      %v2426 = vrot.slane %v2424, 4
      %v2427 = vor.u32 %v2426, %v2422
      %v2428 = vrot.slane %v2427, 4
      %v2430 = vshll.u32 %v408, 16
      %v2432 = vrot.slane %v2430, 5
      %v2433 = vsel %vm633, %v2428, %v2432
      %v2435 = vshrl.u32 %v409, 16
      %v2437 = vrot.slane %v2435, 4
      %v2438 = vshll.u32 %v409, 16
      %v2440 = vrot.slane %v2438, 5
      %v2441 = vor.u32 %v2437, %v2440
      %v2442 = vrot.slane %v2441, 4
      %v2444 = vshll.u32 %v410, 16
      %v2446 = vrot.slane %v2444, 5
      %v2447 = vsel %vm633, %v2442, %v2446
      %v2448 = vshrl.u32 %v410, 16
      %v2450 = vrot.slane %v2448, 4
      %v2451 = vor.u32 %v2450, %v2446
      %v2452 = vrot.slane %v2451, 4
      %v2454 = vshll.u32 %v411, 16
      %v2456 = vrot.slane %v2454, 5
      %v2457 = vsel %vm633, %v2452, %v2456
      %v2459 = vshrl.u32 %v412, 16
      %v2461 = vrot.slane %v2459, 4
      %v2462 = vshll.u32 %v412, 16
      %v2464 = vrot.slane %v2462, 5
      %v2465 = vor.u32 %v2461, %v2464
      %v2466 = vrot.slane %v2465, 4
      %v2468 = vshll.u32 %v413, 16
      %v2470 = vrot.slane %v2468, 5
      %v2471 = vsel %vm633, %v2466, %v2470
      %v2472 = vshrl.u32 %v413, 16
      %v2474 = vrot.slane %v2472, 4
      %v2475 = vor.u32 %v2474, %v2470
      %v2476 = vrot.slane %v2475, 4
      %v2478 = vshll.u32 %v414, 16
      %v2480 = vrot.slane %v2478, 5
      %v2481 = vsel %vm633, %v2476, %v2480
      %v2483 = vshrl.u32 %v415, 16
      %v2485 = vrot.slane %v2483, 4
      %v2486 = vshll.u32 %v415, 16
      %v2488 = vrot.slane %v2486, 5
      %v2489 = vor.u32 %v2485, %v2488
      %v2490 = vrot.slane %v2489, 4
      %v2492 = vshll.u32 %v416, 16
      %v2494 = vrot.slane %v2492, 5
      %v2495 = vsel %vm633, %v2490, %v2494
      %v2496 = vshrl.u32 %v416, 16
      %v2498 = vrot.slane %v2496, 4
      %v2499 = vor.u32 %v2498, %v2494
      %v2500 = vrot.slane %v2499, 4
      %v2502 = vshll.u32 %v417, 16
      %v2504 = vrot.slane %v2502, 5
      %v2505 = vsel %vm633, %v2500, %v2504
      %v2507 = vshrl.u32 %v418, 16
      %v2509 = vrot.slane %v2507, 4
      %v2510 = vshll.u32 %v418, 16
      %v2512 = vrot.slane %v2510, 5
      %v2513 = vor.u32 %v2509, %v2512
      %v2514 = vrot.slane %v2513, 4
      %v2516 = vshll.u32 %v419, 16
      %v2518 = vrot.slane %v2516, 5
      %v2519 = vsel %vm633, %v2514, %v2518
      %v2520 = vshrl.u32 %v419, 16
      %v2522 = vrot.slane %v2520, 4
      %v2523 = vor.u32 %v2522, %v2518
      %v2524 = vrot.slane %v2523, 4
      %v2526 = vshll.u32 %v420, 16
      %v2528 = vrot.slane %v2526, 5
      %v2529 = vsel %vm633, %v2524, %v2528
      %v2531 = vshrl.u32 %v421, 16
      %v2533 = vrot.slane %v2531, 4
      %v2534 = vshll.u32 %v421, 16
      %v2536 = vrot.slane %v2534, 5
      %v2537 = vor.u32 %v2533, %v2536
      %v2538 = vrot.slane %v2537, 4
      %v2540 = vshll.u32 %v422, 16
      %v2542 = vrot.slane %v2540, 5
      %v2543 = vsel %vm633, %v2538, %v2542
      %v2544 = vshrl.u32 %v422, 16
      %v2546 = vrot.slane %v2544, 4
      %v2547 = vor.u32 %v2546, %v2542
      %v2548 = vrot.slane %v2547, 4
      %v2550 = vshll.u32 %v423, 16
      %v2552 = vrot.slane %v2550, 5
      %v2553 = vsel %vm633, %v2548, %v2552
      %v2555 = vshrl.u32 %v427, 16
      %v2557 = vrot.slane %v2555, 4
      %v2558 = vshll.u32 %v427, 16
      %v2560 = vrot.slane %v2558, 5
      %v2561 = vor.u32 %v2557, %v2560
      %v2562 = vrot.slane %v2561, 4
      %v2564 = vshll.u32 %v428, 16
      %v2566 = vrot.slane %v2564, 5
      %v2567 = vsel %vm633, %v2562, %v2566
      %v2568 = vshrl.u32 %v428, 16
      %v2570 = vrot.slane %v2568, 4
      %v2571 = vor.u32 %v2570, %v2566
      %v2572 = vrot.slane %v2571, 4
      %v2574 = vshll.u32 %v429, 16
      %v2576 = vrot.slane %v2574, 5
      %v2577 = vsel %vm633, %v2572, %v2576
      %v2579 = vshrl.u32 %v430, 16
      %v2581 = vrot.slane %v2579, 4
      %v2582 = vshll.u32 %v430, 16
      %v2584 = vrot.slane %v2582, 5
      %v2585 = vor.u32 %v2581, %v2584
      %v2586 = vrot.slane %v2585, 4
      %v2588 = vshll.u32 %v431, 16
      %v2590 = vrot.slane %v2588, 5
      %v2591 = vsel %vm633, %v2586, %v2590
      %v2592 = vshrl.u32 %v431, 16
      %v2594 = vrot.slane %v2592, 4
      %v2595 = vor.u32 %v2594, %v2590
      %v2596 = vrot.slane %v2595, 4
      %v2598 = vshll.u32 %v432, 16
      %v2600 = vrot.slane %v2598, 5
      %v2601 = vsel %vm633, %v2596, %v2600
      %v2603 = vshrl.u32 %v433, 16
      %v2605 = vrot.slane %v2603, 4
      %v2606 = vshll.u32 %v433, 16
      %v2608 = vrot.slane %v2606, 5
      %v2609 = vor.u32 %v2605, %v2608
      %v2610 = vrot.slane %v2609, 4
      %v2612 = vshll.u32 %v434, 16
      %v2614 = vrot.slane %v2612, 5
      %v2615 = vsel %vm633, %v2610, %v2614
      %v2616 = vshrl.u32 %v434, 16
      %v2618 = vrot.slane %v2616, 4
      %v2619 = vor.u32 %v2618, %v2614
      %v2620 = vrot.slane %v2619, 4
      %v2622 = vshll.u32 %v435, 16
      %v2624 = vrot.slane %v2622, 5
      %v2625 = vsel %vm633, %v2620, %v2624
      %v2627 = vshrl.u32 %v436, 16
      %v2629 = vrot.slane %v2627, 4
      %v2630 = vshll.u32 %v436, 16
      %v2632 = vrot.slane %v2630, 5
      %v2633 = vor.u32 %v2629, %v2632
      %v2634 = vrot.slane %v2633, 4
      %v2636 = vshll.u32 %v437, 16
      %v2638 = vrot.slane %v2636, 5
      %v2639 = vsel %vm633, %v2634, %v2638
      %v2640 = vshrl.u32 %v437, 16
      %v2642 = vrot.slane %v2640, 4
      %v2643 = vor.u32 %v2642, %v2638
      %v2644 = vrot.slane %v2643, 4
      %v2646 = vshll.u32 %v438, 16
      %v2648 = vrot.slane %v2646, 5
      %v2649 = vsel %vm633, %v2644, %v2648
      %v2651 = vshrl.u32 %v439, 16
      %v2653 = vrot.slane %v2651, 4
      %v2654 = vshll.u32 %v439, 16
      %v2656 = vrot.slane %v2654, 5
      %v2657 = vor.u32 %v2653, %v2656
      %v2658 = vrot.slane %v2657, 4
      %v2660 = vshll.u32 %v440, 16
      %v2662 = vrot.slane %v2660, 5
      %v2663 = vsel %vm633, %v2658, %v2662
      %v2664 = vshrl.u32 %v440, 16
      %v2666 = vrot.slane %v2664, 4
      %v2667 = vor.u32 %v2666, %v2662
      %v2668 = vrot.slane %v2667, 4
      %v2670 = vshll.u32 %v441, 16
      %v2672 = vrot.slane %v2670, 5
      %v2673 = vsel %vm633, %v2668, %v2672
      %v2675 = vshrl.u32 %v442, 16
      %v2677 = vrot.slane %v2675, 4
      %v2678 = vshll.u32 %v442, 16
      %v2680 = vrot.slane %v2678, 5
      %v2681 = vor.u32 %v2677, %v2680
      %v2682 = vrot.slane %v2681, 4
      %v2684 = vshll.u32 %v443, 16
      %v2686 = vrot.slane %v2684, 5
      %v2687 = vsel %vm633, %v2682, %v2686
      %v2688 = vshrl.u32 %v443, 16
      %v2690 = vrot.slane %v2688, 4
      %v2691 = vor.u32 %v2690, %v2686
      %v2692 = vrot.slane %v2691, 4
      %v2694 = vshll.u32 %v444, 16
      %v2696 = vrot.slane %v2694, 5
      %v2697 = vsel %vm633, %v2692, %v2696
      %v2699 = vshrl.u32 %v445, 16
      %v2701 = vrot.slane %v2699, 4
      %v2702 = vshll.u32 %v445, 16
      %v2704 = vrot.slane %v2702, 5
      %v2705 = vor.u32 %v2701, %v2704
      %v2706 = vrot.slane %v2705, 4
      %v2708 = vshll.u32 %v446, 16
      %v2710 = vrot.slane %v2708, 5
      %v2711 = vsel %vm633, %v2706, %v2710
      %v2712 = vshrl.u32 %v446, 16
      %v2714 = vrot.slane %v2712, 4
      %v2715 = vor.u32 %v2714, %v2710
      %v2716 = vrot.slane %v2715, 4
      %v2718 = vshll.u32 %v447, 16
      %v2720 = vrot.slane %v2718, 5
      %v2721 = vsel %vm633, %v2716, %v2720
      %v2723 = vshrl.u32 %v448, 16
      %v2725 = vrot.slane %v2723, 4
      %v2726 = vshll.u32 %v448, 16
      %v2728 = vrot.slane %v2726, 5
      %v2729 = vor.u32 %v2725, %v2728
      %v2730 = vrot.slane %v2729, 4
      %v2732 = vshll.u32 %v449, 16
      %v2734 = vrot.slane %v2732, 5
      %v2735 = vsel %vm633, %v2730, %v2734
      %v2736 = vshrl.u32 %v449, 16
      %v2738 = vrot.slane %v2736, 4
      %v2739 = vor.u32 %v2738, %v2734
      %v2740 = vrot.slane %v2739, 4
      %v2742 = vshll.u32 %v450, 16
      %v2744 = vrot.slane %v2742, 5
      %v2745 = vsel %vm633, %v2740, %v2744
      %v2747 = vshrl.u32 %v451, 16
      %v2749 = vrot.slane %v2747, 4
      %v2750 = vshll.u32 %v451, 16
      %v2752 = vrot.slane %v2750, 5
      %v2753 = vor.u32 %v2749, %v2752
      %v2754 = vrot.slane %v2753, 4
      %v2756 = vshll.u32 %v452, 16
      %v2758 = vrot.slane %v2756, 5
      %v2759 = vsel %vm633, %v2754, %v2758
      %v2760 = vshrl.u32 %v452, 16
      %v2762 = vrot.slane %v2760, 4
      %v2763 = vor.u32 %v2762, %v2758
      %v2764 = vrot.slane %v2763, 4
      %v2766 = vshll.u32 %v453, 16
      %v2768 = vrot.slane %v2766, 5
      %v2769 = vsel %vm633, %v2764, %v2768
      %v2771 = vshrl.u32 %v454, 16
      %v2773 = vrot.slane %v2771, 4
      %v2774 = vshll.u32 %v454, 16
      %v2776 = vrot.slane %v2774, 5
      %v2777 = vor.u32 %v2773, %v2776
      %v2778 = vrot.slane %v2777, 4
      %v2780 = vshll.u32 %v455, 16
      %v2782 = vrot.slane %v2780, 5
      %v2783 = vsel %vm633, %v2778, %v2782
      %v2784 = vshrl.u32 %v455, 16
      %v2786 = vrot.slane %v2784, 4
      %v2787 = vor.u32 %v2786, %v2782
      %v2788 = vrot.slane %v2787, 4
      %v2790 = vshll.u32 %v456, 16
      %v2792 = vrot.slane %v2790, 5
      %v2793 = vsel %vm633, %v2788, %v2792
      %v2795 = vshrl.u32 %v457, 16
      %v2797 = vrot.slane %v2795, 4
      %v2798 = vshll.u32 %v457, 16
      %v2800 = vrot.slane %v2798, 5
      %v2801 = vor.u32 %v2797, %v2800
      %v2802 = vrot.slane %v2801, 4
      %v2804 = vshll.u32 %v458, 16
      %v2806 = vrot.slane %v2804, 5
      %v2807 = vsel %vm633, %v2802, %v2806
      %v2808 = vshrl.u32 %v458, 16
      %v2810 = vrot.slane %v2808, 4
      %v2811 = vor.u32 %v2810, %v2806
      %v2812 = vrot.slane %v2811, 4
      %v2814 = vshll.u32 %v459, 16
      %v2816 = vrot.slane %v2814, 5
      %v2817 = vsel %vm633, %v2812, %v2816
      %v2819 = vshrl.u32 %v460, 16
      %v2821 = vrot.slane %v2819, 4
      %v2822 = vshll.u32 %v460, 16
      %v2824 = vrot.slane %v2822, 5
      %v2825 = vor.u32 %v2821, %v2824
      %v2826 = vrot.slane %v2825, 4
      %v2828 = vshll.u32 %v461, 16
      %v2830 = vrot.slane %v2828, 5
      %v2831 = vsel %vm633, %v2826, %v2830
      %v2832 = vshrl.u32 %v461, 16
      %v2834 = vrot.slane %v2832, 4
      %v2835 = vor.u32 %v2834, %v2830
      %v2836 = vrot.slane %v2835, 4
      %v2838 = vshll.u32 %v462, 16
      %v2840 = vrot.slane %v2838, 5
      %v2841 = vsel %vm633, %v2836, %v2840
      %v2843 = vshrl.u32 %v463, 16
      %v2845 = vrot.slane %v2843, 4
      %v2846 = vshll.u32 %v463, 16
      %v2848 = vrot.slane %v2846, 5
      %v2849 = vor.u32 %v2845, %v2848
      %v2850 = vrot.slane %v2849, 4
      %v2852 = vshll.u32 %v464, 16
      %v2854 = vrot.slane %v2852, 5
      %v2855 = vsel %vm633, %v2850, %v2854
      %v2856 = vshrl.u32 %v464, 16
      %v2858 = vrot.slane %v2856, 4
      %v2859 = vor.u32 %v2858, %v2854
      %v2860 = vrot.slane %v2859, 4
      %v2862 = vshll.u32 %v465, 16
      %v2864 = vrot.slane %v2862, 5
      %v2865 = vsel %vm633, %v2860, %v2864
      %v2867 = vshrl.u32 %v466, 16
      %v2869 = vrot.slane %v2867, 4
      %v2870 = vshll.u32 %v466, 16
      %v2872 = vrot.slane %v2870, 5
      %v2873 = vor.u32 %v2869, %v2872
      %v2874 = vrot.slane %v2873, 4
      %v2876 = vshll.u32 %v467, 16
      %v2878 = vrot.slane %v2876, 5
      %v2879 = vsel %vm633, %v2874, %v2878
      %v2880 = vshrl.u32 %v467, 16
      %v2882 = vrot.slane %v2880, 4
      %v2883 = vor.u32 %v2882, %v2878
      %v2884 = vrot.slane %v2883, 4
      %v2886 = vshll.u32 %v468, 16
      %v2888 = vrot.slane %v2886, 5
      %v2889 = vsel %vm633, %v2884, %v2888
      %v2891 = vshrl.u32 %v469, 16
      %v2893 = vrot.slane %v2891, 4
      %v2894 = vshll.u32 %v469, 16
      %v2896 = vrot.slane %v2894, 5
      %v2897 = vor.u32 %v2893, %v2896
      %v2898 = vrot.slane %v2897, 4
      %v2900 = vshll.u32 %v470, 16
      %v2902 = vrot.slane %v2900, 5
      %v2903 = vsel %vm633, %v2898, %v2902
      %v2904 = vshrl.u32 %v470, 16
      %v2906 = vrot.slane %v2904, 4
      %v2907 = vor.u32 %v2906, %v2902
      %v2908 = vrot.slane %v2907, 4
      %v2910 = vshll.u32 %v471, 16
      %v2912 = vrot.slane %v2910, 5
      %v2913 = vsel %vm633, %v2908, %v2912
      %v2915 = vshrl.u32 %v472, 16
      %v2917 = vrot.slane %v2915, 4
      %v2918 = vshll.u32 %v472, 16
      %v2920 = vrot.slane %v2918, 5
      %v2921 = vor.u32 %v2917, %v2920
      %v2922 = vrot.slane %v2921, 4
      %v2924 = vshll.u32 %v473, 16
      %v2926 = vrot.slane %v2924, 5
      %v2927 = vsel %vm633, %v2922, %v2926
      %v2928 = vshrl.u32 %v473, 16
      %v2930 = vrot.slane %v2928, 4
      %v2931 = vor.u32 %v2930, %v2926
      %v2932 = vrot.slane %v2931, 4
      %v2934 = vshll.u32 %v474, 16
      %v2936 = vrot.slane %v2934, 5
      %v2937 = vsel %vm633, %v2932, %v2936
      %v2939 = vshrl.u32 %v478, 16
      %v2941 = vrot.slane %v2939, 4
      %v2942 = vshll.u32 %v478, 16
      %v2944 = vrot.slane %v2942, 5
      %v2945 = vor.u32 %v2941, %v2944
      %v2946 = vrot.slane %v2945, 4
      %v2948 = vshll.u32 %v479, 16
      %v2950 = vrot.slane %v2948, 5
      %v2951 = vsel %vm633, %v2946, %v2950
      %v2952 = vshrl.u32 %v479, 16
      %v2954 = vrot.slane %v2952, 4
      %v2955 = vor.u32 %v2954, %v2950
      %v2956 = vrot.slane %v2955, 4
      %v2958 = vshll.u32 %v480, 16
      %v2960 = vrot.slane %v2958, 5
      %v2961 = vsel %vm633, %v2956, %v2960
      %v2963 = vshrl.u32 %v481, 16
      %v2965 = vrot.slane %v2963, 4
      %v2966 = vshll.u32 %v481, 16
      %v2968 = vrot.slane %v2966, 5
      %v2969 = vor.u32 %v2965, %v2968
      %v2970 = vrot.slane %v2969, 4
      %v2972 = vshll.u32 %v482, 16
      %v2974 = vrot.slane %v2972, 5
      %v2975 = vsel %vm633, %v2970, %v2974
      %v2976 = vshrl.u32 %v482, 16
      %v2978 = vrot.slane %v2976, 4
      %v2979 = vor.u32 %v2978, %v2974
      %v2980 = vrot.slane %v2979, 4
      %v2982 = vshll.u32 %v483, 16
      %v2984 = vrot.slane %v2982, 5
      %v2985 = vsel %vm633, %v2980, %v2984
      %v2987 = vshrl.u32 %v484, 16
      %v2989 = vrot.slane %v2987, 4
      %v2990 = vshll.u32 %v484, 16
      %v2992 = vrot.slane %v2990, 5
      %v2993 = vor.u32 %v2989, %v2992
      %v2994 = vrot.slane %v2993, 4
      %v2996 = vshll.u32 %v485, 16
      %v2998 = vrot.slane %v2996, 5
      %v2999 = vsel %vm633, %v2994, %v2998
      %v3000 = vshrl.u32 %v485, 16
      %v3002 = vrot.slane %v3000, 4
      %v3003 = vor.u32 %v3002, %v2998
      %v3004 = vrot.slane %v3003, 4
      %v3006 = vshll.u32 %v486, 16
      %v3008 = vrot.slane %v3006, 5
      %v3009 = vsel %vm633, %v3004, %v3008
      %v3011 = vshrl.u32 %v487, 16
      %v3013 = vrot.slane %v3011, 4
      %v3014 = vshll.u32 %v487, 16
      %v3016 = vrot.slane %v3014, 5
      %v3017 = vor.u32 %v3013, %v3016
      %v3018 = vrot.slane %v3017, 4
      %v3020 = vshll.u32 %v488, 16
      %v3022 = vrot.slane %v3020, 5
      %v3023 = vsel %vm633, %v3018, %v3022
      %v3024 = vshrl.u32 %v488, 16
      %v3026 = vrot.slane %v3024, 4
      %v3027 = vor.u32 %v3026, %v3022
      %v3028 = vrot.slane %v3027, 4
      %v3030 = vshll.u32 %v489, 16
      %v3032 = vrot.slane %v3030, 5
      %v3033 = vsel %vm633, %v3028, %v3032
      %v3035 = vshrl.u32 %v490, 16
      %v3037 = vrot.slane %v3035, 4
      %v3038 = vshll.u32 %v490, 16
      %v3040 = vrot.slane %v3038, 5
      %v3041 = vor.u32 %v3037, %v3040
      %v3042 = vrot.slane %v3041, 4
      %v3044 = vshll.u32 %v491, 16
      %v3046 = vrot.slane %v3044, 5
      %v3047 = vsel %vm633, %v3042, %v3046
      %v3048 = vshrl.u32 %v491, 16
      %v3050 = vrot.slane %v3048, 4
      %v3051 = vor.u32 %v3050, %v3046
      %v3052 = vrot.slane %v3051, 4
      %v3054 = vshll.u32 %v492, 16
      %v3056 = vrot.slane %v3054, 5
      %v3057 = vsel %vm633, %v3052, %v3056
      %v3059 = vshrl.u32 %v493, 16
      %v3061 = vrot.slane %v3059, 4
      %v3062 = vshll.u32 %v493, 16
      %v3064 = vrot.slane %v3062, 5
      %v3065 = vor.u32 %v3061, %v3064
      %v3066 = vrot.slane %v3065, 4
      %v3068 = vshll.u32 %v494, 16
      %v3070 = vrot.slane %v3068, 5
      %v3071 = vsel %vm633, %v3066, %v3070
      %v3072 = vshrl.u32 %v494, 16
      %v3074 = vrot.slane %v3072, 4
      %v3075 = vor.u32 %v3074, %v3070
      %v3076 = vrot.slane %v3075, 4
      %v3078 = vshll.u32 %v495, 16
      %v3080 = vrot.slane %v3078, 5
      %v3081 = vsel %vm633, %v3076, %v3080
      %v3083 = vshrl.u32 %v496, 16
      %v3085 = vrot.slane %v3083, 4
      %v3086 = vshll.u32 %v496, 16
      %v3088 = vrot.slane %v3086, 5
      %v3089 = vor.u32 %v3085, %v3088
      %v3090 = vrot.slane %v3089, 4
      %v3092 = vshll.u32 %v497, 16
      %v3094 = vrot.slane %v3092, 5
      %v3095 = vsel %vm633, %v3090, %v3094
      %v3096 = vshrl.u32 %v497, 16
      %v3098 = vrot.slane %v3096, 4
      %v3099 = vor.u32 %v3098, %v3094
      %v3100 = vrot.slane %v3099, 4
      %v3102 = vshll.u32 %v498, 16
      %v3104 = vrot.slane %v3102, 5
      %v3105 = vsel %vm633, %v3100, %v3104
      %v3107 = vshrl.u32 %v499, 16
      %v3109 = vrot.slane %v3107, 4
      %v3110 = vshll.u32 %v499, 16
      %v3112 = vrot.slane %v3110, 5
      %v3113 = vor.u32 %v3109, %v3112
      %v3114 = vrot.slane %v3113, 4
      %v3116 = vshll.u32 %v500, 16
      %v3118 = vrot.slane %v3116, 5
      %v3119 = vsel %vm633, %v3114, %v3118
      %v3120 = vshrl.u32 %v500, 16
      %v3122 = vrot.slane %v3120, 4
      %v3123 = vor.u32 %v3122, %v3118
      %v3124 = vrot.slane %v3123, 4
      %v3126 = vshll.u32 %v501, 16
      %v3128 = vrot.slane %v3126, 5
      %v3129 = vsel %vm633, %v3124, %v3128
      %v3131 = vshrl.u32 %v502, 16
      %v3133 = vrot.slane %v3131, 4
      %v3134 = vshll.u32 %v502, 16
      %v3136 = vrot.slane %v3134, 5
      %v3137 = vor.u32 %v3133, %v3136
      %v3138 = vrot.slane %v3137, 4
      %v3140 = vshll.u32 %v503, 16
      %v3142 = vrot.slane %v3140, 5
      %v3143 = vsel %vm633, %v3138, %v3142
      %v3144 = vshrl.u32 %v503, 16
      %v3146 = vrot.slane %v3144, 4
      %v3147 = vor.u32 %v3146, %v3142
      %v3148 = vrot.slane %v3147, 4
      %v3150 = vshll.u32 %v504, 16
      %v3152 = vrot.slane %v3150, 5
      %v3153 = vsel %vm633, %v3148, %v3152
      %v3155 = vshrl.u32 %v505, 16
      %v3157 = vrot.slane %v3155, 4
      %v3158 = vshll.u32 %v505, 16
      %v3160 = vrot.slane %v3158, 5
      %v3161 = vor.u32 %v3157, %v3160
      %v3162 = vrot.slane %v3161, 4
      %v3164 = vshll.u32 %v506, 16
      %v3166 = vrot.slane %v3164, 5
      %v3167 = vsel %vm633, %v3162, %v3166
      %v3168 = vshrl.u32 %v506, 16
      %v3170 = vrot.slane %v3168, 4
      %v3171 = vor.u32 %v3170, %v3166
      %v3172 = vrot.slane %v3171, 4
      %v3174 = vshll.u32 %v507, 16
      %v3176 = vrot.slane %v3174, 5
      %v3177 = vsel %vm633, %v3172, %v3176
      %v3179 = vshrl.u32 %v508, 16
      %v3181 = vrot.slane %v3179, 4
      %v3182 = vshll.u32 %v508, 16
      %v3184 = vrot.slane %v3182, 5
      %v3185 = vor.u32 %v3181, %v3184
      %v3186 = vrot.slane %v3185, 4
      %v3188 = vshll.u32 %v509, 16
      %v3190 = vrot.slane %v3188, 5
      %v3191 = vsel %vm633, %v3186, %v3190
      %v3192 = vshrl.u32 %v509, 16
      %v3194 = vrot.slane %v3192, 4
      %v3195 = vor.u32 %v3194, %v3190
      %v3196 = vrot.slane %v3195, 4
      %v3198 = vshll.u32 %v510, 16
      %v3200 = vrot.slane %v3198, 5
      %v3201 = vsel %vm633, %v3196, %v3200
      %v3203 = vshrl.u32 %v511, 16
      %v3205 = vrot.slane %v3203, 4
      %v3206 = vshll.u32 %v511, 16
      %v3208 = vrot.slane %v3206, 5
      %v3209 = vor.u32 %v3205, %v3208
      %v3210 = vrot.slane %v3209, 4
      %v3212 = vshll.u32 %v512, 16
      %v3214 = vrot.slane %v3212, 5
      %v3215 = vsel %vm633, %v3210, %v3214
      %v3216 = vshrl.u32 %v512, 16
      %v3218 = vrot.slane %v3216, 4
      %v3219 = vor.u32 %v3218, %v3214
      %v3220 = vrot.slane %v3219, 4
      %v3222 = vshll.u32 %v513, 16
      %v3224 = vrot.slane %v3222, 5
      %v3225 = vsel %vm633, %v3220, %v3224
      %v3227 = vshrl.u32 %v514, 16
      %v3229 = vrot.slane %v3227, 4
      %v3230 = vshll.u32 %v514, 16
      %v3232 = vrot.slane %v3230, 5
      %v3233 = vor.u32 %v3229, %v3232
      %v3234 = vrot.slane %v3233, 4
      %v3236 = vshll.u32 %v515, 16
      %v3238 = vrot.slane %v3236, 5
      %v3239 = vsel %vm633, %v3234, %v3238
      %v3240 = vshrl.u32 %v515, 16
      %v3242 = vrot.slane %v3240, 4
      %v3243 = vor.u32 %v3242, %v3238
      %v3244 = vrot.slane %v3243, 4
      %v3246 = vshll.u32 %v516, 16
      %v3248 = vrot.slane %v3246, 5
      %v3249 = vsel %vm633, %v3244, %v3248
      %v3251 = vshrl.u32 %v517, 16
      %v3253 = vrot.slane %v3251, 4
      %v3254 = vshll.u32 %v517, 16
      %v3256 = vrot.slane %v3254, 5
      %v3257 = vor.u32 %v3253, %v3256
      %v3258 = vrot.slane %v3257, 4
      %v3260 = vshll.u32 %v518, 16
      %v3262 = vrot.slane %v3260, 5
      %v3263 = vsel %vm633, %v3258, %v3262
      %v3264 = vshrl.u32 %v518, 16
      %v3266 = vrot.slane %v3264, 4
      %v3267 = vor.u32 %v3266, %v3262
      %v3268 = vrot.slane %v3267, 4
      %v3270 = vshll.u32 %v519, 16
      %v3272 = vrot.slane %v3270, 5
      %v3273 = vsel %vm633, %v3268, %v3272
      %v3275 = vshrl.u32 %v520, 16
      %v3277 = vrot.slane %v3275, 4
      %v3278 = vshll.u32 %v520, 16
      %v3280 = vrot.slane %v3278, 5
      %v3281 = vor.u32 %v3277, %v3280
      %v3282 = vrot.slane %v3281, 4
      %v3284 = vshll.u32 %v521, 16
      %v3286 = vrot.slane %v3284, 5
      %v3287 = vsel %vm633, %v3282, %v3286
      %v3288 = vshrl.u32 %v521, 16
      %v3290 = vrot.slane %v3288, 4
      %v3291 = vor.u32 %v3290, %v3286
      %v3292 = vrot.slane %v3291, 4
      %v3294 = vshll.u32 %v522, 16
      %v3296 = vrot.slane %v3294, 5
      %v3297 = vsel %vm633, %v3292, %v3296
      %v3299 = vshrl.u32 %v523, 16
      %v3301 = vrot.slane %v3299, 4
      %v3302 = vshll.u32 %v523, 16
      %v3304 = vrot.slane %v3302, 5
      %v3305 = vor.u32 %v3301, %v3304
      %v3306 = vrot.slane %v3305, 4
      %v3308 = vshll.u32 %v524, 16
      %v3310 = vrot.slane %v3308, 5
      %v3311 = vsel %vm633, %v3306, %v3310
      %v3312 = vshrl.u32 %v524, 16
      %v3314 = vrot.slane %v3312, 4
      %v3315 = vor.u32 %v3314, %v3310
      %v3316 = vrot.slane %v3315, 4
      %v3318 = vshll.u32 %v525, 16
      %v3320 = vrot.slane %v3318, 5
      %v3321 = vsel %vm633, %v3316, %v3320
      %v3323 = vshrl.u32 %v529, 16
      %v3325 = vrot.slane %v3323, 4
      %v3326 = vshll.u32 %v529, 16
      %v3328 = vrot.slane %v3326, 5
      %v3329 = vor.u32 %v3325, %v3328
      %v3330 = vrot.slane %v3329, 4
      %v3332 = vshll.u32 %v530, 16
      %v3334 = vrot.slane %v3332, 5
      %v3335 = vsel %vm633, %v3330, %v3334
      %v3336 = vshrl.u32 %v530, 16
      %v3338 = vrot.slane %v3336, 4
      %v3339 = vor.u32 %v3338, %v3334
      %v3340 = vrot.slane %v3339, 4
      %v3342 = vshll.u32 %v531, 16
      %v3344 = vrot.slane %v3342, 5
      %v3345 = vsel %vm633, %v3340, %v3344
      %v3347 = vshrl.u32 %v532, 16
      %v3349 = vrot.slane %v3347, 4
      %v3350 = vshll.u32 %v532, 16
      %v3352 = vrot.slane %v3350, 5
      %v3353 = vor.u32 %v3349, %v3352
      %v3354 = vrot.slane %v3353, 4
      %v3356 = vshll.u32 %v533, 16
      %v3358 = vrot.slane %v3356, 5
      %v3359 = vsel %vm633, %v3354, %v3358
      %v3360 = vshrl.u32 %v533, 16
      %v3362 = vrot.slane %v3360, 4
      %v3363 = vor.u32 %v3362, %v3358
      %v3364 = vrot.slane %v3363, 4
      %v3366 = vshll.u32 %v534, 16
      %v3368 = vrot.slane %v3366, 5
      %v3369 = vsel %vm633, %v3364, %v3368
      %v3371 = vshrl.u32 %v535, 16
      %v3373 = vrot.slane %v3371, 4
      %v3374 = vshll.u32 %v535, 16
      %v3376 = vrot.slane %v3374, 5
      %v3377 = vor.u32 %v3373, %v3376
      %v3378 = vrot.slane %v3377, 4
      %v3380 = vshll.u32 %v536, 16
      %v3382 = vrot.slane %v3380, 5
      %v3383 = vsel %vm633, %v3378, %v3382
      %v3384 = vshrl.u32 %v536, 16
      %v3386 = vrot.slane %v3384, 4
      %v3387 = vor.u32 %v3386, %v3382
      %v3388 = vrot.slane %v3387, 4
      %v3390 = vshll.u32 %v537, 16
      %v3392 = vrot.slane %v3390, 5
      %v3393 = vsel %vm633, %v3388, %v3392
      %v3395 = vshrl.u32 %v538, 16
      %v3397 = vrot.slane %v3395, 4
      %v3398 = vshll.u32 %v538, 16
      %v3400 = vrot.slane %v3398, 5
      %v3401 = vor.u32 %v3397, %v3400
      %v3402 = vrot.slane %v3401, 4
      %v3404 = vshll.u32 %v539, 16
      %v3406 = vrot.slane %v3404, 5
      %v3407 = vsel %vm633, %v3402, %v3406
      %v3408 = vshrl.u32 %v539, 16
      %v3410 = vrot.slane %v3408, 4
      %v3411 = vor.u32 %v3410, %v3406
      %v3412 = vrot.slane %v3411, 4
      %v3414 = vshll.u32 %v540, 16
      %v3416 = vrot.slane %v3414, 5
      %v3417 = vsel %vm633, %v3412, %v3416
      %v3419 = vshrl.u32 %v541, 16
      %v3421 = vrot.slane %v3419, 4
      %v3422 = vshll.u32 %v541, 16
      %v3424 = vrot.slane %v3422, 5
      %v3425 = vor.u32 %v3421, %v3424
      %v3426 = vrot.slane %v3425, 4
      %v3428 = vshll.u32 %v542, 16
      %v3430 = vrot.slane %v3428, 5
      %v3431 = vsel %vm633, %v3426, %v3430
      %v3432 = vshrl.u32 %v542, 16
      %v3434 = vrot.slane %v3432, 4
      %v3435 = vor.u32 %v3434, %v3430
      %v3436 = vrot.slane %v3435, 4
      %v3438 = vshll.u32 %v543, 16
      %v3440 = vrot.slane %v3438, 5
      %v3441 = vsel %vm633, %v3436, %v3440
      %v3443 = vshrl.u32 %v544, 16
      %v3445 = vrot.slane %v3443, 4
      %v3446 = vshll.u32 %v544, 16
      %v3448 = vrot.slane %v3446, 5
      %v3449 = vor.u32 %v3445, %v3448
      %v3450 = vrot.slane %v3449, 4
      %v3452 = vshll.u32 %v545, 16
      %v3454 = vrot.slane %v3452, 5
      %v3455 = vsel %vm633, %v3450, %v3454
      %v3456 = vshrl.u32 %v545, 16
      %v3458 = vrot.slane %v3456, 4
      %v3459 = vor.u32 %v3458, %v3454
      %v3460 = vrot.slane %v3459, 4
      %v3462 = vshll.u32 %v546, 16
      %v3464 = vrot.slane %v3462, 5
      %v3465 = vsel %vm633, %v3460, %v3464
      %v3467 = vshrl.u32 %v547, 16
      %v3469 = vrot.slane %v3467, 4
      %v3470 = vshll.u32 %v547, 16
      %v3472 = vrot.slane %v3470, 5
      %v3473 = vor.u32 %v3469, %v3472
      %v3474 = vrot.slane %v3473, 4
      %v3476 = vshll.u32 %v548, 16
      %v3478 = vrot.slane %v3476, 5
      %v3479 = vsel %vm633, %v3474, %v3478
      %v3480 = vshrl.u32 %v548, 16
      %v3482 = vrot.slane %v3480, 4
      %v3483 = vor.u32 %v3482, %v3478
      %v3484 = vrot.slane %v3483, 4
      %v3486 = vshll.u32 %v549, 16
      %v3488 = vrot.slane %v3486, 5
      %v3489 = vsel %vm633, %v3484, %v3488
      %v3491 = vshrl.u32 %v550, 16
      %v3493 = vrot.slane %v3491, 4
      %v3494 = vshll.u32 %v550, 16
      %v3496 = vrot.slane %v3494, 5
      %v3497 = vor.u32 %v3493, %v3496
      %v3498 = vrot.slane %v3497, 4
      %v3500 = vshll.u32 %v551, 16
      %v3502 = vrot.slane %v3500, 5
      %v3503 = vsel %vm633, %v3498, %v3502
      %v3504 = vshrl.u32 %v551, 16
      %v3506 = vrot.slane %v3504, 4
      %v3507 = vor.u32 %v3506, %v3502
      %v3508 = vrot.slane %v3507, 4
      %v3510 = vshll.u32 %v552, 16
      %v3512 = vrot.slane %v3510, 5
      %v3513 = vsel %vm633, %v3508, %v3512
      %v3515 = vshrl.u32 %v553, 16
      %v3517 = vrot.slane %v3515, 4
      %v3518 = vshll.u32 %v553, 16
      %v3520 = vrot.slane %v3518, 5
      %v3521 = vor.u32 %v3517, %v3520
      %v3522 = vrot.slane %v3521, 4
      %v3524 = vshll.u32 %v554, 16
      %v3526 = vrot.slane %v3524, 5
      %v3527 = vsel %vm633, %v3522, %v3526
      %v3528 = vshrl.u32 %v554, 16
      %v3530 = vrot.slane %v3528, 4
      %v3531 = vor.u32 %v3530, %v3526
      %v3532 = vrot.slane %v3531, 4
      %v3534 = vshll.u32 %v555, 16
      %v3536 = vrot.slane %v3534, 5
      %v3537 = vsel %vm633, %v3532, %v3536
      %v3539 = vshrl.u32 %v556, 16
      %v3541 = vrot.slane %v3539, 4
      %v3542 = vshll.u32 %v556, 16
      %v3544 = vrot.slane %v3542, 5
      %v3545 = vor.u32 %v3541, %v3544
      %v3546 = vrot.slane %v3545, 4
      %v3548 = vshll.u32 %v557, 16
      %v3550 = vrot.slane %v3548, 5
      %v3551 = vsel %vm633, %v3546, %v3550
      %v3552 = vshrl.u32 %v557, 16
      %v3554 = vrot.slane %v3552, 4
      %v3555 = vor.u32 %v3554, %v3550
      %v3556 = vrot.slane %v3555, 4
      %v3558 = vshll.u32 %v558, 16
      %v3560 = vrot.slane %v3558, 5
      %v3561 = vsel %vm633, %v3556, %v3560
      %v3563 = vshrl.u32 %v559, 16
      %v3565 = vrot.slane %v3563, 4
      %v3566 = vshll.u32 %v559, 16
      %v3568 = vrot.slane %v3566, 5
      %v3569 = vor.u32 %v3565, %v3568
      %v3570 = vrot.slane %v3569, 4
      %v3572 = vshll.u32 %v560, 16
      %v3574 = vrot.slane %v3572, 5
      %v3575 = vsel %vm633, %v3570, %v3574
      %v3576 = vshrl.u32 %v560, 16
      %v3578 = vrot.slane %v3576, 4
      %v3579 = vor.u32 %v3578, %v3574
      %v3580 = vrot.slane %v3579, 4
      %v3582 = vshll.u32 %v561, 16
      %v3584 = vrot.slane %v3582, 5
      %v3585 = vsel %vm633, %v3580, %v3584
      %v3587 = vshrl.u32 %v562, 16
      %v3589 = vrot.slane %v3587, 4
      %v3590 = vshll.u32 %v562, 16
      %v3592 = vrot.slane %v3590, 5
      %v3593 = vor.u32 %v3589, %v3592
      %v3594 = vrot.slane %v3593, 4
      %v3596 = vshll.u32 %v563, 16
      %v3598 = vrot.slane %v3596, 5
      %v3599 = vsel %vm633, %v3594, %v3598
      %v3600 = vshrl.u32 %v563, 16
      %v3602 = vrot.slane %v3600, 4
      %v3603 = vor.u32 %v3602, %v3598
      %v3604 = vrot.slane %v3603, 4
      %v3606 = vshll.u32 %v564, 16
      %v3608 = vrot.slane %v3606, 5
      %v3609 = vsel %vm633, %v3604, %v3608
      %v3611 = vshrl.u32 %v565, 16
      %v3613 = vrot.slane %v3611, 4
      %v3614 = vshll.u32 %v565, 16
      %v3616 = vrot.slane %v3614, 5
      %v3617 = vor.u32 %v3613, %v3616
      %v3618 = vrot.slane %v3617, 4
      %v3620 = vshll.u32 %v566, 16
      %v3622 = vrot.slane %v3620, 5
      %v3623 = vsel %vm633, %v3618, %v3622
      %v3624 = vshrl.u32 %v566, 16
      %v3626 = vrot.slane %v3624, 4
      %v3627 = vor.u32 %v3626, %v3622
      %v3628 = vrot.slane %v3627, 4
      %v3630 = vshll.u32 %v567, 16
      %v3632 = vrot.slane %v3630, 5
      %v3633 = vsel %vm633, %v3628, %v3632
      %v3635 = vshrl.u32 %v568, 16
      %v3637 = vrot.slane %v3635, 4
      %v3638 = vshll.u32 %v568, 16
      %v3640 = vrot.slane %v3638, 5
      %v3641 = vor.u32 %v3637, %v3640
      %v3642 = vrot.slane %v3641, 4
      %v3644 = vshll.u32 %v569, 16
      %v3646 = vrot.slane %v3644, 5
      %v3647 = vsel %vm633, %v3642, %v3646
      %v3648 = vshrl.u32 %v569, 16
      %v3650 = vrot.slane %v3648, 4
      %v3651 = vor.u32 %v3650, %v3646
      %v3652 = vrot.slane %v3651, 4
      %v3654 = vshll.u32 %v570, 16
      %v3656 = vrot.slane %v3654, 5
      %v3657 = vsel %vm633, %v3652, %v3656
      %v3659 = vshrl.u32 %v571, 16
      %v3661 = vrot.slane %v3659, 4
      %v3662 = vshll.u32 %v571, 16
      %v3664 = vrot.slane %v3662, 5
      %v3665 = vor.u32 %v3661, %v3664
      %v3666 = vrot.slane %v3665, 4
      %v3668 = vshll.u32 %v572, 16
      %v3670 = vrot.slane %v3668, 5
      %v3671 = vsel %vm633, %v3666, %v3670
      %v3672 = vshrl.u32 %v572, 16
      %v3674 = vrot.slane %v3672, 4
      %v3675 = vor.u32 %v3674, %v3670
      %v3676 = vrot.slane %v3675, 4
      %v3678 = vshll.u32 %v573, 16
      %v3680 = vrot.slane %v3678, 5
      %v3681 = vsel %vm633, %v3676, %v3680
      %v3683 = vshrl.u32 %v574, 16
      %v3685 = vrot.slane %v3683, 4
      %v3686 = vshll.u32 %v574, 16
      %v3688 = vrot.slane %v3686, 5
      %v3689 = vor.u32 %v3685, %v3688
      %v3690 = vrot.slane %v3689, 4
      %v3692 = vshll.u32 %v575, 16
      %v3694 = vrot.slane %v3692, 5
      %v3695 = vsel %vm633, %v3690, %v3694
      %v3696 = vshrl.u32 %v575, 16
      %v3698 = vrot.slane %v3696, 4
      %v3699 = vor.u32 %v3698, %v3694
      %v3700 = vrot.slane %v3699, 4
      %v3702 = vshll.u32 %v576, 16
      %v3704 = vrot.slane %v3702, 5
      %v3705 = vsel %vm633, %v3700, %v3704
      %v3707 = vshrl.u32 %v220, 16
      %v3709 = vrot.slane %v3707, 4
      %v3710 = vshll.u32 %v220, 16
      %v3712 = vrot.slane %v3710, 5
      %v3713 = vor.u32 %v3709, %v3712
      %v3714 = vrot.slane %v3713, 4
      %v3716 = vshll.u32 %v221, 16
      %v3718 = vrot.slane %v3716, 5
      %v3719 = vsel %vm633, %v3714, %v3718
      %v3720 = vshrl.u32 %v221, 16
      %v3722 = vrot.slane %v3720, 4
      %v3723 = vor.u32 %v3722, %v3718
      %v3724 = vrot.slane %v3723, 4
      %v3726 = vshll.u32 %v222, 16
      %v3728 = vrot.slane %v3726, 5
      %v3729 = vsel %vm633, %v3724, %v3728
      %v3731 = vshrl.u32 %v271, 16
      %v3733 = vrot.slane %v3731, 4
      %v3734 = vshll.u32 %v271, 16
      %v3736 = vrot.slane %v3734, 5
      %v3737 = vor.u32 %v3733, %v3736
      %v3738 = vrot.slane %v3737, 4
      %v3740 = vshll.u32 %v272, 16
      %v3742 = vrot.slane %v3740, 5
      %v3743 = vsel %vm633, %v3738, %v3742
      %v3744 = vshrl.u32 %v272, 16
      %v3746 = vrot.slane %v3744, 4
      %v3747 = vor.u32 %v3746, %v3742
      %v3748 = vrot.slane %v3747, 4
      %v3750 = vshll.u32 %v273, 16
      %v3752 = vrot.slane %v3750, 5
      %v3753 = vsel %vm633, %v3748, %v3752
      %v3755 = vshrl.u32 %v322, 16
      %v3757 = vrot.slane %v3755, 4
      %v3758 = vshll.u32 %v322, 16
      %v3760 = vrot.slane %v3758, 5
      %v3761 = vor.u32 %v3757, %v3760
      %v3762 = vrot.slane %v3761, 4
      %v3764 = vshll.u32 %v323, 16
      %v3766 = vrot.slane %v3764, 5
      %v3767 = vsel %vm633, %v3762, %v3766
      %v3768 = vshrl.u32 %v323, 16
      %v3770 = vrot.slane %v3768, 4
      %v3771 = vor.u32 %v3770, %v3766
      %v3772 = vrot.slane %v3771, 4
      %v3774 = vshll.u32 %v324, 16
      %v3776 = vrot.slane %v3774, 5
      %v3777 = vsel %vm633, %v3772, %v3776
      %v3779 = vshrl.u32 %v373, 16
      %v3781 = vrot.slane %v3779, 4
      %v3782 = vshll.u32 %v373, 16
      %v3784 = vrot.slane %v3782, 5
      %v3785 = vor.u32 %v3781, %v3784
      %v3786 = vrot.slane %v3785, 4
      %v3788 = vshll.u32 %v374, 16
      %v3790 = vrot.slane %v3788, 5
      %v3791 = vsel %vm633, %v3786, %v3790
      %v3792 = vshrl.u32 %v374, 16
      %v3794 = vrot.slane %v3792, 4
      %v3795 = vor.u32 %v3794, %v3790
      %v3796 = vrot.slane %v3795, 4
      %v3798 = vshll.u32 %v375, 16
      %v3800 = vrot.slane %v3798, 5
      %v3801 = vsel %vm633, %v3796, %v3800
      %v3803 = vshrl.u32 %v424, 16
      %v3805 = vrot.slane %v3803, 4
      %v3806 = vshll.u32 %v424, 16
      %v3808 = vrot.slane %v3806, 5
      %v3809 = vor.u32 %v3805, %v3808
      %v3810 = vrot.slane %v3809, 4
      %v3812 = vshll.u32 %v425, 16
      %v3814 = vrot.slane %v3812, 5
      %v3815 = vsel %vm633, %v3810, %v3814
      %v3816 = vshrl.u32 %v425, 16
      %v3818 = vrot.slane %v3816, 4
      %v3819 = vor.u32 %v3818, %v3814
      %v3820 = vrot.slane %v3819, 4
      %v3822 = vshll.u32 %v426, 16
      %v3824 = vrot.slane %v3822, 5
      %v3825 = vsel %vm633, %v3820, %v3824
      %v3827 = vshrl.u32 %v475, 16
      %v3829 = vrot.slane %v3827, 4
      %v3830 = vshll.u32 %v475, 16
      %v3832 = vrot.slane %v3830, 5
      %v3833 = vor.u32 %v3829, %v3832
      %v3834 = vrot.slane %v3833, 4
      %v3836 = vshll.u32 %v476, 16
      %v3838 = vrot.slane %v3836, 5
      %v3839 = vsel %vm633, %v3834, %v3838
      %v3840 = vshrl.u32 %v476, 16
      %v3842 = vrot.slane %v3840, 4
      %v3843 = vor.u32 %v3842, %v3838
      %v3844 = vrot.slane %v3843, 4
      %v3846 = vshll.u32 %v477, 16
      %v3848 = vrot.slane %v3846, 5
      %v3849 = vsel %vm633, %v3844, %v3848
      %v3851 = vshrl.u32 %v526, 16
      %v3853 = vrot.slane %v3851, 4
      %v3854 = vshll.u32 %v526, 16
      %v3856 = vrot.slane %v3854, 5
      %v3857 = vor.u32 %v3853, %v3856
      %v3858 = vrot.slane %v3857, 4
      %v3860 = vshll.u32 %v527, 16
      %v3862 = vrot.slane %v3860, 5
      %v3863 = vsel %vm633, %v3858, %v3862
      %v3864 = vshrl.u32 %v527, 16
      %v3866 = vrot.slane %v3864, 4
      %v3867 = vor.u32 %v3866, %v3862
      %v3868 = vrot.slane %v3867, 4
      %v3870 = vshll.u32 %v528, 16
      %v3872 = vrot.slane %v3870, 5
      %v3873 = vsel %vm633, %v3868, %v3872
      %v3875 = vshrl.u32 %v577, 16
      %v3877 = vrot.slane %v3875, 4
      %v3878 = vshll.u32 %v577, 16
      %v3880 = vrot.slane %v3878, 5
      %v3881 = vor.u32 %v3877, %v3880
      %v3882 = vrot.slane %v3881, 4
      %v3884 = vshll.u32 %v578, 16
      %v3886 = vrot.slane %v3884, 5
      %v3887 = vsel %vm633, %v3882, %v3886
      %v3888 = vshrl.u32 %v578, 16
      %v3890 = vrot.slane %v3888, 4
      %v3891 = vor.u32 %v3890, %v3886
      %v3892 = vrot.slane %v3891, 4
      %v3894 = vshll.u32 %v579, 16
      %v3896 = vrot.slane %v3894, 5
      %v3897 = vsel %vm633, %v3892, %v3896
      %v3899 = vshrl.u32 %v580, 16
      %v3901 = vrot.slane %v3899, 4
      %v3902 = vshll.u32 %v580, 16
      %v3904 = vrot.slane %v3902, 5
      %v3905 = vor.u32 %v3901, %v3904
      %v3906 = vrot.slane %v3905, 4
      %v3908 = vshll.u32 %v581, 16
      %v3910 = vrot.slane %v3908, 5
      %v3911 = vsel %vm633, %v3906, %v3910
      %v3912 = vshrl.u32 %v581, 16
      %v3914 = vrot.slane %v3912, 4
      %v3915 = vor.u32 %v3914, %v3910
      %v3916 = vrot.slane %v3915, 4
      %v3918 = vshll.u32 %v582, 16
      %v3920 = vrot.slane %v3918, 5
      %v3921 = vsel %vm633, %v3916, %v3920
      %v3923 = vshrl.u32 %v583, 16
      %v3925 = vrot.slane %v3923, 4
      %v3926 = vshll.u32 %v583, 16
      %v3928 = vrot.slane %v3926, 5
      %v3929 = vor.u32 %v3925, %v3928
      %v3930 = vrot.slane %v3929, 4
      %v3932 = vshll.u32 %v584, 16
      %v3934 = vrot.slane %v3932, 5
      %v3935 = vsel %vm633, %v3930, %v3934
      %v3936 = vshrl.u32 %v584, 16
      %v3938 = vrot.slane %v3936, 4
      %v3939 = vor.u32 %v3938, %v3934
      %v3940 = vrot.slane %v3939, 4
      %v3942 = vshll.u32 %v585, 16
      %v3944 = vrot.slane %v3942, 5
      %v3945 = vsel %vm633, %v3940, %v3944
      %v3947 = vshrl.u32 %v586, 16
      %v3949 = vrot.slane %v3947, 4
      %v3950 = vshll.u32 %v586, 16
      %v3952 = vrot.slane %v3950, 5
      %v3953 = vor.u32 %v3949, %v3952
      %v3954 = vrot.slane %v3953, 4
      %v3956 = vshll.u32 %v587, 16
      %v3958 = vrot.slane %v3956, 5
      %v3959 = vsel %vm633, %v3954, %v3958
      %v3960 = vshrl.u32 %v587, 16
      %v3962 = vrot.slane %v3960, 4
      %v3963 = vor.u32 %v3962, %v3958
      %v3964 = vrot.slane %v3963, 4
      %v3966 = vshll.u32 %v588, 16
      %v3968 = vrot.slane %v3966, 5
      %v3969 = vsel %vm633, %v3964, %v3968
      %v3971 = vshrl.u32 %v589, 16
      %v3973 = vrot.slane %v3971, 4
      %v3974 = vshll.u32 %v589, 16
      %v3976 = vrot.slane %v3974, 5
      %v3977 = vor.u32 %v3973, %v3976
      %v3978 = vrot.slane %v3977, 4
      %v3980 = vshll.u32 %v590, 16
      %v3982 = vrot.slane %v3980, 5
      %v3983 = vsel %vm633, %v3978, %v3982
      %v3984 = vshrl.u32 %v590, 16
      %v3986 = vrot.slane %v3984, 4
      %v3987 = vor.u32 %v3986, %v3982
      %v3988 = vrot.slane %v3987, 4
      %v3990 = vshll.u32 %v591, 16
      %v3992 = vrot.slane %v3990, 5
      %v3993 = vsel %vm633, %v3988, %v3992
      %v3995 = vshrl.u32 %v592, 16
      %v3997 = vrot.slane %v3995, 4
      %v3998 = vshll.u32 %v592, 16
      %v4000 = vrot.slane %v3998, 5
      %v4001 = vor.u32 %v3997, %v4000
      %v4002 = vrot.slane %v4001, 4
      %v4004 = vshll.u32 %v593, 16
      %v4006 = vrot.slane %v4004, 5
      %v4007 = vsel %vm633, %v4002, %v4006
      %v4008 = vshrl.u32 %v593, 16
      %v4010 = vrot.slane %v4008, 4
      %v4011 = vor.u32 %v4010, %v4006
      %v4012 = vrot.slane %v4011, 4
      %v4014 = vshll.u32 %v594, 16
      %v4016 = vrot.slane %v4014, 5
      %v4017 = vsel %vm633, %v4012, %v4016
      %v4019 = vshrl.u32 %v595, 16
      %v4021 = vrot.slane %v4019, 4
      %v4022 = vshll.u32 %v595, 16
      %v4024 = vrot.slane %v4022, 5
      %v4025 = vor.u32 %v4021, %v4024
      %v4026 = vrot.slane %v4025, 4
      %v4028 = vshll.u32 %v596, 16
      %v4030 = vrot.slane %v4028, 5
      %v4031 = vsel %vm633, %v4026, %v4030
      %v4032 = vshrl.u32 %v596, 16
      %v4034 = vrot.slane %v4032, 4
      %v4035 = vor.u32 %v4034, %v4030
      %v4036 = vrot.slane %v4035, 4
      %v4038 = vshll.u32 %v597, 16
      %v4040 = vrot.slane %v4038, 5
      %v4041 = vsel %vm633, %v4036, %v4040
      %v4043 = vshrl.u32 %v598, 16
      %v4045 = vrot.slane %v4043, 4
      %v4046 = vshll.u32 %v598, 16
      %v4048 = vrot.slane %v4046, 5
      %v4049 = vor.u32 %v4045, %v4048
      %v4050 = vrot.slane %v4049, 4
      %v4052 = vshll.u32 %v599, 16
      %v4054 = vrot.slane %v4052, 5
      %v4055 = vsel %vm633, %v4050, %v4054
      %v4056 = vshrl.u32 %v599, 16
      %v4058 = vrot.slane %v4056, 4
      %v4059 = vor.u32 %v4058, %v4054
      %v4060 = vrot.slane %v4059, 4
      %v4062 = vshll.u32 %v600, 16
      %v4064 = vrot.slane %v4062, 5
      %v4065 = vsel %vm633, %v4060, %v4064
      %v4067 = vshrl.u32 %v601, 16
      %v4069 = vrot.slane %v4067, 4
      %v4070 = vshll.u32 %v601, 16
      %v4072 = vrot.slane %v4070, 5
      %v4073 = vor.u32 %v4069, %v4072
      %v4074 = vrot.slane %v4073, 4
      %v4076 = vshll.u32 %v602, 16
      %v4078 = vrot.slane %v4076, 5
      %v4079 = vsel %vm633, %v4074, %v4078
      %v4080 = vshrl.u32 %v602, 16
      %v4082 = vrot.slane %v4080, 4
      %v4083 = vor.u32 %v4082, %v4078
      %v4084 = vrot.slane %v4083, 4
      %v4086 = vshll.u32 %v603, 16
      %v4088 = vrot.slane %v4086, 5
      %v4089 = vsel %vm633, %v4084, %v4088
      %v4091 = vshrl.u32 %v604, 16
      %v4093 = vrot.slane %v4091, 4
      %v4094 = vshll.u32 %v604, 16
      %v4096 = vrot.slane %v4094, 5
      %v4097 = vor.u32 %v4093, %v4096
      %v4098 = vrot.slane %v4097, 4
      %v4100 = vshll.u32 %v605, 16
      %v4102 = vrot.slane %v4100, 5
      %v4103 = vsel %vm633, %v4098, %v4102
      %v4104 = vshrl.u32 %v605, 16
      %v4106 = vrot.slane %v4104, 4
      %v4107 = vor.u32 %v4106, %v4102
      %v4108 = vrot.slane %v4107, 4
      %v4110 = vshll.u32 %v606, 16
      %v4112 = vrot.slane %v4110, 5
      %v4113 = vsel %vm633, %v4108, %v4112
      %v4115 = vshrl.u32 %v607, 16
      %v4117 = vrot.slane %v4115, 4
      %v4118 = vshll.u32 %v607, 16
      %v4120 = vrot.slane %v4118, 5
      %v4121 = vor.u32 %v4117, %v4120
      %v4122 = vrot.slane %v4121, 4
      %v4124 = vshll.u32 %v608, 16
      %v4126 = vrot.slane %v4124, 5
      %v4127 = vsel %vm633, %v4122, %v4126
      %v4128 = vshrl.u32 %v608, 16
      %v4130 = vrot.slane %v4128, 4
      %v4131 = vor.u32 %v4130, %v4126
      %v4132 = vrot.slane %v4131, 4
      %v4134 = vshll.u32 %v609, 16
      %v4136 = vrot.slane %v4134, 5
      %v4137 = vsel %vm633, %v4132, %v4136
      %v4139 = vshrl.u32 %v610, 16
      %v4141 = vrot.slane %v4139, 4
      %v4142 = vshll.u32 %v610, 16
      %v4144 = vrot.slane %v4142, 5
      %v4145 = vor.u32 %v4141, %v4144
      %v4146 = vrot.slane %v4145, 4
      %v4148 = vshll.u32 %v611, 16
      %v4150 = vrot.slane %v4148, 5
      %v4151 = vsel %vm633, %v4146, %v4150
      %v4152 = vshrl.u32 %v611, 16
      %v4154 = vrot.slane %v4152, 4
      %v4155 = vor.u32 %v4154, %v4150
      %v4156 = vrot.slane %v4155, 4
      %v4158 = vshll.u32 %v612, 16
      %v4160 = vrot.slane %v4158, 5
      %v4161 = vsel %vm633, %v4156, %v4160
      %v4163 = vshrl.u32 %v613, 16
      %v4165 = vrot.slane %v4163, 4
      %v4166 = vshll.u32 %v613, 16
      %v4168 = vrot.slane %v4166, 5
      %v4169 = vor.u32 %v4165, %v4168
      %v4170 = vrot.slane %v4169, 4
      %v4172 = vshll.u32 %v614, 16
      %v4174 = vrot.slane %v4172, 5
      %v4175 = vsel %vm633, %v4170, %v4174
      %v4176 = vshrl.u32 %v614, 16
      %v4178 = vrot.slane %v4176, 4
      %v4179 = vor.u32 %v4178, %v4174
      %v4180 = vrot.slane %v4179, 4
      %v4182 = vshll.u32 %v615, 16
      %v4184 = vrot.slane %v4182, 5
      %v4185 = vsel %vm633, %v4180, %v4184
      %v4187 = vshrl.u32 %v616, 16
      %v4189 = vrot.slane %v4187, 4
      %v4190 = vshll.u32 %v616, 16
      %v4192 = vrot.slane %v4190, 5
      %v4193 = vor.u32 %v4189, %v4192
      %v4194 = vrot.slane %v4193, 4
      %v4196 = vshll.u32 %v617, 16
      %v4198 = vrot.slane %v4196, 5
      %v4199 = vsel %vm633, %v4194, %v4198
      %v4200 = vshrl.u32 %v617, 16
      %v4202 = vrot.slane %v4200, 4
      %v4203 = vor.u32 %v4202, %v4198
      %v4204 = vrot.slane %v4203, 4
      %v4206 = vshll.u32 %v618, 16
      %v4208 = vrot.slane %v4206, 5
      %v4209 = vsel %vm633, %v4204, %v4208
      %v4211 = vshrl.u32 %v619, 16
      %v4213 = vrot.slane %v4211, 4
      %v4214 = vshll.u32 %v619, 16
      %v4216 = vrot.slane %v4214, 5
      %v4217 = vor.u32 %v4213, %v4216
      %v4218 = vrot.slane %v4217, 4
      %v4220 = vshll.u32 %v620, 16
      %v4222 = vrot.slane %v4220, 5
      %v4223 = vsel %vm633, %v4218, %v4222
      %v4224 = vshrl.u32 %v620, 16
      %v4226 = vrot.slane %v4224, 4
      %v4227 = vor.u32 %v4226, %v4222
      %v4228 = vrot.slane %v4227, 4
      %v4230 = vshll.u32 %v621, 16
      %v4232 = vrot.slane %v4230, 5
      %v4233 = vsel %vm633, %v4228, %v4232
      %v4235 = vshrl.u32 %v622, 16
      %v4237 = vrot.slane %v4235, 4
      %v4238 = vshll.u32 %v622, 16
      %v4240 = vrot.slane %v4238, 5
      %v4241 = vor.u32 %v4237, %v4240
      %v4242 = vrot.slane %v4241, 4
      %v4244 = vshll.u32 %v623, 16
      %v4246 = vrot.slane %v4244, 5
      %v4247 = vsel %vm633, %v4242, %v4246
      %v4248 = vshrl.u32 %v623, 16
      %v4250 = vrot.slane %v4248, 4
      %v4251 = vor.u32 %v4250, %v4246
      %v4252 = vrot.slane %v4251, 4
      %v4254 = vshll.u32 %v624, 16
      %v4256 = vrot.slane %v4254, 5
      %v4257 = vsel %vm633, %v4252, %v4256
      %v4259 = vshrl.u32 %v625, 16
      %v4261 = vrot.slane %v4259, 4
      %v4262 = vshll.u32 %v625, 16
      %v4264 = vrot.slane %v4262, 5
      %v4265 = vor.u32 %v4261, %v4264
      %v4266 = vrot.slane %v4265, 4
      %v4268 = vshll.u32 %v626, 16
      %v4270 = vrot.slane %v4268, 5
      %v4271 = vsel %vm633, %v4266, %v4270
      %v4272 = vshrl.u32 %v626, 16
      %v4274 = vrot.slane %v4272, 4
      %v4275 = vor.u32 %v4274, %v4270
      %v4276 = vrot.slane %v4275, 4
      %v4278 = vshll.u32 %v627, 16
      %v4280 = vrot.slane %v4278, 5
      %v4281 = vsel %vm633, %v4276, %v4280
      %v4283 = vshrl.u32 %v628, 16
      %v4285 = vrot.slane %v4283, 4
      %v4286 = vshll.u32 %v628, 16
      %v4288 = vrot.slane %v4286, 5
      %v4289 = vor.u32 %v4285, %v4288
      %v4290 = vrot.slane %v4289, 4
      %v4292 = vshll.u32 %v629, 16
      %v4294 = vrot.slane %v4292, 5
      %v4295 = vsel %vm633, %v4290, %v4294
      %v4296 = vshrl.u32 %v629, 16
      %v4298 = vrot.slane %v4296, 4
      %v4299 = vor.u32 %v4298, %v4294
      %v4300 = vrot.slane %v4299, 4
      %v4302 = vshll.u32 %v630, 16
      %v4304 = vrot.slane %v4302, 5
      %v4305 = vsel %vm633, %v4300, %v4304
      %v4562 = vunpack.c.l.b16 %v172
      %v4563 = vunpack.c.l.b16 %v173
      %v4564 = vunpack.c.l.b16 %v175
      %v4565 = vunpack.c.l.b16 %v176
      %v4566 = vunpack.c.l.b16 %v178
      %v4567 = vunpack.c.l.b16 %v179
      %v4568 = vunpack.c.l.b16 %v181
      %v4569 = vunpack.c.l.b16 %v182
      %v4570 = vunpack.c.l.b16 %v184
      %v4571 = vunpack.c.l.b16 %v185
      %v4572 = vunpack.c.l.b16 %v187
      %v4573 = vunpack.c.l.b16 %v188
      %v4574 = vunpack.c.l.b16 %v190
      %v4575 = vunpack.c.l.b16 %v191
      %v4576 = vunpack.c.l.b16 %v193
      %v4577 = vunpack.c.l.b16 %v194
      %v4578 = vunpack.c.l.b16 %v196
      %v4579 = vunpack.c.l.b16 %v197
      %v4580 = vunpack.c.l.b16 %v199
      %v4581 = vunpack.c.l.b16 %v200
      %v4582 = vunpack.c.l.b16 %v202
      %v4583 = vunpack.c.l.b16 %v203
      %v4584 = vunpack.c.l.b16 %v205
      %v4585 = vunpack.c.l.b16 %v206
      %v4586 = vunpack.c.l.b16 %v208
      %v4587 = vunpack.c.l.b16 %v209
      %v4588 = vunpack.c.l.b16 %v211
      %v4589 = vunpack.c.l.b16 %v212
      %v4590 = vunpack.c.l.b16 %v214
      %v4591 = vunpack.c.l.b16 %v215
      %v4592 = vunpack.c.l.b16 %v217
      %v4593 = vunpack.c.l.b16 %v218
      %v4594 = vunpack.c.l.b16 %v223
      %v4595 = vunpack.c.l.b16 %v224
      %v4596 = vunpack.c.l.b16 %v226
      %v4597 = vunpack.c.l.b16 %v227
      %v4598 = vunpack.c.l.b16 %v229
      %v4599 = vunpack.c.l.b16 %v230
      %v4600 = vunpack.c.l.b16 %v232
      %v4601 = vunpack.c.l.b16 %v233
      %v4602 = vunpack.c.l.b16 %v235
      %v4603 = vunpack.c.l.b16 %v236
      %v4604 = vunpack.c.l.b16 %v238
      %v4605 = vunpack.c.l.b16 %v239
      %v4606 = vunpack.c.l.b16 %v241
      %v4607 = vunpack.c.l.b16 %v242
      %v4608 = vunpack.c.l.b16 %v244
      %v4609 = vunpack.c.l.b16 %v245
      %v4610 = vunpack.c.l.b16 %v247
      %v4611 = vunpack.c.l.b16 %v248
      %v4612 = vunpack.c.l.b16 %v250
      %v4613 = vunpack.c.l.b16 %v251
      %v4614 = vunpack.c.l.b16 %v253
      %v4615 = vunpack.c.l.b16 %v254
      %v4616 = vunpack.c.l.b16 %v256
      %v4617 = vunpack.c.l.b16 %v257
      %v4618 = vunpack.c.l.b16 %v259
      %v4619 = vunpack.c.l.b16 %v260
      %v4620 = vunpack.c.l.b16 %v262
      %v4621 = vunpack.c.l.b16 %v263
      %v4622 = vunpack.c.l.b16 %v265
      %v4623 = vunpack.c.l.b16 %v266
      %v4624 = vunpack.c.l.b16 %v268
      %v4625 = vunpack.c.l.b16 %v269
      %v4626 = vunpack.c.l.b16 %v274
      %v4627 = vunpack.c.l.b16 %v275
      %v4628 = vunpack.c.l.b16 %v277
      %v4629 = vunpack.c.l.b16 %v278
      %v4630 = vunpack.c.l.b16 %v280
      %v4631 = vunpack.c.l.b16 %v281
      %v4632 = vunpack.c.l.b16 %v283
      %v4633 = vunpack.c.l.b16 %v284
      %v4634 = vunpack.c.l.b16 %v286
      %v4635 = vunpack.c.l.b16 %v287
      %v4636 = vunpack.c.l.b16 %v289
      %v4637 = vunpack.c.l.b16 %v290
      %v4638 = vunpack.c.l.b16 %v292
      %v4639 = vunpack.c.l.b16 %v293
      %v4640 = vunpack.c.l.b16 %v295
      %v4641 = vunpack.c.l.b16 %v296
      %v4642 = vunpack.c.l.b16 %v298
      %v4643 = vunpack.c.l.b16 %v299
      %v4644 = vunpack.c.l.b16 %v301
      %v4645 = vunpack.c.l.b16 %v302
      %v4646 = vunpack.c.l.b16 %v304
      %v4647 = vunpack.c.l.b16 %v305
      %v4648 = vunpack.c.l.b16 %v307
      %v4649 = vunpack.c.l.b16 %v308
      %v4650 = vunpack.c.l.b16 %v310
      %v4651 = vunpack.c.l.b16 %v311
      %v4652 = vunpack.c.l.b16 %v313
      %v4653 = vunpack.c.l.b16 %v314
      %v4654 = vunpack.c.l.b16 %v316
      %v4655 = vunpack.c.l.b16 %v317
      %v4656 = vunpack.c.l.b16 %v319
      %v4657 = vunpack.c.l.b16 %v320
      %v4658 = vunpack.c.l.b16 %v325
      %v4659 = vunpack.c.l.b16 %v326
      %v4660 = vunpack.c.l.b16 %v328
      %v4661 = vunpack.c.l.b16 %v329
      %v4662 = vunpack.c.l.b16 %v331
      %v4663 = vunpack.c.l.b16 %v332
      %v4664 = vunpack.c.l.b16 %v334
      %v4665 = vunpack.c.l.b16 %v335
      %v4666 = vunpack.c.l.b16 %v337
      %v4667 = vunpack.c.l.b16 %v338
      %v4668 = vunpack.c.l.b16 %v340
      %v4669 = vunpack.c.l.b16 %v341
      %v4670 = vunpack.c.l.b16 %v343
      %v4671 = vunpack.c.l.b16 %v344
      %v4672 = vunpack.c.l.b16 %v346
      %v4673 = vunpack.c.l.b16 %v347
      %v4674 = vunpack.c.l.b16 %v349
      %v4675 = vunpack.c.l.b16 %v350
      %v4676 = vunpack.c.l.b16 %v352
      %v4677 = vunpack.c.l.b16 %v353
      %v4678 = vunpack.c.l.b16 %v355
      %v4679 = vunpack.c.l.b16 %v356
      %v4680 = vunpack.c.l.b16 %v358
      %v4681 = vunpack.c.l.b16 %v359
      %v4682 = vunpack.c.l.b16 %v361
      %v4683 = vunpack.c.l.b16 %v362
      %v4684 = vunpack.c.l.b16 %v364
      %v4685 = vunpack.c.l.b16 %v365
      %v4686 = vunpack.c.l.b16 %v367
      %v4687 = vunpack.c.l.b16 %v368
      %v4688 = vunpack.c.l.b16 %v370
      %v4689 = vunpack.c.l.b16 %v371
      %v4690 = vunpack.c.l.b16 %v376
      %v4691 = vunpack.c.l.b16 %v377
      %v4692 = vunpack.c.l.b16 %v379
      %v4693 = vunpack.c.l.b16 %v380
      %v4694 = vunpack.c.l.b16 %v382
      %v4695 = vunpack.c.l.b16 %v383
      %v4696 = vunpack.c.l.b16 %v385
      %v4697 = vunpack.c.l.b16 %v386
      %v4698 = vunpack.c.l.b16 %v388
      %v4699 = vunpack.c.l.b16 %v389
      %v4700 = vunpack.c.l.b16 %v391
      %v4701 = vunpack.c.l.b16 %v392
      %v4702 = vunpack.c.l.b16 %v394
      %v4703 = vunpack.c.l.b16 %v395
      %v4704 = vunpack.c.l.b16 %v397
      %v4705 = vunpack.c.l.b16 %v398
      %v4706 = vunpack.c.l.b16 %v400
      %v4707 = vunpack.c.l.b16 %v401
      %v4708 = vunpack.c.l.b16 %v403
      %v4709 = vunpack.c.l.b16 %v404
      %v4710 = vunpack.c.l.b16 %v406
      %v4711 = vunpack.c.l.b16 %v407
      %v4712 = vunpack.c.l.b16 %v409
      %v4713 = vunpack.c.l.b16 %v410
      %v4714 = vunpack.c.l.b16 %v412
      %v4715 = vunpack.c.l.b16 %v413
      %v4716 = vunpack.c.l.b16 %v415
      %v4717 = vunpack.c.l.b16 %v416
      %v4718 = vunpack.c.l.b16 %v418
      %v4719 = vunpack.c.l.b16 %v419
      %v4720 = vunpack.c.l.b16 %v421
      %v4721 = vunpack.c.l.b16 %v422
      %v4722 = vunpack.c.l.b16 %v427
      %v4723 = vunpack.c.l.b16 %v428
      %v4724 = vunpack.c.l.b16 %v430
      %v4725 = vunpack.c.l.b16 %v431
      %v4726 = vunpack.c.l.b16 %v433
      %v4727 = vunpack.c.l.b16 %v434
      %v4728 = vunpack.c.l.b16 %v436
      %v4729 = vunpack.c.l.b16 %v437
      %v4730 = vunpack.c.l.b16 %v439
      %v4731 = vunpack.c.l.b16 %v440
      %v4732 = vunpack.c.l.b16 %v442
      %v4733 = vunpack.c.l.b16 %v443
      %v4734 = vunpack.c.l.b16 %v445
      %v4735 = vunpack.c.l.b16 %v446
      %v4736 = vunpack.c.l.b16 %v448
      %v4737 = vunpack.c.l.b16 %v449
      %v4738 = vunpack.c.l.b16 %v451
      %v4739 = vunpack.c.l.b16 %v452
      %v4740 = vunpack.c.l.b16 %v454
      %v4741 = vunpack.c.l.b16 %v455
      %v4742 = vunpack.c.l.b16 %v457
      %v4743 = vunpack.c.l.b16 %v458
      %v4744 = vunpack.c.l.b16 %v460
      %v4745 = vunpack.c.l.b16 %v461
      %v4746 = vunpack.c.l.b16 %v463
      %v4747 = vunpack.c.l.b16 %v464
      %v4748 = vunpack.c.l.b16 %v466
      %v4749 = vunpack.c.l.b16 %v467
      %v4750 = vunpack.c.l.b16 %v469
      %v4751 = vunpack.c.l.b16 %v470
      %v4752 = vunpack.c.l.b16 %v472
      %v4753 = vunpack.c.l.b16 %v473
      %v4754 = vunpack.c.l.b16 %v478
      %v4755 = vunpack.c.l.b16 %v479
      %v4756 = vunpack.c.l.b16 %v481
      %v4757 = vunpack.c.l.b16 %v482
      %v4758 = vunpack.c.l.b16 %v484
      %v4759 = vunpack.c.l.b16 %v485
      %v4760 = vunpack.c.l.b16 %v487
      %v4761 = vunpack.c.l.b16 %v488
      %v4762 = vunpack.c.l.b16 %v490
      %v4763 = vunpack.c.l.b16 %v491
      %v4764 = vunpack.c.l.b16 %v493
      %v4765 = vunpack.c.l.b16 %v494
      %v4766 = vunpack.c.l.b16 %v496
      %v4767 = vunpack.c.l.b16 %v497
      %v4768 = vunpack.c.l.b16 %v499
      %v4769 = vunpack.c.l.b16 %v500
      %v4770 = vunpack.c.l.b16 %v502
      %v4771 = vunpack.c.l.b16 %v503
      %v4772 = vunpack.c.l.b16 %v505
      %v4773 = vunpack.c.l.b16 %v506
      %v4774 = vunpack.c.l.b16 %v508
      %v4775 = vunpack.c.l.b16 %v509
      %v4776 = vunpack.c.l.b16 %v511
      %v4777 = vunpack.c.l.b16 %v512
      %v4778 = vunpack.c.l.b16 %v514
      %v4779 = vunpack.c.l.b16 %v515
      %v4780 = vunpack.c.l.b16 %v517
      %v4781 = vunpack.c.l.b16 %v518
      %v4782 = vunpack.c.l.b16 %v520
      %v4783 = vunpack.c.l.b16 %v521
      %v4784 = vunpack.c.l.b16 %v523
      %v4785 = vunpack.c.l.b16 %v524
      %v4786 = vunpack.c.l.b16 %v529
      %v4787 = vunpack.c.l.b16 %v530
      %v4788 = vunpack.c.l.b16 %v532
      %v4789 = vunpack.c.l.b16 %v533
      %v4790 = vunpack.c.l.b16 %v535
      %v4791 = vunpack.c.l.b16 %v536
      %v4792 = vunpack.c.l.b16 %v538
      %v4793 = vunpack.c.l.b16 %v539
      %v4794 = vunpack.c.l.b16 %v541
      %v4795 = vunpack.c.l.b16 %v542
      %v4796 = vunpack.c.l.b16 %v544
      %v4797 = vunpack.c.l.b16 %v545
      %v4798 = vunpack.c.l.b16 %v547
      %v4799 = vunpack.c.l.b16 %v548
      %v4800 = vunpack.c.l.b16 %v550
      %v4801 = vunpack.c.l.b16 %v551
      %v4802 = vunpack.c.l.b16 %v553
      %v4803 = vunpack.c.l.b16 %v554
      %v4804 = vunpack.c.l.b16 %v556
      %v4805 = vunpack.c.l.b16 %v557
      %v4806 = vunpack.c.l.b16 %v559
      %v4807 = vunpack.c.l.b16 %v560
      %v4808 = vunpack.c.l.b16 %v562
      %v4809 = vunpack.c.l.b16 %v563
      %v4810 = vunpack.c.l.b16 %v565
      %v4811 = vunpack.c.l.b16 %v566
      %v4812 = vunpack.c.l.b16 %v568
      %v4813 = vunpack.c.l.b16 %v569
      %v4814 = vunpack.c.l.b16 %v571
      %v4815 = vunpack.c.l.b16 %v572
      %v4816 = vunpack.c.l.b16 %v574
      %v4817 = vunpack.c.l.b16 %v575
      %v4818 = vpack.c.b16 %v4563, %v4562
      %v4819 = vpack.c.b16 %v4565, %v4564
      %v4820 = vpack.c.b16 %v4567, %v4566
      %v4821 = vpack.c.b16 %v4569, %v4568
      %v4822 = vpack.c.b16 %v4571, %v4570
      %v4823 = vpack.c.b16 %v4573, %v4572
      %v4824 = vpack.c.b16 %v4575, %v4574
      %v4825 = vpack.c.b16 %v4577, %v4576
      %v4826 = vpack.c.b16 %v4579, %v4578
      %v4827 = vpack.c.b16 %v4581, %v4580
      %v4828 = vpack.c.b16 %v4583, %v4582
      %v4829 = vpack.c.b16 %v4585, %v4584
      %v4830 = vpack.c.b16 %v4587, %v4586
      %v4831 = vpack.c.b16 %v4589, %v4588
      %v4832 = vpack.c.b16 %v4591, %v4590
      %v4833 = vpack.c.b16 %v4593, %v4592
      %v4834 = vpack.c.b16 %v4595, %v4594
      %v4835 = vpack.c.b16 %v4597, %v4596
      %v4836 = vpack.c.b16 %v4599, %v4598
      %v4837 = vpack.c.b16 %v4601, %v4600
      %v4838 = vpack.c.b16 %v4603, %v4602
      %v4839 = vpack.c.b16 %v4605, %v4604
      %v4840 = vpack.c.b16 %v4607, %v4606
      %v4841 = vpack.c.b16 %v4609, %v4608
      %v4842 = vpack.c.b16 %v4611, %v4610
      %v4843 = vpack.c.b16 %v4613, %v4612
      %v4844 = vpack.c.b16 %v4615, %v4614
      %v4845 = vpack.c.b16 %v4617, %v4616
      %v4846 = vpack.c.b16 %v4619, %v4618
      %v4847 = vpack.c.b16 %v4621, %v4620
      %v4848 = vpack.c.b16 %v4623, %v4622
      %v4849 = vpack.c.b16 %v4625, %v4624
      %v4850 = vpack.c.b16 %v4627, %v4626
      %v4851 = vpack.c.b16 %v4629, %v4628
      %v4852 = vpack.c.b16 %v4631, %v4630
      %v4853 = vpack.c.b16 %v4633, %v4632
      %v4854 = vpack.c.b16 %v4635, %v4634
      %v4855 = vpack.c.b16 %v4637, %v4636
      %v4856 = vpack.c.b16 %v4639, %v4638
      %v4857 = vpack.c.b16 %v4641, %v4640
      %v4858 = vpack.c.b16 %v4643, %v4642
      %v4859 = vpack.c.b16 %v4645, %v4644
      %v4860 = vpack.c.b16 %v4647, %v4646
      %v4861 = vpack.c.b16 %v4649, %v4648
      %v4862 = vpack.c.b16 %v4651, %v4650
      %v4863 = vpack.c.b16 %v4653, %v4652
      %v4864 = vpack.c.b16 %v4655, %v4654
      %v4865 = vpack.c.b16 %v4657, %v4656
      %v4866 = vpack.c.b16 %v4659, %v4658
      %v4867 = vpack.c.b16 %v4661, %v4660
      %v4868 = vpack.c.b16 %v4663, %v4662
      %v4869 = vpack.c.b16 %v4665, %v4664
      %v4870 = vpack.c.b16 %v4667, %v4666
      %v4871 = vpack.c.b16 %v4669, %v4668
      %v4872 = vpack.c.b16 %v4671, %v4670
      %v4873 = vpack.c.b16 %v4673, %v4672
      %v4874 = vpack.c.b16 %v4675, %v4674
      %v4875 = vpack.c.b16 %v4677, %v4676
      %v4876 = vpack.c.b16 %v4679, %v4678
      %v4877 = vpack.c.b16 %v4681, %v4680
      %v4878 = vpack.c.b16 %v4683, %v4682
      %v4879 = vpack.c.b16 %v4685, %v4684
      %v4880 = vpack.c.b16 %v4687, %v4686
      %v4881 = vpack.c.b16 %v4689, %v4688
      %v4882 = vpack.c.b16 %v4691, %v4690
      %v4883 = vpack.c.b16 %v4693, %v4692
      %v4884 = vpack.c.b16 %v4695, %v4694
      %v4885 = vpack.c.b16 %v4697, %v4696
      %v4886 = vpack.c.b16 %v4699, %v4698
      %v4887 = vpack.c.b16 %v4701, %v4700
      %v4888 = vpack.c.b16 %v4703, %v4702
      %v4889 = vpack.c.b16 %v4705, %v4704
      %v4890 = vpack.c.b16 %v4707, %v4706
      %v4891 = vpack.c.b16 %v4709, %v4708
      %v4892 = vpack.c.b16 %v4711, %v4710
      %v4893 = vpack.c.b16 %v4713, %v4712
      %v4894 = vpack.c.b16 %v4715, %v4714
      %v4895 = vpack.c.b16 %v4717, %v4716
      %v4896 = vpack.c.b16 %v4719, %v4718
      %v4897 = vpack.c.b16 %v4721, %v4720
      %v4898 = vpack.c.b16 %v4723, %v4722
      %v4899 = vpack.c.b16 %v4725, %v4724
      %v4900 = vpack.c.b16 %v4727, %v4726
      %v4901 = vpack.c.b16 %v4729, %v4728
      %v4902 = vpack.c.b16 %v4731, %v4730
      %v4903 = vpack.c.b16 %v4733, %v4732
      %v4904 = vpack.c.b16 %v4735, %v4734
      %v4905 = vpack.c.b16 %v4737, %v4736
      %v4906 = vpack.c.b16 %v4739, %v4738
      %v4907 = vpack.c.b16 %v4741, %v4740
      %v4908 = vpack.c.b16 %v4743, %v4742
      %v4909 = vpack.c.b16 %v4745, %v4744
      %v4910 = vpack.c.b16 %v4747, %v4746
      %v4911 = vpack.c.b16 %v4749, %v4748
      %v4912 = vpack.c.b16 %v4751, %v4750
      %v4913 = vpack.c.b16 %v4753, %v4752
      %v4914 = vpack.c.b16 %v4755, %v4754
      %v4915 = vpack.c.b16 %v4757, %v4756
      %v4916 = vpack.c.b16 %v4759, %v4758
      %v4917 = vpack.c.b16 %v4761, %v4760
      %v4918 = vpack.c.b16 %v4763, %v4762
      %v4919 = vpack.c.b16 %v4765, %v4764
      %v4920 = vpack.c.b16 %v4767, %v4766
      %v4921 = vpack.c.b16 %v4769, %v4768
      %v4922 = vpack.c.b16 %v4771, %v4770
      %v4923 = vpack.c.b16 %v4773, %v4772
      %v4924 = vpack.c.b16 %v4775, %v4774
      %v4925 = vpack.c.b16 %v4777, %v4776
      %v4926 = vpack.c.b16 %v4779, %v4778
      %v4927 = vpack.c.b16 %v4781, %v4780
      %v4928 = vpack.c.b16 %v4783, %v4782
      %v4929 = vpack.c.b16 %v4785, %v4784
      %v4930 = vpack.c.b16 %v4787, %v4786
      %v4931 = vpack.c.b16 %v4789, %v4788
      %v4932 = vpack.c.b16 %v4791, %v4790
      %v4933 = vpack.c.b16 %v4793, %v4792
      %v4934 = vpack.c.b16 %v4795, %v4794
      %v4935 = vpack.c.b16 %v4797, %v4796
      %v4936 = vpack.c.b16 %v4799, %v4798
      %v4937 = vpack.c.b16 %v4801, %v4800
      %v4938 = vpack.c.b16 %v4803, %v4802
      %v4939 = vpack.c.b16 %v4805, %v4804
      %v4940 = vpack.c.b16 %v4807, %v4806
      %v4941 = vpack.c.b16 %v4809, %v4808
      %v4942 = vpack.c.b16 %v4811, %v4810
      %v4943 = vpack.c.b16 %v4813, %v4812
      %v4944 = vpack.c.b16 %v4815, %v4814
      %v4945 = vpack.c.b16 %v4817, %v4816
      %v4946 = vunpack.c.l.b16 %v647
      %v4947 = vunpack.c.l.b16 %v657
      %v4948 = vunpack.c.l.b16 %v671
      %v4949 = vunpack.c.l.b16 %v681
      %v4950 = vunpack.c.l.b16 %v695
      %v4951 = vunpack.c.l.b16 %v705
      %v4952 = vunpack.c.l.b16 %v719
      %v4953 = vunpack.c.l.b16 %v729
      %v4954 = vunpack.c.l.b16 %v743
      %v4955 = vunpack.c.l.b16 %v753
      %v4956 = vunpack.c.l.b16 %v767
      %v4957 = vunpack.c.l.b16 %v777
      %v4958 = vunpack.c.l.b16 %v791
      %v4959 = vunpack.c.l.b16 %v801
      %v4960 = vunpack.c.l.b16 %v815
      %v4961 = vunpack.c.l.b16 %v825
      %v4962 = vunpack.c.l.b16 %v839
      %v4963 = vunpack.c.l.b16 %v849
      %v4964 = vunpack.c.l.b16 %v863
      %v4965 = vunpack.c.l.b16 %v873
      %v4966 = vunpack.c.l.b16 %v887
      %v4967 = vunpack.c.l.b16 %v897
      %v4968 = vunpack.c.l.b16 %v911
      %v4969 = vunpack.c.l.b16 %v921
      %v4970 = vunpack.c.l.b16 %v935
      %v4971 = vunpack.c.l.b16 %v945
      %v4972 = vunpack.c.l.b16 %v959
      %v4973 = vunpack.c.l.b16 %v969
      %v4974 = vunpack.c.l.b16 %v983
      %v4975 = vunpack.c.l.b16 %v993
      %v4976 = vunpack.c.l.b16 %v1007
      %v4977 = vunpack.c.l.b16 %v1017
      %v4978 = vunpack.c.l.b16 %v1031
      %v4979 = vunpack.c.l.b16 %v1041
      %v4980 = vunpack.c.l.b16 %v1055
      %v4981 = vunpack.c.l.b16 %v1065
      %v4982 = vunpack.c.l.b16 %v1079
      %v4983 = vunpack.c.l.b16 %v1089
      %v4984 = vunpack.c.l.b16 %v1103
      %v4985 = vunpack.c.l.b16 %v1113
      %v4986 = vunpack.c.l.b16 %v1127
      %v4987 = vunpack.c.l.b16 %v1137
      %v4988 = vunpack.c.l.b16 %v1151
      %v4989 = vunpack.c.l.b16 %v1161
      %v4990 = vunpack.c.l.b16 %v1175
      %v4991 = vunpack.c.l.b16 %v1185
      %v4992 = vunpack.c.l.b16 %v1199
      %v4993 = vunpack.c.l.b16 %v1209
      %v4994 = vunpack.c.l.b16 %v1223
      %v4995 = vunpack.c.l.b16 %v1233
      %v4996 = vunpack.c.l.b16 %v1247
      %v4997 = vunpack.c.l.b16 %v1257
      %v4998 = vunpack.c.l.b16 %v1271
      %v4999 = vunpack.c.l.b16 %v1281
      %v5000 = vunpack.c.l.b16 %v1295
      %v5001 = vunpack.c.l.b16 %v1305
      %v5002 = vunpack.c.l.b16 %v1319
      %v5003 = vunpack.c.l.b16 %v1329
      %v5004 = vunpack.c.l.b16 %v1343
      %v5005 = vunpack.c.l.b16 %v1353
      %v5006 = vunpack.c.l.b16 %v1367
      %v5007 = vunpack.c.l.b16 %v1377
      %v5008 = vunpack.c.l.b16 %v1391
      %v5009 = vunpack.c.l.b16 %v1401
      %v5010 = vunpack.c.l.b16 %v1415
      %v5011 = vunpack.c.l.b16 %v1425
      %v5012 = vunpack.c.l.b16 %v1439
      %v5013 = vunpack.c.l.b16 %v1449
      %v5014 = vunpack.c.l.b16 %v1463
      %v5015 = vunpack.c.l.b16 %v1473
      %v5016 = vunpack.c.l.b16 %v1487
      %v5017 = vunpack.c.l.b16 %v1497
      %v5018 = vunpack.c.l.b16 %v1511
      %v5019 = vunpack.c.l.b16 %v1521
      %v5020 = vunpack.c.l.b16 %v1535
      %v5021 = vunpack.c.l.b16 %v1545
      %v5022 = vunpack.c.l.b16 %v1559
      %v5023 = vunpack.c.l.b16 %v1569
      %v5024 = vunpack.c.l.b16 %v1583
      %v5025 = vunpack.c.l.b16 %v1593
      %v5026 = vunpack.c.l.b16 %v1607
      %v5027 = vunpack.c.l.b16 %v1617
      %v5028 = vunpack.c.l.b16 %v1631
      %v5029 = vunpack.c.l.b16 %v1641
      %v5030 = vunpack.c.l.b16 %v1655
      %v5031 = vunpack.c.l.b16 %v1665
      %v5032 = vunpack.c.l.b16 %v1679
      %v5033 = vunpack.c.l.b16 %v1689
      %v5034 = vunpack.c.l.b16 %v1703
      %v5035 = vunpack.c.l.b16 %v1713
      %v5036 = vunpack.c.l.b16 %v1727
      %v5037 = vunpack.c.l.b16 %v1737
      %v5038 = vunpack.c.l.b16 %v1751
      %v5039 = vunpack.c.l.b16 %v1761
      %v5040 = vunpack.c.l.b16 %v1775
      %v5041 = vunpack.c.l.b16 %v1785
      %v5042 = vunpack.c.l.b16 %v1799
      %v5043 = vunpack.c.l.b16 %v1809
      %v5044 = vunpack.c.l.b16 %v1823
      %v5045 = vunpack.c.l.b16 %v1833
      %v5046 = vunpack.c.l.b16 %v1847
      %v5047 = vunpack.c.l.b16 %v1857
      %v5048 = vunpack.c.l.b16 %v1871
      %v5049 = vunpack.c.l.b16 %v1881
      %v5050 = vunpack.c.l.b16 %v1895
      %v5051 = vunpack.c.l.b16 %v1905
      %v5052 = vunpack.c.l.b16 %v1919
      %v5053 = vunpack.c.l.b16 %v1929
      %v5054 = vunpack.c.l.b16 %v1943
      %v5055 = vunpack.c.l.b16 %v1953
      %v5056 = vunpack.c.l.b16 %v1967
      %v5057 = vunpack.c.l.b16 %v1977
      %v5058 = vunpack.c.l.b16 %v1991
      %v5059 = vunpack.c.l.b16 %v2001
      %v5060 = vunpack.c.l.b16 %v2015
      %v5061 = vunpack.c.l.b16 %v2025
      %v5062 = vunpack.c.l.b16 %v2039
      %v5063 = vunpack.c.l.b16 %v2049
      %v5064 = vunpack.c.l.b16 %v2063
      %v5065 = vunpack.c.l.b16 %v2073
      %v5066 = vunpack.c.l.b16 %v2087
      %v5067 = vunpack.c.l.b16 %v2097
      %v5068 = vunpack.c.l.b16 %v2111
      %v5069 = vunpack.c.l.b16 %v2121
      %v5070 = vunpack.c.l.b16 %v2135
      %v5071 = vunpack.c.l.b16 %v2145
      %v5072 = vunpack.c.l.b16 %v2159
      %v5073 = vunpack.c.l.b16 %v2169
      %v5074 = vunpack.c.l.b16 %v2183
      %v5075 = vunpack.c.l.b16 %v2193
      %v5076 = vunpack.c.l.b16 %v2207
      %v5077 = vunpack.c.l.b16 %v2217
      %v5078 = vunpack.c.l.b16 %v2231
      %v5079 = vunpack.c.l.b16 %v2241
      %v5080 = vunpack.c.l.b16 %v2255
      %v5081 = vunpack.c.l.b16 %v2265
      %v5082 = vunpack.c.l.b16 %v2279
      %v5083 = vunpack.c.l.b16 %v2289
      %v5084 = vunpack.c.l.b16 %v2303
      %v5085 = vunpack.c.l.b16 %v2313
      %v5086 = vunpack.c.l.b16 %v2327
      %v5087 = vunpack.c.l.b16 %v2337
      %v5088 = vunpack.c.l.b16 %v2351
      %v5089 = vunpack.c.l.b16 %v2361
      %v5090 = vunpack.c.l.b16 %v2375
      %v5091 = vunpack.c.l.b16 %v2385
      %v5092 = vunpack.c.l.b16 %v2399
      %v5093 = vunpack.c.l.b16 %v2409
      %v5094 = vunpack.c.l.b16 %v2423
      %v5095 = vunpack.c.l.b16 %v2433
      %v5096 = vunpack.c.l.b16 %v2447
      %v5097 = vunpack.c.l.b16 %v2457
      %v5098 = vunpack.c.l.b16 %v2471
      %v5099 = vunpack.c.l.b16 %v2481
      %v5100 = vunpack.c.l.b16 %v2495
      %v5101 = vunpack.c.l.b16 %v2505
      %v5102 = vunpack.c.l.b16 %v2519
      %v5103 = vunpack.c.l.b16 %v2529
      %v5104 = vunpack.c.l.b16 %v2543
      %v5105 = vunpack.c.l.b16 %v2553
      %v5106 = vunpack.c.l.b16 %v2567
      %v5107 = vunpack.c.l.b16 %v2577
      %v5108 = vunpack.c.l.b16 %v2591
      %v5109 = vunpack.c.l.b16 %v2601
      %v5110 = vunpack.c.l.b16 %v2615
      %v5111 = vunpack.c.l.b16 %v2625
      %v5112 = vunpack.c.l.b16 %v2639
      %v5113 = vunpack.c.l.b16 %v2649
      %v5114 = vunpack.c.l.b16 %v2663
      %v5115 = vunpack.c.l.b16 %v2673
      %v5116 = vunpack.c.l.b16 %v2687
      %v5117 = vunpack.c.l.b16 %v2697
      %v5118 = vunpack.c.l.b16 %v2711
      %v5119 = vunpack.c.l.b16 %v2721
      %v5120 = vunpack.c.l.b16 %v2735
      %v5121 = vunpack.c.l.b16 %v2745
      %v5122 = vunpack.c.l.b16 %v2759
      %v5123 = vunpack.c.l.b16 %v2769
      %v5124 = vunpack.c.l.b16 %v2783
      %v5125 = vunpack.c.l.b16 %v2793
      %v5126 = vunpack.c.l.b16 %v2807
      %v5127 = vunpack.c.l.b16 %v2817
      %v5128 = vunpack.c.l.b16 %v2831
      %v5129 = vunpack.c.l.b16 %v2841
      %v5130 = vunpack.c.l.b16 %v2855
      %v5131 = vunpack.c.l.b16 %v2865
      %v5132 = vunpack.c.l.b16 %v2879
      %v5133 = vunpack.c.l.b16 %v2889
      %v5134 = vunpack.c.l.b16 %v2903
      %v5135 = vunpack.c.l.b16 %v2913
      %v5136 = vunpack.c.l.b16 %v2927
      %v5137 = vunpack.c.l.b16 %v2937
      %v5138 = vunpack.c.l.b16 %v2951
      %v5139 = vunpack.c.l.b16 %v2961
      %v5140 = vunpack.c.l.b16 %v2975
      %v5141 = vunpack.c.l.b16 %v2985
      %v5142 = vunpack.c.l.b16 %v2999
      %v5143 = vunpack.c.l.b16 %v3009
      %v5144 = vunpack.c.l.b16 %v3023
      %v5145 = vunpack.c.l.b16 %v3033
      %v5146 = vunpack.c.l.b16 %v3047
      %v5147 = vunpack.c.l.b16 %v3057
      %v5148 = vunpack.c.l.b16 %v3071
      %v5149 = vunpack.c.l.b16 %v3081
      %v5150 = vunpack.c.l.b16 %v3095
      %v5151 = vunpack.c.l.b16 %v3105
      %v5152 = vunpack.c.l.b16 %v3119
      %v5153 = vunpack.c.l.b16 %v3129
      %v5154 = vunpack.c.l.b16 %v3143
      %v5155 = vunpack.c.l.b16 %v3153
      %v5156 = vunpack.c.l.b16 %v3167
      %v5157 = vunpack.c.l.b16 %v3177
      %v5158 = vunpack.c.l.b16 %v3191
      %v5159 = vunpack.c.l.b16 %v3201
      %v5160 = vunpack.c.l.b16 %v3215
      %v5161 = vunpack.c.l.b16 %v3225
      %v5162 = vunpack.c.l.b16 %v3239
      %v5163 = vunpack.c.l.b16 %v3249
      %v5164 = vunpack.c.l.b16 %v3263
      %v5165 = vunpack.c.l.b16 %v3273
      %v5166 = vunpack.c.l.b16 %v3287
      %v5167 = vunpack.c.l.b16 %v3297
      %v5168 = vunpack.c.l.b16 %v3311
      %v5169 = vunpack.c.l.b16 %v3321
      %v5170 = vunpack.c.l.b16 %v3335
      %v5171 = vunpack.c.l.b16 %v3345
      %v5172 = vunpack.c.l.b16 %v3359
      %v5173 = vunpack.c.l.b16 %v3369
      %v5174 = vunpack.c.l.b16 %v3383
      %v5175 = vunpack.c.l.b16 %v3393
      %v5176 = vunpack.c.l.b16 %v3407
      %v5177 = vunpack.c.l.b16 %v3417
      %v5178 = vunpack.c.l.b16 %v3431
      %v5179 = vunpack.c.l.b16 %v3441
      %v5180 = vunpack.c.l.b16 %v3455
      %v5181 = vunpack.c.l.b16 %v3465
      %v5182 = vunpack.c.l.b16 %v3479
      %v5183 = vunpack.c.l.b16 %v3489
      %v5184 = vunpack.c.l.b16 %v3503
      %v5185 = vunpack.c.l.b16 %v3513
      %v5186 = vunpack.c.l.b16 %v3527
      %v5187 = vunpack.c.l.b16 %v3537
      %v5188 = vunpack.c.l.b16 %v3551
      %v5189 = vunpack.c.l.b16 %v3561
      %v5190 = vunpack.c.l.b16 %v3575
      %v5191 = vunpack.c.l.b16 %v3585
      %v5192 = vunpack.c.l.b16 %v3599
      %v5193 = vunpack.c.l.b16 %v3609
      %v5194 = vunpack.c.l.b16 %v3623
      %v5195 = vunpack.c.l.b16 %v3633
      %v5196 = vunpack.c.l.b16 %v3647
      %v5197 = vunpack.c.l.b16 %v3657
      %v5198 = vunpack.c.l.b16 %v3671
      %v5199 = vunpack.c.l.b16 %v3681
      %v5200 = vunpack.c.l.b16 %v3695
      %v5201 = vunpack.c.l.b16 %v3705
      %v5202 = vpack.c.b16 %v4947, %v4946
      %v5203 = vpack.c.b16 %v4949, %v4948
      %v5204 = vpack.c.b16 %v4951, %v4950
      %v5205 = vpack.c.b16 %v4953, %v4952
      %v5206 = vpack.c.b16 %v4955, %v4954
      %v5207 = vpack.c.b16 %v4957, %v4956
      %v5208 = vpack.c.b16 %v4959, %v4958
      %v5209 = vpack.c.b16 %v4961, %v4960
      %v5210 = vpack.c.b16 %v4963, %v4962
      %v5211 = vpack.c.b16 %v4965, %v4964
      %v5212 = vpack.c.b16 %v4967, %v4966
      %v5213 = vpack.c.b16 %v4969, %v4968
      %v5214 = vpack.c.b16 %v4971, %v4970
      %v5215 = vpack.c.b16 %v4973, %v4972
      %v5216 = vpack.c.b16 %v4975, %v4974
      %v5217 = vpack.c.b16 %v4977, %v4976
      %v5218 = vpack.c.b16 %v4979, %v4978
      %v5219 = vpack.c.b16 %v4981, %v4980
      %v5220 = vpack.c.b16 %v4983, %v4982
      %v5221 = vpack.c.b16 %v4985, %v4984
      %v5222 = vpack.c.b16 %v4987, %v4986
      %v5223 = vpack.c.b16 %v4989, %v4988
      %v5224 = vpack.c.b16 %v4991, %v4990
      %v5225 = vpack.c.b16 %v4993, %v4992
      %v5226 = vpack.c.b16 %v4995, %v4994
      %v5227 = vpack.c.b16 %v4997, %v4996
      %v5228 = vpack.c.b16 %v4999, %v4998
      %v5229 = vpack.c.b16 %v5001, %v5000
      %v5230 = vpack.c.b16 %v5003, %v5002
      %v5231 = vpack.c.b16 %v5005, %v5004
      %v5232 = vpack.c.b16 %v5007, %v5006
      %v5233 = vpack.c.b16 %v5009, %v5008
      %v5234 = vpack.c.b16 %v5011, %v5010
      %v5235 = vpack.c.b16 %v5013, %v5012
      %v5236 = vpack.c.b16 %v5015, %v5014
      %v5237 = vpack.c.b16 %v5017, %v5016
      %v5238 = vpack.c.b16 %v5019, %v5018
      %v5239 = vpack.c.b16 %v5021, %v5020
      %v5240 = vpack.c.b16 %v5023, %v5022
      %v5241 = vpack.c.b16 %v5025, %v5024
      %v5242 = vpack.c.b16 %v5027, %v5026
      %v5243 = vpack.c.b16 %v5029, %v5028
      %v5244 = vpack.c.b16 %v5031, %v5030
      %v5245 = vpack.c.b16 %v5033, %v5032
      %v5246 = vpack.c.b16 %v5035, %v5034
      %v5247 = vpack.c.b16 %v5037, %v5036
      %v5248 = vpack.c.b16 %v5039, %v5038
      %v5249 = vpack.c.b16 %v5041, %v5040
      %v5250 = vpack.c.b16 %v5043, %v5042
      %v5251 = vpack.c.b16 %v5045, %v5044
      %v5252 = vpack.c.b16 %v5047, %v5046
      %v5253 = vpack.c.b16 %v5049, %v5048
      %v5254 = vpack.c.b16 %v5051, %v5050
      %v5255 = vpack.c.b16 %v5053, %v5052
      %v5256 = vpack.c.b16 %v5055, %v5054
      %v5257 = vpack.c.b16 %v5057, %v5056
      %v5258 = vpack.c.b16 %v5059, %v5058
      %v5259 = vpack.c.b16 %v5061, %v5060
      %v5260 = vpack.c.b16 %v5063, %v5062
      %v5261 = vpack.c.b16 %v5065, %v5064
      %v5262 = vpack.c.b16 %v5067, %v5066
      %v5263 = vpack.c.b16 %v5069, %v5068
      %v5264 = vpack.c.b16 %v5071, %v5070
      %v5265 = vpack.c.b16 %v5073, %v5072
      %v5266 = vpack.c.b16 %v5075, %v5074
      %v5267 = vpack.c.b16 %v5077, %v5076
      %v5268 = vpack.c.b16 %v5079, %v5078
      %v5269 = vpack.c.b16 %v5081, %v5080
      %v5270 = vpack.c.b16 %v5083, %v5082
      %v5271 = vpack.c.b16 %v5085, %v5084
      %v5272 = vpack.c.b16 %v5087, %v5086
      %v5273 = vpack.c.b16 %v5089, %v5088
      %v5274 = vpack.c.b16 %v5091, %v5090
      %v5275 = vpack.c.b16 %v5093, %v5092
      %v5276 = vpack.c.b16 %v5095, %v5094
      %v5277 = vpack.c.b16 %v5097, %v5096
      %v5278 = vpack.c.b16 %v5099, %v5098
      %v5279 = vpack.c.b16 %v5101, %v5100
      %v5280 = vpack.c.b16 %v5103, %v5102
      %v5281 = vpack.c.b16 %v5105, %v5104
      %v5282 = vpack.c.b16 %v5107, %v5106
      %v5283 = vpack.c.b16 %v5109, %v5108
      %v5284 = vpack.c.b16 %v5111, %v5110
      %v5285 = vpack.c.b16 %v5113, %v5112
      %v5286 = vpack.c.b16 %v5115, %v5114
      %v5287 = vpack.c.b16 %v5117, %v5116
      %v5288 = vpack.c.b16 %v5119, %v5118
      %v5289 = vpack.c.b16 %v5121, %v5120
      %v5290 = vpack.c.b16 %v5123, %v5122
      %v5291 = vpack.c.b16 %v5125, %v5124
      %v5292 = vpack.c.b16 %v5127, %v5126
      %v5293 = vpack.c.b16 %v5129, %v5128
      %v5294 = vpack.c.b16 %v5131, %v5130
      %v5295 = vpack.c.b16 %v5133, %v5132
      %v5296 = vpack.c.b16 %v5135, %v5134
      %v5297 = vpack.c.b16 %v5137, %v5136
      %v5298 = vpack.c.b16 %v5139, %v5138
      %v5299 = vpack.c.b16 %v5141, %v5140
      %v5300 = vpack.c.b16 %v5143, %v5142
      %v5301 = vpack.c.b16 %v5145, %v5144
      %v5302 = vpack.c.b16 %v5147, %v5146
      %v5303 = vpack.c.b16 %v5149, %v5148
      %v5304 = vpack.c.b16 %v5151, %v5150
      %v5305 = vpack.c.b16 %v5153, %v5152
      %v5306 = vpack.c.b16 %v5155, %v5154
      %v5307 = vpack.c.b16 %v5157, %v5156
      %v5308 = vpack.c.b16 %v5159, %v5158
      %v5309 = vpack.c.b16 %v5161, %v5160
      %v5310 = vpack.c.b16 %v5163, %v5162
      %v5311 = vpack.c.b16 %v5165, %v5164
      %v5312 = vpack.c.b16 %v5167, %v5166
      %v5313 = vpack.c.b16 %v5169, %v5168
      %v5314 = vpack.c.b16 %v5171, %v5170
      %v5315 = vpack.c.b16 %v5173, %v5172
      %v5316 = vpack.c.b16 %v5175, %v5174
      %v5317 = vpack.c.b16 %v5177, %v5176
      %v5318 = vpack.c.b16 %v5179, %v5178
      %v5319 = vpack.c.b16 %v5181, %v5180
      %v5320 = vpack.c.b16 %v5183, %v5182
      %v5321 = vpack.c.b16 %v5185, %v5184
      %v5322 = vpack.c.b16 %v5187, %v5186
      %v5323 = vpack.c.b16 %v5189, %v5188
      %v5324 = vpack.c.b16 %v5191, %v5190
      %v5325 = vpack.c.b16 %v5193, %v5192
      %v5326 = vpack.c.b16 %v5195, %v5194
      %v5327 = vpack.c.b16 %v5197, %v5196
      %v5328 = vpack.c.b16 %v5199, %v5198
      %v5329 = vpack.c.b16 %v5201, %v5200
      %5330 = vrot.lane.b32.xlu0 %v5202, 8
      %v5331 = vpop.permute.xlu0 %5330
      %5332 = vrot.lane.b32.xlu0 %v5203, 8
      %v5333 = vpop.permute.xlu0 %5332
      %5334 = vrot.lane.b32.xlu0 %v5204, 8
      %v5335 = vpop.permute.xlu0 %5334
      %5336 = vrot.lane.b32.xlu0 %v5205, 8
      %v5337 = vpop.permute.xlu0 %5336
      %5338 = vrot.lane.b32.xlu0 %v5206, 8
      %v5339 = vpop.permute.xlu0 %5338
      %5340 = vrot.lane.b32.xlu0 %v5207, 8
      %v5341 = vpop.permute.xlu0 %5340
      %5342 = vrot.lane.b32.xlu0 %v5208, 8
      %v5343 = vpop.permute.xlu0 %5342
      %5344 = vrot.lane.b32.xlu0 %v5209, 8
      %v5345 = vpop.permute.xlu0 %5344
      %5346 = vrot.lane.b32.xlu0 %v5210, 8
      %v5347 = vpop.permute.xlu0 %5346
      %5348 = vrot.lane.b32.xlu0 %v5211, 8
      %v5349 = vpop.permute.xlu0 %5348
      %5350 = vrot.lane.b32.xlu0 %v5212, 8
      %v5351 = vpop.permute.xlu0 %5350
      %5352 = vrot.lane.b32.xlu0 %v5213, 8
      %v5353 = vpop.permute.xlu0 %5352
      %5354 = vrot.lane.b32.xlu0 %v5214, 8
      %v5355 = vpop.permute.xlu0 %5354
      %5356 = vrot.lane.b32.xlu0 %v5215, 8
      %v5357 = vpop.permute.xlu0 %5356
      %5358 = vrot.lane.b32.xlu0 %v5216, 8
      %v5359 = vpop.permute.xlu0 %5358
      %5360 = vrot.lane.b32.xlu0 %v5217, 8
      %v5361 = vpop.permute.xlu0 %5360
      %5362 = vrot.lane.b32.xlu0 %v5218, 8
      %v5363 = vpop.permute.xlu0 %5362
      %5364 = vrot.lane.b32.xlu0 %v5219, 8
      %v5365 = vpop.permute.xlu0 %5364
      %5366 = vrot.lane.b32.xlu0 %v5220, 8
      %v5367 = vpop.permute.xlu0 %5366
      %5368 = vrot.lane.b32.xlu0 %v5221, 8
      %v5369 = vpop.permute.xlu0 %5368
      %5370 = vrot.lane.b32.xlu0 %v5222, 8
      %v5371 = vpop.permute.xlu0 %5370
      %5372 = vrot.lane.b32.xlu0 %v5223, 8
      %v5373 = vpop.permute.xlu0 %5372
      %5374 = vrot.lane.b32.xlu0 %v5224, 8
      %v5375 = vpop.permute.xlu0 %5374
      %5376 = vrot.lane.b32.xlu0 %v5225, 8
      %v5377 = vpop.permute.xlu0 %5376
      %5378 = vrot.lane.b32.xlu0 %v5226, 8
      %v5379 = vpop.permute.xlu0 %5378
      %5380 = vrot.lane.b32.xlu0 %v5227, 8
      %v5381 = vpop.permute.xlu0 %5380
      %5382 = vrot.lane.b32.xlu0 %v5228, 8
      %v5383 = vpop.permute.xlu0 %5382
      %5384 = vrot.lane.b32.xlu0 %v5229, 8
      %v5385 = vpop.permute.xlu0 %5384
      %5386 = vrot.lane.b32.xlu0 %v5230, 8
      %v5387 = vpop.permute.xlu0 %5386
      %5388 = vrot.lane.b32.xlu0 %v5231, 8
      %v5389 = vpop.permute.xlu0 %5388
      %5390 = vrot.lane.b32.xlu0 %v5232, 8
      %v5391 = vpop.permute.xlu0 %5390
      %5392 = vrot.lane.b32.xlu0 %v5233, 8
      %v5393 = vpop.permute.xlu0 %5392
      %5394 = vrot.lane.b32.xlu0 %v5234, 8
      %v5395 = vpop.permute.xlu0 %5394
      %5396 = vrot.lane.b32.xlu0 %v5235, 8
      %v5397 = vpop.permute.xlu0 %5396
      %5398 = vrot.lane.b32.xlu0 %v5236, 8
      %v5399 = vpop.permute.xlu0 %5398
      %5400 = vrot.lane.b32.xlu0 %v5237, 8
      %v5401 = vpop.permute.xlu0 %5400
      %5402 = vrot.lane.b32.xlu0 %v5238, 8
      %v5403 = vpop.permute.xlu0 %5402
      %5404 = vrot.lane.b32.xlu0 %v5239, 8
      %v5405 = vpop.permute.xlu0 %5404
      %5406 = vrot.lane.b32.xlu0 %v5240, 8
      %v5407 = vpop.permute.xlu0 %5406
      %5408 = vrot.lane.b32.xlu0 %v5241, 8
      %v5409 = vpop.permute.xlu0 %5408
      %5410 = vrot.lane.b32.xlu0 %v5242, 8
      %v5411 = vpop.permute.xlu0 %5410
      %5412 = vrot.lane.b32.xlu0 %v5243, 8
      %v5413 = vpop.permute.xlu0 %5412
      %5414 = vrot.lane.b32.xlu0 %v5244, 8
      %v5415 = vpop.permute.xlu0 %5414
      %5416 = vrot.lane.b32.xlu0 %v5245, 8
      %v5417 = vpop.permute.xlu0 %5416
      %5418 = vrot.lane.b32.xlu0 %v5246, 8
      %v5419 = vpop.permute.xlu0 %5418
      %5420 = vrot.lane.b32.xlu0 %v5247, 8
      %v5421 = vpop.permute.xlu0 %5420
      %5422 = vrot.lane.b32.xlu0 %v5248, 8
      %v5423 = vpop.permute.xlu0 %5422
      %5424 = vrot.lane.b32.xlu0 %v5249, 8
      %v5425 = vpop.permute.xlu0 %5424
      %5426 = vrot.lane.b32.xlu0 %v5250, 8
      %v5427 = vpop.permute.xlu0 %5426
      %5428 = vrot.lane.b32.xlu0 %v5251, 8
      %v5429 = vpop.permute.xlu0 %5428
      %5430 = vrot.lane.b32.xlu0 %v5252, 8
      %v5431 = vpop.permute.xlu0 %5430
      %5432 = vrot.lane.b32.xlu0 %v5253, 8
      %v5433 = vpop.permute.xlu0 %5432
      %5434 = vrot.lane.b32.xlu0 %v5254, 8
      %v5435 = vpop.permute.xlu0 %5434
      %5436 = vrot.lane.b32.xlu0 %v5255, 8
      %v5437 = vpop.permute.xlu0 %5436
      %5438 = vrot.lane.b32.xlu0 %v5256, 8
      %v5439 = vpop.permute.xlu0 %5438
      %5440 = vrot.lane.b32.xlu0 %v5257, 8
      %v5441 = vpop.permute.xlu0 %5440
      %5442 = vrot.lane.b32.xlu0 %v5258, 8
      %v5443 = vpop.permute.xlu0 %5442
      %5444 = vrot.lane.b32.xlu0 %v5259, 8
      %v5445 = vpop.permute.xlu0 %5444
      %5446 = vrot.lane.b32.xlu0 %v5260, 8
      %v5447 = vpop.permute.xlu0 %5446
      %5448 = vrot.lane.b32.xlu0 %v5261, 8
      %v5449 = vpop.permute.xlu0 %5448
      %5450 = vrot.lane.b32.xlu0 %v5262, 8
      %v5451 = vpop.permute.xlu0 %5450
      %5452 = vrot.lane.b32.xlu0 %v5263, 8
      %v5453 = vpop.permute.xlu0 %5452
      %5454 = vrot.lane.b32.xlu0 %v5264, 8
      %v5455 = vpop.permute.xlu0 %5454
      %5456 = vrot.lane.b32.xlu0 %v5265, 8
      %v5457 = vpop.permute.xlu0 %5456
      %5458 = vrot.lane.b32.xlu0 %v5266, 8
      %v5459 = vpop.permute.xlu0 %5458
      %5460 = vrot.lane.b32.xlu0 %v5267, 8
      %v5461 = vpop.permute.xlu0 %5460
      %5462 = vrot.lane.b32.xlu0 %v5268, 8
      %v5463 = vpop.permute.xlu0 %5462
      %5464 = vrot.lane.b32.xlu0 %v5269, 8
      %v5465 = vpop.permute.xlu0 %5464
      %5466 = vrot.lane.b32.xlu0 %v5270, 8
      %v5467 = vpop.permute.xlu0 %5466
      %5468 = vrot.lane.b32.xlu0 %v5271, 8
      %v5469 = vpop.permute.xlu0 %5468
      %5470 = vrot.lane.b32.xlu0 %v5272, 8
      %v5471 = vpop.permute.xlu0 %5470
      %5472 = vrot.lane.b32.xlu0 %v5273, 8
      %v5473 = vpop.permute.xlu0 %5472
      %5474 = vrot.lane.b32.xlu0 %v5274, 8
      %v5475 = vpop.permute.xlu0 %5474
      %5476 = vrot.lane.b32.xlu0 %v5275, 8
      %v5477 = vpop.permute.xlu0 %5476
      %5478 = vrot.lane.b32.xlu0 %v5276, 8
      %v5479 = vpop.permute.xlu0 %5478
      %5480 = vrot.lane.b32.xlu0 %v5277, 8
      %v5481 = vpop.permute.xlu0 %5480
      %5482 = vrot.lane.b32.xlu0 %v5278, 8
      %v5483 = vpop.permute.xlu0 %5482
      %5484 = vrot.lane.b32.xlu0 %v5279, 8
      %v5485 = vpop.permute.xlu0 %5484
      %5486 = vrot.lane.b32.xlu0 %v5280, 8
      %v5487 = vpop.permute.xlu0 %5486
      %5488 = vrot.lane.b32.xlu0 %v5281, 8
      %v5489 = vpop.permute.xlu0 %5488
      %5490 = vrot.lane.b32.xlu0 %v5282, 8
      %v5491 = vpop.permute.xlu0 %5490
      %5492 = vrot.lane.b32.xlu0 %v5283, 8
      %v5493 = vpop.permute.xlu0 %5492
      %5494 = vrot.lane.b32.xlu0 %v5284, 8
      %v5495 = vpop.permute.xlu0 %5494
      %5496 = vrot.lane.b32.xlu0 %v5285, 8
      %v5497 = vpop.permute.xlu0 %5496
      %5498 = vrot.lane.b32.xlu0 %v5286, 8
      %v5499 = vpop.permute.xlu0 %5498
      %5500 = vrot.lane.b32.xlu0 %v5287, 8
      %v5501 = vpop.permute.xlu0 %5500
      %5502 = vrot.lane.b32.xlu0 %v5288, 8
      %v5503 = vpop.permute.xlu0 %5502
      %5504 = vrot.lane.b32.xlu0 %v5289, 8
      %v5505 = vpop.permute.xlu0 %5504
      %5506 = vrot.lane.b32.xlu0 %v5290, 8
      %v5507 = vpop.permute.xlu0 %5506
      %5508 = vrot.lane.b32.xlu0 %v5291, 8
      %v5509 = vpop.permute.xlu0 %5508
      %5510 = vrot.lane.b32.xlu0 %v5292, 8
      %v5511 = vpop.permute.xlu0 %5510
      %5512 = vrot.lane.b32.xlu0 %v5293, 8
      %v5513 = vpop.permute.xlu0 %5512
      %5514 = vrot.lane.b32.xlu0 %v5294, 8
      %v5515 = vpop.permute.xlu0 %5514
      %5516 = vrot.lane.b32.xlu0 %v5295, 8
      %v5517 = vpop.permute.xlu0 %5516
      %5518 = vrot.lane.b32.xlu0 %v5296, 8
      %v5519 = vpop.permute.xlu0 %5518
      %5520 = vrot.lane.b32.xlu0 %v5297, 8
      %v5521 = vpop.permute.xlu0 %5520
      %5522 = vrot.lane.b32.xlu0 %v5298, 8
      %v5523 = vpop.permute.xlu0 %5522
      %5524 = vrot.lane.b32.xlu0 %v5299, 8
      %v5525 = vpop.permute.xlu0 %5524
      %5526 = vrot.lane.b32.xlu0 %v5300, 8
      %v5527 = vpop.permute.xlu0 %5526
      %5528 = vrot.lane.b32.xlu0 %v5301, 8
      %v5529 = vpop.permute.xlu0 %5528
      %5530 = vrot.lane.b32.xlu0 %v5302, 8
      %v5531 = vpop.permute.xlu0 %5530
      %5532 = vrot.lane.b32.xlu0 %v5303, 8
      %v5533 = vpop.permute.xlu0 %5532
      %5534 = vrot.lane.b32.xlu0 %v5304, 8
      %v5535 = vpop.permute.xlu0 %5534
      %5536 = vrot.lane.b32.xlu0 %v5305, 8
      %v5537 = vpop.permute.xlu0 %5536
      %5538 = vrot.lane.b32.xlu0 %v5306, 8
      %v5539 = vpop.permute.xlu0 %5538
      %5540 = vrot.lane.b32.xlu0 %v5307, 8
      %v5541 = vpop.permute.xlu0 %5540
      %5542 = vrot.lane.b32.xlu0 %v5308, 8
      %v5543 = vpop.permute.xlu0 %5542
      %5544 = vrot.lane.b32.xlu0 %v5309, 8
      %v5545 = vpop.permute.xlu0 %5544
      %5546 = vrot.lane.b32.xlu0 %v5310, 8
      %v5547 = vpop.permute.xlu0 %5546
      %5548 = vrot.lane.b32.xlu0 %v5311, 8
      %v5549 = vpop.permute.xlu0 %5548
      %5550 = vrot.lane.b32.xlu0 %v5312, 8
      %v5551 = vpop.permute.xlu0 %5550
      %5552 = vrot.lane.b32.xlu0 %v5313, 8
      %v5553 = vpop.permute.xlu0 %5552
      %5554 = vrot.lane.b32.xlu0 %v5314, 8
      %v5555 = vpop.permute.xlu0 %5554
      %5556 = vrot.lane.b32.xlu0 %v5315, 8
      %v5557 = vpop.permute.xlu0 %5556
      %5558 = vrot.lane.b32.xlu0 %v5316, 8
      %v5559 = vpop.permute.xlu0 %5558
      %5560 = vrot.lane.b32.xlu0 %v5317, 8
      %v5561 = vpop.permute.xlu0 %5560
      %5562 = vrot.lane.b32.xlu0 %v5318, 8
      %v5563 = vpop.permute.xlu0 %5562
      %5564 = vrot.lane.b32.xlu0 %v5319, 8
      %v5565 = vpop.permute.xlu0 %5564
      %5566 = vrot.lane.b32.xlu0 %v5320, 8
      %v5567 = vpop.permute.xlu0 %5566
      %5568 = vrot.lane.b32.xlu0 %v5321, 8
      %v5569 = vpop.permute.xlu0 %5568
      %5570 = vrot.lane.b32.xlu0 %v5322, 8
      %v5571 = vpop.permute.xlu0 %5570
      %5572 = vrot.lane.b32.xlu0 %v5323, 8
      %v5573 = vpop.permute.xlu0 %5572
      %5574 = vrot.lane.b32.xlu0 %v5324, 8
      %v5575 = vpop.permute.xlu0 %5574
      %5576 = vrot.lane.b32.xlu0 %v5325, 8
      %v5577 = vpop.permute.xlu0 %5576
      %5578 = vrot.lane.b32.xlu0 %v5326, 8
      %v5579 = vpop.permute.xlu0 %5578
      %5580 = vrot.lane.b32.xlu0 %v5327, 8
      %v5581 = vpop.permute.xlu0 %5580
      %5582 = vrot.lane.b32.xlu0 %v5328, 8
      %v5583 = vpop.permute.xlu0 %5582
      %5584 = vrot.lane.b32.xlu0 %v5329, 8
      %v5585 = vpop.permute.xlu0 %5584
      %v5602 = vunpack.c.l.b16 %v220
      %v5603 = vunpack.c.l.b16 %v221
      %v5604 = vunpack.c.l.b16 %v271
      %v5605 = vunpack.c.l.b16 %v272
      %v5606 = vunpack.c.l.b16 %v322
      %v5607 = vunpack.c.l.b16 %v323
      %v5608 = vunpack.c.l.b16 %v373
      %v5609 = vunpack.c.l.b16 %v374
      %v5610 = vunpack.c.l.b16 %v424
      %v5611 = vunpack.c.l.b16 %v425
      %v5612 = vunpack.c.l.b16 %v475
      %v5613 = vunpack.c.l.b16 %v476
      %v5614 = vunpack.c.l.b16 %v526
      %v5615 = vunpack.c.l.b16 %v527
      %v5616 = vunpack.c.l.b16 %v577
      %v5617 = vunpack.c.l.b16 %v578
      %v5618 = vpack.c.b16 %v5603, %v5602
      %v5619 = vpack.c.b16 %v5605, %v5604
      %v5620 = vpack.c.b16 %v5607, %v5606
      %v5621 = vpack.c.b16 %v5609, %v5608
      %v5622 = vpack.c.b16 %v5611, %v5610
      %v5623 = vpack.c.b16 %v5613, %v5612
      %v5624 = vpack.c.b16 %v5615, %v5614
      %v5625 = vpack.c.b16 %v5617, %v5616
      %5626 = vrot.lane.b32.xlu0 %v4819, 16
      %v5627 = vpop.permute.xlu0 %5626
      %5628 = vrot.lane.b32.xlu0 %v4820, 16
      %v5629 = vpop.permute.xlu0 %5628
      %5630 = vrot.lane.b32.xlu0 %v4821, 16
      %v5631 = vpop.permute.xlu0 %5630
      %5632 = vrot.lane.b32.xlu0 %v4822, 16
      %v5633 = vpop.permute.xlu0 %5632
      %5634 = vrot.lane.b32.xlu0 %v4823, 16
      %v5635 = vpop.permute.xlu0 %5634
      %5636 = vrot.lane.b32.xlu0 %v4824, 16
      %v5637 = vpop.permute.xlu0 %5636
      %5638 = vrot.lane.b32.xlu0 %v4825, 16
      %v5639 = vpop.permute.xlu0 %5638
      %5640 = vrot.lane.b32.xlu0 %v4826, 16
      %v5641 = vpop.permute.xlu0 %5640
      %5642 = vrot.lane.b32.xlu0 %v4827, 16
      %v5643 = vpop.permute.xlu0 %5642
      %5644 = vrot.lane.b32.xlu0 %v4828, 16
      %v5645 = vpop.permute.xlu0 %5644
      %5646 = vrot.lane.b32.xlu0 %v4829, 16
      %v5647 = vpop.permute.xlu0 %5646
      %5648 = vrot.lane.b32.xlu0 %v4830, 16
      %v5649 = vpop.permute.xlu0 %5648
      %5650 = vrot.lane.b32.xlu0 %v4831, 16
      %v5651 = vpop.permute.xlu0 %5650
      %5652 = vrot.lane.b32.xlu0 %v4832, 16
      %v5653 = vpop.permute.xlu0 %5652
      %5654 = vrot.lane.b32.xlu0 %v4833, 16
      %v5655 = vpop.permute.xlu0 %5654
      %5656 = vrot.lane.b32.xlu0 %v5618, 16
      %v5657 = vpop.permute.xlu0 %5656
      %5658 = vrot.lane.b32.xlu0 %v4835, 16
      %v5659 = vpop.permute.xlu0 %5658
      %5660 = vrot.lane.b32.xlu0 %v4836, 16
      %v5661 = vpop.permute.xlu0 %5660
      %5662 = vrot.lane.b32.xlu0 %v4837, 16
      %v5663 = vpop.permute.xlu0 %5662
      %5664 = vrot.lane.b32.xlu0 %v4838, 16
      %v5665 = vpop.permute.xlu0 %5664
      %5666 = vrot.lane.b32.xlu0 %v4839, 16
      %v5667 = vpop.permute.xlu0 %5666
      %5668 = vrot.lane.b32.xlu0 %v4840, 16
      %v5669 = vpop.permute.xlu0 %5668
      %5670 = vrot.lane.b32.xlu0 %v4841, 16
      %v5671 = vpop.permute.xlu0 %5670
      %5672 = vrot.lane.b32.xlu0 %v4842, 16
      %v5673 = vpop.permute.xlu0 %5672
      %5674 = vrot.lane.b32.xlu0 %v4843, 16
      %v5675 = vpop.permute.xlu0 %5674
      %5676 = vrot.lane.b32.xlu0 %v4844, 16
      %v5677 = vpop.permute.xlu0 %5676
      %5678 = vrot.lane.b32.xlu0 %v4845, 16
      %v5679 = vpop.permute.xlu0 %5678
      %5680 = vrot.lane.b32.xlu0 %v4846, 16
      %v5681 = vpop.permute.xlu0 %5680
      %5682 = vrot.lane.b32.xlu0 %v4847, 16
      %v5683 = vpop.permute.xlu0 %5682
      %5684 = vrot.lane.b32.xlu0 %v4848, 16
      %v5685 = vpop.permute.xlu0 %5684
      %5686 = vrot.lane.b32.xlu0 %v4849, 16
      %v5687 = vpop.permute.xlu0 %5686
      %5688 = vrot.lane.b32.xlu0 %v5619, 16
      %v5689 = vpop.permute.xlu0 %5688
      %5690 = vrot.lane.b32.xlu0 %v4851, 16
      %v5691 = vpop.permute.xlu0 %5690
      %5692 = vrot.lane.b32.xlu0 %v4852, 16
      %v5693 = vpop.permute.xlu0 %5692
      %5694 = vrot.lane.b32.xlu0 %v4853, 16
      %v5695 = vpop.permute.xlu0 %5694
      %5696 = vrot.lane.b32.xlu0 %v4854, 16
      %v5697 = vpop.permute.xlu0 %5696
      %5698 = vrot.lane.b32.xlu0 %v4855, 16
      %v5699 = vpop.permute.xlu0 %5698
      %5700 = vrot.lane.b32.xlu0 %v4856, 16
      %v5701 = vpop.permute.xlu0 %5700
      %5702 = vrot.lane.b32.xlu0 %v4857, 16
      %v5703 = vpop.permute.xlu0 %5702
      %5704 = vrot.lane.b32.xlu0 %v4858, 16
      %v5705 = vpop.permute.xlu0 %5704
      %5706 = vrot.lane.b32.xlu0 %v4859, 16
      %v5707 = vpop.permute.xlu0 %5706
      %5708 = vrot.lane.b32.xlu0 %v4860, 16
      %v5709 = vpop.permute.xlu0 %5708
      %5710 = vrot.lane.b32.xlu0 %v4861, 16
      %v5711 = vpop.permute.xlu0 %5710
      %5712 = vrot.lane.b32.xlu0 %v4862, 16
      %v5713 = vpop.permute.xlu0 %5712
      %5714 = vrot.lane.b32.xlu0 %v4863, 16
      %v5715 = vpop.permute.xlu0 %5714
      %5716 = vrot.lane.b32.xlu0 %v4864, 16
      %v5717 = vpop.permute.xlu0 %5716
      %5718 = vrot.lane.b32.xlu0 %v4865, 16
      %v5719 = vpop.permute.xlu0 %5718
      %5720 = vrot.lane.b32.xlu0 %v5620, 16
      %v5721 = vpop.permute.xlu0 %5720
      %5722 = vrot.lane.b32.xlu0 %v4867, 16
      %v5723 = vpop.permute.xlu0 %5722
      %5724 = vrot.lane.b32.xlu0 %v4868, 16
      %v5725 = vpop.permute.xlu0 %5724
      %5726 = vrot.lane.b32.xlu0 %v4869, 16
      %v5727 = vpop.permute.xlu0 %5726
      %5728 = vrot.lane.b32.xlu0 %v4870, 16
      %v5729 = vpop.permute.xlu0 %5728
      %5730 = vrot.lane.b32.xlu0 %v4871, 16
      %v5731 = vpop.permute.xlu0 %5730
      %5732 = vrot.lane.b32.xlu0 %v4872, 16
      %v5733 = vpop.permute.xlu0 %5732
      %5734 = vrot.lane.b32.xlu0 %v4873, 16
      %v5735 = vpop.permute.xlu0 %5734
      %5736 = vrot.lane.b32.xlu0 %v4874, 16
      %v5737 = vpop.permute.xlu0 %5736
      %5738 = vrot.lane.b32.xlu0 %v4875, 16
      %v5739 = vpop.permute.xlu0 %5738
      %5740 = vrot.lane.b32.xlu0 %v4876, 16
      %v5741 = vpop.permute.xlu0 %5740
      %5742 = vrot.lane.b32.xlu0 %v4877, 16
      %v5743 = vpop.permute.xlu0 %5742
      %5744 = vrot.lane.b32.xlu0 %v4878, 16
      %v5745 = vpop.permute.xlu0 %5744
      %5746 = vrot.lane.b32.xlu0 %v4879, 16
      %v5747 = vpop.permute.xlu0 %5746
      %5748 = vrot.lane.b32.xlu0 %v4880, 16
      %v5749 = vpop.permute.xlu0 %5748
      %5750 = vrot.lane.b32.xlu0 %v4881, 16
      %v5751 = vpop.permute.xlu0 %5750
      %5752 = vrot.lane.b32.xlu0 %v5621, 16
      %v5753 = vpop.permute.xlu0 %5752
      %5754 = vrot.lane.b32.xlu0 %v4883, 16
      %v5755 = vpop.permute.xlu0 %5754
      %5756 = vrot.lane.b32.xlu0 %v4884, 16
      %v5757 = vpop.permute.xlu0 %5756
      %5758 = vrot.lane.b32.xlu0 %v4885, 16
      %v5759 = vpop.permute.xlu0 %5758
      %5760 = vrot.lane.b32.xlu0 %v4886, 16
      %v5761 = vpop.permute.xlu0 %5760
      %5762 = vrot.lane.b32.xlu0 %v4887, 16
      %v5763 = vpop.permute.xlu0 %5762
      %5764 = vrot.lane.b32.xlu0 %v4888, 16
      %v5765 = vpop.permute.xlu0 %5764
      %5766 = vrot.lane.b32.xlu0 %v4889, 16
      %v5767 = vpop.permute.xlu0 %5766
      %5768 = vrot.lane.b32.xlu0 %v4890, 16
      %v5769 = vpop.permute.xlu0 %5768
      %5770 = vrot.lane.b32.xlu0 %v4891, 16
      %v5771 = vpop.permute.xlu0 %5770
      %5772 = vrot.lane.b32.xlu0 %v4892, 16
      %v5773 = vpop.permute.xlu0 %5772
      %5774 = vrot.lane.b32.xlu0 %v4893, 16
      %v5775 = vpop.permute.xlu0 %5774
      %5776 = vrot.lane.b32.xlu0 %v4894, 16
      %v5777 = vpop.permute.xlu0 %5776
      %5778 = vrot.lane.b32.xlu0 %v4895, 16
      %v5779 = vpop.permute.xlu0 %5778
      %5780 = vrot.lane.b32.xlu0 %v4896, 16
      %v5781 = vpop.permute.xlu0 %5780
      %5782 = vrot.lane.b32.xlu0 %v4897, 16
      %v5783 = vpop.permute.xlu0 %5782
      %5784 = vrot.lane.b32.xlu0 %v5622, 16
      %v5785 = vpop.permute.xlu0 %5784
      %5786 = vrot.lane.b32.xlu0 %v4899, 16
      %v5787 = vpop.permute.xlu0 %5786
      %5788 = vrot.lane.b32.xlu0 %v4900, 16
      %v5789 = vpop.permute.xlu0 %5788
      %5790 = vrot.lane.b32.xlu0 %v4901, 16
      %v5791 = vpop.permute.xlu0 %5790
      %5792 = vrot.lane.b32.xlu0 %v4902, 16
      %v5793 = vpop.permute.xlu0 %5792
      %5794 = vrot.lane.b32.xlu0 %v4903, 16
      %v5795 = vpop.permute.xlu0 %5794
      %5796 = vrot.lane.b32.xlu0 %v4904, 16
      %v5797 = vpop.permute.xlu0 %5796
      %5798 = vrot.lane.b32.xlu0 %v4905, 16
      %v5799 = vpop.permute.xlu0 %5798
      %5800 = vrot.lane.b32.xlu0 %v4906, 16
      %v5801 = vpop.permute.xlu0 %5800
      %5802 = vrot.lane.b32.xlu0 %v4907, 16
      %v5803 = vpop.permute.xlu0 %5802
      %5804 = vrot.lane.b32.xlu0 %v4908, 16
      %v5805 = vpop.permute.xlu0 %5804
      %5806 = vrot.lane.b32.xlu0 %v4909, 16
      %v5807 = vpop.permute.xlu0 %5806
      %5808 = vrot.lane.b32.xlu0 %v4910, 16
      %v5809 = vpop.permute.xlu0 %5808
      %5810 = vrot.lane.b32.xlu0 %v4911, 16
      %v5811 = vpop.permute.xlu0 %5810
      %5812 = vrot.lane.b32.xlu0 %v4912, 16
      %v5813 = vpop.permute.xlu0 %5812
      %5814 = vrot.lane.b32.xlu0 %v4913, 16
      %v5815 = vpop.permute.xlu0 %5814
      %5816 = vrot.lane.b32.xlu0 %v5623, 16
      %v5817 = vpop.permute.xlu0 %5816
      %5818 = vrot.lane.b32.xlu0 %v4915, 16
      %v5819 = vpop.permute.xlu0 %5818
      %5820 = vrot.lane.b32.xlu0 %v4916, 16
      %v5821 = vpop.permute.xlu0 %5820
      %5822 = vrot.lane.b32.xlu0 %v4917, 16
      %v5823 = vpop.permute.xlu0 %5822
      %5824 = vrot.lane.b32.xlu0 %v4918, 16
      %v5825 = vpop.permute.xlu0 %5824
      %5826 = vrot.lane.b32.xlu0 %v4919, 16
      %v5827 = vpop.permute.xlu0 %5826
      %5828 = vrot.lane.b32.xlu0 %v4920, 16
      %v5829 = vpop.permute.xlu0 %5828
      %5830 = vrot.lane.b32.xlu0 %v4921, 16
      %v5831 = vpop.permute.xlu0 %5830
      %5832 = vrot.lane.b32.xlu0 %v4922, 16
      %v5833 = vpop.permute.xlu0 %5832
      %5834 = vrot.lane.b32.xlu0 %v4923, 16
      %v5835 = vpop.permute.xlu0 %5834
      %5836 = vrot.lane.b32.xlu0 %v4924, 16
      %v5837 = vpop.permute.xlu0 %5836
      %5838 = vrot.lane.b32.xlu0 %v4925, 16
      %v5839 = vpop.permute.xlu0 %5838
      %5840 = vrot.lane.b32.xlu0 %v4926, 16
      %v5841 = vpop.permute.xlu0 %5840
      %5842 = vrot.lane.b32.xlu0 %v4927, 16
      %v5843 = vpop.permute.xlu0 %5842
      %5844 = vrot.lane.b32.xlu0 %v4928, 16
      %v5845 = vpop.permute.xlu0 %5844
      %5846 = vrot.lane.b32.xlu0 %v4929, 16
      %v5847 = vpop.permute.xlu0 %5846
      %5848 = vrot.lane.b32.xlu0 %v5624, 16
      %v5849 = vpop.permute.xlu0 %5848
      %5850 = vrot.lane.b32.xlu0 %v4931, 16
      %v5851 = vpop.permute.xlu0 %5850
      %5852 = vrot.lane.b32.xlu0 %v4932, 16
      %v5853 = vpop.permute.xlu0 %5852
      %5854 = vrot.lane.b32.xlu0 %v4933, 16
      %v5855 = vpop.permute.xlu0 %5854
      %5856 = vrot.lane.b32.xlu0 %v4934, 16
      %v5857 = vpop.permute.xlu0 %5856
      %5858 = vrot.lane.b32.xlu0 %v4935, 16
      %v5859 = vpop.permute.xlu0 %5858
      %5860 = vrot.lane.b32.xlu0 %v4936, 16
      %v5861 = vpop.permute.xlu0 %5860
      %5862 = vrot.lane.b32.xlu0 %v4937, 16
      %v5863 = vpop.permute.xlu0 %5862
      %5864 = vrot.lane.b32.xlu0 %v4938, 16
      %v5865 = vpop.permute.xlu0 %5864
      %5866 = vrot.lane.b32.xlu0 %v4939, 16
      %v5867 = vpop.permute.xlu0 %5866
      %5868 = vrot.lane.b32.xlu0 %v4940, 16
      %v5869 = vpop.permute.xlu0 %5868
      %5870 = vrot.lane.b32.xlu0 %v4941, 16
      %v5871 = vpop.permute.xlu0 %5870
      %5872 = vrot.lane.b32.xlu0 %v4942, 16
      %v5873 = vpop.permute.xlu0 %5872
      %5874 = vrot.lane.b32.xlu0 %v4943, 16
      %v5875 = vpop.permute.xlu0 %5874
      %5876 = vrot.lane.b32.xlu0 %v4944, 16
      %v5877 = vpop.permute.xlu0 %5876
      %5878 = vrot.lane.b32.xlu0 %v4945, 16
      %v5879 = vpop.permute.xlu0 %5878
      %5880 = vrot.lane.b32.xlu0 %v5625, 16
      %v5881 = vpop.permute.xlu0 %5880
      %v5882 = vunpack.c.l.b16 %v3719
      %v5883 = vunpack.c.l.b16 %v3729
      %v5884 = vunpack.c.l.b16 %v3743
      %v5885 = vunpack.c.l.b16 %v3753
      %v5886 = vunpack.c.l.b16 %v3767
      %v5887 = vunpack.c.l.b16 %v3777
      %v5888 = vunpack.c.l.b16 %v3791
      %v5889 = vunpack.c.l.b16 %v3801
      %v5890 = vunpack.c.l.b16 %v3815
      %v5891 = vunpack.c.l.b16 %v3825
      %v5892 = vunpack.c.l.b16 %v3839
      %v5893 = vunpack.c.l.b16 %v3849
      %v5894 = vunpack.c.l.b16 %v3863
      %v5895 = vunpack.c.l.b16 %v3873
      %v5896 = vunpack.c.l.b16 %v3887
      %v5897 = vunpack.c.l.b16 %v3897
      %v5898 = vpack.c.b16 %v5883, %v5882
      %v5899 = vpack.c.b16 %v5885, %v5884
      %v5900 = vpack.c.b16 %v5887, %v5886
      %v5901 = vpack.c.b16 %v5889, %v5888
      %v5902 = vpack.c.b16 %v5891, %v5890
      %v5903 = vpack.c.b16 %v5893, %v5892
      %v5904 = vpack.c.b16 %v5895, %v5894
      %v5905 = vpack.c.b16 %v5897, %v5896
      %5906 = vrot.lane.b32.xlu0 %v5203, 24
      %v5907 = vpop.permute.xlu0 %5906
      %5908 = vrot.lane.b32.xlu0 %v5204, 24
      %v5909 = vpop.permute.xlu0 %5908
      %5910 = vrot.lane.b32.xlu0 %v5205, 24
      %v5911 = vpop.permute.xlu0 %5910
      %5912 = vrot.lane.b32.xlu0 %v5206, 24
      %v5913 = vpop.permute.xlu0 %5912
      %5914 = vrot.lane.b32.xlu0 %v5207, 24
      %v5915 = vpop.permute.xlu0 %5914
      %5916 = vrot.lane.b32.xlu0 %v5208, 24
      %v5917 = vpop.permute.xlu0 %5916
      %5918 = vrot.lane.b32.xlu0 %v5209, 24
      %v5919 = vpop.permute.xlu0 %5918
      %5920 = vrot.lane.b32.xlu0 %v5210, 24
      %v5921 = vpop.permute.xlu0 %5920
      %5922 = vrot.lane.b32.xlu0 %v5211, 24
      %v5923 = vpop.permute.xlu0 %5922
      %5924 = vrot.lane.b32.xlu0 %v5212, 24
      %v5925 = vpop.permute.xlu0 %5924
      %5926 = vrot.lane.b32.xlu0 %v5213, 24
      %v5927 = vpop.permute.xlu0 %5926
      %5928 = vrot.lane.b32.xlu0 %v5214, 24
      %v5929 = vpop.permute.xlu0 %5928
      %5930 = vrot.lane.b32.xlu0 %v5215, 24
      %v5931 = vpop.permute.xlu0 %5930
      %5932 = vrot.lane.b32.xlu0 %v5216, 24
      %v5933 = vpop.permute.xlu0 %5932
      %5934 = vrot.lane.b32.xlu0 %v5217, 24
      %v5935 = vpop.permute.xlu0 %5934
      %5936 = vrot.lane.b32.xlu0 %v5898, 24
      %v5937 = vpop.permute.xlu0 %5936
      %5938 = vrot.lane.b32.xlu0 %v5219, 24
      %v5939 = vpop.permute.xlu0 %5938
      %5940 = vrot.lane.b32.xlu0 %v5220, 24
      %v5941 = vpop.permute.xlu0 %5940
      %5942 = vrot.lane.b32.xlu0 %v5221, 24
      %v5943 = vpop.permute.xlu0 %5942
      %5944 = vrot.lane.b32.xlu0 %v5222, 24
      %v5945 = vpop.permute.xlu0 %5944
      %5946 = vrot.lane.b32.xlu0 %v5223, 24
      %v5947 = vpop.permute.xlu0 %5946
      %5948 = vrot.lane.b32.xlu0 %v5224, 24
      %v5949 = vpop.permute.xlu0 %5948
      %5950 = vrot.lane.b32.xlu0 %v5225, 24
      %v5951 = vpop.permute.xlu0 %5950
      %5952 = vrot.lane.b32.xlu0 %v5226, 24
      %v5953 = vpop.permute.xlu0 %5952
      %5954 = vrot.lane.b32.xlu0 %v5227, 24
      %v5955 = vpop.permute.xlu0 %5954
      %5956 = vrot.lane.b32.xlu0 %v5228, 24
      %v5957 = vpop.permute.xlu0 %5956
      %5958 = vrot.lane.b32.xlu0 %v5229, 24
      %v5959 = vpop.permute.xlu0 %5958
      %5960 = vrot.lane.b32.xlu0 %v5230, 24
      %v5961 = vpop.permute.xlu0 %5960
      %5962 = vrot.lane.b32.xlu0 %v5231, 24
      %v5963 = vpop.permute.xlu0 %5962
      %5964 = vrot.lane.b32.xlu0 %v5232, 24
      %v5965 = vpop.permute.xlu0 %5964
      %5966 = vrot.lane.b32.xlu0 %v5233, 24
      %v5967 = vpop.permute.xlu0 %5966
      %5968 = vrot.lane.b32.xlu0 %v5899, 24
      %v5969 = vpop.permute.xlu0 %5968
      %5970 = vrot.lane.b32.xlu0 %v5235, 24
      %v5971 = vpop.permute.xlu0 %5970
      %5972 = vrot.lane.b32.xlu0 %v5236, 24
      %v5973 = vpop.permute.xlu0 %5972
      %5974 = vrot.lane.b32.xlu0 %v5237, 24
      %v5975 = vpop.permute.xlu0 %5974
      %5976 = vrot.lane.b32.xlu0 %v5238, 24
      %v5977 = vpop.permute.xlu0 %5976
      %5978 = vrot.lane.b32.xlu0 %v5239, 24
      %v5979 = vpop.permute.xlu0 %5978
      %5980 = vrot.lane.b32.xlu0 %v5240, 24
      %v5981 = vpop.permute.xlu0 %5980
      %5982 = vrot.lane.b32.xlu0 %v5241, 24
      %v5983 = vpop.permute.xlu0 %5982
      %5984 = vrot.lane.b32.xlu0 %v5242, 24
      %v5985 = vpop.permute.xlu0 %5984
      %5986 = vrot.lane.b32.xlu0 %v5243, 24
      %v5987 = vpop.permute.xlu0 %5986
      %5988 = vrot.lane.b32.xlu0 %v5244, 24
      %v5989 = vpop.permute.xlu0 %5988
      %5990 = vrot.lane.b32.xlu0 %v5245, 24
      %v5991 = vpop.permute.xlu0 %5990
      %5992 = vrot.lane.b32.xlu0 %v5246, 24
      %v5993 = vpop.permute.xlu0 %5992
      %5994 = vrot.lane.b32.xlu0 %v5247, 24
      %v5995 = vpop.permute.xlu0 %5994
      %5996 = vrot.lane.b32.xlu0 %v5248, 24
      %v5997 = vpop.permute.xlu0 %5996
      %5998 = vrot.lane.b32.xlu0 %v5249, 24
      %v5999 = vpop.permute.xlu0 %5998
      %6000 = vrot.lane.b32.xlu0 %v5900, 24
      %v6001 = vpop.permute.xlu0 %6000
      %6002 = vrot.lane.b32.xlu0 %v5251, 24
      %v6003 = vpop.permute.xlu0 %6002
      %6004 = vrot.lane.b32.xlu0 %v5252, 24
      %v6005 = vpop.permute.xlu0 %6004
      %6006 = vrot.lane.b32.xlu0 %v5253, 24
      %v6007 = vpop.permute.xlu0 %6006
      %6008 = vrot.lane.b32.xlu0 %v5254, 24
      %v6009 = vpop.permute.xlu0 %6008
      %6010 = vrot.lane.b32.xlu0 %v5255, 24
      %v6011 = vpop.permute.xlu0 %6010
      %6012 = vrot.lane.b32.xlu0 %v5256, 24
      %v6013 = vpop.permute.xlu0 %6012
      %6014 = vrot.lane.b32.xlu0 %v5257, 24
      %v6015 = vpop.permute.xlu0 %6014
      %6016 = vrot.lane.b32.xlu0 %v5258, 24
      %v6017 = vpop.permute.xlu0 %6016
      %6018 = vrot.lane.b32.xlu0 %v5259, 24
      %v6019 = vpop.permute.xlu0 %6018
      %6020 = vrot.lane.b32.xlu0 %v5260, 24
      %v6021 = vpop.permute.xlu0 %6020
      %6022 = vrot.lane.b32.xlu0 %v5261, 24
      %v6023 = vpop.permute.xlu0 %6022
      %6024 = vrot.lane.b32.xlu0 %v5262, 24
      %v6025 = vpop.permute.xlu0 %6024
      %6026 = vrot.lane.b32.xlu0 %v5263, 24
      %v6027 = vpop.permute.xlu0 %6026
      %6028 = vrot.lane.b32.xlu0 %v5264, 24
      %v6029 = vpop.permute.xlu0 %6028
      %6030 = vrot.lane.b32.xlu0 %v5265, 24
      %v6031 = vpop.permute.xlu0 %6030
      %6032 = vrot.lane.b32.xlu0 %v5901, 24
      %v6033 = vpop.permute.xlu0 %6032
      %6034 = vrot.lane.b32.xlu0 %v5267, 24
      %v6035 = vpop.permute.xlu0 %6034
      %6036 = vrot.lane.b32.xlu0 %v5268, 24
      %v6037 = vpop.permute.xlu0 %6036
      %6038 = vrot.lane.b32.xlu0 %v5269, 24
      %v6039 = vpop.permute.xlu0 %6038
      %6040 = vrot.lane.b32.xlu0 %v5270, 24
      %v6041 = vpop.permute.xlu0 %6040
      %6042 = vrot.lane.b32.xlu0 %v5271, 24
      %v6043 = vpop.permute.xlu0 %6042
      %6044 = vrot.lane.b32.xlu0 %v5272, 24
      %v6045 = vpop.permute.xlu0 %6044
      %6046 = vrot.lane.b32.xlu0 %v5273, 24
      %v6047 = vpop.permute.xlu0 %6046
      %6048 = vrot.lane.b32.xlu0 %v5274, 24
      %v6049 = vpop.permute.xlu0 %6048
      %6050 = vrot.lane.b32.xlu0 %v5275, 24
      %v6051 = vpop.permute.xlu0 %6050
      %6052 = vrot.lane.b32.xlu0 %v5276, 24
      %v6053 = vpop.permute.xlu0 %6052
      %6054 = vrot.lane.b32.xlu0 %v5277, 24
      %v6055 = vpop.permute.xlu0 %6054
      %6056 = vrot.lane.b32.xlu0 %v5278, 24
      %v6057 = vpop.permute.xlu0 %6056
      %6058 = vrot.lane.b32.xlu0 %v5279, 24
      %v6059 = vpop.permute.xlu0 %6058
      %6060 = vrot.lane.b32.xlu0 %v5280, 24
      %v6061 = vpop.permute.xlu0 %6060
      %6062 = vrot.lane.b32.xlu0 %v5281, 24
      %v6063 = vpop.permute.xlu0 %6062
      %6064 = vrot.lane.b32.xlu0 %v5902, 24
      %v6065 = vpop.permute.xlu0 %6064
      %6066 = vrot.lane.b32.xlu0 %v5283, 24
      %v6067 = vpop.permute.xlu0 %6066
      %6068 = vrot.lane.b32.xlu0 %v5284, 24
      %v6069 = vpop.permute.xlu0 %6068
      %6070 = vrot.lane.b32.xlu0 %v5285, 24
      %v6071 = vpop.permute.xlu0 %6070
      %6072 = vrot.lane.b32.xlu0 %v5286, 24
      %v6073 = vpop.permute.xlu0 %6072
      %6074 = vrot.lane.b32.xlu0 %v5287, 24
      %v6075 = vpop.permute.xlu0 %6074
      %6076 = vrot.lane.b32.xlu0 %v5288, 24
      %v6077 = vpop.permute.xlu0 %6076
      %6078 = vrot.lane.b32.xlu0 %v5289, 24
      %v6079 = vpop.permute.xlu0 %6078
      %6080 = vrot.lane.b32.xlu0 %v5290, 24
      %v6081 = vpop.permute.xlu0 %6080
      %6082 = vrot.lane.b32.xlu0 %v5291, 24
      %v6083 = vpop.permute.xlu0 %6082
      %6084 = vrot.lane.b32.xlu0 %v5292, 24
      %v6085 = vpop.permute.xlu0 %6084
      %6086 = vrot.lane.b32.xlu0 %v5293, 24
      %v6087 = vpop.permute.xlu0 %6086
      %6088 = vrot.lane.b32.xlu0 %v5294, 24
      %v6089 = vpop.permute.xlu0 %6088
      %6090 = vrot.lane.b32.xlu0 %v5295, 24
      %v6091 = vpop.permute.xlu0 %6090
      %6092 = vrot.lane.b32.xlu0 %v5296, 24
      %v6093 = vpop.permute.xlu0 %6092
      %6094 = vrot.lane.b32.xlu0 %v5297, 24
      %v6095 = vpop.permute.xlu0 %6094
      %6096 = vrot.lane.b32.xlu0 %v5903, 24
      %v6097 = vpop.permute.xlu0 %6096
      %6098 = vrot.lane.b32.xlu0 %v5299, 24
      %v6099 = vpop.permute.xlu0 %6098
      %6100 = vrot.lane.b32.xlu0 %v5300, 24
      %v6101 = vpop.permute.xlu0 %6100
      %6102 = vrot.lane.b32.xlu0 %v5301, 24
      %v6103 = vpop.permute.xlu0 %6102
      %6104 = vrot.lane.b32.xlu0 %v5302, 24
      %v6105 = vpop.permute.xlu0 %6104
      %6106 = vrot.lane.b32.xlu0 %v5303, 24
      %v6107 = vpop.permute.xlu0 %6106
      %6108 = vrot.lane.b32.xlu0 %v5304, 24
      %v6109 = vpop.permute.xlu0 %6108
      %6110 = vrot.lane.b32.xlu0 %v5305, 24
      %v6111 = vpop.permute.xlu0 %6110
      %6112 = vrot.lane.b32.xlu0 %v5306, 24
      %v6113 = vpop.permute.xlu0 %6112
      %6114 = vrot.lane.b32.xlu0 %v5307, 24
      %v6115 = vpop.permute.xlu0 %6114
      %6116 = vrot.lane.b32.xlu0 %v5308, 24
      %v6117 = vpop.permute.xlu0 %6116
      %6118 = vrot.lane.b32.xlu0 %v5309, 24
      %v6119 = vpop.permute.xlu0 %6118
      %6120 = vrot.lane.b32.xlu0 %v5310, 24
      %v6121 = vpop.permute.xlu0 %6120
      %6122 = vrot.lane.b32.xlu0 %v5311, 24
      %v6123 = vpop.permute.xlu0 %6122
      %6124 = vrot.lane.b32.xlu0 %v5312, 24
      %v6125 = vpop.permute.xlu0 %6124
      %6126 = vrot.lane.b32.xlu0 %v5313, 24
      %v6127 = vpop.permute.xlu0 %6126
      %6128 = vrot.lane.b32.xlu0 %v5904, 24
      %v6129 = vpop.permute.xlu0 %6128
      %6130 = vrot.lane.b32.xlu0 %v5315, 24
      %v6131 = vpop.permute.xlu0 %6130
      %6132 = vrot.lane.b32.xlu0 %v5316, 24
      %v6133 = vpop.permute.xlu0 %6132
      %6134 = vrot.lane.b32.xlu0 %v5317, 24
      %v6135 = vpop.permute.xlu0 %6134
      %6136 = vrot.lane.b32.xlu0 %v5318, 24
      %v6137 = vpop.permute.xlu0 %6136
      %6138 = vrot.lane.b32.xlu0 %v5319, 24
      %v6139 = vpop.permute.xlu0 %6138
      %6140 = vrot.lane.b32.xlu0 %v5320, 24
      %v6141 = vpop.permute.xlu0 %6140
      %6142 = vrot.lane.b32.xlu0 %v5321, 24
      %v6143 = vpop.permute.xlu0 %6142
      %6144 = vrot.lane.b32.xlu0 %v5322, 24
      %v6145 = vpop.permute.xlu0 %6144
      %6146 = vrot.lane.b32.xlu0 %v5323, 24
      %v6147 = vpop.permute.xlu0 %6146
      %6148 = vrot.lane.b32.xlu0 %v5324, 24
      %v6149 = vpop.permute.xlu0 %6148
      %6150 = vrot.lane.b32.xlu0 %v5325, 24
      %v6151 = vpop.permute.xlu0 %6150
      %6152 = vrot.lane.b32.xlu0 %v5326, 24
      %v6153 = vpop.permute.xlu0 %6152
      %6154 = vrot.lane.b32.xlu0 %v5327, 24
      %v6155 = vpop.permute.xlu0 %6154
      %6156 = vrot.lane.b32.xlu0 %v5328, 24
      %v6157 = vpop.permute.xlu0 %6156
      %6158 = vrot.lane.b32.xlu0 %v5329, 24
      %v6159 = vpop.permute.xlu0 %6158
      %6160 = vrot.lane.b32.xlu0 %v5905, 24
      %v6161 = vpop.permute.xlu0 %6160
      %v6194 = vunpack.c.l.b16 %v580
      %v6195 = vunpack.c.l.b16 %v581
      %v6196 = vunpack.c.l.b16 %v583
      %v6197 = vunpack.c.l.b16 %v584
      %v6198 = vunpack.c.l.b16 %v586
      %v6199 = vunpack.c.l.b16 %v587
      %v6200 = vunpack.c.l.b16 %v589
      %v6201 = vunpack.c.l.b16 %v590
      %v6202 = vunpack.c.l.b16 %v592
      %v6203 = vunpack.c.l.b16 %v593
      %v6204 = vunpack.c.l.b16 %v595
      %v6205 = vunpack.c.l.b16 %v596
      %v6206 = vunpack.c.l.b16 %v598
      %v6207 = vunpack.c.l.b16 %v599
      %v6208 = vunpack.c.l.b16 %v601
      %v6209 = vunpack.c.l.b16 %v602
      %v6210 = vunpack.c.l.b16 %v604
      %v6211 = vunpack.c.l.b16 %v605
      %v6212 = vunpack.c.l.b16 %v607
      %v6213 = vunpack.c.l.b16 %v608
      %v6214 = vunpack.c.l.b16 %v610
      %v6215 = vunpack.c.l.b16 %v611
      %v6216 = vunpack.c.l.b16 %v613
      %v6217 = vunpack.c.l.b16 %v614
      %v6218 = vunpack.c.l.b16 %v616
      %v6219 = vunpack.c.l.b16 %v617
      %v6220 = vunpack.c.l.b16 %v619
      %v6221 = vunpack.c.l.b16 %v620
      %v6222 = vunpack.c.l.b16 %v622
      %v6223 = vunpack.c.l.b16 %v623
      %v6224 = vunpack.c.l.b16 %v625
      %v6225 = vunpack.c.l.b16 %v626
      %v6226 = vpack.c.b16 %v6195, %v6194
      %v6227 = vpack.c.b16 %v6197, %v6196
      %v6228 = vpack.c.b16 %v6199, %v6198
      %v6229 = vpack.c.b16 %v6201, %v6200
      %v6230 = vpack.c.b16 %v6203, %v6202
      %v6231 = vpack.c.b16 %v6205, %v6204
      %v6232 = vpack.c.b16 %v6207, %v6206
      %v6233 = vpack.c.b16 %v6209, %v6208
      %v6234 = vpack.c.b16 %v6211, %v6210
      %v6235 = vpack.c.b16 %v6213, %v6212
      %v6236 = vpack.c.b16 %v6215, %v6214
      %v6237 = vpack.c.b16 %v6217, %v6216
      %v6238 = vpack.c.b16 %v6219, %v6218
      %v6239 = vpack.c.b16 %v6221, %v6220
      %v6240 = vpack.c.b16 %v6223, %v6222
      %v6241 = vpack.c.b16 %v6225, %v6224
      %6242 = vrot.lane.b32.xlu0 %v4834, 32
      %v6243 = vpop.permute.xlu0 %6242
      %6244 = vrot.lane.b32.xlu0 %v4835, 32
      %v6245 = vpop.permute.xlu0 %6244
      %6246 = vrot.lane.b32.xlu0 %v4836, 32
      %v6247 = vpop.permute.xlu0 %6246
      %6248 = vrot.lane.b32.xlu0 %v4837, 32
      %v6249 = vpop.permute.xlu0 %6248
      %6250 = vrot.lane.b32.xlu0 %v4838, 32
      %v6251 = vpop.permute.xlu0 %6250
      %6252 = vrot.lane.b32.xlu0 %v4839, 32
      %v6253 = vpop.permute.xlu0 %6252
      %6254 = vrot.lane.b32.xlu0 %v4840, 32
      %v6255 = vpop.permute.xlu0 %6254
      %6256 = vrot.lane.b32.xlu0 %v4841, 32
      %v6257 = vpop.permute.xlu0 %6256
      %6258 = vrot.lane.b32.xlu0 %v4842, 32
      %v6259 = vpop.permute.xlu0 %6258
      %6260 = vrot.lane.b32.xlu0 %v4843, 32
      %v6261 = vpop.permute.xlu0 %6260
      %6262 = vrot.lane.b32.xlu0 %v4844, 32
      %v6263 = vpop.permute.xlu0 %6262
      %6264 = vrot.lane.b32.xlu0 %v4845, 32
      %v6265 = vpop.permute.xlu0 %6264
      %6266 = vrot.lane.b32.xlu0 %v4846, 32
      %v6267 = vpop.permute.xlu0 %6266
      %6268 = vrot.lane.b32.xlu0 %v4847, 32
      %v6269 = vpop.permute.xlu0 %6268
      %6270 = vrot.lane.b32.xlu0 %v4848, 32
      %v6271 = vpop.permute.xlu0 %6270
      %6272 = vrot.lane.b32.xlu0 %v4849, 32
      %v6273 = vpop.permute.xlu0 %6272
      %6274 = vrot.lane.b32.xlu0 %v4850, 32
      %v6275 = vpop.permute.xlu0 %6274
      %6276 = vrot.lane.b32.xlu0 %v4851, 32
      %v6277 = vpop.permute.xlu0 %6276
      %6278 = vrot.lane.b32.xlu0 %v4852, 32
      %v6279 = vpop.permute.xlu0 %6278
      %6280 = vrot.lane.b32.xlu0 %v4853, 32
      %v6281 = vpop.permute.xlu0 %6280
      %6282 = vrot.lane.b32.xlu0 %v4854, 32
      %v6283 = vpop.permute.xlu0 %6282
      %6284 = vrot.lane.b32.xlu0 %v4855, 32
      %v6285 = vpop.permute.xlu0 %6284
      %6286 = vrot.lane.b32.xlu0 %v4856, 32
      %v6287 = vpop.permute.xlu0 %6286
      %6288 = vrot.lane.b32.xlu0 %v4857, 32
      %v6289 = vpop.permute.xlu0 %6288
      %6290 = vrot.lane.b32.xlu0 %v4858, 32
      %v6291 = vpop.permute.xlu0 %6290
      %6292 = vrot.lane.b32.xlu0 %v4859, 32
      %v6293 = vpop.permute.xlu0 %6292
      %6294 = vrot.lane.b32.xlu0 %v4860, 32
      %v6295 = vpop.permute.xlu0 %6294
      %6296 = vrot.lane.b32.xlu0 %v4861, 32
      %v6297 = vpop.permute.xlu0 %6296
      %6298 = vrot.lane.b32.xlu0 %v4862, 32
      %v6299 = vpop.permute.xlu0 %6298
      %6300 = vrot.lane.b32.xlu0 %v4863, 32
      %v6301 = vpop.permute.xlu0 %6300
      %6302 = vrot.lane.b32.xlu0 %v4864, 32
      %v6303 = vpop.permute.xlu0 %6302
      %6304 = vrot.lane.b32.xlu0 %v4865, 32
      %v6305 = vpop.permute.xlu0 %6304
      %6306 = vrot.lane.b32.xlu0 %v4866, 32
      %v6307 = vpop.permute.xlu0 %6306
      %6308 = vrot.lane.b32.xlu0 %v4867, 32
      %v6309 = vpop.permute.xlu0 %6308
      %6310 = vrot.lane.b32.xlu0 %v4868, 32
      %v6311 = vpop.permute.xlu0 %6310
      %6312 = vrot.lane.b32.xlu0 %v4869, 32
      %v6313 = vpop.permute.xlu0 %6312
      %6314 = vrot.lane.b32.xlu0 %v4870, 32
      %v6315 = vpop.permute.xlu0 %6314
      %6316 = vrot.lane.b32.xlu0 %v4871, 32
      %v6317 = vpop.permute.xlu0 %6316
      %6318 = vrot.lane.b32.xlu0 %v4872, 32
      %v6319 = vpop.permute.xlu0 %6318
      %6320 = vrot.lane.b32.xlu0 %v4873, 32
      %v6321 = vpop.permute.xlu0 %6320
      %6322 = vrot.lane.b32.xlu0 %v4874, 32
      %v6323 = vpop.permute.xlu0 %6322
      %6324 = vrot.lane.b32.xlu0 %v4875, 32
      %v6325 = vpop.permute.xlu0 %6324
      %6326 = vrot.lane.b32.xlu0 %v4876, 32
      %v6327 = vpop.permute.xlu0 %6326
      %6328 = vrot.lane.b32.xlu0 %v4877, 32
      %v6329 = vpop.permute.xlu0 %6328
      %6330 = vrot.lane.b32.xlu0 %v4878, 32
      %v6331 = vpop.permute.xlu0 %6330
      %6332 = vrot.lane.b32.xlu0 %v4879, 32
      %v6333 = vpop.permute.xlu0 %6332
      %6334 = vrot.lane.b32.xlu0 %v4880, 32
      %v6335 = vpop.permute.xlu0 %6334
      %6336 = vrot.lane.b32.xlu0 %v4881, 32
      %v6337 = vpop.permute.xlu0 %6336
      %6338 = vrot.lane.b32.xlu0 %v4882, 32
      %v6339 = vpop.permute.xlu0 %6338
      %6340 = vrot.lane.b32.xlu0 %v4883, 32
      %v6341 = vpop.permute.xlu0 %6340
      %6342 = vrot.lane.b32.xlu0 %v4884, 32
      %v6343 = vpop.permute.xlu0 %6342
      %6344 = vrot.lane.b32.xlu0 %v4885, 32
      %v6345 = vpop.permute.xlu0 %6344
      %6346 = vrot.lane.b32.xlu0 %v4886, 32
      %v6347 = vpop.permute.xlu0 %6346
      %6348 = vrot.lane.b32.xlu0 %v4887, 32
      %v6349 = vpop.permute.xlu0 %6348
      %6350 = vrot.lane.b32.xlu0 %v4888, 32
      %v6351 = vpop.permute.xlu0 %6350
      %6352 = vrot.lane.b32.xlu0 %v4889, 32
      %v6353 = vpop.permute.xlu0 %6352
      %6354 = vrot.lane.b32.xlu0 %v4890, 32
      %v6355 = vpop.permute.xlu0 %6354
      %6356 = vrot.lane.b32.xlu0 %v4891, 32
      %v6357 = vpop.permute.xlu0 %6356
      %6358 = vrot.lane.b32.xlu0 %v4892, 32
      %v6359 = vpop.permute.xlu0 %6358
      %6360 = vrot.lane.b32.xlu0 %v4893, 32
      %v6361 = vpop.permute.xlu0 %6360
      %6362 = vrot.lane.b32.xlu0 %v4894, 32
      %v6363 = vpop.permute.xlu0 %6362
      %6364 = vrot.lane.b32.xlu0 %v4895, 32
      %v6365 = vpop.permute.xlu0 %6364
      %6366 = vrot.lane.b32.xlu0 %v4896, 32
      %v6367 = vpop.permute.xlu0 %6366
      %6368 = vrot.lane.b32.xlu0 %v4897, 32
      %v6369 = vpop.permute.xlu0 %6368
      %6370 = vrot.lane.b32.xlu0 %v4898, 32
      %v6371 = vpop.permute.xlu0 %6370
      %6372 = vrot.lane.b32.xlu0 %v4899, 32
      %v6373 = vpop.permute.xlu0 %6372
      %6374 = vrot.lane.b32.xlu0 %v4900, 32
      %v6375 = vpop.permute.xlu0 %6374
      %6376 = vrot.lane.b32.xlu0 %v4901, 32
      %v6377 = vpop.permute.xlu0 %6376
      %6378 = vrot.lane.b32.xlu0 %v4902, 32
      %v6379 = vpop.permute.xlu0 %6378
      %6380 = vrot.lane.b32.xlu0 %v4903, 32
      %v6381 = vpop.permute.xlu0 %6380
      %6382 = vrot.lane.b32.xlu0 %v4904, 32
      %v6383 = vpop.permute.xlu0 %6382
      %6384 = vrot.lane.b32.xlu0 %v4905, 32
      %v6385 = vpop.permute.xlu0 %6384
      %6386 = vrot.lane.b32.xlu0 %v4906, 32
      %v6387 = vpop.permute.xlu0 %6386
      %6388 = vrot.lane.b32.xlu0 %v4907, 32
      %v6389 = vpop.permute.xlu0 %6388
      %6390 = vrot.lane.b32.xlu0 %v4908, 32
      %v6391 = vpop.permute.xlu0 %6390
      %6392 = vrot.lane.b32.xlu0 %v4909, 32
      %v6393 = vpop.permute.xlu0 %6392
      %6394 = vrot.lane.b32.xlu0 %v4910, 32
      %v6395 = vpop.permute.xlu0 %6394
      %6396 = vrot.lane.b32.xlu0 %v4911, 32
      %v6397 = vpop.permute.xlu0 %6396
      %6398 = vrot.lane.b32.xlu0 %v4912, 32
      %v6399 = vpop.permute.xlu0 %6398
      %6400 = vrot.lane.b32.xlu0 %v4913, 32
      %v6401 = vpop.permute.xlu0 %6400
      %6402 = vrot.lane.b32.xlu0 %v4914, 32
      %v6403 = vpop.permute.xlu0 %6402
      %6404 = vrot.lane.b32.xlu0 %v4915, 32
      %v6405 = vpop.permute.xlu0 %6404
      %6406 = vrot.lane.b32.xlu0 %v4916, 32
      %v6407 = vpop.permute.xlu0 %6406
      %6408 = vrot.lane.b32.xlu0 %v4917, 32
      %v6409 = vpop.permute.xlu0 %6408
      %6410 = vrot.lane.b32.xlu0 %v4918, 32
      %v6411 = vpop.permute.xlu0 %6410
      %6412 = vrot.lane.b32.xlu0 %v4919, 32
      %v6413 = vpop.permute.xlu0 %6412
      %6414 = vrot.lane.b32.xlu0 %v4920, 32
      %v6415 = vpop.permute.xlu0 %6414
      %6416 = vrot.lane.b32.xlu0 %v4921, 32
      %v6417 = vpop.permute.xlu0 %6416
      %6418 = vrot.lane.b32.xlu0 %v4922, 32
      %v6419 = vpop.permute.xlu0 %6418
      %6420 = vrot.lane.b32.xlu0 %v4923, 32
      %v6421 = vpop.permute.xlu0 %6420
      %6422 = vrot.lane.b32.xlu0 %v4924, 32
      %v6423 = vpop.permute.xlu0 %6422
      %6424 = vrot.lane.b32.xlu0 %v4925, 32
      %v6425 = vpop.permute.xlu0 %6424
      %6426 = vrot.lane.b32.xlu0 %v4926, 32
      %v6427 = vpop.permute.xlu0 %6426
      %6428 = vrot.lane.b32.xlu0 %v4927, 32
      %v6429 = vpop.permute.xlu0 %6428
      %6430 = vrot.lane.b32.xlu0 %v4928, 32
      %v6431 = vpop.permute.xlu0 %6430
      %6432 = vrot.lane.b32.xlu0 %v4929, 32
      %v6433 = vpop.permute.xlu0 %6432
      %6434 = vrot.lane.b32.xlu0 %v4930, 32
      %v6435 = vpop.permute.xlu0 %6434
      %6436 = vrot.lane.b32.xlu0 %v4931, 32
      %v6437 = vpop.permute.xlu0 %6436
      %6438 = vrot.lane.b32.xlu0 %v4932, 32
      %v6439 = vpop.permute.xlu0 %6438
      %6440 = vrot.lane.b32.xlu0 %v4933, 32
      %v6441 = vpop.permute.xlu0 %6440
      %6442 = vrot.lane.b32.xlu0 %v4934, 32
      %v6443 = vpop.permute.xlu0 %6442
      %6444 = vrot.lane.b32.xlu0 %v4935, 32
      %v6445 = vpop.permute.xlu0 %6444
      %6446 = vrot.lane.b32.xlu0 %v4936, 32
      %v6447 = vpop.permute.xlu0 %6446
      %6448 = vrot.lane.b32.xlu0 %v4937, 32
      %v6449 = vpop.permute.xlu0 %6448
      %6450 = vrot.lane.b32.xlu0 %v4938, 32
      %v6451 = vpop.permute.xlu0 %6450
      %6452 = vrot.lane.b32.xlu0 %v4939, 32
      %v6453 = vpop.permute.xlu0 %6452
      %6454 = vrot.lane.b32.xlu0 %v4940, 32
      %v6455 = vpop.permute.xlu0 %6454
      %6456 = vrot.lane.b32.xlu0 %v4941, 32
      %v6457 = vpop.permute.xlu0 %6456
      %6458 = vrot.lane.b32.xlu0 %v4942, 32
      %v6459 = vpop.permute.xlu0 %6458
      %6460 = vrot.lane.b32.xlu0 %v4943, 32
      %v6461 = vpop.permute.xlu0 %6460
      %6462 = vrot.lane.b32.xlu0 %v4944, 32
      %v6463 = vpop.permute.xlu0 %6462
      %6464 = vrot.lane.b32.xlu0 %v4945, 32
      %v6465 = vpop.permute.xlu0 %6464
      %6466 = vrot.lane.b32.xlu0 %v6226, 32
      %v6467 = vpop.permute.xlu0 %6466
      %6468 = vrot.lane.b32.xlu0 %v6227, 32
      %v6469 = vpop.permute.xlu0 %6468
      %6470 = vrot.lane.b32.xlu0 %v6228, 32
      %v6471 = vpop.permute.xlu0 %6470
      %6472 = vrot.lane.b32.xlu0 %v6229, 32
      %v6473 = vpop.permute.xlu0 %6472
      %6474 = vrot.lane.b32.xlu0 %v6230, 32
      %v6475 = vpop.permute.xlu0 %6474
      %6476 = vrot.lane.b32.xlu0 %v6231, 32
      %v6477 = vpop.permute.xlu0 %6476
      %6478 = vrot.lane.b32.xlu0 %v6232, 32
      %v6479 = vpop.permute.xlu0 %6478
      %6480 = vrot.lane.b32.xlu0 %v6233, 32
      %v6481 = vpop.permute.xlu0 %6480
      %6482 = vrot.lane.b32.xlu0 %v6234, 32
      %v6483 = vpop.permute.xlu0 %6482
      %6484 = vrot.lane.b32.xlu0 %v6235, 32
      %v6485 = vpop.permute.xlu0 %6484
      %6486 = vrot.lane.b32.xlu0 %v6236, 32
      %v6487 = vpop.permute.xlu0 %6486
      %6488 = vrot.lane.b32.xlu0 %v6237, 32
      %v6489 = vpop.permute.xlu0 %6488
      %6490 = vrot.lane.b32.xlu0 %v6238, 32
      %v6491 = vpop.permute.xlu0 %6490
      %6492 = vrot.lane.b32.xlu0 %v6239, 32
      %v6493 = vpop.permute.xlu0 %6492
      %6494 = vrot.lane.b32.xlu0 %v6240, 32
      %v6495 = vpop.permute.xlu0 %6494
      %6496 = vrot.lane.b32.xlu0 %v6241, 32
      %v6497 = vpop.permute.xlu0 %6496
      %v6498 = vunpack.c.l.b16 %v3911
      %v6499 = vunpack.c.l.b16 %v3921
      %v6500 = vunpack.c.l.b16 %v3935
      %v6501 = vunpack.c.l.b16 %v3945
      %v6502 = vunpack.c.l.b16 %v3959
      %v6503 = vunpack.c.l.b16 %v3969
      %v6504 = vunpack.c.l.b16 %v3983
      %v6505 = vunpack.c.l.b16 %v3993
      %v6506 = vunpack.c.l.b16 %v4007
      %v6507 = vunpack.c.l.b16 %v4017
      %v6508 = vunpack.c.l.b16 %v4031
      %v6509 = vunpack.c.l.b16 %v4041
      %v6510 = vunpack.c.l.b16 %v4055
      %v6511 = vunpack.c.l.b16 %v4065
      %v6512 = vunpack.c.l.b16 %v4079
      %v6513 = vunpack.c.l.b16 %v4089
      %v6514 = vunpack.c.l.b16 %v4103
      %v6515 = vunpack.c.l.b16 %v4113
      %v6516 = vunpack.c.l.b16 %v4127
      %v6517 = vunpack.c.l.b16 %v4137
      %v6518 = vunpack.c.l.b16 %v4151
      %v6519 = vunpack.c.l.b16 %v4161
      %v6520 = vunpack.c.l.b16 %v4175
      %v6521 = vunpack.c.l.b16 %v4185
      %v6522 = vunpack.c.l.b16 %v4199
      %v6523 = vunpack.c.l.b16 %v4209
      %v6524 = vunpack.c.l.b16 %v4223
      %v6525 = vunpack.c.l.b16 %v4233
      %v6526 = vunpack.c.l.b16 %v4247
      %v6527 = vunpack.c.l.b16 %v4257
      %v6528 = vunpack.c.l.b16 %v4271
      %v6529 = vunpack.c.l.b16 %v4281
      %v6530 = vpack.c.b16 %v6499, %v6498
      %v6531 = vpack.c.b16 %v6501, %v6500
      %v6532 = vpack.c.b16 %v6503, %v6502
      %v6533 = vpack.c.b16 %v6505, %v6504
      %v6534 = vpack.c.b16 %v6507, %v6506
      %v6535 = vpack.c.b16 %v6509, %v6508
      %v6536 = vpack.c.b16 %v6511, %v6510
      %v6537 = vpack.c.b16 %v6513, %v6512
      %v6538 = vpack.c.b16 %v6515, %v6514
      %v6539 = vpack.c.b16 %v6517, %v6516
      %v6540 = vpack.c.b16 %v6519, %v6518
      %v6541 = vpack.c.b16 %v6521, %v6520
      %v6542 = vpack.c.b16 %v6523, %v6522
      %v6543 = vpack.c.b16 %v6525, %v6524
      %v6544 = vpack.c.b16 %v6527, %v6526
      %v6545 = vpack.c.b16 %v6529, %v6528
      %6546 = vrot.lane.b32.xlu0 %v5218, 40
      %v6547 = vpop.permute.xlu0 %6546
      %6548 = vrot.lane.b32.xlu0 %v5219, 40
      %v6549 = vpop.permute.xlu0 %6548
      %6550 = vrot.lane.b32.xlu0 %v5220, 40
      %v6551 = vpop.permute.xlu0 %6550
      %6552 = vrot.lane.b32.xlu0 %v5221, 40
      %v6553 = vpop.permute.xlu0 %6552
      %6554 = vrot.lane.b32.xlu0 %v5222, 40
      %v6555 = vpop.permute.xlu0 %6554
      %6556 = vrot.lane.b32.xlu0 %v5223, 40
      %v6557 = vpop.permute.xlu0 %6556
      %6558 = vrot.lane.b32.xlu0 %v5224, 40
      %v6559 = vpop.permute.xlu0 %6558
      %6560 = vrot.lane.b32.xlu0 %v5225, 40
      %v6561 = vpop.permute.xlu0 %6560
      %6562 = vrot.lane.b32.xlu0 %v5226, 40
      %v6563 = vpop.permute.xlu0 %6562
      %6564 = vrot.lane.b32.xlu0 %v5227, 40
      %v6565 = vpop.permute.xlu0 %6564
      %6566 = vrot.lane.b32.xlu0 %v5228, 40
      %v6567 = vpop.permute.xlu0 %6566
      %6568 = vrot.lane.b32.xlu0 %v5229, 40
      %v6569 = vpop.permute.xlu0 %6568
      %6570 = vrot.lane.b32.xlu0 %v5230, 40
      %v6571 = vpop.permute.xlu0 %6570
      %6572 = vrot.lane.b32.xlu0 %v5231, 40
      %v6573 = vpop.permute.xlu0 %6572
      %6574 = vrot.lane.b32.xlu0 %v5232, 40
      %v6575 = vpop.permute.xlu0 %6574
      %6576 = vrot.lane.b32.xlu0 %v5233, 40
      %v6577 = vpop.permute.xlu0 %6576
      %6578 = vrot.lane.b32.xlu0 %v5234, 40
      %v6579 = vpop.permute.xlu0 %6578
      %6580 = vrot.lane.b32.xlu0 %v5235, 40
      %v6581 = vpop.permute.xlu0 %6580
      %6582 = vrot.lane.b32.xlu0 %v5236, 40
      %v6583 = vpop.permute.xlu0 %6582
      %6584 = vrot.lane.b32.xlu0 %v5237, 40
      %v6585 = vpop.permute.xlu0 %6584
      %6586 = vrot.lane.b32.xlu0 %v5238, 40
      %v6587 = vpop.permute.xlu0 %6586
      %6588 = vrot.lane.b32.xlu0 %v5239, 40
      %v6589 = vpop.permute.xlu0 %6588
      %6590 = vrot.lane.b32.xlu0 %v5240, 40
      %v6591 = vpop.permute.xlu0 %6590
      %6592 = vrot.lane.b32.xlu0 %v5241, 40
      %v6593 = vpop.permute.xlu0 %6592
      %6594 = vrot.lane.b32.xlu0 %v5242, 40
      %v6595 = vpop.permute.xlu0 %6594
      %6596 = vrot.lane.b32.xlu0 %v5243, 40
      %v6597 = vpop.permute.xlu0 %6596
      %6598 = vrot.lane.b32.xlu0 %v5244, 40
      %v6599 = vpop.permute.xlu0 %6598
      %6600 = vrot.lane.b32.xlu0 %v5245, 40
      %v6601 = vpop.permute.xlu0 %6600
      %6602 = vrot.lane.b32.xlu0 %v5246, 40
      %v6603 = vpop.permute.xlu0 %6602
      %6604 = vrot.lane.b32.xlu0 %v5247, 40
      %v6605 = vpop.permute.xlu0 %6604
      %6606 = vrot.lane.b32.xlu0 %v5248, 40
      %v6607 = vpop.permute.xlu0 %6606
      %6608 = vrot.lane.b32.xlu0 %v5249, 40
      %v6609 = vpop.permute.xlu0 %6608
      %6610 = vrot.lane.b32.xlu0 %v5250, 40
      %v6611 = vpop.permute.xlu0 %6610
      %6612 = vrot.lane.b32.xlu0 %v5251, 40
      %v6613 = vpop.permute.xlu0 %6612
      %6614 = vrot.lane.b32.xlu0 %v5252, 40
      %v6615 = vpop.permute.xlu0 %6614
      %6616 = vrot.lane.b32.xlu0 %v5253, 40
      %v6617 = vpop.permute.xlu0 %6616
      %6618 = vrot.lane.b32.xlu0 %v5254, 40
      %v6619 = vpop.permute.xlu0 %6618
      %6620 = vrot.lane.b32.xlu0 %v5255, 40
      %v6621 = vpop.permute.xlu0 %6620
      %6622 = vrot.lane.b32.xlu0 %v5256, 40
      %v6623 = vpop.permute.xlu0 %6622
      %6624 = vrot.lane.b32.xlu0 %v5257, 40
      %v6625 = vpop.permute.xlu0 %6624
      %6626 = vrot.lane.b32.xlu0 %v5258, 40
      %v6627 = vpop.permute.xlu0 %6626
      %6628 = vrot.lane.b32.xlu0 %v5259, 40
      %v6629 = vpop.permute.xlu0 %6628
      %6630 = vrot.lane.b32.xlu0 %v5260, 40
      %v6631 = vpop.permute.xlu0 %6630
      %6632 = vrot.lane.b32.xlu0 %v5261, 40
      %v6633 = vpop.permute.xlu0 %6632
      %6634 = vrot.lane.b32.xlu0 %v5262, 40
      %v6635 = vpop.permute.xlu0 %6634
      %6636 = vrot.lane.b32.xlu0 %v5263, 40
      %v6637 = vpop.permute.xlu0 %6636
      %6638 = vrot.lane.b32.xlu0 %v5264, 40
      %v6639 = vpop.permute.xlu0 %6638
      %6640 = vrot.lane.b32.xlu0 %v5265, 40
      %v6641 = vpop.permute.xlu0 %6640
      %6642 = vrot.lane.b32.xlu0 %v5266, 40
      %v6643 = vpop.permute.xlu0 %6642
      %6644 = vrot.lane.b32.xlu0 %v5267, 40
      %v6645 = vpop.permute.xlu0 %6644
      %6646 = vrot.lane.b32.xlu0 %v5268, 40
      %v6647 = vpop.permute.xlu0 %6646
      %6648 = vrot.lane.b32.xlu0 %v5269, 40
      %v6649 = vpop.permute.xlu0 %6648
      %6650 = vrot.lane.b32.xlu0 %v5270, 40
      %v6651 = vpop.permute.xlu0 %6650
      %6652 = vrot.lane.b32.xlu0 %v5271, 40
      %v6653 = vpop.permute.xlu0 %6652
      %6654 = vrot.lane.b32.xlu0 %v5272, 40
      %v6655 = vpop.permute.xlu0 %6654
      %6656 = vrot.lane.b32.xlu0 %v5273, 40
      %v6657 = vpop.permute.xlu0 %6656
      %6658 = vrot.lane.b32.xlu0 %v5274, 40
      %v6659 = vpop.permute.xlu0 %6658
      %6660 = vrot.lane.b32.xlu0 %v5275, 40
      %v6661 = vpop.permute.xlu0 %6660
      %6662 = vrot.lane.b32.xlu0 %v5276, 40
      %v6663 = vpop.permute.xlu0 %6662
      %6664 = vrot.lane.b32.xlu0 %v5277, 40
      %v6665 = vpop.permute.xlu0 %6664
      %6666 = vrot.lane.b32.xlu0 %v5278, 40
      %v6667 = vpop.permute.xlu0 %6666
      %6668 = vrot.lane.b32.xlu0 %v5279, 40
      %v6669 = vpop.permute.xlu0 %6668
      %6670 = vrot.lane.b32.xlu0 %v5280, 40
      %v6671 = vpop.permute.xlu0 %6670
      %6672 = vrot.lane.b32.xlu0 %v5281, 40
      %v6673 = vpop.permute.xlu0 %6672
      %6674 = vrot.lane.b32.xlu0 %v5282, 40
      %v6675 = vpop.permute.xlu0 %6674
      %6676 = vrot.lane.b32.xlu0 %v5283, 40
      %v6677 = vpop.permute.xlu0 %6676
      %6678 = vrot.lane.b32.xlu0 %v5284, 40
      %v6679 = vpop.permute.xlu0 %6678
      %6680 = vrot.lane.b32.xlu0 %v5285, 40
      %v6681 = vpop.permute.xlu0 %6680
      %6682 = vrot.lane.b32.xlu0 %v5286, 40
      %v6683 = vpop.permute.xlu0 %6682
      %6684 = vrot.lane.b32.xlu0 %v5287, 40
      %v6685 = vpop.permute.xlu0 %6684
      %6686 = vrot.lane.b32.xlu0 %v5288, 40
      %v6687 = vpop.permute.xlu0 %6686
      %6688 = vrot.lane.b32.xlu0 %v5289, 40
      %v6689 = vpop.permute.xlu0 %6688
      %6690 = vrot.lane.b32.xlu0 %v5290, 40
      %v6691 = vpop.permute.xlu0 %6690
      %6692 = vrot.lane.b32.xlu0 %v5291, 40
      %v6693 = vpop.permute.xlu0 %6692
      %6694 = vrot.lane.b32.xlu0 %v5292, 40
      %v6695 = vpop.permute.xlu0 %6694
      %6696 = vrot.lane.b32.xlu0 %v5293, 40
      %v6697 = vpop.permute.xlu0 %6696
      %6698 = vrot.lane.b32.xlu0 %v5294, 40
      %v6699 = vpop.permute.xlu0 %6698
      %6700 = vrot.lane.b32.xlu0 %v5295, 40
      %v6701 = vpop.permute.xlu0 %6700
      %6702 = vrot.lane.b32.xlu0 %v5296, 40
      %v6703 = vpop.permute.xlu0 %6702
      %6704 = vrot.lane.b32.xlu0 %v5297, 40
      %v6705 = vpop.permute.xlu0 %6704
      %6706 = vrot.lane.b32.xlu0 %v5298, 40
      %v6707 = vpop.permute.xlu0 %6706
      %6708 = vrot.lane.b32.xlu0 %v5299, 40
      %v6709 = vpop.permute.xlu0 %6708
      %6710 = vrot.lane.b32.xlu0 %v5300, 40
      %v6711 = vpop.permute.xlu0 %6710
      %6712 = vrot.lane.b32.xlu0 %v5301, 40
      %v6713 = vpop.permute.xlu0 %6712
      %6714 = vrot.lane.b32.xlu0 %v5302, 40
      %v6715 = vpop.permute.xlu0 %6714
      %6716 = vrot.lane.b32.xlu0 %v5303, 40
      %v6717 = vpop.permute.xlu0 %6716
      %6718 = vrot.lane.b32.xlu0 %v5304, 40
      %v6719 = vpop.permute.xlu0 %6718
      %6720 = vrot.lane.b32.xlu0 %v5305, 40
      %v6721 = vpop.permute.xlu0 %6720
      %6722 = vrot.lane.b32.xlu0 %v5306, 40
      %v6723 = vpop.permute.xlu0 %6722
      %6724 = vrot.lane.b32.xlu0 %v5307, 40
      %v6725 = vpop.permute.xlu0 %6724
      %6726 = vrot.lane.b32.xlu0 %v5308, 40
      %v6727 = vpop.permute.xlu0 %6726
      %6728 = vrot.lane.b32.xlu0 %v5309, 40
      %v6729 = vpop.permute.xlu0 %6728
      %6730 = vrot.lane.b32.xlu0 %v5310, 40
      %v6731 = vpop.permute.xlu0 %6730
      %6732 = vrot.lane.b32.xlu0 %v5311, 40
      %v6733 = vpop.permute.xlu0 %6732
      %6734 = vrot.lane.b32.xlu0 %v5312, 40
      %v6735 = vpop.permute.xlu0 %6734
      %6736 = vrot.lane.b32.xlu0 %v5313, 40
      %v6737 = vpop.permute.xlu0 %6736
      %6738 = vrot.lane.b32.xlu0 %v5314, 40
      %v6739 = vpop.permute.xlu0 %6738
      %6740 = vrot.lane.b32.xlu0 %v5315, 40
      %v6741 = vpop.permute.xlu0 %6740
      %6742 = vrot.lane.b32.xlu0 %v5316, 40
      %v6743 = vpop.permute.xlu0 %6742
      %6744 = vrot.lane.b32.xlu0 %v5317, 40
      %v6745 = vpop.permute.xlu0 %6744
      %6746 = vrot.lane.b32.xlu0 %v5318, 40
      %v6747 = vpop.permute.xlu0 %6746
      %6748 = vrot.lane.b32.xlu0 %v5319, 40
      %v6749 = vpop.permute.xlu0 %6748
      %6750 = vrot.lane.b32.xlu0 %v5320, 40
      %v6751 = vpop.permute.xlu0 %6750
      %6752 = vrot.lane.b32.xlu0 %v5321, 40
      %v6753 = vpop.permute.xlu0 %6752
      %6754 = vrot.lane.b32.xlu0 %v5322, 40
      %v6755 = vpop.permute.xlu0 %6754
      %6756 = vrot.lane.b32.xlu0 %v5323, 40
      %v6757 = vpop.permute.xlu0 %6756
      %6758 = vrot.lane.b32.xlu0 %v5324, 40
      %v6759 = vpop.permute.xlu0 %6758
      %6760 = vrot.lane.b32.xlu0 %v5325, 40
      %v6761 = vpop.permute.xlu0 %6760
      %6762 = vrot.lane.b32.xlu0 %v5326, 40
      %v6763 = vpop.permute.xlu0 %6762
      %6764 = vrot.lane.b32.xlu0 %v5327, 40
      %v6765 = vpop.permute.xlu0 %6764
      %6766 = vrot.lane.b32.xlu0 %v5328, 40
      %v6767 = vpop.permute.xlu0 %6766
      %6768 = vrot.lane.b32.xlu0 %v5329, 40
      %v6769 = vpop.permute.xlu0 %6768
      %6770 = vrot.lane.b32.xlu0 %v6530, 40
      %v6771 = vpop.permute.xlu0 %6770
      %6772 = vrot.lane.b32.xlu0 %v6531, 40
      %v6773 = vpop.permute.xlu0 %6772
      %6774 = vrot.lane.b32.xlu0 %v6532, 40
      %v6775 = vpop.permute.xlu0 %6774
      %6776 = vrot.lane.b32.xlu0 %v6533, 40
      %v6777 = vpop.permute.xlu0 %6776
      %6778 = vrot.lane.b32.xlu0 %v6534, 40
      %v6779 = vpop.permute.xlu0 %6778
      %6780 = vrot.lane.b32.xlu0 %v6535, 40
      %v6781 = vpop.permute.xlu0 %6780
      %6782 = vrot.lane.b32.xlu0 %v6536, 40
      %v6783 = vpop.permute.xlu0 %6782
      %6784 = vrot.lane.b32.xlu0 %v6537, 40
      %v6785 = vpop.permute.xlu0 %6784
      %6786 = vrot.lane.b32.xlu0 %v6538, 40
      %v6787 = vpop.permute.xlu0 %6786
      %6788 = vrot.lane.b32.xlu0 %v6539, 40
      %v6789 = vpop.permute.xlu0 %6788
      %6790 = vrot.lane.b32.xlu0 %v6540, 40
      %v6791 = vpop.permute.xlu0 %6790
      %6792 = vrot.lane.b32.xlu0 %v6541, 40
      %v6793 = vpop.permute.xlu0 %6792
      %6794 = vrot.lane.b32.xlu0 %v6542, 40
      %v6795 = vpop.permute.xlu0 %6794
      %6796 = vrot.lane.b32.xlu0 %v6543, 40
      %v6797 = vpop.permute.xlu0 %6796
      %6798 = vrot.lane.b32.xlu0 %v6544, 40
      %v6799 = vpop.permute.xlu0 %6798
      %6800 = vrot.lane.b32.xlu0 %v6545, 40
      %v6801 = vpop.permute.xlu0 %6800
      %v6804 = vunpack.c.l.b16 %v628
      %v6805 = vunpack.c.l.b16 %v629
      %v6806 = vpack.c.b16 %v6805, %v6804
      %6807 = vrot.lane.b32.xlu0 %v4835, 48
      %v6808 = vpop.permute.xlu0 %6807
      %6809 = vrot.lane.b32.xlu0 %v4836, 48
      %v6810 = vpop.permute.xlu0 %6809
      %6811 = vrot.lane.b32.xlu0 %v4837, 48
      %v6812 = vpop.permute.xlu0 %6811
      %6813 = vrot.lane.b32.xlu0 %v4838, 48
      %v6814 = vpop.permute.xlu0 %6813
      %6815 = vrot.lane.b32.xlu0 %v4839, 48
      %v6816 = vpop.permute.xlu0 %6815
      %6817 = vrot.lane.b32.xlu0 %v4840, 48
      %v6818 = vpop.permute.xlu0 %6817
      %6819 = vrot.lane.b32.xlu0 %v4841, 48
      %v6820 = vpop.permute.xlu0 %6819
      %6821 = vrot.lane.b32.xlu0 %v4842, 48
      %v6822 = vpop.permute.xlu0 %6821
      %6823 = vrot.lane.b32.xlu0 %v4843, 48
      %v6824 = vpop.permute.xlu0 %6823
      %6825 = vrot.lane.b32.xlu0 %v4844, 48
      %v6826 = vpop.permute.xlu0 %6825
      %6827 = vrot.lane.b32.xlu0 %v4845, 48
      %v6828 = vpop.permute.xlu0 %6827
      %6829 = vrot.lane.b32.xlu0 %v4846, 48
      %v6830 = vpop.permute.xlu0 %6829
      %6831 = vrot.lane.b32.xlu0 %v4847, 48
      %v6832 = vpop.permute.xlu0 %6831
      %6833 = vrot.lane.b32.xlu0 %v4848, 48
      %v6834 = vpop.permute.xlu0 %6833
      %6835 = vrot.lane.b32.xlu0 %v4849, 48
      %v6836 = vpop.permute.xlu0 %6835
      %6837 = vrot.lane.b32.xlu0 %v5619, 48
      %v6838 = vpop.permute.xlu0 %6837
      %6839 = vrot.lane.b32.xlu0 %v4851, 48
      %v6840 = vpop.permute.xlu0 %6839
      %6841 = vrot.lane.b32.xlu0 %v4852, 48
      %v6842 = vpop.permute.xlu0 %6841
      %6843 = vrot.lane.b32.xlu0 %v4853, 48
      %v6844 = vpop.permute.xlu0 %6843
      %6845 = vrot.lane.b32.xlu0 %v4854, 48
      %v6846 = vpop.permute.xlu0 %6845
      %6847 = vrot.lane.b32.xlu0 %v4855, 48
      %v6848 = vpop.permute.xlu0 %6847
      %6849 = vrot.lane.b32.xlu0 %v4856, 48
      %v6850 = vpop.permute.xlu0 %6849
      %6851 = vrot.lane.b32.xlu0 %v4857, 48
      %v6852 = vpop.permute.xlu0 %6851
      %6853 = vrot.lane.b32.xlu0 %v4858, 48
      %v6854 = vpop.permute.xlu0 %6853
      %6855 = vrot.lane.b32.xlu0 %v4859, 48
      %v6856 = vpop.permute.xlu0 %6855
      %6857 = vrot.lane.b32.xlu0 %v4860, 48
      %v6858 = vpop.permute.xlu0 %6857
      %6859 = vrot.lane.b32.xlu0 %v4861, 48
      %v6860 = vpop.permute.xlu0 %6859
      %6861 = vrot.lane.b32.xlu0 %v4862, 48
      %v6862 = vpop.permute.xlu0 %6861
      %6863 = vrot.lane.b32.xlu0 %v4863, 48
      %v6864 = vpop.permute.xlu0 %6863
      %6865 = vrot.lane.b32.xlu0 %v4864, 48
      %v6866 = vpop.permute.xlu0 %6865
      %6867 = vrot.lane.b32.xlu0 %v4865, 48
      %v6868 = vpop.permute.xlu0 %6867
      %6869 = vrot.lane.b32.xlu0 %v5620, 48
      %v6870 = vpop.permute.xlu0 %6869
      %6871 = vrot.lane.b32.xlu0 %v4867, 48
      %v6872 = vpop.permute.xlu0 %6871
      %6873 = vrot.lane.b32.xlu0 %v4868, 48
      %v6874 = vpop.permute.xlu0 %6873
      %6875 = vrot.lane.b32.xlu0 %v4869, 48
      %v6876 = vpop.permute.xlu0 %6875
      %6877 = vrot.lane.b32.xlu0 %v4870, 48
      %v6878 = vpop.permute.xlu0 %6877
      %6879 = vrot.lane.b32.xlu0 %v4871, 48
      %v6880 = vpop.permute.xlu0 %6879
      %6881 = vrot.lane.b32.xlu0 %v4872, 48
      %v6882 = vpop.permute.xlu0 %6881
      %6883 = vrot.lane.b32.xlu0 %v4873, 48
      %v6884 = vpop.permute.xlu0 %6883
      %6885 = vrot.lane.b32.xlu0 %v4874, 48
      %v6886 = vpop.permute.xlu0 %6885
      %6887 = vrot.lane.b32.xlu0 %v4875, 48
      %v6888 = vpop.permute.xlu0 %6887
      %6889 = vrot.lane.b32.xlu0 %v4876, 48
      %v6890 = vpop.permute.xlu0 %6889
      %6891 = vrot.lane.b32.xlu0 %v4877, 48
      %v6892 = vpop.permute.xlu0 %6891
      %6893 = vrot.lane.b32.xlu0 %v4878, 48
      %v6894 = vpop.permute.xlu0 %6893
      %6895 = vrot.lane.b32.xlu0 %v4879, 48
      %v6896 = vpop.permute.xlu0 %6895
      %6897 = vrot.lane.b32.xlu0 %v4880, 48
      %v6898 = vpop.permute.xlu0 %6897
      %6899 = vrot.lane.b32.xlu0 %v4881, 48
      %v6900 = vpop.permute.xlu0 %6899
      %6901 = vrot.lane.b32.xlu0 %v5621, 48
      %v6902 = vpop.permute.xlu0 %6901
      %6903 = vrot.lane.b32.xlu0 %v4883, 48
      %v6904 = vpop.permute.xlu0 %6903
      %6905 = vrot.lane.b32.xlu0 %v4884, 48
      %v6906 = vpop.permute.xlu0 %6905
      %6907 = vrot.lane.b32.xlu0 %v4885, 48
      %v6908 = vpop.permute.xlu0 %6907
      %6909 = vrot.lane.b32.xlu0 %v4886, 48
      %v6910 = vpop.permute.xlu0 %6909
      %6911 = vrot.lane.b32.xlu0 %v4887, 48
      %v6912 = vpop.permute.xlu0 %6911
      %6913 = vrot.lane.b32.xlu0 %v4888, 48
      %v6914 = vpop.permute.xlu0 %6913
      %6915 = vrot.lane.b32.xlu0 %v4889, 48
      %v6916 = vpop.permute.xlu0 %6915
      %6917 = vrot.lane.b32.xlu0 %v4890, 48
      %v6918 = vpop.permute.xlu0 %6917
      %6919 = vrot.lane.b32.xlu0 %v4891, 48
      %v6920 = vpop.permute.xlu0 %6919
      %6921 = vrot.lane.b32.xlu0 %v4892, 48
      %v6922 = vpop.permute.xlu0 %6921
      %6923 = vrot.lane.b32.xlu0 %v4893, 48
      %v6924 = vpop.permute.xlu0 %6923
      %6925 = vrot.lane.b32.xlu0 %v4894, 48
      %v6926 = vpop.permute.xlu0 %6925
      %6927 = vrot.lane.b32.xlu0 %v4895, 48
      %v6928 = vpop.permute.xlu0 %6927
      %6929 = vrot.lane.b32.xlu0 %v4896, 48
      %v6930 = vpop.permute.xlu0 %6929
      %6931 = vrot.lane.b32.xlu0 %v4897, 48
      %v6932 = vpop.permute.xlu0 %6931
      %6933 = vrot.lane.b32.xlu0 %v5622, 48
      %v6934 = vpop.permute.xlu0 %6933
      %6935 = vrot.lane.b32.xlu0 %v4899, 48
      %v6936 = vpop.permute.xlu0 %6935
      %6937 = vrot.lane.b32.xlu0 %v4900, 48
      %v6938 = vpop.permute.xlu0 %6937
      %6939 = vrot.lane.b32.xlu0 %v4901, 48
      %v6940 = vpop.permute.xlu0 %6939
      %6941 = vrot.lane.b32.xlu0 %v4902, 48
      %v6942 = vpop.permute.xlu0 %6941
      %6943 = vrot.lane.b32.xlu0 %v4903, 48
      %v6944 = vpop.permute.xlu0 %6943
      %6945 = vrot.lane.b32.xlu0 %v4904, 48
      %v6946 = vpop.permute.xlu0 %6945
      %6947 = vrot.lane.b32.xlu0 %v4905, 48
      %v6948 = vpop.permute.xlu0 %6947
      %6949 = vrot.lane.b32.xlu0 %v4906, 48
      %v6950 = vpop.permute.xlu0 %6949
      %6951 = vrot.lane.b32.xlu0 %v4907, 48
      %v6952 = vpop.permute.xlu0 %6951
      %6953 = vrot.lane.b32.xlu0 %v4908, 48
      %v6954 = vpop.permute.xlu0 %6953
      %6955 = vrot.lane.b32.xlu0 %v4909, 48
      %v6956 = vpop.permute.xlu0 %6955
      %6957 = vrot.lane.b32.xlu0 %v4910, 48
      %v6958 = vpop.permute.xlu0 %6957
      %6959 = vrot.lane.b32.xlu0 %v4911, 48
      %v6960 = vpop.permute.xlu0 %6959
      %6961 = vrot.lane.b32.xlu0 %v4912, 48
      %v6962 = vpop.permute.xlu0 %6961
      %6963 = vrot.lane.b32.xlu0 %v4913, 48
      %v6964 = vpop.permute.xlu0 %6963
      %6965 = vrot.lane.b32.xlu0 %v5623, 48
      %v6966 = vpop.permute.xlu0 %6965
      %6967 = vrot.lane.b32.xlu0 %v4915, 48
      %v6968 = vpop.permute.xlu0 %6967
      %6969 = vrot.lane.b32.xlu0 %v4916, 48
      %v6970 = vpop.permute.xlu0 %6969
      %6971 = vrot.lane.b32.xlu0 %v4917, 48
      %v6972 = vpop.permute.xlu0 %6971
      %6973 = vrot.lane.b32.xlu0 %v4918, 48
      %v6974 = vpop.permute.xlu0 %6973
      %6975 = vrot.lane.b32.xlu0 %v4919, 48
      %v6976 = vpop.permute.xlu0 %6975
      %6977 = vrot.lane.b32.xlu0 %v4920, 48
      %v6978 = vpop.permute.xlu0 %6977
      %6979 = vrot.lane.b32.xlu0 %v4921, 48
      %v6980 = vpop.permute.xlu0 %6979
      %6981 = vrot.lane.b32.xlu0 %v4922, 48
      %v6982 = vpop.permute.xlu0 %6981
      %6983 = vrot.lane.b32.xlu0 %v4923, 48
      %v6984 = vpop.permute.xlu0 %6983
      %6985 = vrot.lane.b32.xlu0 %v4924, 48
      %v6986 = vpop.permute.xlu0 %6985
      %6987 = vrot.lane.b32.xlu0 %v4925, 48
      %v6988 = vpop.permute.xlu0 %6987
      %6989 = vrot.lane.b32.xlu0 %v4926, 48
      %v6990 = vpop.permute.xlu0 %6989
      %6991 = vrot.lane.b32.xlu0 %v4927, 48
      %v6992 = vpop.permute.xlu0 %6991
      %6993 = vrot.lane.b32.xlu0 %v4928, 48
      %v6994 = vpop.permute.xlu0 %6993
      %6995 = vrot.lane.b32.xlu0 %v4929, 48
      %v6996 = vpop.permute.xlu0 %6995
      %6997 = vrot.lane.b32.xlu0 %v5624, 48
      %v6998 = vpop.permute.xlu0 %6997
      %6999 = vrot.lane.b32.xlu0 %v4931, 48
      %v7000 = vpop.permute.xlu0 %6999
      %7001 = vrot.lane.b32.xlu0 %v4932, 48
      %v7002 = vpop.permute.xlu0 %7001
      %7003 = vrot.lane.b32.xlu0 %v4933, 48
      %v7004 = vpop.permute.xlu0 %7003
      %7005 = vrot.lane.b32.xlu0 %v4934, 48
      %v7006 = vpop.permute.xlu0 %7005
      %7007 = vrot.lane.b32.xlu0 %v4935, 48
      %v7008 = vpop.permute.xlu0 %7007
      %7009 = vrot.lane.b32.xlu0 %v4936, 48
      %v7010 = vpop.permute.xlu0 %7009
      %7011 = vrot.lane.b32.xlu0 %v4937, 48
      %v7012 = vpop.permute.xlu0 %7011
      %7013 = vrot.lane.b32.xlu0 %v4938, 48
      %v7014 = vpop.permute.xlu0 %7013
      %7015 = vrot.lane.b32.xlu0 %v4939, 48
      %v7016 = vpop.permute.xlu0 %7015
      %7017 = vrot.lane.b32.xlu0 %v4940, 48
      %v7018 = vpop.permute.xlu0 %7017
      %7019 = vrot.lane.b32.xlu0 %v4941, 48
      %v7020 = vpop.permute.xlu0 %7019
      %7021 = vrot.lane.b32.xlu0 %v4942, 48
      %v7022 = vpop.permute.xlu0 %7021
      %7023 = vrot.lane.b32.xlu0 %v4943, 48
      %v7024 = vpop.permute.xlu0 %7023
      %7025 = vrot.lane.b32.xlu0 %v4944, 48
      %v7026 = vpop.permute.xlu0 %7025
      %7027 = vrot.lane.b32.xlu0 %v4945, 48
      %v7028 = vpop.permute.xlu0 %7027
      %7029 = vrot.lane.b32.xlu0 %v5625, 48
      %v7030 = vpop.permute.xlu0 %7029
      %7031 = vrot.lane.b32.xlu0 %v6227, 48
      %v7032 = vpop.permute.xlu0 %7031
      %7033 = vrot.lane.b32.xlu0 %v6228, 48
      %v7034 = vpop.permute.xlu0 %7033
      %7035 = vrot.lane.b32.xlu0 %v6229, 48
      %v7036 = vpop.permute.xlu0 %7035
      %7037 = vrot.lane.b32.xlu0 %v6230, 48
      %v7038 = vpop.permute.xlu0 %7037
      %7039 = vrot.lane.b32.xlu0 %v6231, 48
      %v7040 = vpop.permute.xlu0 %7039
      %7041 = vrot.lane.b32.xlu0 %v6232, 48
      %v7042 = vpop.permute.xlu0 %7041
      %7043 = vrot.lane.b32.xlu0 %v6233, 48
      %v7044 = vpop.permute.xlu0 %7043
      %7045 = vrot.lane.b32.xlu0 %v6234, 48
      %v7046 = vpop.permute.xlu0 %7045
      %7047 = vrot.lane.b32.xlu0 %v6235, 48
      %v7048 = vpop.permute.xlu0 %7047
      %7049 = vrot.lane.b32.xlu0 %v6236, 48
      %v7050 = vpop.permute.xlu0 %7049
      %7051 = vrot.lane.b32.xlu0 %v6237, 48
      %v7052 = vpop.permute.xlu0 %7051
      %7053 = vrot.lane.b32.xlu0 %v6238, 48
      %v7054 = vpop.permute.xlu0 %7053
      %7055 = vrot.lane.b32.xlu0 %v6239, 48
      %v7056 = vpop.permute.xlu0 %7055
      %7057 = vrot.lane.b32.xlu0 %v6240, 48
      %v7058 = vpop.permute.xlu0 %7057
      %7059 = vrot.lane.b32.xlu0 %v6241, 48
      %v7060 = vpop.permute.xlu0 %7059
      %7061 = vrot.lane.b32.xlu0 %v6806, 48
      %v7062 = vpop.permute.xlu0 %7061
      %v7063 = vunpack.c.l.b16 %v4295
      %v7064 = vunpack.c.l.b16 %v4305
      %v7065 = vpack.c.b16 %v7064, %v7063
      %7066 = vrot.lane.b32.xlu0 %v5219, 56
      %v7067 = vpop.permute.xlu0 %7066
      %7068 = vrot.lane.b32.xlu0 %v5220, 56
      %v7069 = vpop.permute.xlu0 %7068
      %7070 = vrot.lane.b32.xlu0 %v5221, 56
      %v7071 = vpop.permute.xlu0 %7070
      %7072 = vrot.lane.b32.xlu0 %v5222, 56
      %v7073 = vpop.permute.xlu0 %7072
      %7074 = vrot.lane.b32.xlu0 %v5223, 56
      %v7075 = vpop.permute.xlu0 %7074
      %7076 = vrot.lane.b32.xlu0 %v5224, 56
      %v7077 = vpop.permute.xlu0 %7076
      %7078 = vrot.lane.b32.xlu0 %v5225, 56
      %v7079 = vpop.permute.xlu0 %7078
      %7080 = vrot.lane.b32.xlu0 %v5226, 56
      %v7081 = vpop.permute.xlu0 %7080
      %7082 = vrot.lane.b32.xlu0 %v5227, 56
      %v7083 = vpop.permute.xlu0 %7082
      %7084 = vrot.lane.b32.xlu0 %v5228, 56
      %v7085 = vpop.permute.xlu0 %7084
      %7086 = vrot.lane.b32.xlu0 %v5229, 56
      %v7087 = vpop.permute.xlu0 %7086
      %7088 = vrot.lane.b32.xlu0 %v5230, 56
      %v7089 = vpop.permute.xlu0 %7088
      %7090 = vrot.lane.b32.xlu0 %v5231, 56
      %v7091 = vpop.permute.xlu0 %7090
      %7092 = vrot.lane.b32.xlu0 %v5232, 56
      %v7093 = vpop.permute.xlu0 %7092
      %7094 = vrot.lane.b32.xlu0 %v5233, 56
      %v7095 = vpop.permute.xlu0 %7094
      %7096 = vrot.lane.b32.xlu0 %v5899, 56
      %v7097 = vpop.permute.xlu0 %7096
      %7098 = vrot.lane.b32.xlu0 %v5235, 56
      %v7099 = vpop.permute.xlu0 %7098
      %7100 = vrot.lane.b32.xlu0 %v5236, 56
      %v7101 = vpop.permute.xlu0 %7100
      %7102 = vrot.lane.b32.xlu0 %v5237, 56
      %v7103 = vpop.permute.xlu0 %7102
      %7104 = vrot.lane.b32.xlu0 %v5238, 56
      %v7105 = vpop.permute.xlu0 %7104
      %7106 = vrot.lane.b32.xlu0 %v5239, 56
      %v7107 = vpop.permute.xlu0 %7106
      %7108 = vrot.lane.b32.xlu0 %v5240, 56
      %v7109 = vpop.permute.xlu0 %7108
      %7110 = vrot.lane.b32.xlu0 %v5241, 56
      %v7111 = vpop.permute.xlu0 %7110
      %7112 = vrot.lane.b32.xlu0 %v5242, 56
      %v7113 = vpop.permute.xlu0 %7112
      %7114 = vrot.lane.b32.xlu0 %v5243, 56
      %v7115 = vpop.permute.xlu0 %7114
      %7116 = vrot.lane.b32.xlu0 %v5244, 56
      %v7117 = vpop.permute.xlu0 %7116
      %7118 = vrot.lane.b32.xlu0 %v5245, 56
      %v7119 = vpop.permute.xlu0 %7118
      %7120 = vrot.lane.b32.xlu0 %v5246, 56
      %v7121 = vpop.permute.xlu0 %7120
      %7122 = vrot.lane.b32.xlu0 %v5247, 56
      %v7123 = vpop.permute.xlu0 %7122
      %7124 = vrot.lane.b32.xlu0 %v5248, 56
      %v7125 = vpop.permute.xlu0 %7124
      %7126 = vrot.lane.b32.xlu0 %v5249, 56
      %v7127 = vpop.permute.xlu0 %7126
      %7128 = vrot.lane.b32.xlu0 %v5900, 56
      %v7129 = vpop.permute.xlu0 %7128
      %7130 = vrot.lane.b32.xlu0 %v5251, 56
      %v7131 = vpop.permute.xlu0 %7130
      %7132 = vrot.lane.b32.xlu0 %v5252, 56
      %v7133 = vpop.permute.xlu0 %7132
      %7134 = vrot.lane.b32.xlu0 %v5253, 56
      %v7135 = vpop.permute.xlu0 %7134
      %7136 = vrot.lane.b32.xlu0 %v5254, 56
      %v7137 = vpop.permute.xlu0 %7136
      %7138 = vrot.lane.b32.xlu0 %v5255, 56
      %v7139 = vpop.permute.xlu0 %7138
      %7140 = vrot.lane.b32.xlu0 %v5256, 56
      %v7141 = vpop.permute.xlu0 %7140
      %7142 = vrot.lane.b32.xlu0 %v5257, 56
      %v7143 = vpop.permute.xlu0 %7142
      %7144 = vrot.lane.b32.xlu0 %v5258, 56
      %v7145 = vpop.permute.xlu0 %7144
      %7146 = vrot.lane.b32.xlu0 %v5259, 56
      %v7147 = vpop.permute.xlu0 %7146
      %7148 = vrot.lane.b32.xlu0 %v5260, 56
      %v7149 = vpop.permute.xlu0 %7148
      %7150 = vrot.lane.b32.xlu0 %v5261, 56
      %v7151 = vpop.permute.xlu0 %7150
      %7152 = vrot.lane.b32.xlu0 %v5262, 56
      %v7153 = vpop.permute.xlu0 %7152
      %7154 = vrot.lane.b32.xlu0 %v5263, 56
      %v7155 = vpop.permute.xlu0 %7154
      %7156 = vrot.lane.b32.xlu0 %v5264, 56
      %v7157 = vpop.permute.xlu0 %7156
      %7158 = vrot.lane.b32.xlu0 %v5265, 56
      %v7159 = vpop.permute.xlu0 %7158
      %7160 = vrot.lane.b32.xlu0 %v5901, 56
      %v7161 = vpop.permute.xlu0 %7160
      %7162 = vrot.lane.b32.xlu0 %v5267, 56
      %v7163 = vpop.permute.xlu0 %7162
      %7164 = vrot.lane.b32.xlu0 %v5268, 56
      %v7165 = vpop.permute.xlu0 %7164
      %7166 = vrot.lane.b32.xlu0 %v5269, 56
      %v7167 = vpop.permute.xlu0 %7166
      %7168 = vrot.lane.b32.xlu0 %v5270, 56
      %v7169 = vpop.permute.xlu0 %7168
      %7170 = vrot.lane.b32.xlu0 %v5271, 56
      %v7171 = vpop.permute.xlu0 %7170
      %7172 = vrot.lane.b32.xlu0 %v5272, 56
      %v7173 = vpop.permute.xlu0 %7172
      %7174 = vrot.lane.b32.xlu0 %v5273, 56
      %v7175 = vpop.permute.xlu0 %7174
      %7176 = vrot.lane.b32.xlu0 %v5274, 56
      %v7177 = vpop.permute.xlu0 %7176
      %7178 = vrot.lane.b32.xlu0 %v5275, 56
      %v7179 = vpop.permute.xlu0 %7178
      %7180 = vrot.lane.b32.xlu0 %v5276, 56
      %v7181 = vpop.permute.xlu0 %7180
      %7182 = vrot.lane.b32.xlu0 %v5277, 56
      %v7183 = vpop.permute.xlu0 %7182
      %7184 = vrot.lane.b32.xlu0 %v5278, 56
      %v7185 = vpop.permute.xlu0 %7184
      %7186 = vrot.lane.b32.xlu0 %v5279, 56
      %v7187 = vpop.permute.xlu0 %7186
      %7188 = vrot.lane.b32.xlu0 %v5280, 56
      %v7189 = vpop.permute.xlu0 %7188
      %7190 = vrot.lane.b32.xlu0 %v5281, 56
      %v7191 = vpop.permute.xlu0 %7190
      %7192 = vrot.lane.b32.xlu0 %v5902, 56
      %v7193 = vpop.permute.xlu0 %7192
      %7194 = vrot.lane.b32.xlu0 %v5283, 56
      %v7195 = vpop.permute.xlu0 %7194
      %7196 = vrot.lane.b32.xlu0 %v5284, 56
      %v7197 = vpop.permute.xlu0 %7196
      %7198 = vrot.lane.b32.xlu0 %v5285, 56
      %v7199 = vpop.permute.xlu0 %7198
      %7200 = vrot.lane.b32.xlu0 %v5286, 56
      %v7201 = vpop.permute.xlu0 %7200
      %7202 = vrot.lane.b32.xlu0 %v5287, 56
      %v7203 = vpop.permute.xlu0 %7202
      %7204 = vrot.lane.b32.xlu0 %v5288, 56
      %v7205 = vpop.permute.xlu0 %7204
      %7206 = vrot.lane.b32.xlu0 %v5289, 56
      %v7207 = vpop.permute.xlu0 %7206
      %7208 = vrot.lane.b32.xlu0 %v5290, 56
      %v7209 = vpop.permute.xlu0 %7208
      %7210 = vrot.lane.b32.xlu0 %v5291, 56
      %v7211 = vpop.permute.xlu0 %7210
      %7212 = vrot.lane.b32.xlu0 %v5292, 56
      %v7213 = vpop.permute.xlu0 %7212
      %7214 = vrot.lane.b32.xlu0 %v5293, 56
      %v7215 = vpop.permute.xlu0 %7214
      %7216 = vrot.lane.b32.xlu0 %v5294, 56
      %v7217 = vpop.permute.xlu0 %7216
      %7218 = vrot.lane.b32.xlu0 %v5295, 56
      %v7219 = vpop.permute.xlu0 %7218
      %7220 = vrot.lane.b32.xlu0 %v5296, 56
      %v7221 = vpop.permute.xlu0 %7220
      %7222 = vrot.lane.b32.xlu0 %v5297, 56
      %v7223 = vpop.permute.xlu0 %7222
      %7224 = vrot.lane.b32.xlu0 %v5903, 56
      %v7225 = vpop.permute.xlu0 %7224
      %7226 = vrot.lane.b32.xlu0 %v5299, 56
      %v7227 = vpop.permute.xlu0 %7226
      %7228 = vrot.lane.b32.xlu0 %v5300, 56
      %v7229 = vpop.permute.xlu0 %7228
      %7230 = vrot.lane.b32.xlu0 %v5301, 56
      %v7231 = vpop.permute.xlu0 %7230
      %7232 = vrot.lane.b32.xlu0 %v5302, 56
      %v7233 = vpop.permute.xlu0 %7232
      %7234 = vrot.lane.b32.xlu0 %v5303, 56
      %v7235 = vpop.permute.xlu0 %7234
      %7236 = vrot.lane.b32.xlu0 %v5304, 56
      %v7237 = vpop.permute.xlu0 %7236
      %7238 = vrot.lane.b32.xlu0 %v5305, 56
      %v7239 = vpop.permute.xlu0 %7238
      %7240 = vrot.lane.b32.xlu0 %v5306, 56
      %v7241 = vpop.permute.xlu0 %7240
      %7242 = vrot.lane.b32.xlu0 %v5307, 56
      %v7243 = vpop.permute.xlu0 %7242
      %7244 = vrot.lane.b32.xlu0 %v5308, 56
      %v7245 = vpop.permute.xlu0 %7244
      %7246 = vrot.lane.b32.xlu0 %v5309, 56
      %v7247 = vpop.permute.xlu0 %7246
      %7248 = vrot.lane.b32.xlu0 %v5310, 56
      %v7249 = vpop.permute.xlu0 %7248
      %7250 = vrot.lane.b32.xlu0 %v5311, 56
      %v7251 = vpop.permute.xlu0 %7250
      %7252 = vrot.lane.b32.xlu0 %v5312, 56
      %v7253 = vpop.permute.xlu0 %7252
      %7254 = vrot.lane.b32.xlu0 %v5313, 56
      %v7255 = vpop.permute.xlu0 %7254
      %7256 = vrot.lane.b32.xlu0 %v5904, 56
      %v7257 = vpop.permute.xlu0 %7256
      %7258 = vrot.lane.b32.xlu0 %v5315, 56
      %v7259 = vpop.permute.xlu0 %7258
      %7260 = vrot.lane.b32.xlu0 %v5316, 56
      %v7261 = vpop.permute.xlu0 %7260
      %7262 = vrot.lane.b32.xlu0 %v5317, 56
      %v7263 = vpop.permute.xlu0 %7262
      %7264 = vrot.lane.b32.xlu0 %v5318, 56
      %v7265 = vpop.permute.xlu0 %7264
      %7266 = vrot.lane.b32.xlu0 %v5319, 56
      %v7267 = vpop.permute.xlu0 %7266
      %7268 = vrot.lane.b32.xlu0 %v5320, 56
      %v7269 = vpop.permute.xlu0 %7268
      %7270 = vrot.lane.b32.xlu0 %v5321, 56
      %v7271 = vpop.permute.xlu0 %7270
      %7272 = vrot.lane.b32.xlu0 %v5322, 56
      %v7273 = vpop.permute.xlu0 %7272
      %7274 = vrot.lane.b32.xlu0 %v5323, 56
      %v7275 = vpop.permute.xlu0 %7274
      %7276 = vrot.lane.b32.xlu0 %v5324, 56
      %v7277 = vpop.permute.xlu0 %7276
      %7278 = vrot.lane.b32.xlu0 %v5325, 56
      %v7279 = vpop.permute.xlu0 %7278
      %7280 = vrot.lane.b32.xlu0 %v5326, 56
      %v7281 = vpop.permute.xlu0 %7280
      %7282 = vrot.lane.b32.xlu0 %v5327, 56
      %v7283 = vpop.permute.xlu0 %7282
      %7284 = vrot.lane.b32.xlu0 %v5328, 56
      %v7285 = vpop.permute.xlu0 %7284
      %7286 = vrot.lane.b32.xlu0 %v5329, 56
      %v7287 = vpop.permute.xlu0 %7286
      %7288 = vrot.lane.b32.xlu0 %v5905, 56
      %v7289 = vpop.permute.xlu0 %7288
      %7290 = vrot.lane.b32.xlu0 %v6531, 56
      %v7291 = vpop.permute.xlu0 %7290
      %7292 = vrot.lane.b32.xlu0 %v6532, 56
      %v7293 = vpop.permute.xlu0 %7292
      %7294 = vrot.lane.b32.xlu0 %v6533, 56
      %v7295 = vpop.permute.xlu0 %7294
      %7296 = vrot.lane.b32.xlu0 %v6534, 56
      %v7297 = vpop.permute.xlu0 %7296
      %7298 = vrot.lane.b32.xlu0 %v6535, 56
      %v7299 = vpop.permute.xlu0 %7298
      %7300 = vrot.lane.b32.xlu0 %v6536, 56
      %v7301 = vpop.permute.xlu0 %7300
      %7302 = vrot.lane.b32.xlu0 %v6537, 56
      %v7303 = vpop.permute.xlu0 %7302
      %7304 = vrot.lane.b32.xlu0 %v6538, 56
      %v7305 = vpop.permute.xlu0 %7304
      %7306 = vrot.lane.b32.xlu0 %v6539, 56
      %v7307 = vpop.permute.xlu0 %7306
      %7308 = vrot.lane.b32.xlu0 %v6540, 56
      %v7309 = vpop.permute.xlu0 %7308
      %7310 = vrot.lane.b32.xlu0 %v6541, 56
      %v7311 = vpop.permute.xlu0 %7310
      %7312 = vrot.lane.b32.xlu0 %v6542, 56
      %v7313 = vpop.permute.xlu0 %7312
      %7314 = vrot.lane.b32.xlu0 %v6543, 56
      %v7315 = vpop.permute.xlu0 %7314
      %7316 = vrot.lane.b32.xlu0 %v6544, 56
      %v7317 = vpop.permute.xlu0 %7316
      %7318 = vrot.lane.b32.xlu0 %v6545, 56
      %v7319 = vpop.permute.xlu0 %7318
      %7320 = vrot.lane.b32.xlu0 %v7065, 56
      %v7321 = vpop.permute.xlu0 %7320
      %vm7322 = vcmask 64512
      %v7325 = vsel %vm7322, %v4818, %v5331
      %v7328 = vsel %vm7322, %v4819, %v5333
      %v7331 = vsel %vm7322, %v4820, %v5335
      %v7334 = vsel %vm7322, %v4821, %v5337
      %v7337 = vsel %vm7322, %v4822, %v5339
      %v7340 = vsel %vm7322, %v4823, %v5341
      %v7343 = vsel %vm7322, %v4824, %v5343
      %v7346 = vsel %vm7322, %v4825, %v5345
      %v7349 = vsel %vm7322, %v4826, %v5347
      %v7352 = vsel %vm7322, %v4827, %v5349
      %v7355 = vsel %vm7322, %v4828, %v5351
      %v7358 = vsel %vm7322, %v4829, %v5353
      %v7361 = vsel %vm7322, %v4830, %v5355
      %v7364 = vsel %vm7322, %v4831, %v5357
      %v7367 = vsel %vm7322, %v4832, %v5359
      %v7370 = vsel %vm7322, %v4833, %v5361
      %v7373 = vsel %vm7322, %v4834, %v5363
      %v7376 = vsel %vm7322, %v4835, %v5365
      %v7379 = vsel %vm7322, %v4836, %v5367
      %v7382 = vsel %vm7322, %v4837, %v5369
      %v7385 = vsel %vm7322, %v4838, %v5371
      %v7388 = vsel %vm7322, %v4839, %v5373
      %v7391 = vsel %vm7322, %v4840, %v5375
      %v7394 = vsel %vm7322, %v4841, %v5377
      %v7397 = vsel %vm7322, %v4842, %v5379
      %v7400 = vsel %vm7322, %v4843, %v5381
      %v7403 = vsel %vm7322, %v4844, %v5383
      %v7406 = vsel %vm7322, %v4845, %v5385
      %v7409 = vsel %vm7322, %v4846, %v5387
      %v7412 = vsel %vm7322, %v4847, %v5389
      %v7415 = vsel %vm7322, %v4848, %v5391
      %v7418 = vsel %vm7322, %v4849, %v5393
      %v7421 = vsel %vm7322, %v4850, %v5395
      %v7424 = vsel %vm7322, %v4851, %v5397
      %v7427 = vsel %vm7322, %v4852, %v5399
      %v7430 = vsel %vm7322, %v4853, %v5401
      %v7433 = vsel %vm7322, %v4854, %v5403
      %v7436 = vsel %vm7322, %v4855, %v5405
      %v7439 = vsel %vm7322, %v4856, %v5407
      %v7442 = vsel %vm7322, %v4857, %v5409
      %v7445 = vsel %vm7322, %v4858, %v5411
      %v7448 = vsel %vm7322, %v4859, %v5413
      %v7451 = vsel %vm7322, %v4860, %v5415
      %v7454 = vsel %vm7322, %v4861, %v5417
      %v7457 = vsel %vm7322, %v4862, %v5419
      %v7460 = vsel %vm7322, %v4863, %v5421
      %v7463 = vsel %vm7322, %v4864, %v5423
      %v7466 = vsel %vm7322, %v4865, %v5425
      %v7469 = vsel %vm7322, %v4866, %v5427
      %v7472 = vsel %vm7322, %v4867, %v5429
      %v7475 = vsel %vm7322, %v4868, %v5431
      %v7478 = vsel %vm7322, %v4869, %v5433
      %v7481 = vsel %vm7322, %v4870, %v5435
      %v7484 = vsel %vm7322, %v4871, %v5437
      %v7487 = vsel %vm7322, %v4872, %v5439
      %v7490 = vsel %vm7322, %v4873, %v5441
      %v7493 = vsel %vm7322, %v4874, %v5443
      %v7496 = vsel %vm7322, %v4875, %v5445
      %v7499 = vsel %vm7322, %v4876, %v5447
      %v7502 = vsel %vm7322, %v4877, %v5449
      %v7505 = vsel %vm7322, %v4878, %v5451
      %v7508 = vsel %vm7322, %v4879, %v5453
      %v7511 = vsel %vm7322, %v4880, %v5455
      %v7514 = vsel %vm7322, %v4881, %v5457
      %v7517 = vsel %vm7322, %v4882, %v5459
      %v7520 = vsel %vm7322, %v4883, %v5461
      %v7523 = vsel %vm7322, %v4884, %v5463
      %v7526 = vsel %vm7322, %v4885, %v5465
      %v7529 = vsel %vm7322, %v4886, %v5467
      %v7532 = vsel %vm7322, %v4887, %v5469
      %v7535 = vsel %vm7322, %v4888, %v5471
      %v7538 = vsel %vm7322, %v4889, %v5473
      %v7541 = vsel %vm7322, %v4890, %v5475
      %v7544 = vsel %vm7322, %v4891, %v5477
      %v7547 = vsel %vm7322, %v4892, %v5479
      %v7550 = vsel %vm7322, %v4893, %v5481
      %v7553 = vsel %vm7322, %v4894, %v5483
      %v7556 = vsel %vm7322, %v4895, %v5485
      %v7559 = vsel %vm7322, %v4896, %v5487
      %v7562 = vsel %vm7322, %v4897, %v5489
      %v7565 = vsel %vm7322, %v4898, %v5491
      %v7568 = vsel %vm7322, %v4899, %v5493
      %v7571 = vsel %vm7322, %v4900, %v5495
      %v7574 = vsel %vm7322, %v4901, %v5497
      %v7577 = vsel %vm7322, %v4902, %v5499
      %v7580 = vsel %vm7322, %v4903, %v5501
      %v7583 = vsel %vm7322, %v4904, %v5503
      %v7586 = vsel %vm7322, %v4905, %v5505
      %v7589 = vsel %vm7322, %v4906, %v5507
      %v7592 = vsel %vm7322, %v4907, %v5509
      %v7595 = vsel %vm7322, %v4908, %v5511
      %v7598 = vsel %vm7322, %v4909, %v5513
      %v7601 = vsel %vm7322, %v4910, %v5515
      %v7604 = vsel %vm7322, %v4911, %v5517
      %v7607 = vsel %vm7322, %v4912, %v5519
      %v7610 = vsel %vm7322, %v4913, %v5521
      %v7613 = vsel %vm7322, %v4914, %v5523
      %v7616 = vsel %vm7322, %v4915, %v5525
      %v7619 = vsel %vm7322, %v4916, %v5527
      %v7622 = vsel %vm7322, %v4917, %v5529
      %v7625 = vsel %vm7322, %v4918, %v5531
      %v7628 = vsel %vm7322, %v4919, %v5533
      %v7631 = vsel %vm7322, %v4920, %v5535
      %v7634 = vsel %vm7322, %v4921, %v5537
      %v7637 = vsel %vm7322, %v4922, %v5539
      %v7640 = vsel %vm7322, %v4923, %v5541
      %v7643 = vsel %vm7322, %v4924, %v5543
      %v7646 = vsel %vm7322, %v4925, %v5545
      %v7649 = vsel %vm7322, %v4926, %v5547
      %v7652 = vsel %vm7322, %v4927, %v5549
      %v7655 = vsel %vm7322, %v4928, %v5551
      %v7658 = vsel %vm7322, %v4929, %v5553
      %v7661 = vsel %vm7322, %v4930, %v5555
      %v7664 = vsel %vm7322, %v4931, %v5557
      %v7667 = vsel %vm7322, %v4932, %v5559
      %v7670 = vsel %vm7322, %v4933, %v5561
      %v7673 = vsel %vm7322, %v4934, %v5563
      %v7676 = vsel %vm7322, %v4935, %v5565
      %v7679 = vsel %vm7322, %v4936, %v5567
      %v7682 = vsel %vm7322, %v4937, %v5569
      %v7685 = vsel %vm7322, %v4938, %v5571
      %v7688 = vsel %vm7322, %v4939, %v5573
      %v7691 = vsel %vm7322, %v4940, %v5575
      %v7694 = vsel %vm7322, %v4941, %v5577
      %v7697 = vsel %vm7322, %v4942, %v5579
      %v7700 = vsel %vm7322, %v4943, %v5581
      %v7703 = vsel %vm7322, %v4944, %v5583
      %v7706 = vsel %vm7322, %v4945, %v5585
      %vm7707 = vcmask 130048
      %v7709 = vsel %vm7707, %v7325, %v5627
      %v7711 = vsel %vm7707, %v7328, %v5629
      %v7713 = vsel %vm7707, %v7331, %v5631
      %v7715 = vsel %vm7707, %v7334, %v5633
      %v7717 = vsel %vm7707, %v7337, %v5635
      %v7719 = vsel %vm7707, %v7340, %v5637
      %v7721 = vsel %vm7707, %v7343, %v5639
      %v7723 = vsel %vm7707, %v7346, %v5641
      %v7725 = vsel %vm7707, %v7349, %v5643
      %v7727 = vsel %vm7707, %v7352, %v5645
      %v7729 = vsel %vm7707, %v7355, %v5647
      %v7731 = vsel %vm7707, %v7358, %v5649
      %v7733 = vsel %vm7707, %v7361, %v5651
      %v7735 = vsel %vm7707, %v7364, %v5653
      %v7737 = vsel %vm7707, %v7367, %v5655
      %v7739 = vsel %vm7707, %v7370, %v5657
      %v7741 = vsel %vm7707, %v7373, %v5659
      %v7743 = vsel %vm7707, %v7376, %v5661
      %v7745 = vsel %vm7707, %v7379, %v5663
      %v7747 = vsel %vm7707, %v7382, %v5665
      %v7749 = vsel %vm7707, %v7385, %v5667
      %v7751 = vsel %vm7707, %v7388, %v5669
      %v7753 = vsel %vm7707, %v7391, %v5671
      %v7755 = vsel %vm7707, %v7394, %v5673
      %v7757 = vsel %vm7707, %v7397, %v5675
      %v7759 = vsel %vm7707, %v7400, %v5677
      %v7761 = vsel %vm7707, %v7403, %v5679
      %v7763 = vsel %vm7707, %v7406, %v5681
      %v7765 = vsel %vm7707, %v7409, %v5683
      %v7767 = vsel %vm7707, %v7412, %v5685
      %v7769 = vsel %vm7707, %v7415, %v5687
      %v7771 = vsel %vm7707, %v7418, %v5689
      %v7773 = vsel %vm7707, %v7421, %v5691
      %v7775 = vsel %vm7707, %v7424, %v5693
      %v7777 = vsel %vm7707, %v7427, %v5695
      %v7779 = vsel %vm7707, %v7430, %v5697
      %v7781 = vsel %vm7707, %v7433, %v5699
      %v7783 = vsel %vm7707, %v7436, %v5701
      %v7785 = vsel %vm7707, %v7439, %v5703
      %v7787 = vsel %vm7707, %v7442, %v5705
      %v7789 = vsel %vm7707, %v7445, %v5707
      %v7791 = vsel %vm7707, %v7448, %v5709
      %v7793 = vsel %vm7707, %v7451, %v5711
      %v7795 = vsel %vm7707, %v7454, %v5713
      %v7797 = vsel %vm7707, %v7457, %v5715
      %v7799 = vsel %vm7707, %v7460, %v5717
      %v7801 = vsel %vm7707, %v7463, %v5719
      %v7803 = vsel %vm7707, %v7466, %v5721
      %v7805 = vsel %vm7707, %v7469, %v5723
      %v7807 = vsel %vm7707, %v7472, %v5725
      %v7809 = vsel %vm7707, %v7475, %v5727
      %v7811 = vsel %vm7707, %v7478, %v5729
      %v7813 = vsel %vm7707, %v7481, %v5731
      %v7815 = vsel %vm7707, %v7484, %v5733
      %v7817 = vsel %vm7707, %v7487, %v5735
      %v7819 = vsel %vm7707, %v7490, %v5737
      %v7821 = vsel %vm7707, %v7493, %v5739
      %v7823 = vsel %vm7707, %v7496, %v5741
      %v7825 = vsel %vm7707, %v7499, %v5743
      %v7827 = vsel %vm7707, %v7502, %v5745
      %v7829 = vsel %vm7707, %v7505, %v5747
      %v7831 = vsel %vm7707, %v7508, %v5749
      %v7833 = vsel %vm7707, %v7511, %v5751
      %v7835 = vsel %vm7707, %v7514, %v5753
      %v7837 = vsel %vm7707, %v7517, %v5755
      %v7839 = vsel %vm7707, %v7520, %v5757
      %v7841 = vsel %vm7707, %v7523, %v5759
      %v7843 = vsel %vm7707, %v7526, %v5761
      %v7845 = vsel %vm7707, %v7529, %v5763
      %v7847 = vsel %vm7707, %v7532, %v5765
      %v7849 = vsel %vm7707, %v7535, %v5767
      %v7851 = vsel %vm7707, %v7538, %v5769
      %v7853 = vsel %vm7707, %v7541, %v5771
      %v7855 = vsel %vm7707, %v7544, %v5773
      %v7857 = vsel %vm7707, %v7547, %v5775
      %v7859 = vsel %vm7707, %v7550, %v5777
      %v7861 = vsel %vm7707, %v7553, %v5779
      %v7863 = vsel %vm7707, %v7556, %v5781
      %v7865 = vsel %vm7707, %v7559, %v5783
      %v7867 = vsel %vm7707, %v7562, %v5785
      %v7869 = vsel %vm7707, %v7565, %v5787
      %v7871 = vsel %vm7707, %v7568, %v5789
      %v7873 = vsel %vm7707, %v7571, %v5791
      %v7875 = vsel %vm7707, %v7574, %v5793
      %v7877 = vsel %vm7707, %v7577, %v5795
      %v7879 = vsel %vm7707, %v7580, %v5797
      %v7881 = vsel %vm7707, %v7583, %v5799
      %v7883 = vsel %vm7707, %v7586, %v5801
      %v7885 = vsel %vm7707, %v7589, %v5803
      %v7887 = vsel %vm7707, %v7592, %v5805
      %v7889 = vsel %vm7707, %v7595, %v5807
      %v7891 = vsel %vm7707, %v7598, %v5809
      %v7893 = vsel %vm7707, %v7601, %v5811
      %v7895 = vsel %vm7707, %v7604, %v5813
      %v7897 = vsel %vm7707, %v7607, %v5815
      %v7899 = vsel %vm7707, %v7610, %v5817
      %v7901 = vsel %vm7707, %v7613, %v5819
      %v7903 = vsel %vm7707, %v7616, %v5821
      %v7905 = vsel %vm7707, %v7619, %v5823
      %v7907 = vsel %vm7707, %v7622, %v5825
      %v7909 = vsel %vm7707, %v7625, %v5827
      %v7911 = vsel %vm7707, %v7628, %v5829
      %v7913 = vsel %vm7707, %v7631, %v5831
      %v7915 = vsel %vm7707, %v7634, %v5833
      %v7917 = vsel %vm7707, %v7637, %v5835
      %v7919 = vsel %vm7707, %v7640, %v5837
      %v7921 = vsel %vm7707, %v7643, %v5839
      %v7923 = vsel %vm7707, %v7646, %v5841
      %v7925 = vsel %vm7707, %v7649, %v5843
      %v7927 = vsel %vm7707, %v7652, %v5845
      %v7929 = vsel %vm7707, %v7655, %v5847
      %v7931 = vsel %vm7707, %v7658, %v5849
      %v7933 = vsel %vm7707, %v7661, %v5851
      %v7935 = vsel %vm7707, %v7664, %v5853
      %v7937 = vsel %vm7707, %v7667, %v5855
      %v7939 = vsel %vm7707, %v7670, %v5857
      %v7941 = vsel %vm7707, %v7673, %v5859
      %v7943 = vsel %vm7707, %v7676, %v5861
      %v7945 = vsel %vm7707, %v7679, %v5863
      %v7947 = vsel %vm7707, %v7682, %v5865
      %v7949 = vsel %vm7707, %v7685, %v5867
      %v7951 = vsel %vm7707, %v7688, %v5869
      %v7953 = vsel %vm7707, %v7691, %v5871
      %v7955 = vsel %vm7707, %v7694, %v5873
      %v7957 = vsel %vm7707, %v7697, %v5875
      %v7959 = vsel %vm7707, %v7700, %v5877
      %v7961 = vsel %vm7707, %v7703, %v5879
      %v7963 = vsel %vm7707, %v7706, %v5881
      %vm7964 = vcmask 195584
      %v7966 = vsel %vm7964, %v7709, %v5907
      %v7968 = vsel %vm7964, %v7711, %v5909
      %v7970 = vsel %vm7964, %v7713, %v5911
      %v7972 = vsel %vm7964, %v7715, %v5913
      %v7974 = vsel %vm7964, %v7717, %v5915
      %v7976 = vsel %vm7964, %v7719, %v5917
      %v7978 = vsel %vm7964, %v7721, %v5919
      %v7980 = vsel %vm7964, %v7723, %v5921
      %v7982 = vsel %vm7964, %v7725, %v5923
      %v7984 = vsel %vm7964, %v7727, %v5925
      %v7986 = vsel %vm7964, %v7729, %v5927
      %v7988 = vsel %vm7964, %v7731, %v5929
      %v7990 = vsel %vm7964, %v7733, %v5931
      %v7992 = vsel %vm7964, %v7735, %v5933
      %v7994 = vsel %vm7964, %v7737, %v5935
      %v7996 = vsel %vm7964, %v7739, %v5937
      %v7998 = vsel %vm7964, %v7741, %v5939
      %v8000 = vsel %vm7964, %v7743, %v5941
      %v8002 = vsel %vm7964, %v7745, %v5943
      %v8004 = vsel %vm7964, %v7747, %v5945
      %v8006 = vsel %vm7964, %v7749, %v5947
      %v8008 = vsel %vm7964, %v7751, %v5949
      %v8010 = vsel %vm7964, %v7753, %v5951
      %v8012 = vsel %vm7964, %v7755, %v5953
      %v8014 = vsel %vm7964, %v7757, %v5955
      %v8016 = vsel %vm7964, %v7759, %v5957
      %v8018 = vsel %vm7964, %v7761, %v5959
      %v8020 = vsel %vm7964, %v7763, %v5961
      %v8022 = vsel %vm7964, %v7765, %v5963
      %v8024 = vsel %vm7964, %v7767, %v5965
      %v8026 = vsel %vm7964, %v7769, %v5967
      %v8028 = vsel %vm7964, %v7771, %v5969
      %v8030 = vsel %vm7964, %v7773, %v5971
      %v8032 = vsel %vm7964, %v7775, %v5973
      %v8034 = vsel %vm7964, %v7777, %v5975
      %v8036 = vsel %vm7964, %v7779, %v5977
      %v8038 = vsel %vm7964, %v7781, %v5979
      %v8040 = vsel %vm7964, %v7783, %v5981
      %v8042 = vsel %vm7964, %v7785, %v5983
      %v8044 = vsel %vm7964, %v7787, %v5985
      %v8046 = vsel %vm7964, %v7789, %v5987
      %v8048 = vsel %vm7964, %v7791, %v5989
      %v8050 = vsel %vm7964, %v7793, %v5991
      %v8052 = vsel %vm7964, %v7795, %v5993
      %v8054 = vsel %vm7964, %v7797, %v5995
      %v8056 = vsel %vm7964, %v7799, %v5997
      %v8058 = vsel %vm7964, %v7801, %v5999
      %v8060 = vsel %vm7964, %v7803, %v6001
      %v8062 = vsel %vm7964, %v7805, %v6003
      %v8064 = vsel %vm7964, %v7807, %v6005
      %v8066 = vsel %vm7964, %v7809, %v6007
      %v8068 = vsel %vm7964, %v7811, %v6009
      %v8070 = vsel %vm7964, %v7813, %v6011
      %v8072 = vsel %vm7964, %v7815, %v6013
      %v8074 = vsel %vm7964, %v7817, %v6015
      %v8076 = vsel %vm7964, %v7819, %v6017
      %v8078 = vsel %vm7964, %v7821, %v6019
      %v8080 = vsel %vm7964, %v7823, %v6021
      %v8082 = vsel %vm7964, %v7825, %v6023
      %v8084 = vsel %vm7964, %v7827, %v6025
      %v8086 = vsel %vm7964, %v7829, %v6027
      %v8088 = vsel %vm7964, %v7831, %v6029
      %v8090 = vsel %vm7964, %v7833, %v6031
      %v8092 = vsel %vm7964, %v7835, %v6033
      %v8094 = vsel %vm7964, %v7837, %v6035
      %v8096 = vsel %vm7964, %v7839, %v6037
      %v8098 = vsel %vm7964, %v7841, %v6039
      %v8100 = vsel %vm7964, %v7843, %v6041
      %v8102 = vsel %vm7964, %v7845, %v6043
      %v8104 = vsel %vm7964, %v7847, %v6045
      %v8106 = vsel %vm7964, %v7849, %v6047
      %v8108 = vsel %vm7964, %v7851, %v6049
      %v8110 = vsel %vm7964, %v7853, %v6051
      %v8112 = vsel %vm7964, %v7855, %v6053
      %v8114 = vsel %vm7964, %v7857, %v6055
      %v8116 = vsel %vm7964, %v7859, %v6057
      %v8118 = vsel %vm7964, %v7861, %v6059
      %v8120 = vsel %vm7964, %v7863, %v6061
      %v8122 = vsel %vm7964, %v7865, %v6063
      %v8124 = vsel %vm7964, %v7867, %v6065
      %v8126 = vsel %vm7964, %v7869, %v6067
      %v8128 = vsel %vm7964, %v7871, %v6069
      %v8130 = vsel %vm7964, %v7873, %v6071
      %v8132 = vsel %vm7964, %v7875, %v6073
      %v8134 = vsel %vm7964, %v7877, %v6075
      %v8136 = vsel %vm7964, %v7879, %v6077
      %v8138 = vsel %vm7964, %v7881, %v6079
      %v8140 = vsel %vm7964, %v7883, %v6081
      %v8142 = vsel %vm7964, %v7885, %v6083
      %v8144 = vsel %vm7964, %v7887, %v6085
      %v8146 = vsel %vm7964, %v7889, %v6087
      %v8148 = vsel %vm7964, %v7891, %v6089
      %v8150 = vsel %vm7964, %v7893, %v6091
      %v8152 = vsel %vm7964, %v7895, %v6093
      %v8154 = vsel %vm7964, %v7897, %v6095
      %v8156 = vsel %vm7964, %v7899, %v6097
      %v8158 = vsel %vm7964, %v7901, %v6099
      %v8160 = vsel %vm7964, %v7903, %v6101
      %v8162 = vsel %vm7964, %v7905, %v6103
      %v8164 = vsel %vm7964, %v7907, %v6105
      %v8166 = vsel %vm7964, %v7909, %v6107
      %v8168 = vsel %vm7964, %v7911, %v6109
      %v8170 = vsel %vm7964, %v7913, %v6111
      %v8172 = vsel %vm7964, %v7915, %v6113
      %v8174 = vsel %vm7964, %v7917, %v6115
      %v8176 = vsel %vm7964, %v7919, %v6117
      %v8178 = vsel %vm7964, %v7921, %v6119
      %v8180 = vsel %vm7964, %v7923, %v6121
      %v8182 = vsel %vm7964, %v7925, %v6123
      %v8184 = vsel %vm7964, %v7927, %v6125
      %v8186 = vsel %vm7964, %v7929, %v6127
      %v8188 = vsel %vm7964, %v7931, %v6129
      %v8190 = vsel %vm7964, %v7933, %v6131
      %v8192 = vsel %vm7964, %v7935, %v6133
      %v8194 = vsel %vm7964, %v7937, %v6135
      %v8196 = vsel %vm7964, %v7939, %v6137
      %v8198 = vsel %vm7964, %v7941, %v6139
      %v8200 = vsel %vm7964, %v7943, %v6141
      %v8202 = vsel %vm7964, %v7945, %v6143
      %v8204 = vsel %vm7964, %v7947, %v6145
      %v8206 = vsel %vm7964, %v7949, %v6147
      %v8208 = vsel %vm7964, %v7951, %v6149
      %v8210 = vsel %vm7964, %v7953, %v6151
      %v8212 = vsel %vm7964, %v7955, %v6153
      %v8214 = vsel %vm7964, %v7957, %v6155
      %v8216 = vsel %vm7964, %v7959, %v6157
      %v8218 = vsel %vm7964, %v7961, %v6159
      %v8220 = vsel %vm7964, %v7963, %v6161
      %vm8221 = vcmask 261120
      %v8223 = vsel %vm8221, %v7966, %v6243
      %v8225 = vsel %vm8221, %v7968, %v6245
      %v8227 = vsel %vm8221, %v7970, %v6247
      %v8229 = vsel %vm8221, %v7972, %v6249
      %v8231 = vsel %vm8221, %v7974, %v6251
      %v8233 = vsel %vm8221, %v7976, %v6253
      %v8235 = vsel %vm8221, %v7978, %v6255
      %v8237 = vsel %vm8221, %v7980, %v6257
      %v8239 = vsel %vm8221, %v7982, %v6259
      %v8241 = vsel %vm8221, %v7984, %v6261
      %v8243 = vsel %vm8221, %v7986, %v6263
      %v8245 = vsel %vm8221, %v7988, %v6265
      %v8247 = vsel %vm8221, %v7990, %v6267
      %v8249 = vsel %vm8221, %v7992, %v6269
      %v8251 = vsel %vm8221, %v7994, %v6271
      %v8253 = vsel %vm8221, %v7996, %v6273
      %v8255 = vsel %vm8221, %v7998, %v6275
      %v8257 = vsel %vm8221, %v8000, %v6277
      %v8259 = vsel %vm8221, %v8002, %v6279
      %v8261 = vsel %vm8221, %v8004, %v6281
      %v8263 = vsel %vm8221, %v8006, %v6283
      %v8265 = vsel %vm8221, %v8008, %v6285
      %v8267 = vsel %vm8221, %v8010, %v6287
      %v8269 = vsel %vm8221, %v8012, %v6289
      %v8271 = vsel %vm8221, %v8014, %v6291
      %v8273 = vsel %vm8221, %v8016, %v6293
      %v8275 = vsel %vm8221, %v8018, %v6295
      %v8277 = vsel %vm8221, %v8020, %v6297
      %v8279 = vsel %vm8221, %v8022, %v6299
      %v8281 = vsel %vm8221, %v8024, %v6301
      %v8283 = vsel %vm8221, %v8026, %v6303
      %v8285 = vsel %vm8221, %v8028, %v6305
      %v8287 = vsel %vm8221, %v8030, %v6307
      %v8289 = vsel %vm8221, %v8032, %v6309
      %v8291 = vsel %vm8221, %v8034, %v6311
      %v8293 = vsel %vm8221, %v8036, %v6313
      %v8295 = vsel %vm8221, %v8038, %v6315
      %v8297 = vsel %vm8221, %v8040, %v6317
      %v8299 = vsel %vm8221, %v8042, %v6319
      %v8301 = vsel %vm8221, %v8044, %v6321
      %v8303 = vsel %vm8221, %v8046, %v6323
      %v8305 = vsel %vm8221, %v8048, %v6325
      %v8307 = vsel %vm8221, %v8050, %v6327
      %v8309 = vsel %vm8221, %v8052, %v6329
      %v8311 = vsel %vm8221, %v8054, %v6331
      %v8313 = vsel %vm8221, %v8056, %v6333
      %v8315 = vsel %vm8221, %v8058, %v6335
      %v8317 = vsel %vm8221, %v8060, %v6337
      %v8319 = vsel %vm8221, %v8062, %v6339
      %v8321 = vsel %vm8221, %v8064, %v6341
      %v8323 = vsel %vm8221, %v8066, %v6343
      %v8325 = vsel %vm8221, %v8068, %v6345
      %v8327 = vsel %vm8221, %v8070, %v6347
      %v8329 = vsel %vm8221, %v8072, %v6349
      %v8331 = vsel %vm8221, %v8074, %v6351
      %v8333 = vsel %vm8221, %v8076, %v6353
      %v8335 = vsel %vm8221, %v8078, %v6355
      %v8337 = vsel %vm8221, %v8080, %v6357
      %v8339 = vsel %vm8221, %v8082, %v6359
      %v8341 = vsel %vm8221, %v8084, %v6361
      %v8343 = vsel %vm8221, %v8086, %v6363
      %v8345 = vsel %vm8221, %v8088, %v6365
      %v8347 = vsel %vm8221, %v8090, %v6367
      %v8349 = vsel %vm8221, %v8092, %v6369
      %v8351 = vsel %vm8221, %v8094, %v6371
      %v8353 = vsel %vm8221, %v8096, %v6373
      %v8355 = vsel %vm8221, %v8098, %v6375
      %v8357 = vsel %vm8221, %v8100, %v6377
      %v8359 = vsel %vm8221, %v8102, %v6379
      %v8361 = vsel %vm8221, %v8104, %v6381
      %v8363 = vsel %vm8221, %v8106, %v6383
      %v8365 = vsel %vm8221, %v8108, %v6385
      %v8367 = vsel %vm8221, %v8110, %v6387
      %v8369 = vsel %vm8221, %v8112, %v6389
      %v8371 = vsel %vm8221, %v8114, %v6391
      %v8373 = vsel %vm8221, %v8116, %v6393
      %v8375 = vsel %vm8221, %v8118, %v6395
      %v8377 = vsel %vm8221, %v8120, %v6397
      %v8379 = vsel %vm8221, %v8122, %v6399
      %v8381 = vsel %vm8221, %v8124, %v6401
      %v8383 = vsel %vm8221, %v8126, %v6403
      %v8385 = vsel %vm8221, %v8128, %v6405
      %v8387 = vsel %vm8221, %v8130, %v6407
      %v8389 = vsel %vm8221, %v8132, %v6409
      %v8391 = vsel %vm8221, %v8134, %v6411
      %v8393 = vsel %vm8221, %v8136, %v6413
      %v8395 = vsel %vm8221, %v8138, %v6415
      %v8397 = vsel %vm8221, %v8140, %v6417
      %v8399 = vsel %vm8221, %v8142, %v6419
      %v8401 = vsel %vm8221, %v8144, %v6421
      %v8403 = vsel %vm8221, %v8146, %v6423
      %v8405 = vsel %vm8221, %v8148, %v6425
      %v8407 = vsel %vm8221, %v8150, %v6427
      %v8409 = vsel %vm8221, %v8152, %v6429
      %v8411 = vsel %vm8221, %v8154, %v6431
      %v8413 = vsel %vm8221, %v8156, %v6433
      %v8415 = vsel %vm8221, %v8158, %v6435
      %v8417 = vsel %vm8221, %v8160, %v6437
      %v8419 = vsel %vm8221, %v8162, %v6439
      %v8421 = vsel %vm8221, %v8164, %v6441
      %v8423 = vsel %vm8221, %v8166, %v6443
      %v8425 = vsel %vm8221, %v8168, %v6445
      %v8427 = vsel %vm8221, %v8170, %v6447
      %v8429 = vsel %vm8221, %v8172, %v6449
      %v8431 = vsel %vm8221, %v8174, %v6451
      %v8433 = vsel %vm8221, %v8176, %v6453
      %v8435 = vsel %vm8221, %v8178, %v6455
      %v8437 = vsel %vm8221, %v8180, %v6457
      %v8439 = vsel %vm8221, %v8182, %v6459
      %v8441 = vsel %vm8221, %v8184, %v6461
      %v8443 = vsel %vm8221, %v8186, %v6463
      %v8445 = vsel %vm8221, %v8188, %v6465
      %v8447 = vsel %vm8221, %v8190, %v6467
      %v8449 = vsel %vm8221, %v8192, %v6469
      %v8451 = vsel %vm8221, %v8194, %v6471
      %v8453 = vsel %vm8221, %v8196, %v6473
      %v8455 = vsel %vm8221, %v8198, %v6475
      %v8457 = vsel %vm8221, %v8200, %v6477
      %v8459 = vsel %vm8221, %v8202, %v6479
      %v8461 = vsel %vm8221, %v8204, %v6481
      %v8463 = vsel %vm8221, %v8206, %v6483
      %v8465 = vsel %vm8221, %v8208, %v6485
      %v8467 = vsel %vm8221, %v8210, %v6487
      %v8469 = vsel %vm8221, %v8212, %v6489
      %v8471 = vsel %vm8221, %v8214, %v6491
      %v8473 = vsel %vm8221, %v8216, %v6493
      %v8475 = vsel %vm8221, %v8218, %v6495
      %v8477 = vsel %vm8221, %v8220, %v6497
      %vm8478 = vcmask 326656
      %v8480 = vsel %vm8478, %v8223, %v6547
      %v8482 = vsel %vm8478, %v8225, %v6549
      %v8484 = vsel %vm8478, %v8227, %v6551
      %v8486 = vsel %vm8478, %v8229, %v6553
      %v8488 = vsel %vm8478, %v8231, %v6555
      %v8490 = vsel %vm8478, %v8233, %v6557
      %v8492 = vsel %vm8478, %v8235, %v6559
      %v8494 = vsel %vm8478, %v8237, %v6561
      %v8496 = vsel %vm8478, %v8239, %v6563
      %v8498 = vsel %vm8478, %v8241, %v6565
      %v8500 = vsel %vm8478, %v8243, %v6567
      %v8502 = vsel %vm8478, %v8245, %v6569
      %v8504 = vsel %vm8478, %v8247, %v6571
      %v8506 = vsel %vm8478, %v8249, %v6573
      %v8508 = vsel %vm8478, %v8251, %v6575
      %v8510 = vsel %vm8478, %v8253, %v6577
      %v8512 = vsel %vm8478, %v8255, %v6579
      %v8514 = vsel %vm8478, %v8257, %v6581
      %v8516 = vsel %vm8478, %v8259, %v6583
      %v8518 = vsel %vm8478, %v8261, %v6585
      %v8520 = vsel %vm8478, %v8263, %v6587
      %v8522 = vsel %vm8478, %v8265, %v6589
      %v8524 = vsel %vm8478, %v8267, %v6591
      %v8526 = vsel %vm8478, %v8269, %v6593
      %v8528 = vsel %vm8478, %v8271, %v6595
      %v8530 = vsel %vm8478, %v8273, %v6597
      %v8532 = vsel %vm8478, %v8275, %v6599
      %v8534 = vsel %vm8478, %v8277, %v6601
      %v8536 = vsel %vm8478, %v8279, %v6603
      %v8538 = vsel %vm8478, %v8281, %v6605
      %v8540 = vsel %vm8478, %v8283, %v6607
      %v8542 = vsel %vm8478, %v8285, %v6609
      %v8544 = vsel %vm8478, %v8287, %v6611
      %v8546 = vsel %vm8478, %v8289, %v6613
      %v8548 = vsel %vm8478, %v8291, %v6615
      %v8550 = vsel %vm8478, %v8293, %v6617
      %v8552 = vsel %vm8478, %v8295, %v6619
      %v8554 = vsel %vm8478, %v8297, %v6621
      %v8556 = vsel %vm8478, %v8299, %v6623
      %v8558 = vsel %vm8478, %v8301, %v6625
      %v8560 = vsel %vm8478, %v8303, %v6627
      %v8562 = vsel %vm8478, %v8305, %v6629
      %v8564 = vsel %vm8478, %v8307, %v6631
      %v8566 = vsel %vm8478, %v8309, %v6633
      %v8568 = vsel %vm8478, %v8311, %v6635
      %v8570 = vsel %vm8478, %v8313, %v6637
      %v8572 = vsel %vm8478, %v8315, %v6639
      %v8574 = vsel %vm8478, %v8317, %v6641
      %v8576 = vsel %vm8478, %v8319, %v6643
      %v8578 = vsel %vm8478, %v8321, %v6645
      %v8580 = vsel %vm8478, %v8323, %v6647
      %v8582 = vsel %vm8478, %v8325, %v6649
      %v8584 = vsel %vm8478, %v8327, %v6651
      %v8586 = vsel %vm8478, %v8329, %v6653
      %v8588 = vsel %vm8478, %v8331, %v6655
      %v8590 = vsel %vm8478, %v8333, %v6657
      %v8592 = vsel %vm8478, %v8335, %v6659
      %v8594 = vsel %vm8478, %v8337, %v6661
      %v8596 = vsel %vm8478, %v8339, %v6663
      %v8598 = vsel %vm8478, %v8341, %v6665
      %v8600 = vsel %vm8478, %v8343, %v6667
      %v8602 = vsel %vm8478, %v8345, %v6669
      %v8604 = vsel %vm8478, %v8347, %v6671
      %v8606 = vsel %vm8478, %v8349, %v6673
      %v8608 = vsel %vm8478, %v8351, %v6675
      %v8610 = vsel %vm8478, %v8353, %v6677
      %v8612 = vsel %vm8478, %v8355, %v6679
      %v8614 = vsel %vm8478, %v8357, %v6681
      %v8616 = vsel %vm8478, %v8359, %v6683
      %v8618 = vsel %vm8478, %v8361, %v6685
      %v8620 = vsel %vm8478, %v8363, %v6687
      %v8622 = vsel %vm8478, %v8365, %v6689
      %v8624 = vsel %vm8478, %v8367, %v6691
      %v8626 = vsel %vm8478, %v8369, %v6693
      %v8628 = vsel %vm8478, %v8371, %v6695
      %v8630 = vsel %vm8478, %v8373, %v6697
      %v8632 = vsel %vm8478, %v8375, %v6699
      %v8634 = vsel %vm8478, %v8377, %v6701
      %v8636 = vsel %vm8478, %v8379, %v6703
      %v8638 = vsel %vm8478, %v8381, %v6705
      %v8640 = vsel %vm8478, %v8383, %v6707
      %v8642 = vsel %vm8478, %v8385, %v6709
      %v8644 = vsel %vm8478, %v8387, %v6711
      %v8646 = vsel %vm8478, %v8389, %v6713
      %v8648 = vsel %vm8478, %v8391, %v6715
      %v8650 = vsel %vm8478, %v8393, %v6717
      %v8652 = vsel %vm8478, %v8395, %v6719
      %v8654 = vsel %vm8478, %v8397, %v6721
      %v8656 = vsel %vm8478, %v8399, %v6723
      %v8658 = vsel %vm8478, %v8401, %v6725
      %v8660 = vsel %vm8478, %v8403, %v6727
      %v8662 = vsel %vm8478, %v8405, %v6729
      %v8664 = vsel %vm8478, %v8407, %v6731
      %v8666 = vsel %vm8478, %v8409, %v6733
      %v8668 = vsel %vm8478, %v8411, %v6735
      %v8670 = vsel %vm8478, %v8413, %v6737
      %v8672 = vsel %vm8478, %v8415, %v6739
      %v8674 = vsel %vm8478, %v8417, %v6741
      %v8676 = vsel %vm8478, %v8419, %v6743
      %v8678 = vsel %vm8478, %v8421, %v6745
      %v8680 = vsel %vm8478, %v8423, %v6747
      %v8682 = vsel %vm8478, %v8425, %v6749
      %v8684 = vsel %vm8478, %v8427, %v6751
      %v8686 = vsel %vm8478, %v8429, %v6753
      %v8688 = vsel %vm8478, %v8431, %v6755
      %v8690 = vsel %vm8478, %v8433, %v6757
      %v8692 = vsel %vm8478, %v8435, %v6759
      %v8694 = vsel %vm8478, %v8437, %v6761
      %v8696 = vsel %vm8478, %v8439, %v6763
      %v8698 = vsel %vm8478, %v8441, %v6765
      %v8700 = vsel %vm8478, %v8443, %v6767
      %v8702 = vsel %vm8478, %v8445, %v6769
      %v8704 = vsel %vm8478, %v8447, %v6771
      %v8706 = vsel %vm8478, %v8449, %v6773
      %v8708 = vsel %vm8478, %v8451, %v6775
      %v8710 = vsel %vm8478, %v8453, %v6777
      %v8712 = vsel %vm8478, %v8455, %v6779
      %v8714 = vsel %vm8478, %v8457, %v6781
      %v8716 = vsel %vm8478, %v8459, %v6783
      %v8718 = vsel %vm8478, %v8461, %v6785
      %v8720 = vsel %vm8478, %v8463, %v6787
      %v8722 = vsel %vm8478, %v8465, %v6789
      %v8724 = vsel %vm8478, %v8467, %v6791
      %v8726 = vsel %vm8478, %v8469, %v6793
      %v8728 = vsel %vm8478, %v8471, %v6795
      %v8730 = vsel %vm8478, %v8473, %v6797
      %v8732 = vsel %vm8478, %v8475, %v6799
      %v8734 = vsel %vm8478, %v8477, %v6801
      %vm8735 = vcmask 392192
      %v8737 = vsel %vm8735, %v8480, %v6808
      %v8739 = vsel %vm8735, %v8482, %v6810
      %v8741 = vsel %vm8735, %v8484, %v6812
      %v8743 = vsel %vm8735, %v8486, %v6814
      %v8745 = vsel %vm8735, %v8488, %v6816
      %v8747 = vsel %vm8735, %v8490, %v6818
      %v8749 = vsel %vm8735, %v8492, %v6820
      %v8751 = vsel %vm8735, %v8494, %v6822
      %v8753 = vsel %vm8735, %v8496, %v6824
      %v8755 = vsel %vm8735, %v8498, %v6826
      %v8757 = vsel %vm8735, %v8500, %v6828
      %v8759 = vsel %vm8735, %v8502, %v6830
      %v8761 = vsel %vm8735, %v8504, %v6832
      %v8763 = vsel %vm8735, %v8506, %v6834
      %v8765 = vsel %vm8735, %v8508, %v6836
      %v8767 = vsel %vm8735, %v8510, %v6838
      %v8769 = vsel %vm8735, %v8512, %v6840
      %v8771 = vsel %vm8735, %v8514, %v6842
      %v8773 = vsel %vm8735, %v8516, %v6844
      %v8775 = vsel %vm8735, %v8518, %v6846
      %v8777 = vsel %vm8735, %v8520, %v6848
      %v8779 = vsel %vm8735, %v8522, %v6850
      %v8781 = vsel %vm8735, %v8524, %v6852
      %v8783 = vsel %vm8735, %v8526, %v6854
      %v8785 = vsel %vm8735, %v8528, %v6856
      %v8787 = vsel %vm8735, %v8530, %v6858
      %v8789 = vsel %vm8735, %v8532, %v6860
      %v8791 = vsel %vm8735, %v8534, %v6862
      %v8793 = vsel %vm8735, %v8536, %v6864
      %v8795 = vsel %vm8735, %v8538, %v6866
      %v8797 = vsel %vm8735, %v8540, %v6868
      %v8799 = vsel %vm8735, %v8542, %v6870
      %v8801 = vsel %vm8735, %v8544, %v6872
      %v8803 = vsel %vm8735, %v8546, %v6874
      %v8805 = vsel %vm8735, %v8548, %v6876
      %v8807 = vsel %vm8735, %v8550, %v6878
      %v8809 = vsel %vm8735, %v8552, %v6880
      %v8811 = vsel %vm8735, %v8554, %v6882
      %v8813 = vsel %vm8735, %v8556, %v6884
      %v8815 = vsel %vm8735, %v8558, %v6886
      %v8817 = vsel %vm8735, %v8560, %v6888
      %v8819 = vsel %vm8735, %v8562, %v6890
      %v8821 = vsel %vm8735, %v8564, %v6892
      %v8823 = vsel %vm8735, %v8566, %v6894
      %v8825 = vsel %vm8735, %v8568, %v6896
      %v8827 = vsel %vm8735, %v8570, %v6898
      %v8829 = vsel %vm8735, %v8572, %v6900
      %v8831 = vsel %vm8735, %v8574, %v6902
      %v8833 = vsel %vm8735, %v8576, %v6904
      %v8835 = vsel %vm8735, %v8578, %v6906
      %v8837 = vsel %vm8735, %v8580, %v6908
      %v8839 = vsel %vm8735, %v8582, %v6910
      %v8841 = vsel %vm8735, %v8584, %v6912
      %v8843 = vsel %vm8735, %v8586, %v6914
      %v8845 = vsel %vm8735, %v8588, %v6916
      %v8847 = vsel %vm8735, %v8590, %v6918
      %v8849 = vsel %vm8735, %v8592, %v6920
      %v8851 = vsel %vm8735, %v8594, %v6922
      %v8853 = vsel %vm8735, %v8596, %v6924
      %v8855 = vsel %vm8735, %v8598, %v6926
      %v8857 = vsel %vm8735, %v8600, %v6928
      %v8859 = vsel %vm8735, %v8602, %v6930
      %v8861 = vsel %vm8735, %v8604, %v6932
      %v8863 = vsel %vm8735, %v8606, %v6934
      %v8865 = vsel %vm8735, %v8608, %v6936
      %v8867 = vsel %vm8735, %v8610, %v6938
      %v8869 = vsel %vm8735, %v8612, %v6940
      %v8871 = vsel %vm8735, %v8614, %v6942
      %v8873 = vsel %vm8735, %v8616, %v6944
      %v8875 = vsel %vm8735, %v8618, %v6946
      %v8877 = vsel %vm8735, %v8620, %v6948
      %v8879 = vsel %vm8735, %v8622, %v6950
      %v8881 = vsel %vm8735, %v8624, %v6952
      %v8883 = vsel %vm8735, %v8626, %v6954
      %v8885 = vsel %vm8735, %v8628, %v6956
      %v8887 = vsel %vm8735, %v8630, %v6958
      %v8889 = vsel %vm8735, %v8632, %v6960
      %v8891 = vsel %vm8735, %v8634, %v6962
      %v8893 = vsel %vm8735, %v8636, %v6964
      %v8895 = vsel %vm8735, %v8638, %v6966
      %v8897 = vsel %vm8735, %v8640, %v6968
      %v8899 = vsel %vm8735, %v8642, %v6970
      %v8901 = vsel %vm8735, %v8644, %v6972
      %v8903 = vsel %vm8735, %v8646, %v6974
      %v8905 = vsel %vm8735, %v8648, %v6976
      %v8907 = vsel %vm8735, %v8650, %v6978
      %v8909 = vsel %vm8735, %v8652, %v6980
      %v8911 = vsel %vm8735, %v8654, %v6982
      %v8913 = vsel %vm8735, %v8656, %v6984
      %v8915 = vsel %vm8735, %v8658, %v6986
      %v8917 = vsel %vm8735, %v8660, %v6988
      %v8919 = vsel %vm8735, %v8662, %v6990
      %v8921 = vsel %vm8735, %v8664, %v6992
      %v8923 = vsel %vm8735, %v8666, %v6994
      %v8925 = vsel %vm8735, %v8668, %v6996
      %v8927 = vsel %vm8735, %v8670, %v6998
      %v8929 = vsel %vm8735, %v8672, %v7000
      %v8931 = vsel %vm8735, %v8674, %v7002
      %v8933 = vsel %vm8735, %v8676, %v7004
      %v8935 = vsel %vm8735, %v8678, %v7006
      %v8937 = vsel %vm8735, %v8680, %v7008
      %v8939 = vsel %vm8735, %v8682, %v7010
      %v8941 = vsel %vm8735, %v8684, %v7012
      %v8943 = vsel %vm8735, %v8686, %v7014
      %v8945 = vsel %vm8735, %v8688, %v7016
      %v8947 = vsel %vm8735, %v8690, %v7018
      %v8949 = vsel %vm8735, %v8692, %v7020
      %v8951 = vsel %vm8735, %v8694, %v7022
      %v8953 = vsel %vm8735, %v8696, %v7024
      %v8955 = vsel %vm8735, %v8698, %v7026
      %v8957 = vsel %vm8735, %v8700, %v7028
      %v8959 = vsel %vm8735, %v8702, %v7030
      %v8961 = vsel %vm8735, %v8704, %v7032
      %v8963 = vsel %vm8735, %v8706, %v7034
      %v8965 = vsel %vm8735, %v8708, %v7036
      %v8967 = vsel %vm8735, %v8710, %v7038
      %v8969 = vsel %vm8735, %v8712, %v7040
      %v8971 = vsel %vm8735, %v8714, %v7042
      %v8973 = vsel %vm8735, %v8716, %v7044
      %v8975 = vsel %vm8735, %v8718, %v7046
      %v8977 = vsel %vm8735, %v8720, %v7048
      %v8979 = vsel %vm8735, %v8722, %v7050
      %v8981 = vsel %vm8735, %v8724, %v7052
      %v8983 = vsel %vm8735, %v8726, %v7054
      %v8985 = vsel %vm8735, %v8728, %v7056
      %v8987 = vsel %vm8735, %v8730, %v7058
      %v8989 = vsel %vm8735, %v8732, %v7060
      %v8991 = vsel %vm8735, %v8734, %v7062
      %vm8992 = vcmask 457728
      %v8994 = vsel %vm8992, %v8737, %v7067
      %v8996 = vsel %vm8992, %v8739, %v7069
      %v8998 = vsel %vm8992, %v8741, %v7071
      %v9000 = vsel %vm8992, %v8743, %v7073
      %v9002 = vsel %vm8992, %v8745, %v7075
      %v9004 = vsel %vm8992, %v8747, %v7077
      %v9006 = vsel %vm8992, %v8749, %v7079
      %v9008 = vsel %vm8992, %v8751, %v7081
      %v9010 = vsel %vm8992, %v8753, %v7083
      %v9012 = vsel %vm8992, %v8755, %v7085
      %v9014 = vsel %vm8992, %v8757, %v7087
      %v9016 = vsel %vm8992, %v8759, %v7089
      %v9018 = vsel %vm8992, %v8761, %v7091
      %v9020 = vsel %vm8992, %v8763, %v7093
      %v9022 = vsel %vm8992, %v8765, %v7095
      %v9024 = vsel %vm8992, %v8767, %v7097
      %v9026 = vsel %vm8992, %v8769, %v7099
      %v9028 = vsel %vm8992, %v8771, %v7101
      %v9030 = vsel %vm8992, %v8773, %v7103
      %v9032 = vsel %vm8992, %v8775, %v7105
      %v9034 = vsel %vm8992, %v8777, %v7107
      %v9036 = vsel %vm8992, %v8779, %v7109
      %v9038 = vsel %vm8992, %v8781, %v7111
      %v9040 = vsel %vm8992, %v8783, %v7113
      %v9042 = vsel %vm8992, %v8785, %v7115
      %v9044 = vsel %vm8992, %v8787, %v7117
      %v9046 = vsel %vm8992, %v8789, %v7119
      %v9048 = vsel %vm8992, %v8791, %v7121
      %v9050 = vsel %vm8992, %v8793, %v7123
      %v9052 = vsel %vm8992, %v8795, %v7125
      %v9054 = vsel %vm8992, %v8797, %v7127
      %v9056 = vsel %vm8992, %v8799, %v7129
      %v9058 = vsel %vm8992, %v8801, %v7131
      %v9060 = vsel %vm8992, %v8803, %v7133
      %v9062 = vsel %vm8992, %v8805, %v7135
      %v9064 = vsel %vm8992, %v8807, %v7137
      %v9066 = vsel %vm8992, %v8809, %v7139
      %v9068 = vsel %vm8992, %v8811, %v7141
      %v9070 = vsel %vm8992, %v8813, %v7143
      %v9072 = vsel %vm8992, %v8815, %v7145
      %v9074 = vsel %vm8992, %v8817, %v7147
      %v9076 = vsel %vm8992, %v8819, %v7149
      %v9078 = vsel %vm8992, %v8821, %v7151
      %v9080 = vsel %vm8992, %v8823, %v7153
      %v9082 = vsel %vm8992, %v8825, %v7155
      %v9084 = vsel %vm8992, %v8827, %v7157
      %v9086 = vsel %vm8992, %v8829, %v7159
      %v9088 = vsel %vm8992, %v8831, %v7161
      %v9090 = vsel %vm8992, %v8833, %v7163
      %v9092 = vsel %vm8992, %v8835, %v7165
      %v9094 = vsel %vm8992, %v8837, %v7167
      %v9096 = vsel %vm8992, %v8839, %v7169
      %v9098 = vsel %vm8992, %v8841, %v7171
      %v9100 = vsel %vm8992, %v8843, %v7173
      %v9102 = vsel %vm8992, %v8845, %v7175
      %v9104 = vsel %vm8992, %v8847, %v7177
      %v9106 = vsel %vm8992, %v8849, %v7179
      %v9108 = vsel %vm8992, %v8851, %v7181
      %v9110 = vsel %vm8992, %v8853, %v7183
      %v9112 = vsel %vm8992, %v8855, %v7185
      %v9114 = vsel %vm8992, %v8857, %v7187
      %v9116 = vsel %vm8992, %v8859, %v7189
      %v9118 = vsel %vm8992, %v8861, %v7191
      %v9120 = vsel %vm8992, %v8863, %v7193
      %v9122 = vsel %vm8992, %v8865, %v7195
      %v9124 = vsel %vm8992, %v8867, %v7197
      %v9126 = vsel %vm8992, %v8869, %v7199
      %v9128 = vsel %vm8992, %v8871, %v7201
      %v9130 = vsel %vm8992, %v8873, %v7203
      %v9132 = vsel %vm8992, %v8875, %v7205
      %v9134 = vsel %vm8992, %v8877, %v7207
      %v9136 = vsel %vm8992, %v8879, %v7209
      %v9138 = vsel %vm8992, %v8881, %v7211
      %v9140 = vsel %vm8992, %v8883, %v7213
      %v9142 = vsel %vm8992, %v8885, %v7215
      %v9144 = vsel %vm8992, %v8887, %v7217
      %v9146 = vsel %vm8992, %v8889, %v7219
      %v9148 = vsel %vm8992, %v8891, %v7221
      %v9150 = vsel %vm8992, %v8893, %v7223
      %v9152 = vsel %vm8992, %v8895, %v7225
      %v9154 = vsel %vm8992, %v8897, %v7227
      %v9156 = vsel %vm8992, %v8899, %v7229
      %v9158 = vsel %vm8992, %v8901, %v7231
      %v9160 = vsel %vm8992, %v8903, %v7233
      %v9162 = vsel %vm8992, %v8905, %v7235
      %v9164 = vsel %vm8992, %v8907, %v7237
      %v9166 = vsel %vm8992, %v8909, %v7239
      %v9168 = vsel %vm8992, %v8911, %v7241
      %v9170 = vsel %vm8992, %v8913, %v7243
      %v9172 = vsel %vm8992, %v8915, %v7245
      %v9174 = vsel %vm8992, %v8917, %v7247
      %v9176 = vsel %vm8992, %v8919, %v7249
      %v9178 = vsel %vm8992, %v8921, %v7251
      %v9180 = vsel %vm8992, %v8923, %v7253
      %v9182 = vsel %vm8992, %v8925, %v7255
      %v9184 = vsel %vm8992, %v8927, %v7257
      %v9186 = vsel %vm8992, %v8929, %v7259
      %v9188 = vsel %vm8992, %v8931, %v7261
      %v9190 = vsel %vm8992, %v8933, %v7263
      %v9192 = vsel %vm8992, %v8935, %v7265
      %v9194 = vsel %vm8992, %v8937, %v7267
      %v9196 = vsel %vm8992, %v8939, %v7269
      %v9198 = vsel %vm8992, %v8941, %v7271
      %v9200 = vsel %vm8992, %v8943, %v7273
      %v9202 = vsel %vm8992, %v8945, %v7275
      %v9204 = vsel %vm8992, %v8947, %v7277
      %v9206 = vsel %vm8992, %v8949, %v7279
      %v9208 = vsel %vm8992, %v8951, %v7281
      %v9210 = vsel %vm8992, %v8953, %v7283
      %v9212 = vsel %vm8992, %v8955, %v7285
      %v9214 = vsel %vm8992, %v8957, %v7287
      %v9216 = vsel %vm8992, %v8959, %v7289
      %v9218 = vsel %vm8992, %v8961, %v7291
      %v9220 = vsel %vm8992, %v8963, %v7293
      %v9222 = vsel %vm8992, %v8965, %v7295
      %v9224 = vsel %vm8992, %v8967, %v7297
      %v9226 = vsel %vm8992, %v8969, %v7299
      %v9228 = vsel %vm8992, %v8971, %v7301
      %v9230 = vsel %vm8992, %v8973, %v7303
      %v9232 = vsel %vm8992, %v8975, %v7305
      %v9234 = vsel %vm8992, %v8977, %v7307
      %v9236 = vsel %vm8992, %v8979, %v7309
      %v9238 = vsel %vm8992, %v8981, %v7311
      %v9240 = vsel %vm8992, %v8983, %v7313
      %v9242 = vsel %vm8992, %v8985, %v7315
      %v9244 = vsel %vm8992, %v8987, %v7317
      %v9246 = vsel %vm8992, %v8989, %v7319
      %v9248 = vsel %vm8992, %v8991, %v7321
      %v9249 = vld [vmem:[%s1] sm:$0xf]
      %v9250 = vld [vmem:[%s1 + $0x4] sm:$0xf]
      %v9251 = vld [vmem:[%s1 + $0x8] sm:$0xf]
      %v9252 = vld [vmem:[%s1 + $0xc] sm:$0xf]
      %v9253 = vld [vmem:[%s1 + $0x10] sm:$0xf]
      %v9254 = vld [vmem:[%s1 + $0x14] sm:$0xf]
      %v9255 = vld [vmem:[%s1 + $0x18] sm:$0xf]
      %v9256 = vld [vmem:[%s1 + $0x1c] sm:$0xf]
      %v9257 = vld [vmem:[%s2] sm:$0x1]
      %v9259 = vlaneseq
      %v9260 = vshrl.u32 %v9259, 7
      %v9261 = vsub.s32 0, %v9260
      %v9262 = vrot.slane %v9257, %v9261
      %v9272 = vunpack.c.l.b16 %v9249
      %v9273 = vunpack.c.l.b16 %v9250
      %v9274 = vunpack.c.l.b16 %v9251
      %v9275 = vunpack.c.l.b16 %v9252
      %v9276 = vunpack.c.l.b16 %v9253
      %v9277 = vunpack.c.l.b16 %v9254
      %v9278 = vunpack.c.l.b16 %v9255
      %v9279 = vunpack.c.l.b16 %v9256
      %v9280 = vpack.c.b16 %v9273, %v9272
      %v9281 = vpack.c.b16 %v9275, %v9274
      %v9282 = vpack.c.b16 %v9277, %v9276
      %v9283 = vpack.c.b16 %v9279, %v9278
      %vm9288 = vcmask 523264
      %v9289 = vsel %vm9288, %v8994, 0
      %v9291 = vsel %vm9288, %v8996, 0
      %v9293 = vsel %vm9288, %v8998, 0
      %v9295 = vsel %vm9288, %v9000, 0
      %v9297 = vsel %vm9288, %v9002, 0
      %v9299 = vsel %vm9288, %v9004, 0
      %v9301 = vsel %vm9288, %v9006, 0
      %v9303 = vsel %vm9288, %v9008, 0
      %v9305 = vsel %vm9288, %v9010, 0
      %v9307 = vsel %vm9288, %v9012, 0
      %v9309 = vsel %vm9288, %v9014, 0
      %v9311 = vsel %vm9288, %v9016, 0
      %v9313 = vsel %vm9288, %v9018, 0
      %v9315 = vsel %vm9288, %v9020, 0
      %v9317 = vsel %vm9288, %v9022, 0
      %v9319 = vsel %vm9288, %v9024, 0
      %v9321 = vsel %vm9288, %v9026, 0
      %v9323 = vsel %vm9288, %v9028, 0
      %v9325 = vsel %vm9288, %v9030, 0
      %v9327 = vsel %vm9288, %v9032, 0
      %v9329 = vsel %vm9288, %v9034, 0
      %v9331 = vsel %vm9288, %v9036, 0
      %v9333 = vsel %vm9288, %v9038, 0
      %v9335 = vsel %vm9288, %v9040, 0
      %v9337 = vsel %vm9288, %v9042, 0
      %v9339 = vsel %vm9288, %v9044, 0
      %v9341 = vsel %vm9288, %v9046, 0
      %v9343 = vsel %vm9288, %v9048, 0
      %v9345 = vsel %vm9288, %v9050, 0
      %v9347 = vsel %vm9288, %v9052, 0
      %v9349 = vsel %vm9288, %v9054, 0
      %v9351 = vsel %vm9288, %v9056, 0
      %v9353 = vsel %vm9288, %v9058, 0
      %v9355 = vsel %vm9288, %v9060, 0
      %v9357 = vsel %vm9288, %v9062, 0
      %v9359 = vsel %vm9288, %v9064, 0
      %v9361 = vsel %vm9288, %v9066, 0
      %v9363 = vsel %vm9288, %v9068, 0
      %v9365 = vsel %vm9288, %v9070, 0
      %v9367 = vsel %vm9288, %v9072, 0
      %v9369 = vsel %vm9288, %v9074, 0
      %v9371 = vsel %vm9288, %v9076, 0
      %v9373 = vsel %vm9288, %v9078, 0
      %v9375 = vsel %vm9288, %v9080, 0
      %v9377 = vsel %vm9288, %v9082, 0
      %v9379 = vsel %vm9288, %v9084, 0
      %v9381 = vsel %vm9288, %v9086, 0
      %v9383 = vsel %vm9288, %v9088, 0
      %v9385 = vsel %vm9288, %v9090, 0
      %v9387 = vsel %vm9288, %v9092, 0
      %v9389 = vsel %vm9288, %v9094, 0
      %v9391 = vsel %vm9288, %v9096, 0
      %v9393 = vsel %vm9288, %v9098, 0
      %v9395 = vsel %vm9288, %v9100, 0
      %v9397 = vsel %vm9288, %v9102, 0
      %v9399 = vsel %vm9288, %v9104, 0
      %v9401 = vsel %vm9288, %v9106, 0
      %v9403 = vsel %vm9288, %v9108, 0
      %v9405 = vsel %vm9288, %v9110, 0
      %v9407 = vsel %vm9288, %v9112, 0
      %v9409 = vsel %vm9288, %v9114, 0
      %v9411 = vsel %vm9288, %v9116, 0
      %v9413 = vsel %vm9288, %v9118, 0
      %v9415 = vsel %vm9288, %v9120, 0
      %v9417 = vsel %vm9288, %v9122, 0
      %v9419 = vsel %vm9288, %v9124, 0
      %v9421 = vsel %vm9288, %v9126, 0
      %v9423 = vsel %vm9288, %v9128, 0
      %v9425 = vsel %vm9288, %v9130, 0
      %v9427 = vsel %vm9288, %v9132, 0
      %v9429 = vsel %vm9288, %v9134, 0
      %v9431 = vsel %vm9288, %v9136, 0
      %v9433 = vsel %vm9288, %v9138, 0
      %v9435 = vsel %vm9288, %v9140, 0
      %v9437 = vsel %vm9288, %v9142, 0
      %v9439 = vsel %vm9288, %v9144, 0
      %v9441 = vsel %vm9288, %v9146, 0
      %v9443 = vsel %vm9288, %v9148, 0
      %v9445 = vsel %vm9288, %v9150, 0
      %v9447 = vsel %vm9288, %v9152, 0
      %v9449 = vsel %vm9288, %v9154, 0
      %v9451 = vsel %vm9288, %v9156, 0
      %v9453 = vsel %vm9288, %v9158, 0
      %v9455 = vsel %vm9288, %v9160, 0
      %v9457 = vsel %vm9288, %v9162, 0
      %v9459 = vsel %vm9288, %v9164, 0
      %v9461 = vsel %vm9288, %v9166, 0
      %v9463 = vsel %vm9288, %v9168, 0
      %v9465 = vsel %vm9288, %v9170, 0
      %v9467 = vsel %vm9288, %v9172, 0
      %v9469 = vsel %vm9288, %v9174, 0
      %v9471 = vsel %vm9288, %v9176, 0
      %v9473 = vsel %vm9288, %v9178, 0
      %v9475 = vsel %vm9288, %v9180, 0
      %v9477 = vsel %vm9288, %v9182, 0
      %v9479 = vsel %vm9288, %v9184, 0
      %v9481 = vsel %vm9288, %v9186, 0
      %v9483 = vsel %vm9288, %v9188, 0
      %v9485 = vsel %vm9288, %v9190, 0
      %v9487 = vsel %vm9288, %v9192, 0
      %v9489 = vsel %vm9288, %v9194, 0
      %v9491 = vsel %vm9288, %v9196, 0
      %v9493 = vsel %vm9288, %v9198, 0
      %v9495 = vsel %vm9288, %v9200, 0
      %v9497 = vsel %vm9288, %v9202, 0
      %v9499 = vsel %vm9288, %v9204, 0
      %v9501 = vsel %vm9288, %v9206, 0
      %v9503 = vsel %vm9288, %v9208, 0
      %v9505 = vsel %vm9288, %v9210, 0
      %v9507 = vsel %vm9288, %v9212, 0
      %v9509 = vsel %vm9288, %v9214, 0
      %v9511 = vsel %vm9288, %v9216, 0
      %v9513 = vsel %vm9288, %v9218, 0
      %v9515 = vsel %vm9288, %v9220, 0
      %v9517 = vsel %vm9288, %v9222, 0
      %v9519 = vsel %vm9288, %v9224, 0
      %v9521 = vsel %vm9288, %v9226, 0
      %v9523 = vsel %vm9288, %v9228, 0
      %v9525 = vsel %vm9288, %v9230, 0
      %v9527 = vsel %vm9288, %v9232, 0
      %v9529 = vsel %vm9288, %v9234, 0
      %v9531 = vsel %vm9288, %v9236, 0
      %v9533 = vsel %vm9288, %v9238, 0
      %v9535 = vsel %vm9288, %v9240, 0
      %v9537 = vsel %vm9288, %v9242, 0
      %v9539 = vsel %vm9288, %v9244, 0
      %v9541 = vsel %vm9288, %v9246, 0
      %v9543 = vsel %vm9288, %v9248, 0
      %9545 = vmatprep.subr.bf16.mxu0 0
      %9546 = vmatpush1.bf16.msra.mxu0 0
      %9547 = vmatprep.subr.bf16.mxu0 0
      %9548 = vmatpush1.bf16.msra.mxu0 0
      %9549 = vmatprep.subr.bf16.mxu0 0
      %9550 = vmatpush1.bf16.msra.mxu0 0
      %9551 = vmatprep.subr.bf16.mxu0 0
      %9552 = vmatpush1.bf16.msra.mxu0 0
      %9553 = vmatprep.subr.bf16.mxu0 0
      %9554 = vmatpush1.bf16.msra.mxu0 %v9283
      %9555 = vmatprep.subr.bf16.mxu0 0
      %9556 = vmatpush1.bf16.msra.mxu0 %v9282
      %9557 = vmatprep.subr.bf16.mxu0 0
      %9558 = vmatpush1.bf16.msra.mxu0 %v9281
      %9559 = vmatprep.subr.bf16.mxu0 0
      %9560 = vmatpush1.bf16.msra.mxu0 %v9280
      %9561 = vmatprep.subr.bf16.mxu0 0
      %9562 = vmatpush2.bf16.msra.mxu0 0
      %9563 = vmatprep.subr.bf16.mxu0 0
      %9564 = vmatpush2.bf16.msra.mxu0 0
      %9565 = vmatprep.subr.bf16.mxu0 0
      %9566 = vmatpush2.bf16.msra.mxu0 0
      %9567 = vmatprep.subr.bf16.mxu0 0
      %9568 = vmatpush2.bf16.msra.mxu0 0
      %9569 = vmatprep.subr.bf16.mxu0 0
      %9570 = vmatpush2.bf16.msra.mxu0 0
      %9571 = vmatprep.subr.bf16.mxu0 0
      %9572 = vmatpush2.bf16.msra.mxu0 0
      %9573 = vmatprep.subr.bf16.mxu0 0
      %9574 = vmatpush2.bf16.msra.mxu0 0
      %9575 = vmatprep.subr.bf16.mxu0 0
      %9576 = vmatpush2.bf16.msra.mxu0 0
      %9577 = vmatprep.mubr.bf16.mxu0 0
      %9578 = vmatmul.mubr.bf16.gmra.mxu0 %v9289
      %v9579 = vpop.f32.mrf.mxu0
      %v9580 = vadd.f32 %v9262, %v9579
      %v9581 = vpop.f32.mrf.mxu0
      %v9582 = vpop.f32.mrf.mxu0
      %v9583 = vadd.f32 %v9262, %v9582
      %v9584 = vpop.f32.mrf.mxu0
      %9585 = vmatprep.mubr.bf16.mxu0 0
      %9586 = vmatmul.mubr.bf16.gmra.mxu0 %v9291
      %v9587 = vpop.f32.mrf.mxu0
      %v9588 = vadd.f32 %v9262, %v9587
      %v9589 = vpop.f32.mrf.mxu0
      %v9590 = vpop.f32.mrf.mxu0
      %v9591 = vadd.f32 %v9262, %v9590
      %v9592 = vpop.f32.mrf.mxu0
      %9593 = vmatprep.mubr.bf16.mxu0 0
      %9594 = vmatmul.mubr.bf16.gmra.mxu0 %v9293
      %v9595 = vpop.f32.mrf.mxu0
      %v9596 = vadd.f32 %v9262, %v9595
      %v9597 = vpop.f32.mrf.mxu0
      %v9598 = vpop.f32.mrf.mxu0
      %v9599 = vadd.f32 %v9262, %v9598
      %v9600 = vpop.f32.mrf.mxu0
      %9601 = vmatprep.mubr.bf16.mxu0 0
      %9602 = vmatmul.mubr.bf16.gmra.mxu0 %v9295
      %v9603 = vpop.f32.mrf.mxu0
      %v9604 = vadd.f32 %v9262, %v9603
      %v9605 = vpop.f32.mrf.mxu0
      %v9606 = vpop.f32.mrf.mxu0
      %v9607 = vadd.f32 %v9262, %v9606
      %v9608 = vpop.f32.mrf.mxu0
      %9609 = vmatprep.mubr.bf16.mxu0 0
      %9610 = vmatmul.mubr.bf16.gmra.mxu0 %v9297
      %v9611 = vpop.f32.mrf.mxu0
      %v9612 = vadd.f32 %v9262, %v9611
      %v9613 = vpop.f32.mrf.mxu0
      %v9614 = vpop.f32.mrf.mxu0
      %v9615 = vadd.f32 %v9262, %v9614
      %v9616 = vpop.f32.mrf.mxu0
      %9617 = vmatprep.mubr.bf16.mxu0 0
      %9618 = vmatmul.mubr.bf16.gmra.mxu0 %v9299
      %v9619 = vpop.f32.mrf.mxu0
      %v9620 = vadd.f32 %v9262, %v9619
      %v9621 = vpop.f32.mrf.mxu0
      %v9622 = vpop.f32.mrf.mxu0
      %v9623 = vadd.f32 %v9262, %v9622
      %v9624 = vpop.f32.mrf.mxu0
      %9625 = vmatprep.mubr.bf16.mxu0 0
      %9626 = vmatmul.mubr.bf16.gmra.mxu0 %v9301
      %v9627 = vpop.f32.mrf.mxu0
      %v9628 = vadd.f32 %v9262, %v9627
      %v9629 = vpop.f32.mrf.mxu0
      %v9630 = vpop.f32.mrf.mxu0
      %v9631 = vadd.f32 %v9262, %v9630
      %v9632 = vpop.f32.mrf.mxu0
      %9633 = vmatprep.mubr.bf16.mxu0 0
      %9634 = vmatmul.mubr.bf16.gmra.mxu0 %v9303
      %v9635 = vpop.f32.mrf.mxu0
      %v9636 = vadd.f32 %v9262, %v9635
      %v9637 = vpop.f32.mrf.mxu0
      %v9638 = vpop.f32.mrf.mxu0
      %v9639 = vadd.f32 %v9262, %v9638
      %v9640 = vpop.f32.mrf.mxu0
      %9641 = vmatprep.mubr.bf16.mxu0 0
      %9642 = vmatmul.mubr.bf16.gmra.mxu0 %v9305
      %v9643 = vpop.f32.mrf.mxu0
      %v9644 = vadd.f32 %v9262, %v9643
      %v9645 = vpop.f32.mrf.mxu0
      %v9646 = vpop.f32.mrf.mxu0
      %v9647 = vadd.f32 %v9262, %v9646
      %v9648 = vpop.f32.mrf.mxu0
      %9649 = vmatprep.mubr.bf16.mxu0 0
      %9650 = vmatmul.mubr.bf16.gmra.mxu0 %v9307
      %v9651 = vpop.f32.mrf.mxu0
      %v9652 = vadd.f32 %v9262, %v9651
      %v9653 = vpop.f32.mrf.mxu0
      %v9654 = vpop.f32.mrf.mxu0
      %v9655 = vadd.f32 %v9262, %v9654
      %v9656 = vpop.f32.mrf.mxu0
      %9657 = vmatprep.mubr.bf16.mxu0 0
      %9658 = vmatmul.mubr.bf16.gmra.mxu0 %v9309
      %v9659 = vpop.f32.mrf.mxu0
      %v9660 = vadd.f32 %v9262, %v9659
      %v9661 = vpop.f32.mrf.mxu0
      %v9662 = vpop.f32.mrf.mxu0
      %v9663 = vadd.f32 %v9262, %v9662
      %v9664 = vpop.f32.mrf.mxu0
      %9665 = vmatprep.mubr.bf16.mxu0 0
      %9666 = vmatmul.mubr.bf16.gmra.mxu0 %v9311
      %v9667 = vpop.f32.mrf.mxu0
      %v9668 = vadd.f32 %v9262, %v9667
      %v9669 = vpop.f32.mrf.mxu0
      %v9670 = vpop.f32.mrf.mxu0
      %v9671 = vadd.f32 %v9262, %v9670
      %v9672 = vpop.f32.mrf.mxu0
      %9673 = vmatprep.mubr.bf16.mxu0 0
      %9674 = vmatmul.mubr.bf16.gmra.mxu0 %v9313
      %v9675 = vpop.f32.mrf.mxu0
      %v9676 = vadd.f32 %v9262, %v9675
      %v9677 = vpop.f32.mrf.mxu0
      %v9678 = vpop.f32.mrf.mxu0
      %v9679 = vadd.f32 %v9262, %v9678
      %v9680 = vpop.f32.mrf.mxu0
      %9681 = vmatprep.mubr.bf16.mxu0 0
      %9682 = vmatmul.mubr.bf16.gmra.mxu0 %v9315
      %v9683 = vpop.f32.mrf.mxu0
      %v9684 = vadd.f32 %v9262, %v9683
      %v9685 = vpop.f32.mrf.mxu0
      %v9686 = vpop.f32.mrf.mxu0
      %v9687 = vadd.f32 %v9262, %v9686
      %v9688 = vpop.f32.mrf.mxu0
      %9689 = vmatprep.mubr.bf16.mxu0 0
      %9690 = vmatmul.mubr.bf16.gmra.mxu0 %v9317
      %v9691 = vpop.f32.mrf.mxu0
      %v9692 = vadd.f32 %v9262, %v9691
      %v9693 = vpop.f32.mrf.mxu0
      %v9694 = vpop.f32.mrf.mxu0
      %v9695 = vadd.f32 %v9262, %v9694
      %v9696 = vpop.f32.mrf.mxu0
      %9697 = vmatprep.mubr.bf16.mxu0 0
      %9698 = vmatmul.mubr.bf16.gmra.mxu0 %v9319
      %v9699 = vpop.f32.mrf.mxu0
      %v9700 = vadd.f32 %v9262, %v9699
      %v9701 = vpop.f32.mrf.mxu0
      %v9702 = vpop.f32.mrf.mxu0
      %v9703 = vadd.f32 %v9262, %v9702
      %v9704 = vpop.f32.mrf.mxu0
      %9705 = vmatprep.mubr.bf16.mxu0 0
      %9706 = vmatmul.mubr.bf16.gmra.mxu0 %v9321
      %v9707 = vpop.f32.mrf.mxu0
      %v9708 = vadd.f32 %v9262, %v9707
      %v9709 = vpop.f32.mrf.mxu0
      %v9710 = vpop.f32.mrf.mxu0
      %v9711 = vadd.f32 %v9262, %v9710
      %v9712 = vpop.f32.mrf.mxu0
      %9713 = vmatprep.mubr.bf16.mxu0 0
      %9714 = vmatmul.mubr.bf16.gmra.mxu0 %v9323
      %v9715 = vpop.f32.mrf.mxu0
      %v9716 = vadd.f32 %v9262, %v9715
      %v9717 = vpop.f32.mrf.mxu0
      %v9718 = vpop.f32.mrf.mxu0
      %v9719 = vadd.f32 %v9262, %v9718
      %v9720 = vpop.f32.mrf.mxu0
      %9721 = vmatprep.mubr.bf16.mxu0 0
      %9722 = vmatmul.mubr.bf16.gmra.mxu0 %v9325
      %v9723 = vpop.f32.mrf.mxu0
      %v9724 = vadd.f32 %v9262, %v9723
      %v9725 = vpop.f32.mrf.mxu0
      %v9726 = vpop.f32.mrf.mxu0
      %v9727 = vadd.f32 %v9262, %v9726
      %v9728 = vpop.f32.mrf.mxu0
      %9729 = vmatprep.mubr.bf16.mxu0 0
      %9730 = vmatmul.mubr.bf16.gmra.mxu0 %v9327
      %v9731 = vpop.f32.mrf.mxu0
      %v9732 = vadd.f32 %v9262, %v9731
      %v9733 = vpop.f32.mrf.mxu0
      %v9734 = vpop.f32.mrf.mxu0
      %v9735 = vadd.f32 %v9262, %v9734
      %v9736 = vpop.f32.mrf.mxu0
      %9737 = vmatprep.mubr.bf16.mxu0 0
      %9738 = vmatmul.mubr.bf16.gmra.mxu0 %v9329
      %v9739 = vpop.f32.mrf.mxu0
      %v9740 = vadd.f32 %v9262, %v9739
      %v9741 = vpop.f32.mrf.mxu0
      %v9742 = vpop.f32.mrf.mxu0
      %v9743 = vadd.f32 %v9262, %v9742
      %v9744 = vpop.f32.mrf.mxu0
      %9745 = vmatprep.mubr.bf16.mxu0 0
      %9746 = vmatmul.mubr.bf16.gmra.mxu0 %v9331
      %v9747 = vpop.f32.mrf.mxu0
      %v9748 = vadd.f32 %v9262, %v9747
      %v9749 = vpop.f32.mrf.mxu0
      %v9750 = vpop.f32.mrf.mxu0
      %v9751 = vadd.f32 %v9262, %v9750
      %v9752 = vpop.f32.mrf.mxu0
      %9753 = vmatprep.mubr.bf16.mxu0 0
      %9754 = vmatmul.mubr.bf16.gmra.mxu0 %v9333
      %v9755 = vpop.f32.mrf.mxu0
      %v9756 = vadd.f32 %v9262, %v9755
      %v9757 = vpop.f32.mrf.mxu0
      %v9758 = vpop.f32.mrf.mxu0
      %v9759 = vadd.f32 %v9262, %v9758
      %v9760 = vpop.f32.mrf.mxu0
      %9761 = vmatprep.mubr.bf16.mxu0 0
      %9762 = vmatmul.mubr.bf16.gmra.mxu0 %v9335
      %v9763 = vpop.f32.mrf.mxu0
      %v9764 = vadd.f32 %v9262, %v9763
      %v9765 = vpop.f32.mrf.mxu0
      %v9766 = vpop.f32.mrf.mxu0
      %v9767 = vadd.f32 %v9262, %v9766
      %v9768 = vpop.f32.mrf.mxu0
      %9769 = vmatprep.mubr.bf16.mxu0 0
      %9770 = vmatmul.mubr.bf16.gmra.mxu0 %v9337
      %v9771 = vpop.f32.mrf.mxu0
      %v9772 = vadd.f32 %v9262, %v9771
      %v9773 = vpop.f32.mrf.mxu0
      %v9774 = vpop.f32.mrf.mxu0
      %v9775 = vadd.f32 %v9262, %v9774
      %v9776 = vpop.f32.mrf.mxu0
      %9777 = vmatprep.mubr.bf16.mxu0 0
      %9778 = vmatmul.mubr.bf16.gmra.mxu0 %v9339
      %v9779 = vpop.f32.mrf.mxu0
      %v9780 = vadd.f32 %v9262, %v9779
      %v9781 = vpop.f32.mrf.mxu0
      %v9782 = vpop.f32.mrf.mxu0
      %v9783 = vadd.f32 %v9262, %v9782
      %v9784 = vpop.f32.mrf.mxu0
      %9785 = vmatprep.mubr.bf16.mxu0 0
      %9786 = vmatmul.mubr.bf16.gmra.mxu0 %v9341
      %v9787 = vpop.f32.mrf.mxu0
      %v9788 = vadd.f32 %v9262, %v9787
      %v9789 = vpop.f32.mrf.mxu0
      %v9790 = vpop.f32.mrf.mxu0
      %v9791 = vadd.f32 %v9262, %v9790
      %v9792 = vpop.f32.mrf.mxu0
      %9793 = vmatprep.mubr.bf16.mxu0 0
      %9794 = vmatmul.mubr.bf16.gmra.mxu0 %v9343
      %v9795 = vpop.f32.mrf.mxu0
      %v9796 = vadd.f32 %v9262, %v9795
      %v9797 = vpop.f32.mrf.mxu0
      %v9798 = vpop.f32.mrf.mxu0
      %v9799 = vadd.f32 %v9262, %v9798
      %v9800 = vpop.f32.mrf.mxu0
      %9801 = vmatprep.mubr.bf16.mxu0 0
      %9802 = vmatmul.mubr.bf16.gmra.mxu0 %v9345
      %v9803 = vpop.f32.mrf.mxu0
      %v9804 = vadd.f32 %v9262, %v9803
      %v9805 = vpop.f32.mrf.mxu0
      %v9806 = vpop.f32.mrf.mxu0
      %v9807 = vadd.f32 %v9262, %v9806
      %v9808 = vpop.f32.mrf.mxu0
      %9809 = vmatprep.mubr.bf16.mxu0 0
      %9810 = vmatmul.mubr.bf16.gmra.mxu0 %v9347
      %v9811 = vpop.f32.mrf.mxu0
      %v9812 = vadd.f32 %v9262, %v9811
      %v9813 = vpop.f32.mrf.mxu0
      %v9814 = vpop.f32.mrf.mxu0
      %v9815 = vadd.f32 %v9262, %v9814
      %v9816 = vpop.f32.mrf.mxu0
      %9817 = vmatprep.mubr.bf16.mxu0 0
      %9818 = vmatmul.mubr.bf16.gmra.mxu0 %v9349
      %v9819 = vpop.f32.mrf.mxu0
      %v9820 = vadd.f32 %v9262, %v9819
      %v9821 = vpop.f32.mrf.mxu0
      %v9822 = vpop.f32.mrf.mxu0
      %v9823 = vadd.f32 %v9262, %v9822
      %v9824 = vpop.f32.mrf.mxu0
      %9825 = vmatprep.mubr.bf16.mxu0 0
      %9826 = vmatmul.mubr.bf16.gmra.mxu0 %v9351
      %v9827 = vpop.f32.mrf.mxu0
      %v9828 = vadd.f32 %v9262, %v9827
      %v9829 = vpop.f32.mrf.mxu0
      %v9830 = vpop.f32.mrf.mxu0
      %v9831 = vadd.f32 %v9262, %v9830
      %v9832 = vpop.f32.mrf.mxu0
      %9833 = vmatprep.mubr.bf16.mxu0 0
      %9834 = vmatmul.mubr.bf16.gmra.mxu0 %v9353
      %v9835 = vpop.f32.mrf.mxu0
      %v9836 = vadd.f32 %v9262, %v9835
      %v9837 = vpop.f32.mrf.mxu0
      %v9838 = vpop.f32.mrf.mxu0
      %v9839 = vadd.f32 %v9262, %v9838
      %v9840 = vpop.f32.mrf.mxu0
      %9841 = vmatprep.mubr.bf16.mxu0 0
      %9842 = vmatmul.mubr.bf16.gmra.mxu0 %v9355
      %v9843 = vpop.f32.mrf.mxu0
      %v9844 = vadd.f32 %v9262, %v9843
      %v9845 = vpop.f32.mrf.mxu0
      %v9846 = vpop.f32.mrf.mxu0
      %v9847 = vadd.f32 %v9262, %v9846
      %v9848 = vpop.f32.mrf.mxu0
      %9849 = vmatprep.mubr.bf16.mxu0 0
      %9850 = vmatmul.mubr.bf16.gmra.mxu0 %v9357
      %v9851 = vpop.f32.mrf.mxu0
      %v9852 = vadd.f32 %v9262, %v9851
      %v9853 = vpop.f32.mrf.mxu0
      %v9854 = vpop.f32.mrf.mxu0
      %v9855 = vadd.f32 %v9262, %v9854
      %v9856 = vpop.f32.mrf.mxu0
      %9857 = vmatprep.mubr.bf16.mxu0 0
      %9858 = vmatmul.mubr.bf16.gmra.mxu0 %v9359
      %v9859 = vpop.f32.mrf.mxu0
      %v9860 = vadd.f32 %v9262, %v9859
      %v9861 = vpop.f32.mrf.mxu0
      %v9862 = vpop.f32.mrf.mxu0
      %v9863 = vadd.f32 %v9262, %v9862
      %v9864 = vpop.f32.mrf.mxu0
      %9865 = vmatprep.mubr.bf16.mxu0 0
      %9866 = vmatmul.mubr.bf16.gmra.mxu0 %v9361
      %v9867 = vpop.f32.mrf.mxu0
      %v9868 = vadd.f32 %v9262, %v9867
      %v9869 = vpop.f32.mrf.mxu0
      %v9870 = vpop.f32.mrf.mxu0
      %v9871 = vadd.f32 %v9262, %v9870
      %v9872 = vpop.f32.mrf.mxu0
      %9873 = vmatprep.mubr.bf16.mxu0 0
      %9874 = vmatmul.mubr.bf16.gmra.mxu0 %v9363
      %v9875 = vpop.f32.mrf.mxu0
      %v9876 = vadd.f32 %v9262, %v9875
      %v9877 = vpop.f32.mrf.mxu0
      %v9878 = vpop.f32.mrf.mxu0
      %v9879 = vadd.f32 %v9262, %v9878
      %v9880 = vpop.f32.mrf.mxu0
      %9881 = vmatprep.mubr.bf16.mxu0 0
      %9882 = vmatmul.mubr.bf16.gmra.mxu0 %v9365
      %v9883 = vpop.f32.mrf.mxu0
      %v9884 = vadd.f32 %v9262, %v9883
      %v9885 = vpop.f32.mrf.mxu0
      %v9886 = vpop.f32.mrf.mxu0
      %v9887 = vadd.f32 %v9262, %v9886
      %v9888 = vpop.f32.mrf.mxu0
      %9889 = vmatprep.mubr.bf16.mxu0 0
      %9890 = vmatmul.mubr.bf16.gmra.mxu0 %v9367
      %v9891 = vpop.f32.mrf.mxu0
      %v9892 = vadd.f32 %v9262, %v9891
      %v9893 = vpop.f32.mrf.mxu0
      %v9894 = vpop.f32.mrf.mxu0
      %v9895 = vadd.f32 %v9262, %v9894
      %v9896 = vpop.f32.mrf.mxu0
      %9897 = vmatprep.mubr.bf16.mxu0 0
      %9898 = vmatmul.mubr.bf16.gmra.mxu0 %v9369
      %v9899 = vpop.f32.mrf.mxu0
      %v9900 = vadd.f32 %v9262, %v9899
      %v9901 = vpop.f32.mrf.mxu0
      %v9902 = vpop.f32.mrf.mxu0
      %v9903 = vadd.f32 %v9262, %v9902
      %v9904 = vpop.f32.mrf.mxu0
      %9905 = vmatprep.mubr.bf16.mxu0 0
      %9906 = vmatmul.mubr.bf16.gmra.mxu0 %v9371
      %v9907 = vpop.f32.mrf.mxu0
      %v9908 = vadd.f32 %v9262, %v9907
      %v9909 = vpop.f32.mrf.mxu0
      %v9910 = vpop.f32.mrf.mxu0
      %v9911 = vadd.f32 %v9262, %v9910
      %v9912 = vpop.f32.mrf.mxu0
      %9913 = vmatprep.mubr.bf16.mxu0 0
      %9914 = vmatmul.mubr.bf16.gmra.mxu0 %v9373
      %v9915 = vpop.f32.mrf.mxu0
      %v9916 = vadd.f32 %v9262, %v9915
      %v9917 = vpop.f32.mrf.mxu0
      %v9918 = vpop.f32.mrf.mxu0
      %v9919 = vadd.f32 %v9262, %v9918
      %v9920 = vpop.f32.mrf.mxu0
      %9921 = vmatprep.mubr.bf16.mxu0 0
      %9922 = vmatmul.mubr.bf16.gmra.mxu0 %v9375
      %v9923 = vpop.f32.mrf.mxu0
      %v9924 = vadd.f32 %v9262, %v9923
      %v9925 = vpop.f32.mrf.mxu0
      %v9926 = vpop.f32.mrf.mxu0
      %v9927 = vadd.f32 %v9262, %v9926
      %v9928 = vpop.f32.mrf.mxu0
      %9929 = vmatprep.mubr.bf16.mxu0 0
      %9930 = vmatmul.mubr.bf16.gmra.mxu0 %v9377
      %v9931 = vpop.f32.mrf.mxu0
      %v9932 = vadd.f32 %v9262, %v9931
      %v9933 = vpop.f32.mrf.mxu0
      %v9934 = vpop.f32.mrf.mxu0
      %v9935 = vadd.f32 %v9262, %v9934
      %v9936 = vpop.f32.mrf.mxu0
      %9937 = vmatprep.mubr.bf16.mxu0 0
      %9938 = vmatmul.mubr.bf16.gmra.mxu0 %v9379
      %v9939 = vpop.f32.mrf.mxu0
      %v9940 = vadd.f32 %v9262, %v9939
      %v9941 = vpop.f32.mrf.mxu0
      %v9942 = vpop.f32.mrf.mxu0
      %v9943 = vadd.f32 %v9262, %v9942
      %v9944 = vpop.f32.mrf.mxu0
      %9945 = vmatprep.mubr.bf16.mxu0 0
      %9946 = vmatmul.mubr.bf16.gmra.mxu0 %v9381
      %v9947 = vpop.f32.mrf.mxu0
      %v9948 = vadd.f32 %v9262, %v9947
      %v9949 = vpop.f32.mrf.mxu0
      %v9950 = vpop.f32.mrf.mxu0
      %v9951 = vadd.f32 %v9262, %v9950
      %v9952 = vpop.f32.mrf.mxu0
      %9953 = vmatprep.mubr.bf16.mxu0 0
      %9954 = vmatmul.mubr.bf16.gmra.mxu0 %v9383
      %v9955 = vpop.f32.mrf.mxu0
      %v9956 = vadd.f32 %v9262, %v9955
      %v9957 = vpop.f32.mrf.mxu0
      %v9958 = vpop.f32.mrf.mxu0
      %v9959 = vadd.f32 %v9262, %v9958
      %v9960 = vpop.f32.mrf.mxu0
      %9961 = vmatprep.mubr.bf16.mxu0 0
      %9962 = vmatmul.mubr.bf16.gmra.mxu0 %v9385
      %v9963 = vpop.f32.mrf.mxu0
      %v9964 = vadd.f32 %v9262, %v9963
      %v9965 = vpop.f32.mrf.mxu0
      %v9966 = vpop.f32.mrf.mxu0
      %v9967 = vadd.f32 %v9262, %v9966
      %v9968 = vpop.f32.mrf.mxu0
      %9969 = vmatprep.mubr.bf16.mxu0 0
      %9970 = vmatmul.mubr.bf16.gmra.mxu0 %v9387
      %v9971 = vpop.f32.mrf.mxu0
      %v9972 = vadd.f32 %v9262, %v9971
      %v9973 = vpop.f32.mrf.mxu0
      %v9974 = vpop.f32.mrf.mxu0
      %v9975 = vadd.f32 %v9262, %v9974
      %v9976 = vpop.f32.mrf.mxu0
      %9977 = vmatprep.mubr.bf16.mxu0 0
      %9978 = vmatmul.mubr.bf16.gmra.mxu0 %v9389
      %v9979 = vpop.f32.mrf.mxu0
      %v9980 = vadd.f32 %v9262, %v9979
      %v9981 = vpop.f32.mrf.mxu0
      %v9982 = vpop.f32.mrf.mxu0
      %v9983 = vadd.f32 %v9262, %v9982
      %v9984 = vpop.f32.mrf.mxu0
      %9985 = vmatprep.mubr.bf16.mxu0 0
      %9986 = vmatmul.mubr.bf16.gmra.mxu0 %v9391
      %v9987 = vpop.f32.mrf.mxu0
      %v9988 = vadd.f32 %v9262, %v9987
      %v9989 = vpop.f32.mrf.mxu0
      %v9990 = vpop.f32.mrf.mxu0
      %v9991 = vadd.f32 %v9262, %v9990
      %v9992 = vpop.f32.mrf.mxu0
      %9993 = vmatprep.mubr.bf16.mxu0 0
      %9994 = vmatmul.mubr.bf16.gmra.mxu0 %v9393
      %v9995 = vpop.f32.mrf.mxu0
      %v9996 = vadd.f32 %v9262, %v9995
      %v9997 = vpop.f32.mrf.mxu0
      %v9998 = vpop.f32.mrf.mxu0
      %v9999 = vadd.f32 %v9262, %v9998
      %v10000 = vpop.f32.mrf.mxu0
      %10001 = vmatprep.mubr.bf16.mxu0 0
      %10002 = vmatmul.mubr.bf16.gmra.mxu0 %v9395
      %v10003 = vpop.f32.mrf.mxu0
      %v10004 = vadd.f32 %v9262, %v10003
      %v10005 = vpop.f32.mrf.mxu0
      %v10006 = vpop.f32.mrf.mxu0
      %v10007 = vadd.f32 %v9262, %v10006
      %v10008 = vpop.f32.mrf.mxu0
      %10009 = vmatprep.mubr.bf16.mxu0 0
      %10010 = vmatmul.mubr.bf16.gmra.mxu0 %v9397
      %v10011 = vpop.f32.mrf.mxu0
      %v10012 = vadd.f32 %v9262, %v10011
      %v10013 = vpop.f32.mrf.mxu0
      %v10014 = vpop.f32.mrf.mxu0
      %v10015 = vadd.f32 %v9262, %v10014
      %v10016 = vpop.f32.mrf.mxu0
      %10017 = vmatprep.mubr.bf16.mxu0 0
      %10018 = vmatmul.mubr.bf16.gmra.mxu0 %v9399
      %v10019 = vpop.f32.mrf.mxu0
      %v10020 = vadd.f32 %v9262, %v10019
      %v10021 = vpop.f32.mrf.mxu0
      %v10022 = vpop.f32.mrf.mxu0
      %v10023 = vadd.f32 %v9262, %v10022
      %v10024 = vpop.f32.mrf.mxu0
      %10025 = vmatprep.mubr.bf16.mxu0 0
      %10026 = vmatmul.mubr.bf16.gmra.mxu0 %v9401
      %v10027 = vpop.f32.mrf.mxu0
      %v10028 = vadd.f32 %v9262, %v10027
      %v10029 = vpop.f32.mrf.mxu0
      %v10030 = vpop.f32.mrf.mxu0
      %v10031 = vadd.f32 %v9262, %v10030
      %v10032 = vpop.f32.mrf.mxu0
      %10033 = vmatprep.mubr.bf16.mxu0 0
      %10034 = vmatmul.mubr.bf16.gmra.mxu0 %v9403
      %v10035 = vpop.f32.mrf.mxu0
      %v10036 = vadd.f32 %v9262, %v10035
      %v10037 = vpop.f32.mrf.mxu0
      %v10038 = vpop.f32.mrf.mxu0
      %v10039 = vadd.f32 %v9262, %v10038
      %v10040 = vpop.f32.mrf.mxu0
      %10041 = vmatprep.mubr.bf16.mxu0 0
      %10042 = vmatmul.mubr.bf16.gmra.mxu0 %v9405
      %v10043 = vpop.f32.mrf.mxu0
      %v10044 = vadd.f32 %v9262, %v10043
      %v10045 = vpop.f32.mrf.mxu0
      %v10046 = vpop.f32.mrf.mxu0
      %v10047 = vadd.f32 %v9262, %v10046
      %v10048 = vpop.f32.mrf.mxu0
      %10049 = vmatprep.mubr.bf16.mxu0 0
      %10050 = vmatmul.mubr.bf16.gmra.mxu0 %v9407
      %v10051 = vpop.f32.mrf.mxu0
      %v10052 = vadd.f32 %v9262, %v10051
      %v10053 = vpop.f32.mrf.mxu0
      %v10054 = vpop.f32.mrf.mxu0
      %v10055 = vadd.f32 %v9262, %v10054
      %v10056 = vpop.f32.mrf.mxu0
      %10057 = vmatprep.mubr.bf16.mxu0 0
      %10058 = vmatmul.mubr.bf16.gmra.mxu0 %v9409
      %v10059 = vpop.f32.mrf.mxu0
      %v10060 = vadd.f32 %v9262, %v10059
      %v10061 = vpop.f32.mrf.mxu0
      %v10062 = vpop.f32.mrf.mxu0
      %v10063 = vadd.f32 %v9262, %v10062
      %v10064 = vpop.f32.mrf.mxu0
      %10065 = vmatprep.mubr.bf16.mxu0 0
      %10066 = vmatmul.mubr.bf16.gmra.mxu0 %v9411
      %v10067 = vpop.f32.mrf.mxu0
      %v10068 = vadd.f32 %v9262, %v10067
      %v10069 = vpop.f32.mrf.mxu0
      %v10070 = vpop.f32.mrf.mxu0
      %v10071 = vadd.f32 %v9262, %v10070
      %v10072 = vpop.f32.mrf.mxu0
      %10073 = vmatprep.mubr.bf16.mxu0 0
      %10074 = vmatmul.mubr.bf16.gmra.mxu0 %v9413
      %v10075 = vpop.f32.mrf.mxu0
      %v10076 = vadd.f32 %v9262, %v10075
      %v10077 = vpop.f32.mrf.mxu0
      %v10078 = vpop.f32.mrf.mxu0
      %v10079 = vadd.f32 %v9262, %v10078
      %v10080 = vpop.f32.mrf.mxu0
      %10081 = vmatprep.mubr.bf16.mxu0 0
      %10082 = vmatmul.mubr.bf16.gmra.mxu0 %v9415
      %v10083 = vpop.f32.mrf.mxu0
      %v10084 = vadd.f32 %v9262, %v10083
      %v10085 = vpop.f32.mrf.mxu0
      %v10086 = vpop.f32.mrf.mxu0
      %v10087 = vadd.f32 %v9262, %v10086
      %v10088 = vpop.f32.mrf.mxu0
      %10089 = vmatprep.mubr.bf16.mxu0 0
      %10090 = vmatmul.mubr.bf16.gmra.mxu0 %v9417
      %v10091 = vpop.f32.mrf.mxu0
      %v10092 = vadd.f32 %v9262, %v10091
      %v10093 = vpop.f32.mrf.mxu0
      %v10094 = vpop.f32.mrf.mxu0
      %v10095 = vadd.f32 %v9262, %v10094
      %v10096 = vpop.f32.mrf.mxu0
      %10097 = vmatprep.mubr.bf16.mxu0 0
      %10098 = vmatmul.mubr.bf16.gmra.mxu0 %v9419
      %v10099 = vpop.f32.mrf.mxu0
      %v10100 = vadd.f32 %v9262, %v10099
      %v10101 = vpop.f32.mrf.mxu0
      %v10102 = vpop.f32.mrf.mxu0
      %v10103 = vadd.f32 %v9262, %v10102
      %v10104 = vpop.f32.mrf.mxu0
      %10105 = vmatprep.mubr.bf16.mxu0 0
      %10106 = vmatmul.mubr.bf16.gmra.mxu0 %v9421
      %v10107 = vpop.f32.mrf.mxu0
      %v10108 = vadd.f32 %v9262, %v10107
      %v10109 = vpop.f32.mrf.mxu0
      %v10110 = vpop.f32.mrf.mxu0
      %v10111 = vadd.f32 %v9262, %v10110
      %v10112 = vpop.f32.mrf.mxu0
      %10113 = vmatprep.mubr.bf16.mxu0 0
      %10114 = vmatmul.mubr.bf16.gmra.mxu0 %v9423
      %v10115 = vpop.f32.mrf.mxu0
      %v10116 = vadd.f32 %v9262, %v10115
      %v10117 = vpop.f32.mrf.mxu0
      %v10118 = vpop.f32.mrf.mxu0
      %v10119 = vadd.f32 %v9262, %v10118
      %v10120 = vpop.f32.mrf.mxu0
      %10121 = vmatprep.mubr.bf16.mxu0 0
      %10122 = vmatmul.mubr.bf16.gmra.mxu0 %v9425
      %v10123 = vpop.f32.mrf.mxu0
      %v10124 = vadd.f32 %v9262, %v10123
      %v10125 = vpop.f32.mrf.mxu0
      %v10126 = vpop.f32.mrf.mxu0
      %v10127 = vadd.f32 %v9262, %v10126
      %v10128 = vpop.f32.mrf.mxu0
      %10129 = vmatprep.mubr.bf16.mxu0 0
      %10130 = vmatmul.mubr.bf16.gmra.mxu0 %v9427
      %v10131 = vpop.f32.mrf.mxu0
      %v10132 = vadd.f32 %v9262, %v10131
      %v10133 = vpop.f32.mrf.mxu0
      %v10134 = vpop.f32.mrf.mxu0
      %v10135 = vadd.f32 %v9262, %v10134
      %v10136 = vpop.f32.mrf.mxu0
      %10137 = vmatprep.mubr.bf16.mxu0 0
      %10138 = vmatmul.mubr.bf16.gmra.mxu0 %v9429
      %v10139 = vpop.f32.mrf.mxu0
      %v10140 = vadd.f32 %v9262, %v10139
      %v10141 = vpop.f32.mrf.mxu0
      %v10142 = vpop.f32.mrf.mxu0
      %v10143 = vadd.f32 %v9262, %v10142
      %v10144 = vpop.f32.mrf.mxu0
      %10145 = vmatprep.mubr.bf16.mxu0 0
      %10146 = vmatmul.mubr.bf16.gmra.mxu0 %v9431
      %v10147 = vpop.f32.mrf.mxu0
      %v10148 = vadd.f32 %v9262, %v10147
      %v10149 = vpop.f32.mrf.mxu0
      %v10150 = vpop.f32.mrf.mxu0
      %v10151 = vadd.f32 %v9262, %v10150
      %v10152 = vpop.f32.mrf.mxu0
      %10153 = vmatprep.mubr.bf16.mxu0 0
      %10154 = vmatmul.mubr.bf16.gmra.mxu0 %v9433
      %v10155 = vpop.f32.mrf.mxu0
      %v10156 = vadd.f32 %v9262, %v10155
      %v10157 = vpop.f32.mrf.mxu0
      %v10158 = vpop.f32.mrf.mxu0
      %v10159 = vadd.f32 %v9262, %v10158
      %v10160 = vpop.f32.mrf.mxu0
      %10161 = vmatprep.mubr.bf16.mxu0 0
      %10162 = vmatmul.mubr.bf16.gmra.mxu0 %v9435
      %v10163 = vpop.f32.mrf.mxu0
      %v10164 = vadd.f32 %v9262, %v10163
      %v10165 = vpop.f32.mrf.mxu0
      %v10166 = vpop.f32.mrf.mxu0
      %v10167 = vadd.f32 %v9262, %v10166
      %v10168 = vpop.f32.mrf.mxu0
      %10169 = vmatprep.mubr.bf16.mxu0 0
      %10170 = vmatmul.mubr.bf16.gmra.mxu0 %v9437
      %v10171 = vpop.f32.mrf.mxu0
      %v10172 = vadd.f32 %v9262, %v10171
      %v10173 = vpop.f32.mrf.mxu0
      %v10174 = vpop.f32.mrf.mxu0
      %v10175 = vadd.f32 %v9262, %v10174
      %v10176 = vpop.f32.mrf.mxu0
      %10177 = vmatprep.mubr.bf16.mxu0 0
      %10178 = vmatmul.mubr.bf16.gmra.mxu0 %v9439
      %v10179 = vpop.f32.mrf.mxu0
      %v10180 = vadd.f32 %v9262, %v10179
      %v10181 = vpop.f32.mrf.mxu0
      %v10182 = vpop.f32.mrf.mxu0
      %v10183 = vadd.f32 %v9262, %v10182
      %v10184 = vpop.f32.mrf.mxu0
      %10185 = vmatprep.mubr.bf16.mxu0 0
      %10186 = vmatmul.mubr.bf16.gmra.mxu0 %v9441
      %v10187 = vpop.f32.mrf.mxu0
      %v10188 = vadd.f32 %v9262, %v10187
      %v10189 = vpop.f32.mrf.mxu0
      %v10190 = vpop.f32.mrf.mxu0
      %v10191 = vadd.f32 %v9262, %v10190
      %v10192 = vpop.f32.mrf.mxu0
      %10193 = vmatprep.mubr.bf16.mxu0 0
      %10194 = vmatmul.mubr.bf16.gmra.mxu0 %v9443
      %v10195 = vpop.f32.mrf.mxu0
      %v10196 = vadd.f32 %v9262, %v10195
      %v10197 = vpop.f32.mrf.mxu0
      %v10198 = vpop.f32.mrf.mxu0
      %v10199 = vadd.f32 %v9262, %v10198
      %v10200 = vpop.f32.mrf.mxu0
      %10201 = vmatprep.mubr.bf16.mxu0 0
      %10202 = vmatmul.mubr.bf16.gmra.mxu0 %v9445
      %v10203 = vpop.f32.mrf.mxu0
      %v10204 = vadd.f32 %v9262, %v10203
      %v10205 = vpop.f32.mrf.mxu0
      %v10206 = vpop.f32.mrf.mxu0
      %v10207 = vadd.f32 %v9262, %v10206
      %v10208 = vpop.f32.mrf.mxu0
      %10209 = vmatprep.mubr.bf16.mxu0 0
      %10210 = vmatmul.mubr.bf16.gmra.mxu0 %v9447
      %v10211 = vpop.f32.mrf.mxu0
      %v10212 = vadd.f32 %v9262, %v10211
      %v10213 = vpop.f32.mrf.mxu0
      %v10214 = vpop.f32.mrf.mxu0
      %v10215 = vadd.f32 %v9262, %v10214
      %v10216 = vpop.f32.mrf.mxu0
      %10217 = vmatprep.mubr.bf16.mxu0 0
      %10218 = vmatmul.mubr.bf16.gmra.mxu0 %v9449
      %v10219 = vpop.f32.mrf.mxu0
      %v10220 = vadd.f32 %v9262, %v10219
      %v10221 = vpop.f32.mrf.mxu0
      %v10222 = vpop.f32.mrf.mxu0
      %v10223 = vadd.f32 %v9262, %v10222
      %v10224 = vpop.f32.mrf.mxu0
      %10225 = vmatprep.mubr.bf16.mxu0 0
      %10226 = vmatmul.mubr.bf16.gmra.mxu0 %v9451
      %v10227 = vpop.f32.mrf.mxu0
      %v10228 = vadd.f32 %v9262, %v10227
      %v10229 = vpop.f32.mrf.mxu0
      %v10230 = vpop.f32.mrf.mxu0
      %v10231 = vadd.f32 %v9262, %v10230
      %v10232 = vpop.f32.mrf.mxu0
      %10233 = vmatprep.mubr.bf16.mxu0 0
      %10234 = vmatmul.mubr.bf16.gmra.mxu0 %v9453
      %v10235 = vpop.f32.mrf.mxu0
      %v10236 = vadd.f32 %v9262, %v10235
      %v10237 = vpop.f32.mrf.mxu0
      %v10238 = vpop.f32.mrf.mxu0
      %v10239 = vadd.f32 %v9262, %v10238
      %v10240 = vpop.f32.mrf.mxu0
      %10241 = vmatprep.mubr.bf16.mxu0 0
      %10242 = vmatmul.mubr.bf16.gmra.mxu0 %v9455
      %v10243 = vpop.f32.mrf.mxu0
      %v10244 = vadd.f32 %v9262, %v10243
      %v10245 = vpop.f32.mrf.mxu0
      %v10246 = vpop.f32.mrf.mxu0
      %v10247 = vadd.f32 %v9262, %v10246
      %v10248 = vpop.f32.mrf.mxu0
      %10249 = vmatprep.mubr.bf16.mxu0 0
      %10250 = vmatmul.mubr.bf16.gmra.mxu0 %v9457
      %v10251 = vpop.f32.mrf.mxu0
      %v10252 = vadd.f32 %v9262, %v10251
      %v10253 = vpop.f32.mrf.mxu0
      %v10254 = vpop.f32.mrf.mxu0
      %v10255 = vadd.f32 %v9262, %v10254
      %v10256 = vpop.f32.mrf.mxu0
      %10257 = vmatprep.mubr.bf16.mxu0 0
      %10258 = vmatmul.mubr.bf16.gmra.mxu0 %v9459
      %v10259 = vpop.f32.mrf.mxu0
      %v10260 = vadd.f32 %v9262, %v10259
      %v10261 = vpop.f32.mrf.mxu0
      %v10262 = vpop.f32.mrf.mxu0
      %v10263 = vadd.f32 %v9262, %v10262
      %v10264 = vpop.f32.mrf.mxu0
      %10265 = vmatprep.mubr.bf16.mxu0 0
      %10266 = vmatmul.mubr.bf16.gmra.mxu0 %v9461
      %v10267 = vpop.f32.mrf.mxu0
      %v10268 = vadd.f32 %v9262, %v10267
      %v10269 = vpop.f32.mrf.mxu0
      %v10270 = vpop.f32.mrf.mxu0
      %v10271 = vadd.f32 %v9262, %v10270
      %v10272 = vpop.f32.mrf.mxu0
      %10273 = vmatprep.mubr.bf16.mxu0 0
      %10274 = vmatmul.mubr.bf16.gmra.mxu0 %v9463
      %v10275 = vpop.f32.mrf.mxu0
      %v10276 = vadd.f32 %v9262, %v10275
      %v10277 = vpop.f32.mrf.mxu0
      %v10278 = vpop.f32.mrf.mxu0
      %v10279 = vadd.f32 %v9262, %v10278
      %v10280 = vpop.f32.mrf.mxu0
      %10281 = vmatprep.mubr.bf16.mxu0 0
      %10282 = vmatmul.mubr.bf16.gmra.mxu0 %v9465
      %v10283 = vpop.f32.mrf.mxu0
      %v10284 = vadd.f32 %v9262, %v10283
      %v10285 = vpop.f32.mrf.mxu0
      %v10286 = vpop.f32.mrf.mxu0
      %v10287 = vadd.f32 %v9262, %v10286
      %v10288 = vpop.f32.mrf.mxu0
      %10289 = vmatprep.mubr.bf16.mxu0 0
      %10290 = vmatmul.mubr.bf16.gmra.mxu0 %v9467
      %v10291 = vpop.f32.mrf.mxu0
      %v10292 = vadd.f32 %v9262, %v10291
      %v10293 = vpop.f32.mrf.mxu0
      %v10294 = vpop.f32.mrf.mxu0
      %v10295 = vadd.f32 %v9262, %v10294
      %v10296 = vpop.f32.mrf.mxu0
      %10297 = vmatprep.mubr.bf16.mxu0 0
      %10298 = vmatmul.mubr.bf16.gmra.mxu0 %v9469
      %v10299 = vpop.f32.mrf.mxu0
      %v10300 = vadd.f32 %v9262, %v10299
      %v10301 = vpop.f32.mrf.mxu0
      %v10302 = vpop.f32.mrf.mxu0
      %v10303 = vadd.f32 %v9262, %v10302
      %v10304 = vpop.f32.mrf.mxu0
      %10305 = vmatprep.mubr.bf16.mxu0 0
      %10306 = vmatmul.mubr.bf16.gmra.mxu0 %v9471
      %v10307 = vpop.f32.mrf.mxu0
      %v10308 = vadd.f32 %v9262, %v10307
      %v10309 = vpop.f32.mrf.mxu0
      %v10310 = vpop.f32.mrf.mxu0
      %v10311 = vadd.f32 %v9262, %v10310
      %v10312 = vpop.f32.mrf.mxu0
      %10313 = vmatprep.mubr.bf16.mxu0 0
      %10314 = vmatmul.mubr.bf16.gmra.mxu0 %v9473
      %v10315 = vpop.f32.mrf.mxu0
      %v10316 = vadd.f32 %v9262, %v10315
      %v10317 = vpop.f32.mrf.mxu0
      %v10318 = vpop.f32.mrf.mxu0
      %v10319 = vadd.f32 %v9262, %v10318
      %v10320 = vpop.f32.mrf.mxu0
      %10321 = vmatprep.mubr.bf16.mxu0 0
      %10322 = vmatmul.mubr.bf16.gmra.mxu0 %v9475
      %v10323 = vpop.f32.mrf.mxu0
      %v10324 = vadd.f32 %v9262, %v10323
      %v10325 = vpop.f32.mrf.mxu0
      %v10326 = vpop.f32.mrf.mxu0
      %v10327 = vadd.f32 %v9262, %v10326
      %v10328 = vpop.f32.mrf.mxu0
      %10329 = vmatprep.mubr.bf16.mxu0 0
      %10330 = vmatmul.mubr.bf16.gmra.mxu0 %v9477
      %v10331 = vpop.f32.mrf.mxu0
      %v10332 = vadd.f32 %v9262, %v10331
      %v10333 = vpop.f32.mrf.mxu0
      %v10334 = vpop.f32.mrf.mxu0
      %v10335 = vadd.f32 %v9262, %v10334
      %v10336 = vpop.f32.mrf.mxu0
      %10337 = vmatprep.mubr.bf16.mxu0 0
      %10338 = vmatmul.mubr.bf16.gmra.mxu0 %v9479
      %v10339 = vpop.f32.mrf.mxu0
      %v10340 = vadd.f32 %v9262, %v10339
      %v10341 = vpop.f32.mrf.mxu0
      %v10342 = vpop.f32.mrf.mxu0
      %v10343 = vadd.f32 %v9262, %v10342
      %v10344 = vpop.f32.mrf.mxu0
      %10345 = vmatprep.mubr.bf16.mxu0 0
      %10346 = vmatmul.mubr.bf16.gmra.mxu0 %v9481
      %v10347 = vpop.f32.mrf.mxu0
      %v10348 = vadd.f32 %v9262, %v10347
      %v10349 = vpop.f32.mrf.mxu0
      %v10350 = vpop.f32.mrf.mxu0
      %v10351 = vadd.f32 %v9262, %v10350
      %v10352 = vpop.f32.mrf.mxu0
      %10353 = vmatprep.mubr.bf16.mxu0 0
      %10354 = vmatmul.mubr.bf16.gmra.mxu0 %v9483
      %v10355 = vpop.f32.mrf.mxu0
      %v10356 = vadd.f32 %v9262, %v10355
      %v10357 = vpop.f32.mrf.mxu0
      %v10358 = vpop.f32.mrf.mxu0
      %v10359 = vadd.f32 %v9262, %v10358
      %v10360 = vpop.f32.mrf.mxu0
      %10361 = vmatprep.mubr.bf16.mxu0 0
      %10362 = vmatmul.mubr.bf16.gmra.mxu0 %v9485
      %v10363 = vpop.f32.mrf.mxu0
      %v10364 = vadd.f32 %v9262, %v10363
      %v10365 = vpop.f32.mrf.mxu0
      %v10366 = vpop.f32.mrf.mxu0
      %v10367 = vadd.f32 %v9262, %v10366
      %v10368 = vpop.f32.mrf.mxu0
      %10369 = vmatprep.mubr.bf16.mxu0 0
      %10370 = vmatmul.mubr.bf16.gmra.mxu0 %v9487
      %v10371 = vpop.f32.mrf.mxu0
      %v10372 = vadd.f32 %v9262, %v10371
      %v10373 = vpop.f32.mrf.mxu0
      %v10374 = vpop.f32.mrf.mxu0
      %v10375 = vadd.f32 %v9262, %v10374
      %v10376 = vpop.f32.mrf.mxu0
      %10377 = vmatprep.mubr.bf16.mxu0 0
      %10378 = vmatmul.mubr.bf16.gmra.mxu0 %v9489
      %v10379 = vpop.f32.mrf.mxu0
      %v10380 = vadd.f32 %v9262, %v10379
      %v10381 = vpop.f32.mrf.mxu0
      %v10382 = vpop.f32.mrf.mxu0
      %v10383 = vadd.f32 %v9262, %v10382
      %v10384 = vpop.f32.mrf.mxu0
      %10385 = vmatprep.mubr.bf16.mxu0 0
      %10386 = vmatmul.mubr.bf16.gmra.mxu0 %v9491
      %v10387 = vpop.f32.mrf.mxu0
      %v10388 = vadd.f32 %v9262, %v10387
      %v10389 = vpop.f32.mrf.mxu0
      %v10390 = vpop.f32.mrf.mxu0
      %v10391 = vadd.f32 %v9262, %v10390
      %v10392 = vpop.f32.mrf.mxu0
      %10393 = vmatprep.mubr.bf16.mxu0 0
      %10394 = vmatmul.mubr.bf16.gmra.mxu0 %v9493
      %v10395 = vpop.f32.mrf.mxu0
      %v10396 = vadd.f32 %v9262, %v10395
      %v10397 = vpop.f32.mrf.mxu0
      %v10398 = vpop.f32.mrf.mxu0
      %v10399 = vadd.f32 %v9262, %v10398
      %v10400 = vpop.f32.mrf.mxu0
      %10401 = vmatprep.mubr.bf16.mxu0 0
      %10402 = vmatmul.mubr.bf16.gmra.mxu0 %v9495
      %v10403 = vpop.f32.mrf.mxu0
      %v10404 = vadd.f32 %v9262, %v10403
      %v10405 = vpop.f32.mrf.mxu0
      %v10406 = vpop.f32.mrf.mxu0
      %v10407 = vadd.f32 %v9262, %v10406
      %v10408 = vpop.f32.mrf.mxu0
      %10409 = vmatprep.mubr.bf16.mxu0 0
      %10410 = vmatmul.mubr.bf16.gmra.mxu0 %v9497
      %v10411 = vpop.f32.mrf.mxu0
      %v10412 = vadd.f32 %v9262, %v10411
      %v10413 = vpop.f32.mrf.mxu0
      %v10414 = vpop.f32.mrf.mxu0
      %v10415 = vadd.f32 %v9262, %v10414
      %v10416 = vpop.f32.mrf.mxu0
      %10417 = vmatprep.mubr.bf16.mxu0 0
      %10418 = vmatmul.mubr.bf16.gmra.mxu0 %v9499
      %v10419 = vpop.f32.mrf.mxu0
      %v10420 = vadd.f32 %v9262, %v10419
      %v10421 = vpop.f32.mrf.mxu0
      %v10422 = vpop.f32.mrf.mxu0
      %v10423 = vadd.f32 %v9262, %v10422
      %v10424 = vpop.f32.mrf.mxu0
      %10425 = vmatprep.mubr.bf16.mxu0 0
      %10426 = vmatmul.mubr.bf16.gmra.mxu0 %v9501
      %v10427 = vpop.f32.mrf.mxu0
      %v10428 = vadd.f32 %v9262, %v10427
      %v10429 = vpop.f32.mrf.mxu0
      %v10430 = vpop.f32.mrf.mxu0
      %v10431 = vadd.f32 %v9262, %v10430
      %v10432 = vpop.f32.mrf.mxu0
      %10433 = vmatprep.mubr.bf16.mxu0 0
      %10434 = vmatmul.mubr.bf16.gmra.mxu0 %v9503
      %v10435 = vpop.f32.mrf.mxu0
      %v10436 = vadd.f32 %v9262, %v10435
      %v10437 = vpop.f32.mrf.mxu0
      %v10438 = vpop.f32.mrf.mxu0
      %v10439 = vadd.f32 %v9262, %v10438
      %v10440 = vpop.f32.mrf.mxu0
      %10441 = vmatprep.mubr.bf16.mxu0 0
      %10442 = vmatmul.mubr.bf16.gmra.mxu0 %v9505
      %v10443 = vpop.f32.mrf.mxu0
      %v10444 = vadd.f32 %v9262, %v10443
      %v10445 = vpop.f32.mrf.mxu0
      %v10446 = vpop.f32.mrf.mxu0
      %v10447 = vadd.f32 %v9262, %v10446
      %v10448 = vpop.f32.mrf.mxu0
      %10449 = vmatprep.mubr.bf16.mxu0 0
      %10450 = vmatmul.mubr.bf16.gmra.mxu0 %v9507
      %v10451 = vpop.f32.mrf.mxu0
      %v10452 = vadd.f32 %v9262, %v10451
      %v10453 = vpop.f32.mrf.mxu0
      %v10454 = vpop.f32.mrf.mxu0
      %v10455 = vadd.f32 %v9262, %v10454
      %v10456 = vpop.f32.mrf.mxu0
      %10457 = vmatprep.mubr.bf16.mxu0 0
      %10458 = vmatmul.mubr.bf16.gmra.mxu0 %v9509
      %v10459 = vpop.f32.mrf.mxu0
      %v10460 = vadd.f32 %v9262, %v10459
      %v10461 = vpop.f32.mrf.mxu0
      %v10462 = vpop.f32.mrf.mxu0
      %v10463 = vadd.f32 %v9262, %v10462
      %v10464 = vpop.f32.mrf.mxu0
      %10465 = vmatprep.mubr.bf16.mxu0 0
      %10466 = vmatmul.mubr.bf16.gmra.mxu0 %v9511
      %v10467 = vpop.f32.mrf.mxu0
      %v10468 = vadd.f32 %v9262, %v10467
      %v10469 = vpop.f32.mrf.mxu0
      %v10470 = vpop.f32.mrf.mxu0
      %v10471 = vadd.f32 %v9262, %v10470
      %v10472 = vpop.f32.mrf.mxu0
      %10473 = vmatprep.mubr.bf16.mxu0 0
      %10474 = vmatmul.mubr.bf16.gmra.mxu0 %v9513
      %v10475 = vpop.f32.mrf.mxu0
      %v10476 = vadd.f32 %v9262, %v10475
      %v10477 = vpop.f32.mrf.mxu0
      %v10478 = vpop.f32.mrf.mxu0
      %v10479 = vadd.f32 %v9262, %v10478
      %v10480 = vpop.f32.mrf.mxu0
      %10481 = vmatprep.mubr.bf16.mxu0 0
      %10482 = vmatmul.mubr.bf16.gmra.mxu0 %v9515
      %v10483 = vpop.f32.mrf.mxu0
      %v10484 = vadd.f32 %v9262, %v10483
      %v10485 = vpop.f32.mrf.mxu0
      %v10486 = vpop.f32.mrf.mxu0
      %v10487 = vadd.f32 %v9262, %v10486
      %v10488 = vpop.f32.mrf.mxu0
      %10489 = vmatprep.mubr.bf16.mxu0 0
      %10490 = vmatmul.mubr.bf16.gmra.mxu0 %v9517
      %v10491 = vpop.f32.mrf.mxu0
      %v10492 = vadd.f32 %v9262, %v10491
      %v10493 = vpop.f32.mrf.mxu0
      %v10494 = vpop.f32.mrf.mxu0
      %v10495 = vadd.f32 %v9262, %v10494
      %v10496 = vpop.f32.mrf.mxu0
      %10497 = vmatprep.mubr.bf16.mxu0 0
      %10498 = vmatmul.mubr.bf16.gmra.mxu0 %v9519
      %v10499 = vpop.f32.mrf.mxu0
      %v10500 = vadd.f32 %v9262, %v10499
      %v10501 = vpop.f32.mrf.mxu0
      %v10502 = vpop.f32.mrf.mxu0
      %v10503 = vadd.f32 %v9262, %v10502
      %v10504 = vpop.f32.mrf.mxu0
      %10505 = vmatprep.mubr.bf16.mxu0 0
      %10506 = vmatmul.mubr.bf16.gmra.mxu0 %v9521
      %v10507 = vpop.f32.mrf.mxu0
      %v10508 = vadd.f32 %v9262, %v10507
      %v10509 = vpop.f32.mrf.mxu0
      %v10510 = vpop.f32.mrf.mxu0
      %v10511 = vadd.f32 %v9262, %v10510
      %v10512 = vpop.f32.mrf.mxu0
      %10513 = vmatprep.mubr.bf16.mxu0 0
      %10514 = vmatmul.mubr.bf16.gmra.mxu0 %v9523
      %v10515 = vpop.f32.mrf.mxu0
      %v10516 = vadd.f32 %v9262, %v10515
      %v10517 = vpop.f32.mrf.mxu0
      %v10518 = vpop.f32.mrf.mxu0
      %v10519 = vadd.f32 %v9262, %v10518
      %v10520 = vpop.f32.mrf.mxu0
      %10521 = vmatprep.mubr.bf16.mxu0 0
      %10522 = vmatmul.mubr.bf16.gmra.mxu0 %v9525
      %v10523 = vpop.f32.mrf.mxu0
      %v10524 = vadd.f32 %v9262, %v10523
      %v10525 = vpop.f32.mrf.mxu0
      %v10526 = vpop.f32.mrf.mxu0
      %v10527 = vadd.f32 %v9262, %v10526
      %v10528 = vpop.f32.mrf.mxu0
      %10529 = vmatprep.mubr.bf16.mxu0 0
      %10530 = vmatmul.mubr.bf16.gmra.mxu0 %v9527
      %v10531 = vpop.f32.mrf.mxu0
      %v10532 = vadd.f32 %v9262, %v10531
      %v10533 = vpop.f32.mrf.mxu0
      %v10534 = vpop.f32.mrf.mxu0
      %v10535 = vadd.f32 %v9262, %v10534
      %v10536 = vpop.f32.mrf.mxu0
      %10537 = vmatprep.mubr.bf16.mxu0 0
      %10538 = vmatmul.mubr.bf16.gmra.mxu0 %v9529
      %v10539 = vpop.f32.mrf.mxu0
      %v10540 = vadd.f32 %v9262, %v10539
      %v10541 = vpop.f32.mrf.mxu0
      %v10542 = vpop.f32.mrf.mxu0
      %v10543 = vadd.f32 %v9262, %v10542
      %v10544 = vpop.f32.mrf.mxu0
      %10545 = vmatprep.mubr.bf16.mxu0 0
      %10546 = vmatmul.mubr.bf16.gmra.mxu0 %v9531
      %v10547 = vpop.f32.mrf.mxu0
      %v10548 = vadd.f32 %v9262, %v10547
      %v10549 = vpop.f32.mrf.mxu0
      %v10550 = vpop.f32.mrf.mxu0
      %v10551 = vadd.f32 %v9262, %v10550
      %v10552 = vpop.f32.mrf.mxu0
      %10553 = vmatprep.mubr.bf16.mxu0 0
      %10554 = vmatmul.mubr.bf16.gmra.mxu0 %v9533
      %v10555 = vpop.f32.mrf.mxu0
      %v10556 = vadd.f32 %v9262, %v10555
      %v10557 = vpop.f32.mrf.mxu0
      %v10558 = vpop.f32.mrf.mxu0
      %v10559 = vadd.f32 %v9262, %v10558
      %v10560 = vpop.f32.mrf.mxu0
      %10561 = vmatprep.mubr.bf16.mxu0 0
      %10562 = vmatmul.mubr.bf16.gmra.mxu0 %v9535
      %v10563 = vpop.f32.mrf.mxu0
      %v10564 = vadd.f32 %v9262, %v10563
      %v10565 = vpop.f32.mrf.mxu0
      %v10566 = vpop.f32.mrf.mxu0
      %v10567 = vadd.f32 %v9262, %v10566
      %v10568 = vpop.f32.mrf.mxu0
      %10569 = vmatprep.mubr.bf16.mxu0 0
      %10570 = vmatmul.mubr.bf16.gmra.mxu0 %v9537
      %v10571 = vpop.f32.mrf.mxu0
      %v10572 = vadd.f32 %v9262, %v10571
      %v10573 = vpop.f32.mrf.mxu0
      %v10574 = vpop.f32.mrf.mxu0
      %v10575 = vadd.f32 %v9262, %v10574
      %v10576 = vpop.f32.mrf.mxu0
      %10577 = vmatprep.mubr.bf16.mxu0 0
      %10578 = vmatmul.mubr.bf16.gmra.mxu0 %v9539
      %v10579 = vpop.f32.mrf.mxu0
      %v10580 = vadd.f32 %v9262, %v10579
      %v10581 = vpop.f32.mrf.mxu0
      %v10582 = vpop.f32.mrf.mxu0
      %v10583 = vadd.f32 %v9262, %v10582
      %v10584 = vpop.f32.mrf.mxu0
      %10585 = vmatprep.mubr.bf16.mxu0 0
      %10586 = vmatmul.mubr.bf16.gmra.mxu0 %v9541
      %v10587 = vpop.f32.mrf.mxu0
      %v10588 = vadd.f32 %v9262, %v10587
      %v10589 = vpop.f32.mrf.mxu0
      %v10590 = vpop.f32.mrf.mxu0
      %v10591 = vadd.f32 %v9262, %v10590
      %v10592 = vpop.f32.mrf.mxu0
      %10593 = vmatprep.mubr.bf16.mxu0 0
      %10594 = vmatmul.mubr.bf16.gmra.mxu0 %v9543
      %v10595 = vpop.f32.mrf.mxu0
      %v10596 = vadd.f32 %v9262, %v10595
      %v10597 = vpop.f32.mrf.mxu0
      %v10598 = vpop.f32.mrf.mxu0
      %v10599 = vadd.f32 %v9262, %v10598
      %v10600 = vpop.f32.mrf.mxu0
      %10601 = vdwg.mxu0
      %v10602 = vmax.f32 %v9580, 0.0
      %v10603 = vmax.f32 %v9583, 0.0
      %v10604 = vmax.f32 %v9588, 0.0
      %v10605 = vmax.f32 %v9591, 0.0
      %v10606 = vmax.f32 %v9596, 0.0
      %v10607 = vmax.f32 %v9599, 0.0
      %v10608 = vmax.f32 %v9604, 0.0
      %v10609 = vmax.f32 %v9607, 0.0
      %v10610 = vmax.f32 %v9612, 0.0
      %v10611 = vmax.f32 %v9615, 0.0
      %v10612 = vmax.f32 %v9620, 0.0
      %v10613 = vmax.f32 %v9623, 0.0
      %v10614 = vmax.f32 %v9628, 0.0
      %v10615 = vmax.f32 %v9631, 0.0
      %v10616 = vmax.f32 %v9636, 0.0
      %v10617 = vmax.f32 %v9639, 0.0
      %v10618 = vmax.f32 %v9644, 0.0
      %v10619 = vmax.f32 %v9647, 0.0
      %v10620 = vmax.f32 %v9652, 0.0
      %v10621 = vmax.f32 %v9655, 0.0
      %v10622 = vmax.f32 %v9660, 0.0
      %v10623 = vmax.f32 %v9663, 0.0
      %v10624 = vmax.f32 %v9668, 0.0
      %v10625 = vmax.f32 %v9671, 0.0
      %v10626 = vmax.f32 %v9676, 0.0
      %v10627 = vmax.f32 %v9679, 0.0
      %v10628 = vmax.f32 %v9684, 0.0
      %v10629 = vmax.f32 %v9687, 0.0
      %v10630 = vmax.f32 %v9692, 0.0
      %v10631 = vmax.f32 %v9695, 0.0
      %v10632 = vmax.f32 %v9700, 0.0
      %v10633 = vmax.f32 %v9703, 0.0
      %v10634 = vmax.f32 %v9708, 0.0
      %v10635 = vmax.f32 %v9711, 0.0
      %v10636 = vmax.f32 %v9716, 0.0
      %v10637 = vmax.f32 %v9719, 0.0
      %v10638 = vmax.f32 %v9724, 0.0
      %v10639 = vmax.f32 %v9727, 0.0
      %v10640 = vmax.f32 %v9732, 0.0
      %v10641 = vmax.f32 %v9735, 0.0
      %v10642 = vmax.f32 %v9740, 0.0
      %v10643 = vmax.f32 %v9743, 0.0
      %v10644 = vmax.f32 %v9748, 0.0
      %v10645 = vmax.f32 %v9751, 0.0
      %v10646 = vmax.f32 %v9756, 0.0
      %v10647 = vmax.f32 %v9759, 0.0
      %v10648 = vmax.f32 %v9764, 0.0
      %v10649 = vmax.f32 %v9767, 0.0
      %v10650 = vmax.f32 %v9772, 0.0
      %v10651 = vmax.f32 %v9775, 0.0
      %v10652 = vmax.f32 %v9780, 0.0
      %v10653 = vmax.f32 %v9783, 0.0
      %v10654 = vmax.f32 %v9788, 0.0
      %v10655 = vmax.f32 %v9791, 0.0
      %v10656 = vmax.f32 %v9796, 0.0
      %v10657 = vmax.f32 %v9799, 0.0
      %v10658 = vmax.f32 %v9804, 0.0
      %v10659 = vmax.f32 %v9807, 0.0
      %v10660 = vmax.f32 %v9812, 0.0
      %v10661 = vmax.f32 %v9815, 0.0
      %v10662 = vmax.f32 %v9820, 0.0
      %v10663 = vmax.f32 %v9823, 0.0
      %v10664 = vmax.f32 %v9828, 0.0
      %v10665 = vmax.f32 %v9831, 0.0
      %v10666 = vmax.f32 %v9836, 0.0
      %v10667 = vmax.f32 %v9839, 0.0
      %v10668 = vmax.f32 %v9844, 0.0
      %v10669 = vmax.f32 %v9847, 0.0
      %v10670 = vmax.f32 %v9852, 0.0
      %v10671 = vmax.f32 %v9855, 0.0
      %v10672 = vmax.f32 %v9860, 0.0
      %v10673 = vmax.f32 %v9863, 0.0
      %v10674 = vmax.f32 %v9868, 0.0
      %v10675 = vmax.f32 %v9871, 0.0
      %v10676 = vmax.f32 %v9876, 0.0
      %v10677 = vmax.f32 %v9879, 0.0
      %v10678 = vmax.f32 %v9884, 0.0
      %v10679 = vmax.f32 %v9887, 0.0
      %v10680 = vmax.f32 %v9892, 0.0
      %v10681 = vmax.f32 %v9895, 0.0
      %v10682 = vmax.f32 %v9900, 0.0
      %v10683 = vmax.f32 %v9903, 0.0
      %v10684 = vmax.f32 %v9908, 0.0
      %v10685 = vmax.f32 %v9911, 0.0
      %v10686 = vmax.f32 %v9916, 0.0
      %v10687 = vmax.f32 %v9919, 0.0
      %v10688 = vmax.f32 %v9924, 0.0
      %v10689 = vmax.f32 %v9927, 0.0
      %v10690 = vmax.f32 %v9932, 0.0
      %v10691 = vmax.f32 %v9935, 0.0
      %v10692 = vmax.f32 %v9940, 0.0
      %v10693 = vmax.f32 %v9943, 0.0
      %v10694 = vmax.f32 %v9948, 0.0
      %v10695 = vmax.f32 %v9951, 0.0
      %v10696 = vmax.f32 %v9956, 0.0
      %v10697 = vmax.f32 %v9959, 0.0
      %v10698 = vmax.f32 %v9964, 0.0
      %v10699 = vmax.f32 %v9967, 0.0
      %v10700 = vmax.f32 %v9972, 0.0
      %v10701 = vmax.f32 %v9975, 0.0
      %v10702 = vmax.f32 %v9980, 0.0
      %v10703 = vmax.f32 %v9983, 0.0
      %v10704 = vmax.f32 %v9988, 0.0
      %v10705 = vmax.f32 %v9991, 0.0
      %v10706 = vmax.f32 %v9996, 0.0
      %v10707 = vmax.f32 %v9999, 0.0
      %v10708 = vmax.f32 %v10004, 0.0
      %v10709 = vmax.f32 %v10007, 0.0
      %v10710 = vmax.f32 %v10012, 0.0
      %v10711 = vmax.f32 %v10015, 0.0
      %v10712 = vmax.f32 %v10020, 0.0
      %v10713 = vmax.f32 %v10023, 0.0
      %v10714 = vmax.f32 %v10028, 0.0
      %v10715 = vmax.f32 %v10031, 0.0
      %v10716 = vmax.f32 %v10036, 0.0
      %v10717 = vmax.f32 %v10039, 0.0
      %v10718 = vmax.f32 %v10044, 0.0
      %v10719 = vmax.f32 %v10047, 0.0
      %v10720 = vmax.f32 %v10052, 0.0
      %v10721 = vmax.f32 %v10055, 0.0
      %v10722 = vmax.f32 %v10060, 0.0
      %v10723 = vmax.f32 %v10063, 0.0
      %v10724 = vmax.f32 %v10068, 0.0
      %v10725 = vmax.f32 %v10071, 0.0
      %v10726 = vmax.f32 %v10076, 0.0
      %v10727 = vmax.f32 %v10079, 0.0
      %v10728 = vmax.f32 %v10084, 0.0
      %v10729 = vmax.f32 %v10087, 0.0
      %v10730 = vmax.f32 %v10092, 0.0
      %v10731 = vmax.f32 %v10095, 0.0
      %v10732 = vmax.f32 %v10100, 0.0
      %v10733 = vmax.f32 %v10103, 0.0
      %v10734 = vmax.f32 %v10108, 0.0
      %v10735 = vmax.f32 %v10111, 0.0
      %v10736 = vmax.f32 %v10116, 0.0
      %v10737 = vmax.f32 %v10119, 0.0
      %v10738 = vmax.f32 %v10124, 0.0
      %v10739 = vmax.f32 %v10127, 0.0
      %v10740 = vmax.f32 %v10132, 0.0
      %v10741 = vmax.f32 %v10135, 0.0
      %v10742 = vmax.f32 %v10140, 0.0
      %v10743 = vmax.f32 %v10143, 0.0
      %v10744 = vmax.f32 %v10148, 0.0
      %v10745 = vmax.f32 %v10151, 0.0
      %v10746 = vmax.f32 %v10156, 0.0
      %v10747 = vmax.f32 %v10159, 0.0
      %v10748 = vmax.f32 %v10164, 0.0
      %v10749 = vmax.f32 %v10167, 0.0
      %v10750 = vmax.f32 %v10172, 0.0
      %v10751 = vmax.f32 %v10175, 0.0
      %v10752 = vmax.f32 %v10180, 0.0
      %v10753 = vmax.f32 %v10183, 0.0
      %v10754 = vmax.f32 %v10188, 0.0
      %v10755 = vmax.f32 %v10191, 0.0
      %v10756 = vmax.f32 %v10196, 0.0
      %v10757 = vmax.f32 %v10199, 0.0
      %v10758 = vmax.f32 %v10204, 0.0
      %v10759 = vmax.f32 %v10207, 0.0
      %v10760 = vmax.f32 %v10212, 0.0
      %v10761 = vmax.f32 %v10215, 0.0
      %v10762 = vmax.f32 %v10220, 0.0
      %v10763 = vmax.f32 %v10223, 0.0
      %v10764 = vmax.f32 %v10228, 0.0
      %v10765 = vmax.f32 %v10231, 0.0
      %v10766 = vmax.f32 %v10236, 0.0
      %v10767 = vmax.f32 %v10239, 0.0
      %v10768 = vmax.f32 %v10244, 0.0
      %v10769 = vmax.f32 %v10247, 0.0
      %v10770 = vmax.f32 %v10252, 0.0
      %v10771 = vmax.f32 %v10255, 0.0
      %v10772 = vmax.f32 %v10260, 0.0
      %v10773 = vmax.f32 %v10263, 0.0
      %v10774 = vmax.f32 %v10268, 0.0
      %v10775 = vmax.f32 %v10271, 0.0
      %v10776 = vmax.f32 %v10276, 0.0
      %v10777 = vmax.f32 %v10279, 0.0
      %v10778 = vmax.f32 %v10284, 0.0
      %v10779 = vmax.f32 %v10287, 0.0
      %v10780 = vmax.f32 %v10292, 0.0
      %v10781 = vmax.f32 %v10295, 0.0
      %v10782 = vmax.f32 %v10300, 0.0
      %v10783 = vmax.f32 %v10303, 0.0
      %v10784 = vmax.f32 %v10308, 0.0
      %v10785 = vmax.f32 %v10311, 0.0
      %v10786 = vmax.f32 %v10316, 0.0
      %v10787 = vmax.f32 %v10319, 0.0
      %v10788 = vmax.f32 %v10324, 0.0
      %v10789 = vmax.f32 %v10327, 0.0
      %v10790 = vmax.f32 %v10332, 0.0
      %v10791 = vmax.f32 %v10335, 0.0
      %v10792 = vmax.f32 %v10340, 0.0
      %v10793 = vmax.f32 %v10343, 0.0
      %v10794 = vmax.f32 %v10348, 0.0
      %v10795 = vmax.f32 %v10351, 0.0
      %v10796 = vmax.f32 %v10356, 0.0
      %v10797 = vmax.f32 %v10359, 0.0
      %v10798 = vmax.f32 %v10364, 0.0
      %v10799 = vmax.f32 %v10367, 0.0
      %v10800 = vmax.f32 %v10372, 0.0
      %v10801 = vmax.f32 %v10375, 0.0
      %v10802 = vmax.f32 %v10380, 0.0
      %v10803 = vmax.f32 %v10383, 0.0
      %v10804 = vmax.f32 %v10388, 0.0
      %v10805 = vmax.f32 %v10391, 0.0
      %v10806 = vmax.f32 %v10396, 0.0
      %v10807 = vmax.f32 %v10399, 0.0
      %v10808 = vmax.f32 %v10404, 0.0
      %v10809 = vmax.f32 %v10407, 0.0
      %v10810 = vmax.f32 %v10412, 0.0
      %v10811 = vmax.f32 %v10415, 0.0
      %v10812 = vmax.f32 %v10420, 0.0
      %v10813 = vmax.f32 %v10423, 0.0
      %v10814 = vmax.f32 %v10428, 0.0
      %v10815 = vmax.f32 %v10431, 0.0
      %v10816 = vmax.f32 %v10436, 0.0
      %v10817 = vmax.f32 %v10439, 0.0
      %v10818 = vmax.f32 %v10444, 0.0
      %v10819 = vmax.f32 %v10447, 0.0
      %v10820 = vmax.f32 %v10452, 0.0
      %v10821 = vmax.f32 %v10455, 0.0
      %v10822 = vmax.f32 %v10460, 0.0
      %v10823 = vmax.f32 %v10463, 0.0
      %v10824 = vmax.f32 %v10468, 0.0
      %v10825 = vmax.f32 %v10471, 0.0
      %v10826 = vmax.f32 %v10476, 0.0
      %v10827 = vmax.f32 %v10479, 0.0
      %v10828 = vmax.f32 %v10484, 0.0
      %v10829 = vmax.f32 %v10487, 0.0
      %v10830 = vmax.f32 %v10492, 0.0
      %v10831 = vmax.f32 %v10495, 0.0
      %v10832 = vmax.f32 %v10500, 0.0
      %v10833 = vmax.f32 %v10503, 0.0
      %v10834 = vmax.f32 %v10508, 0.0
      %v10835 = vmax.f32 %v10511, 0.0
      %v10836 = vmax.f32 %v10516, 0.0
      %v10837 = vmax.f32 %v10519, 0.0
      %v10838 = vmax.f32 %v10524, 0.0
      %v10839 = vmax.f32 %v10527, 0.0
      %v10840 = vmax.f32 %v10532, 0.0
      %v10841 = vmax.f32 %v10535, 0.0
      %v10842 = vmax.f32 %v10540, 0.0
      %v10843 = vmax.f32 %v10543, 0.0
      %v10844 = vmax.f32 %v10548, 0.0
      %v10845 = vmax.f32 %v10551, 0.0
      %v10846 = vmax.f32 %v10556, 0.0
      %v10847 = vmax.f32 %v10559, 0.0
      %v10848 = vmax.f32 %v10564, 0.0
      %v10849 = vmax.f32 %v10567, 0.0
      %v10850 = vmax.f32 %v10572, 0.0
      %v10851 = vmax.f32 %v10575, 0.0
      %v10852 = vmax.f32 %v10580, 0.0
      %v10853 = vmax.f32 %v10583, 0.0
      %v10854 = vmax.f32 %v10588, 0.0
      %v10855 = vmax.f32 %v10591, 0.0
      %v10856 = vmax.f32 %v10596, 0.0
      %v10857 = vmax.f32 %v10599, 0.0
      %v10858 = vpack.c.bf16 %v10603, %v10602
      %v10859 = vpack.c.bf16 %v10605, %v10604
      %v10860 = vpack.c.bf16 %v10607, %v10606
      %v10861 = vpack.c.bf16 %v10609, %v10608
      %v10862 = vpack.c.bf16 %v10611, %v10610
      %v10863 = vpack.c.bf16 %v10613, %v10612
      %v10864 = vpack.c.bf16 %v10615, %v10614
      %v10865 = vpack.c.bf16 %v10617, %v10616
      %v10866 = vpack.c.bf16 %v10619, %v10618
      %v10867 = vpack.c.bf16 %v10621, %v10620
      %v10868 = vpack.c.bf16 %v10623, %v10622
      %v10869 = vpack.c.bf16 %v10625, %v10624
      %v10870 = vpack.c.bf16 %v10627, %v10626
      %v10871 = vpack.c.bf16 %v10629, %v10628
      %v10872 = vpack.c.bf16 %v10631, %v10630
      %v10873 = vpack.c.bf16 %v10633, %v10632
      %v10874 = vpack.c.bf16 %v10635, %v10634
      %v10875 = vpack.c.bf16 %v10637, %v10636
      %v10876 = vpack.c.bf16 %v10639, %v10638
      %v10877 = vpack.c.bf16 %v10641, %v10640
      %v10878 = vpack.c.bf16 %v10643, %v10642
      %v10879 = vpack.c.bf16 %v10645, %v10644
      %v10880 = vpack.c.bf16 %v10647, %v10646
      %v10881 = vpack.c.bf16 %v10649, %v10648
      %v10882 = vpack.c.bf16 %v10651, %v10650
      %v10883 = vpack.c.bf16 %v10653, %v10652
      %v10884 = vpack.c.bf16 %v10655, %v10654
      %v10885 = vpack.c.bf16 %v10657, %v10656
      %v10886 = vpack.c.bf16 %v10659, %v10658
      %v10887 = vpack.c.bf16 %v10661, %v10660
      %v10888 = vpack.c.bf16 %v10663, %v10662
      %v10889 = vpack.c.bf16 %v10665, %v10664
      %v10890 = vpack.c.bf16 %v10667, %v10666
      %v10891 = vpack.c.bf16 %v10669, %v10668
      %v10892 = vpack.c.bf16 %v10671, %v10670
      %v10893 = vpack.c.bf16 %v10673, %v10672
      %v10894 = vpack.c.bf16 %v10675, %v10674
      %v10895 = vpack.c.bf16 %v10677, %v10676
      %v10896 = vpack.c.bf16 %v10679, %v10678
      %v10897 = vpack.c.bf16 %v10681, %v10680
      %v10898 = vpack.c.bf16 %v10683, %v10682
      %v10899 = vpack.c.bf16 %v10685, %v10684
      %v10900 = vpack.c.bf16 %v10687, %v10686
      %v10901 = vpack.c.bf16 %v10689, %v10688
      %v10902 = vpack.c.bf16 %v10691, %v10690
      %v10903 = vpack.c.bf16 %v10693, %v10692
      %v10904 = vpack.c.bf16 %v10695, %v10694
      %v10905 = vpack.c.bf16 %v10697, %v10696
      %v10906 = vpack.c.bf16 %v10699, %v10698
      %v10907 = vpack.c.bf16 %v10701, %v10700
      %v10908 = vpack.c.bf16 %v10703, %v10702
      %v10909 = vpack.c.bf16 %v10705, %v10704
      %v10910 = vpack.c.bf16 %v10707, %v10706
      %v10911 = vpack.c.bf16 %v10709, %v10708
      %v10912 = vpack.c.bf16 %v10711, %v10710
      %v10913 = vpack.c.bf16 %v10713, %v10712
      %v10914 = vpack.c.bf16 %v10715, %v10714
      %v10915 = vpack.c.bf16 %v10717, %v10716
      %v10916 = vpack.c.bf16 %v10719, %v10718
      %v10917 = vpack.c.bf16 %v10721, %v10720
      %v10918 = vpack.c.bf16 %v10723, %v10722
      %v10919 = vpack.c.bf16 %v10725, %v10724
      %v10920 = vpack.c.bf16 %v10727, %v10726
      %v10921 = vpack.c.bf16 %v10729, %v10728
      %v10922 = vpack.c.bf16 %v10731, %v10730
      %v10923 = vpack.c.bf16 %v10733, %v10732
      %v10924 = vpack.c.bf16 %v10735, %v10734
      %v10925 = vpack.c.bf16 %v10737, %v10736
      %v10926 = vpack.c.bf16 %v10739, %v10738
      %v10927 = vpack.c.bf16 %v10741, %v10740
      %v10928 = vpack.c.bf16 %v10743, %v10742
      %v10929 = vpack.c.bf16 %v10745, %v10744
      %v10930 = vpack.c.bf16 %v10747, %v10746
      %v10931 = vpack.c.bf16 %v10749, %v10748
      %v10932 = vpack.c.bf16 %v10751, %v10750
      %v10933 = vpack.c.bf16 %v10753, %v10752
      %v10934 = vpack.c.bf16 %v10755, %v10754
      %v10935 = vpack.c.bf16 %v10757, %v10756
      %v10936 = vpack.c.bf16 %v10759, %v10758
      %v10937 = vpack.c.bf16 %v10761, %v10760
      %v10938 = vpack.c.bf16 %v10763, %v10762
      %v10939 = vpack.c.bf16 %v10765, %v10764
      %v10940 = vpack.c.bf16 %v10767, %v10766
      %v10941 = vpack.c.bf16 %v10769, %v10768
      %v10942 = vpack.c.bf16 %v10771, %v10770
      %v10943 = vpack.c.bf16 %v10773, %v10772
      %v10944 = vpack.c.bf16 %v10775, %v10774
      %v10945 = vpack.c.bf16 %v10777, %v10776
      %v10946 = vpack.c.bf16 %v10779, %v10778
      %v10947 = vpack.c.bf16 %v10781, %v10780
      %v10948 = vpack.c.bf16 %v10783, %v10782
      %v10949 = vpack.c.bf16 %v10785, %v10784
      %v10950 = vpack.c.bf16 %v10787, %v10786
      %v10951 = vpack.c.bf16 %v10789, %v10788
      %v10952 = vpack.c.bf16 %v10791, %v10790
      %v10953 = vpack.c.bf16 %v10793, %v10792
      %v10954 = vpack.c.bf16 %v10795, %v10794
      %v10955 = vpack.c.bf16 %v10797, %v10796
      %v10956 = vpack.c.bf16 %v10799, %v10798
      %v10957 = vpack.c.bf16 %v10801, %v10800
      %v10958 = vpack.c.bf16 %v10803, %v10802
      %v10959 = vpack.c.bf16 %v10805, %v10804
      %v10960 = vpack.c.bf16 %v10807, %v10806
      %v10961 = vpack.c.bf16 %v10809, %v10808
      %v10962 = vpack.c.bf16 %v10811, %v10810
      %v10963 = vpack.c.bf16 %v10813, %v10812
      %v10964 = vpack.c.bf16 %v10815, %v10814
      %v10965 = vpack.c.bf16 %v10817, %v10816
      %v10966 = vpack.c.bf16 %v10819, %v10818
      %v10967 = vpack.c.bf16 %v10821, %v10820
      %v10968 = vpack.c.bf16 %v10823, %v10822
      %v10969 = vpack.c.bf16 %v10825, %v10824
      %v10970 = vpack.c.bf16 %v10827, %v10826
      %v10971 = vpack.c.bf16 %v10829, %v10828
      %v10972 = vpack.c.bf16 %v10831, %v10830
      %v10973 = vpack.c.bf16 %v10833, %v10832
      %v10974 = vpack.c.bf16 %v10835, %v10834
      %v10975 = vpack.c.bf16 %v10837, %v10836
      %v10976 = vpack.c.bf16 %v10839, %v10838
      %v10977 = vpack.c.bf16 %v10841, %v10840
      %v10978 = vpack.c.bf16 %v10843, %v10842
      %v10979 = vpack.c.bf16 %v10845, %v10844
      %v10980 = vpack.c.bf16 %v10847, %v10846
      %v10981 = vpack.c.bf16 %v10849, %v10848
      %v10982 = vpack.c.bf16 %v10851, %v10850
      %v10983 = vpack.c.bf16 %v10853, %v10852
      %v10984 = vpack.c.bf16 %v10855, %v10854
      %v10985 = vpack.c.bf16 %v10857, %v10856
      %v11114 = vunpack.c.l.b16 %v10858
      %v11115 = vunpack.c.h.b16 %v10858
      %v11116 = vunpack.c.l.b16 %v10859
      %v11117 = vunpack.c.h.b16 %v10859
      %v11118 = vunpack.c.l.b16 %v10860
      %v11119 = vunpack.c.h.b16 %v10860
      %v11120 = vunpack.c.l.b16 %v10861
      %v11121 = vunpack.c.h.b16 %v10861
      %v11122 = vunpack.c.l.b16 %v10862
      %v11123 = vunpack.c.h.b16 %v10862
      %v11124 = vunpack.c.l.b16 %v10863
      %v11125 = vunpack.c.h.b16 %v10863
      %v11126 = vunpack.c.l.b16 %v10864
      %v11127 = vunpack.c.h.b16 %v10864
      %v11128 = vunpack.c.l.b16 %v10865
      %v11129 = vunpack.c.h.b16 %v10865
      %v11130 = vunpack.c.l.b16 %v10866
      %v11131 = vunpack.c.h.b16 %v10866
      %v11132 = vunpack.c.l.b16 %v10867
      %v11133 = vunpack.c.h.b16 %v10867
      %v11134 = vunpack.c.l.b16 %v10868
      %v11135 = vunpack.c.h.b16 %v10868
      %v11136 = vunpack.c.l.b16 %v10869
      %v11137 = vunpack.c.h.b16 %v10869
      %v11138 = vunpack.c.l.b16 %v10870
      %v11139 = vunpack.c.h.b16 %v10870
      %v11140 = vunpack.c.l.b16 %v10871
      %v11141 = vunpack.c.h.b16 %v10871
      %v11142 = vunpack.c.l.b16 %v10872
      %v11143 = vunpack.c.h.b16 %v10872
      %v11144 = vunpack.c.l.b16 %v10873
      %v11145 = vunpack.c.h.b16 %v10873
      %v11146 = vunpack.c.l.b16 %v10874
      %v11147 = vunpack.c.h.b16 %v10874
      %v11148 = vunpack.c.l.b16 %v10875
      %v11149 = vunpack.c.h.b16 %v10875
      %v11150 = vunpack.c.l.b16 %v10876
      %v11151 = vunpack.c.h.b16 %v10876
      %v11152 = vunpack.c.l.b16 %v10877
      %v11153 = vunpack.c.h.b16 %v10877
      %v11154 = vunpack.c.l.b16 %v10878
      %v11155 = vunpack.c.h.b16 %v10878
      %v11156 = vunpack.c.l.b16 %v10879
      %v11157 = vunpack.c.h.b16 %v10879
      %v11158 = vunpack.c.l.b16 %v10880
      %v11159 = vunpack.c.h.b16 %v10880
      %v11160 = vunpack.c.l.b16 %v10881
      %v11161 = vunpack.c.h.b16 %v10881
      %v11162 = vunpack.c.l.b16 %v10882
      %v11163 = vunpack.c.h.b16 %v10882
      %v11164 = vunpack.c.l.b16 %v10883
      %v11165 = vunpack.c.h.b16 %v10883
      %v11166 = vunpack.c.l.b16 %v10884
      %v11167 = vunpack.c.h.b16 %v10884
      %v11168 = vunpack.c.l.b16 %v10885
      %v11169 = vunpack.c.h.b16 %v10885
      %v11170 = vunpack.c.l.b16 %v10886
      %v11171 = vunpack.c.h.b16 %v10886
      %v11172 = vunpack.c.l.b16 %v10887
      %v11173 = vunpack.c.h.b16 %v10887
      %v11174 = vunpack.c.l.b16 %v10888
      %v11175 = vunpack.c.h.b16 %v10888
      %v11176 = vunpack.c.l.b16 %v10889
      %v11177 = vunpack.c.h.b16 %v10889
      %v11178 = vunpack.c.l.b16 %v10890
      %v11179 = vunpack.c.h.b16 %v10890
      %v11180 = vunpack.c.l.b16 %v10891
      %v11181 = vunpack.c.h.b16 %v10891
      %v11182 = vunpack.c.l.b16 %v10892
      %v11183 = vunpack.c.h.b16 %v10892
      %v11184 = vunpack.c.l.b16 %v10893
      %v11185 = vunpack.c.h.b16 %v10893
      %v11186 = vunpack.c.l.b16 %v10894
      %v11187 = vunpack.c.h.b16 %v10894
      %v11188 = vunpack.c.l.b16 %v10895
      %v11189 = vunpack.c.h.b16 %v10895
      %v11190 = vunpack.c.l.b16 %v10896
      %v11191 = vunpack.c.h.b16 %v10896
      %v11192 = vunpack.c.l.b16 %v10897
      %v11193 = vunpack.c.h.b16 %v10897
      %v11194 = vunpack.c.l.b16 %v10898
      %v11195 = vunpack.c.h.b16 %v10898
      %v11196 = vunpack.c.l.b16 %v10899
      %v11197 = vunpack.c.h.b16 %v10899
      %v11198 = vunpack.c.l.b16 %v10900
      %v11199 = vunpack.c.h.b16 %v10900
      %v11200 = vunpack.c.l.b16 %v10901
      %v11201 = vunpack.c.h.b16 %v10901
      %v11202 = vunpack.c.l.b16 %v10902
      %v11203 = vunpack.c.h.b16 %v10902
      %v11204 = vunpack.c.l.b16 %v10903
      %v11205 = vunpack.c.h.b16 %v10903
      %v11206 = vunpack.c.l.b16 %v10904
      %v11207 = vunpack.c.h.b16 %v10904
      %v11208 = vunpack.c.l.b16 %v10905
      %v11209 = vunpack.c.h.b16 %v10905
      %v11210 = vunpack.c.l.b16 %v10906
      %v11211 = vunpack.c.h.b16 %v10906
      %v11212 = vunpack.c.l.b16 %v10907
      %v11213 = vunpack.c.h.b16 %v10907
      %v11214 = vunpack.c.l.b16 %v10908
      %v11215 = vunpack.c.h.b16 %v10908
      %v11216 = vunpack.c.l.b16 %v10909
      %v11217 = vunpack.c.h.b16 %v10909
      %v11218 = vunpack.c.l.b16 %v10910
      %v11219 = vunpack.c.h.b16 %v10910
      %v11220 = vunpack.c.l.b16 %v10911
      %v11221 = vunpack.c.h.b16 %v10911
      %v11222 = vunpack.c.l.b16 %v10912
      %v11223 = vunpack.c.h.b16 %v10912
      %v11224 = vunpack.c.l.b16 %v10913
      %v11225 = vunpack.c.h.b16 %v10913
      %v11226 = vunpack.c.l.b16 %v10914
      %v11227 = vunpack.c.h.b16 %v10914
      %v11228 = vunpack.c.l.b16 %v10915
      %v11229 = vunpack.c.h.b16 %v10915
      %v11230 = vunpack.c.l.b16 %v10916
      %v11231 = vunpack.c.h.b16 %v10916
      %v11232 = vunpack.c.l.b16 %v10917
      %v11233 = vunpack.c.h.b16 %v10917
      %v11234 = vunpack.c.l.b16 %v10918
      %v11235 = vunpack.c.h.b16 %v10918
      %v11236 = vunpack.c.l.b16 %v10919
      %v11237 = vunpack.c.h.b16 %v10919
      %v11238 = vunpack.c.l.b16 %v10920
      %v11239 = vunpack.c.h.b16 %v10920
      %v11240 = vunpack.c.l.b16 %v10921
      %v11241 = vunpack.c.h.b16 %v10921
      %v11242 = vunpack.c.l.b16 %v10922
      %v11243 = vunpack.c.h.b16 %v10922
      %v11244 = vunpack.c.l.b16 %v10923
      %v11245 = vunpack.c.h.b16 %v10923
      %v11246 = vunpack.c.l.b16 %v10924
      %v11247 = vunpack.c.h.b16 %v10924
      %v11248 = vunpack.c.l.b16 %v10925
      %v11249 = vunpack.c.h.b16 %v10925
      %v11250 = vunpack.c.l.b16 %v10926
      %v11251 = vunpack.c.h.b16 %v10926
      %v11252 = vunpack.c.l.b16 %v10927
      %v11253 = vunpack.c.h.b16 %v10927
      %v11254 = vunpack.c.l.b16 %v10928
      %v11255 = vunpack.c.h.b16 %v10928
      %v11256 = vunpack.c.l.b16 %v10929
      %v11257 = vunpack.c.h.b16 %v10929
      %v11258 = vunpack.c.l.b16 %v10930
      %v11259 = vunpack.c.h.b16 %v10930
      %v11260 = vunpack.c.l.b16 %v10931
      %v11261 = vunpack.c.h.b16 %v10931
      %v11262 = vunpack.c.l.b16 %v10932
      %v11263 = vunpack.c.h.b16 %v10932
      %v11264 = vunpack.c.l.b16 %v10933
      %v11265 = vunpack.c.h.b16 %v10933
      %v11266 = vunpack.c.l.b16 %v10934
      %v11267 = vunpack.c.h.b16 %v10934
      %v11268 = vunpack.c.l.b16 %v10935
      %v11269 = vunpack.c.h.b16 %v10935
      %v11270 = vunpack.c.l.b16 %v10936
      %v11271 = vunpack.c.h.b16 %v10936
      %v11272 = vunpack.c.l.b16 %v10937
      %v11273 = vunpack.c.h.b16 %v10937
      %v11274 = vunpack.c.l.b16 %v10938
      %v11275 = vunpack.c.h.b16 %v10938
      %v11276 = vunpack.c.l.b16 %v10939
      %v11277 = vunpack.c.h.b16 %v10939
      %v11278 = vunpack.c.l.b16 %v10940
      %v11279 = vunpack.c.h.b16 %v10940
      %v11280 = vunpack.c.l.b16 %v10941
      %v11281 = vunpack.c.h.b16 %v10941
      %v11282 = vunpack.c.l.b16 %v10942
      %v11283 = vunpack.c.h.b16 %v10942
      %v11284 = vunpack.c.l.b16 %v10943
      %v11285 = vunpack.c.h.b16 %v10943
      %v11286 = vunpack.c.l.b16 %v10944
      %v11287 = vunpack.c.h.b16 %v10944
      %v11288 = vunpack.c.l.b16 %v10945
      %v11289 = vunpack.c.h.b16 %v10945
      %v11290 = vunpack.c.l.b16 %v10946
      %v11291 = vunpack.c.h.b16 %v10946
      %v11292 = vunpack.c.l.b16 %v10947
      %v11293 = vunpack.c.h.b16 %v10947
      %v11294 = vunpack.c.l.b16 %v10948
      %v11295 = vunpack.c.h.b16 %v10948
      %v11296 = vunpack.c.l.b16 %v10949
      %v11297 = vunpack.c.h.b16 %v10949
      %v11298 = vunpack.c.l.b16 %v10950
      %v11299 = vunpack.c.h.b16 %v10950
      %v11300 = vunpack.c.l.b16 %v10951
      %v11301 = vunpack.c.h.b16 %v10951
      %v11302 = vunpack.c.l.b16 %v10952
      %v11303 = vunpack.c.h.b16 %v10952
      %v11304 = vunpack.c.l.b16 %v10953
      %v11305 = vunpack.c.h.b16 %v10953
      %v11306 = vunpack.c.l.b16 %v10954
      %v11307 = vunpack.c.h.b16 %v10954
      %v11308 = vunpack.c.l.b16 %v10955
      %v11309 = vunpack.c.h.b16 %v10955
      %v11310 = vunpack.c.l.b16 %v10956
      %v11311 = vunpack.c.h.b16 %v10956
      %v11312 = vunpack.c.l.b16 %v10957
      %v11313 = vunpack.c.h.b16 %v10957
      %v11314 = vunpack.c.l.b16 %v10958
      %v11315 = vunpack.c.h.b16 %v10958
      %v11316 = vunpack.c.l.b16 %v10959
      %v11317 = vunpack.c.h.b16 %v10959
      %v11318 = vunpack.c.l.b16 %v10960
      %v11319 = vunpack.c.h.b16 %v10960
      %v11320 = vunpack.c.l.b16 %v10961
      %v11321 = vunpack.c.h.b16 %v10961
      %v11322 = vunpack.c.l.b16 %v10962
      %v11323 = vunpack.c.h.b16 %v10962
      %v11324 = vunpack.c.l.b16 %v10963
      %v11325 = vunpack.c.h.b16 %v10963
      %v11326 = vunpack.c.l.b16 %v10964
      %v11327 = vunpack.c.h.b16 %v10964
      %v11328 = vunpack.c.l.b16 %v10965
      %v11329 = vunpack.c.h.b16 %v10965
      %v11330 = vunpack.c.l.b16 %v10966
      %v11331 = vunpack.c.h.b16 %v10966
      %v11332 = vunpack.c.l.b16 %v10967
      %v11333 = vunpack.c.h.b16 %v10967
      %v11334 = vunpack.c.l.b16 %v10968
      %v11335 = vunpack.c.h.b16 %v10968
      %v11336 = vunpack.c.l.b16 %v10969
      %v11337 = vunpack.c.h.b16 %v10969
      %v11338 = vunpack.c.l.b16 %v10970
      %v11339 = vunpack.c.h.b16 %v10970
      %v11340 = vunpack.c.l.b16 %v10971
      %v11341 = vunpack.c.h.b16 %v10971
      %v11342 = vunpack.c.l.b16 %v10972
      %v11343 = vunpack.c.h.b16 %v10972
      %v11344 = vunpack.c.l.b16 %v10973
      %v11345 = vunpack.c.h.b16 %v10973
      %v11346 = vunpack.c.l.b16 %v10974
      %v11347 = vunpack.c.h.b16 %v10974
      %v11348 = vunpack.c.l.b16 %v10975
      %v11349 = vunpack.c.h.b16 %v10975
      %v11350 = vunpack.c.l.b16 %v10976
      %v11351 = vunpack.c.h.b16 %v10976
      %v11352 = vunpack.c.l.b16 %v10977
      %v11353 = vunpack.c.h.b16 %v10977
      %v11354 = vunpack.c.l.b16 %v10978
      %v11355 = vunpack.c.h.b16 %v10978
      %v11356 = vunpack.c.l.b16 %v10979
      %v11357 = vunpack.c.h.b16 %v10979
      %v11358 = vunpack.c.l.b16 %v10980
      %v11359 = vunpack.c.h.b16 %v10980
      %v11360 = vunpack.c.l.b16 %v10981
      %v11361 = vunpack.c.h.b16 %v10981
      %v11362 = vunpack.c.l.b16 %v10982
      %v11363 = vunpack.c.h.b16 %v10982
      %v11364 = vunpack.c.l.b16 %v10983
      %v11365 = vunpack.c.h.b16 %v10983
      %v11366 = vunpack.c.l.b16 %v10984
      %v11367 = vunpack.c.h.b16 %v10984
      %v11368 = vunpack.c.l.b16 %v10985
      %v11369 = vunpack.c.h.b16 %v10985
      %v11370 = vpack.c.b16 %v11114, %v11114
      %v11371 = vpack.c.b16 %v11115, %v11115
      %v11372 = vpack.c.b16 %v11116, %v11116
      %v11373 = vpack.c.b16 %v11117, %v11117
      %v11374 = vpack.c.b16 %v11118, %v11118
      %v11375 = vpack.c.b16 %v11119, %v11119
      %v11376 = vpack.c.b16 %v11120, %v11120
      %v11377 = vpack.c.b16 %v11121, %v11121
      %v11378 = vpack.c.b16 %v11122, %v11122
      %v11379 = vpack.c.b16 %v11123, %v11123
      %v11380 = vpack.c.b16 %v11124, %v11124
      %v11381 = vpack.c.b16 %v11125, %v11125
      %v11382 = vpack.c.b16 %v11126, %v11126
      %v11383 = vpack.c.b16 %v11127, %v11127
      %v11384 = vpack.c.b16 %v11128, %v11128
      %v11385 = vpack.c.b16 %v11129, %v11129
      %v11386 = vpack.c.b16 %v11130, %v11130
      %v11387 = vpack.c.b16 %v11131, %v11131
      %v11388 = vpack.c.b16 %v11132, %v11132
      %v11389 = vpack.c.b16 %v11133, %v11133
      %v11390 = vpack.c.b16 %v11134, %v11134
      %v11391 = vpack.c.b16 %v11135, %v11135
      %v11392 = vpack.c.b16 %v11136, %v11136
      %v11393 = vpack.c.b16 %v11137, %v11137
      %v11394 = vpack.c.b16 %v11138, %v11138
      %v11395 = vpack.c.b16 %v11139, %v11139
      %v11396 = vpack.c.b16 %v11140, %v11140
      %v11397 = vpack.c.b16 %v11141, %v11141
      %v11398 = vpack.c.b16 %v11142, %v11142
      %v11399 = vpack.c.b16 %v11143, %v11143
      %v11400 = vpack.c.b16 %v11144, %v11144
      %v11401 = vpack.c.b16 %v11145, %v11145
      %v11402 = vpack.c.b16 %v11146, %v11146
      %v11403 = vpack.c.b16 %v11147, %v11147
      %v11404 = vpack.c.b16 %v11148, %v11148
      %v11405 = vpack.c.b16 %v11149, %v11149
      %v11406 = vpack.c.b16 %v11150, %v11150
      %v11407 = vpack.c.b16 %v11151, %v11151
      %v11408 = vpack.c.b16 %v11152, %v11152
      %v11409 = vpack.c.b16 %v11153, %v11153
      %v11410 = vpack.c.b16 %v11154, %v11154
      %v11411 = vpack.c.b16 %v11155, %v11155
      %v11412 = vpack.c.b16 %v11156, %v11156
      %v11413 = vpack.c.b16 %v11157, %v11157
      %v11414 = vpack.c.b16 %v11158, %v11158
      %v11415 = vpack.c.b16 %v11159, %v11159
      %v11416 = vpack.c.b16 %v11160, %v11160
      %v11417 = vpack.c.b16 %v11161, %v11161
      %v11418 = vpack.c.b16 %v11162, %v11162
      %v11419 = vpack.c.b16 %v11163, %v11163
      %v11420 = vpack.c.b16 %v11164, %v11164
      %v11421 = vpack.c.b16 %v11165, %v11165
      %v11422 = vpack.c.b16 %v11166, %v11166
      %v11423 = vpack.c.b16 %v11167, %v11167
      %v11424 = vpack.c.b16 %v11168, %v11168
      %v11425 = vpack.c.b16 %v11169, %v11169
      %v11426 = vpack.c.b16 %v11170, %v11170
      %v11427 = vpack.c.b16 %v11171, %v11171
      %v11428 = vpack.c.b16 %v11172, %v11172
      %v11429 = vpack.c.b16 %v11173, %v11173
      %v11430 = vpack.c.b16 %v11174, %v11174
      %v11431 = vpack.c.b16 %v11175, %v11175
      %v11432 = vpack.c.b16 %v11176, %v11176
      %v11433 = vpack.c.b16 %v11177, %v11177
      %v11434 = vpack.c.b16 %v11178, %v11178
      %v11435 = vpack.c.b16 %v11179, %v11179
      %v11436 = vpack.c.b16 %v11180, %v11180
      %v11437 = vpack.c.b16 %v11181, %v11181
      %v11438 = vpack.c.b16 %v11182, %v11182
      %v11439 = vpack.c.b16 %v11183, %v11183
      %v11440 = vpack.c.b16 %v11184, %v11184
      %v11441 = vpack.c.b16 %v11185, %v11185
      %v11442 = vpack.c.b16 %v11186, %v11186
      %v11443 = vpack.c.b16 %v11187, %v11187
      %v11444 = vpack.c.b16 %v11188, %v11188
      %v11445 = vpack.c.b16 %v11189, %v11189
      %v11446 = vpack.c.b16 %v11190, %v11190
      %v11447 = vpack.c.b16 %v11191, %v11191
      %v11448 = vpack.c.b16 %v11192, %v11192
      %v11449 = vpack.c.b16 %v11193, %v11193
      %v11450 = vpack.c.b16 %v11194, %v11194
      %v11451 = vpack.c.b16 %v11195, %v11195
      %v11452 = vpack.c.b16 %v11196, %v11196
      %v11453 = vpack.c.b16 %v11197, %v11197
      %v11454 = vpack.c.b16 %v11198, %v11198
      %v11455 = vpack.c.b16 %v11199, %v11199
      %v11456 = vpack.c.b16 %v11200, %v11200
      %v11457 = vpack.c.b16 %v11201, %v11201
      %v11458 = vpack.c.b16 %v11202, %v11202
      %v11459 = vpack.c.b16 %v11203, %v11203
      %v11460 = vpack.c.b16 %v11204, %v11204
      %v11461 = vpack.c.b16 %v11205, %v11205
      %v11462 = vpack.c.b16 %v11206, %v11206
      %v11463 = vpack.c.b16 %v11207, %v11207
      %v11464 = vpack.c.b16 %v11208, %v11208
      %v11465 = vpack.c.b16 %v11209, %v11209
      %v11466 = vpack.c.b16 %v11210, %v11210
      %v11467 = vpack.c.b16 %v11211, %v11211
      %v11468 = vpack.c.b16 %v11212, %v11212
      %v11469 = vpack.c.b16 %v11213, %v11213
      %v11470 = vpack.c.b16 %v11214, %v11214
      %v11471 = vpack.c.b16 %v11215, %v11215
      %v11472 = vpack.c.b16 %v11216, %v11216
      %v11473 = vpack.c.b16 %v11217, %v11217
      %v11474 = vpack.c.b16 %v11218, %v11218
      %v11475 = vpack.c.b16 %v11219, %v11219
      %v11476 = vpack.c.b16 %v11220, %v11220
      %v11477 = vpack.c.b16 %v11221, %v11221
      %v11478 = vpack.c.b16 %v11222, %v11222
      %v11479 = vpack.c.b16 %v11223, %v11223
      %v11480 = vpack.c.b16 %v11224, %v11224
      %v11481 = vpack.c.b16 %v11225, %v11225
      %v11482 = vpack.c.b16 %v11226, %v11226
      %v11483 = vpack.c.b16 %v11227, %v11227
      %v11484 = vpack.c.b16 %v11228, %v11228
      %v11485 = vpack.c.b16 %v11229, %v11229
      %v11486 = vpack.c.b16 %v11230, %v11230
      %v11487 = vpack.c.b16 %v11231, %v11231
      %v11488 = vpack.c.b16 %v11232, %v11232
      %v11489 = vpack.c.b16 %v11233, %v11233
      %v11490 = vpack.c.b16 %v11234, %v11234
      %v11491 = vpack.c.b16 %v11235, %v11235
      %v11492 = vpack.c.b16 %v11236, %v11236
      %v11493 = vpack.c.b16 %v11237, %v11237
      %v11494 = vpack.c.b16 %v11238, %v11238
      %v11495 = vpack.c.b16 %v11239, %v11239
      %v11496 = vpack.c.b16 %v11240, %v11240
      %v11497 = vpack.c.b16 %v11241, %v11241
      %v11498 = vpack.c.b16 %v11242, %v11242
      %v11499 = vpack.c.b16 %v11243, %v11243
      %v11500 = vpack.c.b16 %v11244, %v11244
      %v11501 = vpack.c.b16 %v11245, %v11245
      %v11502 = vpack.c.b16 %v11246, %v11246
      %v11503 = vpack.c.b16 %v11247, %v11247
      %v11504 = vpack.c.b16 %v11248, %v11248
      %v11505 = vpack.c.b16 %v11249, %v11249
      %v11506 = vpack.c.b16 %v11250, %v11250
      %v11507 = vpack.c.b16 %v11251, %v11251
      %v11508 = vpack.c.b16 %v11252, %v11252
      %v11509 = vpack.c.b16 %v11253, %v11253
      %v11510 = vpack.c.b16 %v11254, %v11254
      %v11511 = vpack.c.b16 %v11255, %v11255
      %v11512 = vpack.c.b16 %v11256, %v11256
      %v11513 = vpack.c.b16 %v11257, %v11257
      %v11514 = vpack.c.b16 %v11258, %v11258
      %v11515 = vpack.c.b16 %v11259, %v11259
      %v11516 = vpack.c.b16 %v11260, %v11260
      %v11517 = vpack.c.b16 %v11261, %v11261
      %v11518 = vpack.c.b16 %v11262, %v11262
      %v11519 = vpack.c.b16 %v11263, %v11263
      %v11520 = vpack.c.b16 %v11264, %v11264
      %v11521 = vpack.c.b16 %v11265, %v11265
      %v11522 = vpack.c.b16 %v11266, %v11266
      %v11523 = vpack.c.b16 %v11267, %v11267
      %v11524 = vpack.c.b16 %v11268, %v11268
      %v11525 = vpack.c.b16 %v11269, %v11269
      %v11526 = vpack.c.b16 %v11270, %v11270
      %v11527 = vpack.c.b16 %v11271, %v11271
      %v11528 = vpack.c.b16 %v11272, %v11272
      %v11529 = vpack.c.b16 %v11273, %v11273
      %v11530 = vpack.c.b16 %v11274, %v11274
      %v11531 = vpack.c.b16 %v11275, %v11275
      %v11532 = vpack.c.b16 %v11276, %v11276
      %v11533 = vpack.c.b16 %v11277, %v11277
      %v11534 = vpack.c.b16 %v11278, %v11278
      %v11535 = vpack.c.b16 %v11279, %v11279
      %v11536 = vpack.c.b16 %v11280, %v11280
      %v11537 = vpack.c.b16 %v11281, %v11281
      %v11538 = vpack.c.b16 %v11282, %v11282
      %v11539 = vpack.c.b16 %v11283, %v11283
      %v11540 = vpack.c.b16 %v11284, %v11284
      %v11541 = vpack.c.b16 %v11285, %v11285
      %v11542 = vpack.c.b16 %v11286, %v11286
      %v11543 = vpack.c.b16 %v11287, %v11287
      %v11544 = vpack.c.b16 %v11288, %v11288
      %v11545 = vpack.c.b16 %v11289, %v11289
      %v11546 = vpack.c.b16 %v11290, %v11290
      %v11547 = vpack.c.b16 %v11291, %v11291
      %v11548 = vpack.c.b16 %v11292, %v11292
      %v11549 = vpack.c.b16 %v11293, %v11293
      %v11550 = vpack.c.b16 %v11294, %v11294
      %v11551 = vpack.c.b16 %v11295, %v11295
      %v11552 = vpack.c.b16 %v11296, %v11296
      %v11553 = vpack.c.b16 %v11297, %v11297
      %v11554 = vpack.c.b16 %v11298, %v11298
      %v11555 = vpack.c.b16 %v11299, %v11299
      %v11556 = vpack.c.b16 %v11300, %v11300
      %v11557 = vpack.c.b16 %v11301, %v11301
      %v11558 = vpack.c.b16 %v11302, %v11302
      %v11559 = vpack.c.b16 %v11303, %v11303
      %v11560 = vpack.c.b16 %v11304, %v11304
      %v11561 = vpack.c.b16 %v11305, %v11305
      %v11562 = vpack.c.b16 %v11306, %v11306
      %v11563 = vpack.c.b16 %v11307, %v11307
      %v11564 = vpack.c.b16 %v11308, %v11308
      %v11565 = vpack.c.b16 %v11309, %v11309
      %v11566 = vpack.c.b16 %v11310, %v11310
      %v11567 = vpack.c.b16 %v11311, %v11311
      %v11568 = vpack.c.b16 %v11312, %v11312
      %v11569 = vpack.c.b16 %v11313, %v11313
      %v11570 = vpack.c.b16 %v11314, %v11314
      %v11571 = vpack.c.b16 %v11315, %v11315
      %v11572 = vpack.c.b16 %v11316, %v11316
      %v11573 = vpack.c.b16 %v11317, %v11317
      %v11574 = vpack.c.b16 %v11318, %v11318
      %v11575 = vpack.c.b16 %v11319, %v11319
      %v11576 = vpack.c.b16 %v11320, %v11320
      %v11577 = vpack.c.b16 %v11321, %v11321
      %v11578 = vpack.c.b16 %v11322, %v11322
      %v11579 = vpack.c.b16 %v11323, %v11323
      %v11580 = vpack.c.b16 %v11324, %v11324
      %v11581 = vpack.c.b16 %v11325, %v11325
      %v11582 = vpack.c.b16 %v11326, %v11326
      %v11583 = vpack.c.b16 %v11327, %v11327
      %v11584 = vpack.c.b16 %v11328, %v11328
      %v11585 = vpack.c.b16 %v11329, %v11329
      %v11586 = vpack.c.b16 %v11330, %v11330
      %v11587 = vpack.c.b16 %v11331, %v11331
      %v11588 = vpack.c.b16 %v11332, %v11332
      %v11589 = vpack.c.b16 %v11333, %v11333
      %v11590 = vpack.c.b16 %v11334, %v11334
      %v11591 = vpack.c.b16 %v11335, %v11335
      %v11592 = vpack.c.b16 %v11336, %v11336
      %v11593 = vpack.c.b16 %v11337, %v11337
      %v11594 = vpack.c.b16 %v11338, %v11338
      %v11595 = vpack.c.b16 %v11339, %v11339
      %v11596 = vpack.c.b16 %v11340, %v11340
      %v11597 = vpack.c.b16 %v11341, %v11341
      %v11598 = vpack.c.b16 %v11342, %v11342
      %v11599 = vpack.c.b16 %v11343, %v11343
      %v11600 = vpack.c.b16 %v11344, %v11344
      %v11601 = vpack.c.b16 %v11345, %v11345
      %v11602 = vpack.c.b16 %v11346, %v11346
      %v11603 = vpack.c.b16 %v11347, %v11347
      %v11604 = vpack.c.b16 %v11348, %v11348
      %v11605 = vpack.c.b16 %v11349, %v11349
      %v11606 = vpack.c.b16 %v11350, %v11350
      %v11607 = vpack.c.b16 %v11351, %v11351
      %v11608 = vpack.c.b16 %v11352, %v11352
      %v11609 = vpack.c.b16 %v11353, %v11353
      %v11610 = vpack.c.b16 %v11354, %v11354
      %v11611 = vpack.c.b16 %v11355, %v11355
      %v11612 = vpack.c.b16 %v11356, %v11356
      %v11613 = vpack.c.b16 %v11357, %v11357
      %v11614 = vpack.c.b16 %v11358, %v11358
      %v11615 = vpack.c.b16 %v11359, %v11359
      %v11616 = vpack.c.b16 %v11360, %v11360
      %v11617 = vpack.c.b16 %v11361, %v11361
      %v11618 = vpack.c.b16 %v11362, %v11362
      %v11619 = vpack.c.b16 %v11363, %v11363
      %v11620 = vpack.c.b16 %v11364, %v11364
      %v11621 = vpack.c.b16 %v11365, %v11365
      %v11622 = vpack.c.b16 %v11366, %v11366
      %v11623 = vpack.c.b16 %v11367, %v11367
      %v11624 = vpack.c.b16 %v11368, %v11368
      %v11625 = vpack.c.b16 %v11369, %v11369
      %vm11882 = vcmask 257024
      %11883 = vst.msk [vmem:[%s170] sm:$0xf] %vm11882, %v11370
      %11884 = vst.msk [vmem:[%s170 + $0x4] sm:$0xf] %vm11882, %v11371
      %11885 = vst.msk [vmem:[%s170 + $0x8] sm:$0xf] %vm11882, %v11372
      %11886 = vst.msk [vmem:[%s170 + $0xc] sm:$0xf] %vm11882, %v11373
      %11887 = vst.msk [vmem:[%s170 + $0x10] sm:$0xf] %vm11882, %v11374
      %11888 = vst.msk [vmem:[%s170 + $0x14] sm:$0xf] %vm11882, %v11375
      %11889 = vst.msk [vmem:[%s170 + $0x18] sm:$0xf] %vm11882, %v11376
      %11890 = vst.msk [vmem:[%s170 + $0x1c] sm:$0xf] %vm11882, %v11377
      %11891 = vst.msk [vmem:[%s170 + $0x20] sm:$0xf] %vm11882, %v11378
      %11892 = vst.msk [vmem:[%s170 + $0x24] sm:$0xf] %vm11882, %v11379
      %11893 = vst.msk [vmem:[%s170 + $0x28] sm:$0xf] %vm11882, %v11380
      %11894 = vst.msk [vmem:[%s170 + $0x2c] sm:$0xf] %vm11882, %v11381
      %11895 = vst.msk [vmem:[%s170 + $0x30] sm:$0xf] %vm11882, %v11382
      %11896 = vst.msk [vmem:[%s170 + $0x34] sm:$0xf] %vm11882, %v11383
      %11897 = vst.msk [vmem:[%s170 + $0x38] sm:$0xf] %vm11882, %v11384
      %11898 = vst.msk [vmem:[%s170 + $0x3c] sm:$0xf] %vm11882, %v11385
      %11899 = vst.msk [vmem:[%s170 + $0x40] sm:$0xf] %vm11882, %v11386
      %11900 = vst.msk [vmem:[%s170 + $0x44] sm:$0xf] %vm11882, %v11387
      %11901 = vst.msk [vmem:[%s170 + $0x48] sm:$0xf] %vm11882, %v11388
      %11902 = vst.msk [vmem:[%s170 + $0x4c] sm:$0xf] %vm11882, %v11389
      %11903 = vst.msk [vmem:[%s170 + $0x50] sm:$0xf] %vm11882, %v11390
      %11904 = vst.msk [vmem:[%s170 + $0x54] sm:$0xf] %vm11882, %v11391
      %11905 = vst.msk [vmem:[%s170 + $0x58] sm:$0xf] %vm11882, %v11392
      %11906 = vst.msk [vmem:[%s170 + $0x5c] sm:$0xf] %vm11882, %v11393
      %11907 = vst.msk [vmem:[%s170 + $0x60] sm:$0xf] %vm11882, %v11394
      %11908 = vst.msk [vmem:[%s170 + $0x64] sm:$0xf] %vm11882, %v11395
      %11909 = vst.msk [vmem:[%s170 + $0x68] sm:$0xf] %vm11882, %v11396
      %11910 = vst.msk [vmem:[%s170 + $0x6c] sm:$0xf] %vm11882, %v11397
      %11911 = vst.msk [vmem:[%s170 + $0x70] sm:$0xf] %vm11882, %v11398
      %11912 = vst.msk [vmem:[%s170 + $0x74] sm:$0xf] %vm11882, %v11399
      %11913 = vst.msk [vmem:[%s170 + $0x78] sm:$0xf] %vm11882, %v11400
      %11914 = vst.msk [vmem:[%s170 + $0x7c] sm:$0xf] %vm11882, %v11401
      %11915 = vst.msk [vmem:[%s170 + $0x80] sm:$0xf] %vm11882, %v11402
      %11916 = vst.msk [vmem:[%s170 + $0x84] sm:$0xf] %vm11882, %v11403
      %11917 = vst.msk [vmem:[%s170 + $0x88] sm:$0xf] %vm11882, %v11404
      %11918 = vst.msk [vmem:[%s170 + $0x8c] sm:$0xf] %vm11882, %v11405
      %11919 = vst.msk [vmem:[%s170 + $0x90] sm:$0xf] %vm11882, %v11406
      %11920 = vst.msk [vmem:[%s170 + $0x94] sm:$0xf] %vm11882, %v11407
      %11921 = vst.msk [vmem:[%s170 + $0x98] sm:$0xf] %vm11882, %v11408
      %11922 = vst.msk [vmem:[%s170 + $0x9c] sm:$0xf] %vm11882, %v11409
      %11923 = vst.msk [vmem:[%s170 + $0xa0] sm:$0xf] %vm11882, %v11410
      %11924 = vst.msk [vmem:[%s170 + $0xa4] sm:$0xf] %vm11882, %v11411
      %11925 = vst.msk [vmem:[%s170 + $0xa8] sm:$0xf] %vm11882, %v11412
      %11926 = vst.msk [vmem:[%s170 + $0xac] sm:$0xf] %vm11882, %v11413
      %11927 = vst.msk [vmem:[%s170 + $0xb0] sm:$0xf] %vm11882, %v11414
      %11928 = vst.msk [vmem:[%s170 + $0xb4] sm:$0xf] %vm11882, %v11415
      %11929 = vst.msk [vmem:[%s170 + $0xb8] sm:$0xf] %vm11882, %v11416
      %11930 = vst.msk [vmem:[%s170 + $0xbc] sm:$0xf] %vm11882, %v11417
      %11931 = vst.msk [vmem:[%s170 + $0xc0] sm:$0xf] %vm11882, %v11418
      %11932 = vst.msk [vmem:[%s170 + $0xc4] sm:$0xf] %vm11882, %v11419
      %11933 = vst.msk [vmem:[%s170 + $0xc8] sm:$0xf] %vm11882, %v11420
      %11934 = vst.msk [vmem:[%s170 + $0xcc] sm:$0xf] %vm11882, %v11421
      %11935 = vst.msk [vmem:[%s170 + $0xd0] sm:$0xf] %vm11882, %v11422
      %11936 = vst.msk [vmem:[%s170 + $0xd4] sm:$0xf] %vm11882, %v11423
      %11937 = vst.msk [vmem:[%s170 + $0xd8] sm:$0xf] %vm11882, %v11424
      %11938 = vst.msk [vmem:[%s170 + $0xdc] sm:$0xf] %vm11882, %v11425
      %11939 = vst.msk [vmem:[%s170 + $0xe0] sm:$0xf] %vm11882, %v11426
      %11940 = vst.msk [vmem:[%s170 + $0xe4] sm:$0xf] %vm11882, %v11427
      %11941 = vst.msk [vmem:[%s170 + $0xe8] sm:$0xf] %vm11882, %v11428
      %11942 = vst.msk [vmem:[%s170 + $0xec] sm:$0xf] %vm11882, %v11429
      %11943 = vst.msk [vmem:[%s170 + $0xf0] sm:$0xf] %vm11882, %v11430
      %11944 = vst.msk [vmem:[%s170 + $0xf4] sm:$0xf] %vm11882, %v11431
      %11945 = vst.msk [vmem:[%s170 + $0xf8] sm:$0xf] %vm11882, %v11432
      %11946 = vst.msk [vmem:[%s170 + $0xfc] sm:$0xf] %vm11882, %v11433
      %11947 = vst.msk [vmem:[%s170 + $0x100] sm:$0xf] %vm11882, %v11434
      %11948 = vst.msk [vmem:[%s170 + $0x104] sm:$0xf] %vm11882, %v11435
      %11949 = vst.msk [vmem:[%s170 + $0x108] sm:$0xf] %vm11882, %v11436
      %11950 = vst.msk [vmem:[%s170 + $0x10c] sm:$0xf] %vm11882, %v11437
      %11951 = vst.msk [vmem:[%s170 + $0x110] sm:$0xf] %vm11882, %v11438
      %11952 = vst.msk [vmem:[%s170 + $0x114] sm:$0xf] %vm11882, %v11439
      %11953 = vst.msk [vmem:[%s170 + $0x118] sm:$0xf] %vm11882, %v11440
      %11954 = vst.msk [vmem:[%s170 + $0x11c] sm:$0xf] %vm11882, %v11441
      %11955 = vst.msk [vmem:[%s170 + $0x120] sm:$0xf] %vm11882, %v11442
      %11956 = vst.msk [vmem:[%s170 + $0x124] sm:$0xf] %vm11882, %v11443
      %11957 = vst.msk [vmem:[%s170 + $0x128] sm:$0xf] %vm11882, %v11444
      %11958 = vst.msk [vmem:[%s170 + $0x12c] sm:$0xf] %vm11882, %v11445
      %11959 = vst.msk [vmem:[%s170 + $0x130] sm:$0xf] %vm11882, %v11446
      %11960 = vst.msk [vmem:[%s170 + $0x134] sm:$0xf] %vm11882, %v11447
      %11961 = vst.msk [vmem:[%s170 + $0x138] sm:$0xf] %vm11882, %v11448
      %11962 = vst.msk [vmem:[%s170 + $0x13c] sm:$0xf] %vm11882, %v11449
      %11963 = vst.msk [vmem:[%s170 + $0x140] sm:$0xf] %vm11882, %v11450
      %11964 = vst.msk [vmem:[%s170 + $0x144] sm:$0xf] %vm11882, %v11451
      %11965 = vst.msk [vmem:[%s170 + $0x148] sm:$0xf] %vm11882, %v11452
      %11966 = vst.msk [vmem:[%s170 + $0x14c] sm:$0xf] %vm11882, %v11453
      %11967 = vst.msk [vmem:[%s170 + $0x150] sm:$0xf] %vm11882, %v11454
      %11968 = vst.msk [vmem:[%s170 + $0x154] sm:$0xf] %vm11882, %v11455
      %11969 = vst.msk [vmem:[%s170 + $0x158] sm:$0xf] %vm11882, %v11456
      %11970 = vst.msk [vmem:[%s170 + $0x15c] sm:$0xf] %vm11882, %v11457
      %11971 = vst.msk [vmem:[%s170 + $0x160] sm:$0xf] %vm11882, %v11458
      %11972 = vst.msk [vmem:[%s170 + $0x164] sm:$0xf] %vm11882, %v11459
      %11973 = vst.msk [vmem:[%s170 + $0x168] sm:$0xf] %vm11882, %v11460
      %11974 = vst.msk [vmem:[%s170 + $0x16c] sm:$0xf] %vm11882, %v11461
      %11975 = vst.msk [vmem:[%s170 + $0x170] sm:$0xf] %vm11882, %v11462
      %11976 = vst.msk [vmem:[%s170 + $0x174] sm:$0xf] %vm11882, %v11463
      %11977 = vst.msk [vmem:[%s170 + $0x178] sm:$0xf] %vm11882, %v11464
      %11978 = vst.msk [vmem:[%s170 + $0x17c] sm:$0xf] %vm11882, %v11465
      %11979 = vst.msk [vmem:[%s170 + $0x180] sm:$0xf] %vm11882, %v11466
      %11980 = vst.msk [vmem:[%s170 + $0x184] sm:$0xf] %vm11882, %v11467
      %11981 = vst.msk [vmem:[%s170 + $0x188] sm:$0xf] %vm11882, %v11468
      %11982 = vst.msk [vmem:[%s170 + $0x18c] sm:$0xf] %vm11882, %v11469
      %11983 = vst.msk [vmem:[%s170 + $0x190] sm:$0xf] %vm11882, %v11470
      %11984 = vst.msk [vmem:[%s170 + $0x194] sm:$0xf] %vm11882, %v11471
      %11985 = vst.msk [vmem:[%s170 + $0x198] sm:$0xf] %vm11882, %v11472
      %11986 = vst.msk [vmem:[%s170 + $0x19c] sm:$0xf] %vm11882, %v11473
      %11987 = vst.msk [vmem:[%s170 + $0x1a0] sm:$0xf] %vm11882, %v11474
      %11988 = vst.msk [vmem:[%s170 + $0x1a4] sm:$0xf] %vm11882, %v11475
      %11989 = vst.msk [vmem:[%s170 + $0x1a8] sm:$0xf] %vm11882, %v11476
      %11990 = vst.msk [vmem:[%s170 + $0x1ac] sm:$0xf] %vm11882, %v11477
      %11991 = vst.msk [vmem:[%s170 + $0x1b0] sm:$0xf] %vm11882, %v11478
      %11992 = vst.msk [vmem:[%s170 + $0x1b4] sm:$0xf] %vm11882, %v11479
      %11993 = vst.msk [vmem:[%s170 + $0x1b8] sm:$0xf] %vm11882, %v11480
      %11994 = vst.msk [vmem:[%s170 + $0x1bc] sm:$0xf] %vm11882, %v11481
      %11995 = vst.msk [vmem:[%s170 + $0x1c0] sm:$0xf] %vm11882, %v11482
      %11996 = vst.msk [vmem:[%s170 + $0x1c4] sm:$0xf] %vm11882, %v11483
      %11997 = vst.msk [vmem:[%s170 + $0x1c8] sm:$0xf] %vm11882, %v11484
      %11998 = vst.msk [vmem:[%s170 + $0x1cc] sm:$0xf] %vm11882, %v11485
      %11999 = vst.msk [vmem:[%s170 + $0x1d0] sm:$0xf] %vm11882, %v11486
      %12000 = vst.msk [vmem:[%s170 + $0x1d4] sm:$0xf] %vm11882, %v11487
      %12001 = vst.msk [vmem:[%s170 + $0x1d8] sm:$0xf] %vm11882, %v11488
      %12002 = vst.msk [vmem:[%s170 + $0x1dc] sm:$0xf] %vm11882, %v11489
      %12003 = vst.msk [vmem:[%s170 + $0x1e0] sm:$0xf] %vm11882, %v11490
      %12004 = vst.msk [vmem:[%s170 + $0x1e4] sm:$0xf] %vm11882, %v11491
      %12005 = vst.msk [vmem:[%s170 + $0x1e8] sm:$0xf] %vm11882, %v11492
      %12006 = vst.msk [vmem:[%s170 + $0x1ec] sm:$0xf] %vm11882, %v11493
      %12007 = vst.msk [vmem:[%s170 + $0x1f0] sm:$0xf] %vm11882, %v11494
      %12008 = vst.msk [vmem:[%s170 + $0x1f4] sm:$0xf] %vm11882, %v11495
      %12009 = vst.msk [vmem:[%s170 + $0x1f8] sm:$0xf] %vm11882, %v11496
      %12010 = vst.msk [vmem:[%s170 + $0x1fc] sm:$0xf] %vm11882, %v11497
      %12011 = vst.msk [vmem:[%s170 + $0x200] sm:$0xf] %vm11882, %v11498
      %12012 = vst.msk [vmem:[%s170 + $0x204] sm:$0xf] %vm11882, %v11499
      %12013 = vst.msk [vmem:[%s170 + $0x208] sm:$0xf] %vm11882, %v11500
      %12014 = vst.msk [vmem:[%s170 + $0x20c] sm:$0xf] %vm11882, %v11501
      %12015 = vst.msk [vmem:[%s170 + $0x210] sm:$0xf] %vm11882, %v11502
      %12016 = vst.msk [vmem:[%s170 + $0x214] sm:$0xf] %vm11882, %v11503
      %12017 = vst.msk [vmem:[%s170 + $0x218] sm:$0xf] %vm11882, %v11504
      %12018 = vst.msk [vmem:[%s170 + $0x21c] sm:$0xf] %vm11882, %v11505
      %12019 = vst.msk [vmem:[%s170 + $0x220] sm:$0xf] %vm11882, %v11506
      %12020 = vst.msk [vmem:[%s170 + $0x224] sm:$0xf] %vm11882, %v11507
      %12021 = vst.msk [vmem:[%s170 + $0x228] sm:$0xf] %vm11882, %v11508
      %12022 = vst.msk [vmem:[%s170 + $0x22c] sm:$0xf] %vm11882, %v11509
      %12023 = vst.msk [vmem:[%s170 + $0x230] sm:$0xf] %vm11882, %v11510
      %12024 = vst.msk [vmem:[%s170 + $0x234] sm:$0xf] %vm11882, %v11511
      %12025 = vst.msk [vmem:[%s170 + $0x238] sm:$0xf] %vm11882, %v11512
      %12026 = vst.msk [vmem:[%s170 + $0x23c] sm:$0xf] %vm11882, %v11513
      %12027 = vst.msk [vmem:[%s170 + $0x240] sm:$0xf] %vm11882, %v11514
      %12028 = vst.msk [vmem:[%s170 + $0x244] sm:$0xf] %vm11882, %v11515
      %12029 = vst.msk [vmem:[%s170 + $0x248] sm:$0xf] %vm11882, %v11516
      %12030 = vst.msk [vmem:[%s170 + $0x24c] sm:$0xf] %vm11882, %v11517
      %12031 = vst.msk [vmem:[%s170 + $0x250] sm:$0xf] %vm11882, %v11518
      %12032 = vst.msk [vmem:[%s170 + $0x254] sm:$0xf] %vm11882, %v11519
      %12033 = vst.msk [vmem:[%s170 + $0x258] sm:$0xf] %vm11882, %v11520
      %12034 = vst.msk [vmem:[%s170 + $0x25c] sm:$0xf] %vm11882, %v11521
      %12035 = vst.msk [vmem:[%s170 + $0x260] sm:$0xf] %vm11882, %v11522
      %12036 = vst.msk [vmem:[%s170 + $0x264] sm:$0xf] %vm11882, %v11523
      %12037 = vst.msk [vmem:[%s170 + $0x268] sm:$0xf] %vm11882, %v11524
      %12038 = vst.msk [vmem:[%s170 + $0x26c] sm:$0xf] %vm11882, %v11525
      %12039 = vst.msk [vmem:[%s170 + $0x270] sm:$0xf] %vm11882, %v11526
      %12040 = vst.msk [vmem:[%s170 + $0x274] sm:$0xf] %vm11882, %v11527
      %12041 = vst.msk [vmem:[%s170 + $0x278] sm:$0xf] %vm11882, %v11528
      %12042 = vst.msk [vmem:[%s170 + $0x27c] sm:$0xf] %vm11882, %v11529
      %12043 = vst.msk [vmem:[%s170 + $0x280] sm:$0xf] %vm11882, %v11530
      %12044 = vst.msk [vmem:[%s170 + $0x284] sm:$0xf] %vm11882, %v11531
      %12045 = vst.msk [vmem:[%s170 + $0x288] sm:$0xf] %vm11882, %v11532
      %12046 = vst.msk [vmem:[%s170 + $0x28c] sm:$0xf] %vm11882, %v11533
      %12047 = vst.msk [vmem:[%s170 + $0x290] sm:$0xf] %vm11882, %v11534
      %12048 = vst.msk [vmem:[%s170 + $0x294] sm:$0xf] %vm11882, %v11535
      %12049 = vst.msk [vmem:[%s170 + $0x298] sm:$0xf] %vm11882, %v11536
      %12050 = vst.msk [vmem:[%s170 + $0x29c] sm:$0xf] %vm11882, %v11537
      %12051 = vst.msk [vmem:[%s170 + $0x2a0] sm:$0xf] %vm11882, %v11538
      %12052 = vst.msk [vmem:[%s170 + $0x2a4] sm:$0xf] %vm11882, %v11539
      %12053 = vst.msk [vmem:[%s170 + $0x2a8] sm:$0xf] %vm11882, %v11540
      %12054 = vst.msk [vmem:[%s170 + $0x2ac] sm:$0xf] %vm11882, %v11541
      %12055 = vst.msk [vmem:[%s170 + $0x2b0] sm:$0xf] %vm11882, %v11542
      %12056 = vst.msk [vmem:[%s170 + $0x2b4] sm:$0xf] %vm11882, %v11543
      %12057 = vst.msk [vmem:[%s170 + $0x2b8] sm:$0xf] %vm11882, %v11544
      %12058 = vst.msk [vmem:[%s170 + $0x2bc] sm:$0xf] %vm11882, %v11545
      %12059 = vst.msk [vmem:[%s170 + $0x2c0] sm:$0xf] %vm11882, %v11546
      %12060 = vst.msk [vmem:[%s170 + $0x2c4] sm:$0xf] %vm11882, %v11547
      %12061 = vst.msk [vmem:[%s170 + $0x2c8] sm:$0xf] %vm11882, %v11548
      %12062 = vst.msk [vmem:[%s170 + $0x2cc] sm:$0xf] %vm11882, %v11549
      %12063 = vst.msk [vmem:[%s170 + $0x2d0] sm:$0xf] %vm11882, %v11550
      %12064 = vst.msk [vmem:[%s170 + $0x2d4] sm:$0xf] %vm11882, %v11551
      %12065 = vst.msk [vmem:[%s170 + $0x2d8] sm:$0xf] %vm11882, %v11552
      %12066 = vst.msk [vmem:[%s170 + $0x2dc] sm:$0xf] %vm11882, %v11553
      %12067 = vst.msk [vmem:[%s170 + $0x2e0] sm:$0xf] %vm11882, %v11554
      %12068 = vst.msk [vmem:[%s170 + $0x2e4] sm:$0xf] %vm11882, %v11555
      %12069 = vst.msk [vmem:[%s170 + $0x2e8] sm:$0xf] %vm11882, %v11556
      %12070 = vst.msk [vmem:[%s170 + $0x2ec] sm:$0xf] %vm11882, %v11557
      %12071 = vst.msk [vmem:[%s170 + $0x2f0] sm:$0xf] %vm11882, %v11558
      %12072 = vst.msk [vmem:[%s170 + $0x2f4] sm:$0xf] %vm11882, %v11559
      %12073 = vst.msk [vmem:[%s170 + $0x2f8] sm:$0xf] %vm11882, %v11560
      %12074 = vst.msk [vmem:[%s170 + $0x2fc] sm:$0xf] %vm11882, %v11561
      %12075 = vst.msk [vmem:[%s170 + $0x300] sm:$0xf] %vm11882, %v11562
      %12076 = vst.msk [vmem:[%s170 + $0x304] sm:$0xf] %vm11882, %v11563
      %12077 = vst.msk [vmem:[%s170 + $0x308] sm:$0xf] %vm11882, %v11564
      %12078 = vst.msk [vmem:[%s170 + $0x30c] sm:$0xf] %vm11882, %v11565
      %12079 = vst.msk [vmem:[%s170 + $0x310] sm:$0xf] %vm11882, %v11566
      %12080 = vst.msk [vmem:[%s170 + $0x314] sm:$0xf] %vm11882, %v11567
      %12081 = vst.msk [vmem:[%s170 + $0x318] sm:$0xf] %vm11882, %v11568
      %12082 = vst.msk [vmem:[%s170 + $0x31c] sm:$0xf] %vm11882, %v11569
      %12083 = vst.msk [vmem:[%s170 + $0x320] sm:$0xf] %vm11882, %v11570
      %12084 = vst.msk [vmem:[%s170 + $0x324] sm:$0xf] %vm11882, %v11571
      %12085 = vst.msk [vmem:[%s170 + $0x328] sm:$0xf] %vm11882, %v11572
      %12086 = vst.msk [vmem:[%s170 + $0x32c] sm:$0xf] %vm11882, %v11573
      %12087 = vst.msk [vmem:[%s170 + $0x330] sm:$0xf] %vm11882, %v11574
      %12088 = vst.msk [vmem:[%s170 + $0x334] sm:$0xf] %vm11882, %v11575
      %12089 = vst.msk [vmem:[%s170 + $0x338] sm:$0xf] %vm11882, %v11576
      %12090 = vst.msk [vmem:[%s170 + $0x33c] sm:$0xf] %vm11882, %v11577
      %12091 = vst.msk [vmem:[%s170 + $0x340] sm:$0xf] %vm11882, %v11578
      %12092 = vst.msk [vmem:[%s170 + $0x344] sm:$0xf] %vm11882, %v11579
      %12093 = vst.msk [vmem:[%s170 + $0x348] sm:$0xf] %vm11882, %v11580
      %12094 = vst.msk [vmem:[%s170 + $0x34c] sm:$0xf] %vm11882, %v11581
      %12095 = vst.msk [vmem:[%s170 + $0x350] sm:$0xf] %vm11882, %v11582
      %12096 = vst.msk [vmem:[%s170 + $0x354] sm:$0xf] %vm11882, %v11583
      %12097 = vst.msk [vmem:[%s170 + $0x358] sm:$0xf] %vm11882, %v11584
      %12098 = vst.msk [vmem:[%s170 + $0x35c] sm:$0xf] %vm11882, %v11585
      %12099 = vst.msk [vmem:[%s170 + $0x360] sm:$0xf] %vm11882, %v11586
      %12100 = vst.msk [vmem:[%s170 + $0x364] sm:$0xf] %vm11882, %v11587
      %12101 = vst.msk [vmem:[%s170 + $0x368] sm:$0xf] %vm11882, %v11588
      %12102 = vst.msk [vmem:[%s170 + $0x36c] sm:$0xf] %vm11882, %v11589
      %12103 = vst.msk [vmem:[%s170 + $0x370] sm:$0xf] %vm11882, %v11590
      %12104 = vst.msk [vmem:[%s170 + $0x374] sm:$0xf] %vm11882, %v11591
      %12105 = vst.msk [vmem:[%s170 + $0x378] sm:$0xf] %vm11882, %v11592
      %12106 = vst.msk [vmem:[%s170 + $0x37c] sm:$0xf] %vm11882, %v11593
      %12107 = vst.msk [vmem:[%s170 + $0x380] sm:$0xf] %vm11882, %v11594
      %12108 = vst.msk [vmem:[%s170 + $0x384] sm:$0xf] %vm11882, %v11595
      %12109 = vst.msk [vmem:[%s170 + $0x388] sm:$0xf] %vm11882, %v11596
      %12110 = vst.msk [vmem:[%s170 + $0x38c] sm:$0xf] %vm11882, %v11597
      %12111 = vst.msk [vmem:[%s170 + $0x390] sm:$0xf] %vm11882, %v11598
      %12112 = vst.msk [vmem:[%s170 + $0x394] sm:$0xf] %vm11882, %v11599
      %12113 = vst.msk [vmem:[%s170 + $0x398] sm:$0xf] %vm11882, %v11600
      %12114 = vst.msk [vmem:[%s170 + $0x39c] sm:$0xf] %vm11882, %v11601
      %12115 = vst.msk [vmem:[%s170 + $0x3a0] sm:$0xf] %vm11882, %v11602
      %12116 = vst.msk [vmem:[%s170 + $0x3a4] sm:$0xf] %vm11882, %v11603
      %12117 = vst.msk [vmem:[%s170 + $0x3a8] sm:$0xf] %vm11882, %v11604
      %12118 = vst.msk [vmem:[%s170 + $0x3ac] sm:$0xf] %vm11882, %v11605
      %12119 = vst.msk [vmem:[%s170 + $0x3b0] sm:$0xf] %vm11882, %v11606
      %12120 = vst.msk [vmem:[%s170 + $0x3b4] sm:$0xf] %vm11882, %v11607
      %12121 = vst.msk [vmem:[%s170 + $0x3b8] sm:$0xf] %vm11882, %v11608
      %12122 = vst.msk [vmem:[%s170 + $0x3bc] sm:$0xf] %vm11882, %v11609
      %12123 = vst.msk [vmem:[%s170 + $0x3c0] sm:$0xf] %vm11882, %v11610
      %12124 = vst.msk [vmem:[%s170 + $0x3c4] sm:$0xf] %vm11882, %v11611
      %12125 = vst.msk [vmem:[%s170 + $0x3c8] sm:$0xf] %vm11882, %v11612
      %12126 = vst.msk [vmem:[%s170 + $0x3cc] sm:$0xf] %vm11882, %v11613
      %12127 = vst.msk [vmem:[%s170 + $0x3d0] sm:$0xf] %vm11882, %v11614
      %12128 = vst.msk [vmem:[%s170 + $0x3d4] sm:$0xf] %vm11882, %v11615
      %12129 = vst.msk [vmem:[%s170 + $0x3d8] sm:$0xf] %vm11882, %v11616
      %12130 = vst.msk [vmem:[%s170 + $0x3dc] sm:$0xf] %vm11882, %v11617
      %12131 = vst.msk [vmem:[%s170 + $0x3e0] sm:$0xf] %vm11882, %v11618
      %12132 = vst.msk [vmem:[%s170 + $0x3e4] sm:$0xf] %vm11882, %v11619
      %12133 = vst.msk [vmem:[%s170 + $0x3e8] sm:$0xf] %vm11882, %v11620
      %12134 = vst.msk [vmem:[%s170 + $0x3ec] sm:$0xf] %vm11882, %v11621
      %12135 = vst.msk [vmem:[%s170 + $0x3f0] sm:$0xf] %vm11882, %v11622
      %12136 = vst.msk [vmem:[%s170 + $0x3f4] sm:$0xf] %vm11882, %v11623
      %12137 = vst.msk [vmem:[%s170 + $0x3f8] sm:$0xf] %vm11882, %v11624
      %12138 = vst.msk [vmem:[%s170 + $0x3fc] sm:$0xf] %vm11882, %v11625
      %p12139 = scmp.lt.s32.totalorder %s14, 1
      %s12140 = scalar_select %p12139, %s14, 1
      %s12141 = smul.addr %s12140, 256
      %s12142 = smul.addr %s12141, 4
      %s12143 = scalar_lea.vmem %s3, %s12142
      // Predicated region
      $region33: #{tpu_custom_call.1} parent=31 // pred_check
        %p12144 = pneg %p100
      $region34: #{tpu_custom_call.1} parent=31 // pred_check_branch
        %12146 = sbr.rel (%p12144) target = $region36
      $region35: #{tpu_custom_call.1} parent=31 // pred_region
        _
      $region36: #{tpu_custom_call.1} parent=31 // pred_fallthru
        _
    $region32: #{tpu_custom_call.1} parent=5 // pred_fallthru
      _
    %p12147 = scmp.le.s32.totalorder 2, %s9
    // Predicated region
    $region37: #{tpu_custom_call.1} parent=5 // pred_check
      %p12148 = pneg %p12147
    $region38: #{tpu_custom_call.1} parent=5 // pred_check_branch
      %12150 = sbr.rel (%p12148) target = $region40
    $region39: #{tpu_custom_call.1} parent=5 // pred_region
      %s12151 = ssub.s32 %s9, 2
      // Predicated region
      $region41: #{tpu_custom_call.1} parent=39 // pred_check
        %p12152 = pneg %p106
      $region42: #{tpu_custom_call.1} parent=39 // pred_check_branch
        %12154 = sbr.rel (%p12152) target = $region44
      $region43: #{tpu_custom_call.1} parent=39 // pred_region
        %p12155 = scmp.lt.s32.totalorder %s15, 1
        %s12156 = scalar_select %p12155, %s15, 1
        %s12157 = smul.addr %s12156, 256
        %s12158 = smul.addr %s12157, 4
        %s12159 = scalar_lea.vmem %s3, %s12158
      $region44: #{tpu_custom_call.1} parent=39 // pred_fallthru
        _
    $region40: #{tpu_custom_call.1} parent=5 // pred_fallthru
      _
  $region6: #{tpu_custom_call.1} parent=0 // loop_footer
    %s13 = sadd.s32 1, %s9
  $region7: #{tpu_custom_call.1} parent=0 // loop_footer_branch
    %8 = sbr.rel target = $region3
  $region8: #{tpu_custom_call.1} parent=0 // loop_exit
    _

</llo_original>
